<compile_context>
chip_gen: v5e
topology: v5e:2x2
jax: 0.10.0
libtpu: 0.0.40
codegen_flags: <defaults>
</compile_context>

<pallas_src>
import numpy as np
import jax
import jax.numpy as jnp
from jax.experimental import pallas as pl
from jax.experimental.pallas import tpu as pltpu

EPS = 1e-9
TEMP = 0.66            # concrete temperature (returned as a constant; no sampling)
Z_PRIVATE = 50
Z_SHARED = 10
N_PAD = 128            # lane-dense FC output width (110 padded to 128)
K1_PAD = 64            # conv1 im2col K padded 48 -> 64


# ----------------------------------------------------------------------------
# Fused Pallas kernel: conv1(matmul) -> conv2..conv4 (gather + big-K matmul)
#                      -> FC head.  One grid step per batch sample.
# ----------------------------------------------------------------------------
def _encoder_fused_kernel(p1_ref, w1c_ref, s2_ref, w2c_ref, s3_ref, w3c_ref,
                          s4_ref, w4c_ref, wf1_ref, b1_ref, wf2_ref, b2_ref,
                          stats_ref, std_ref):
    f32 = jnp.float32
    bf16 = jnp.bfloat16

    # conv1: im2col patches (256, 64) @ (64, 32), fused ReLU.
    a1 = jnp.maximum(
        jnp.dot(p1_ref[0], w1c_ref[...], preferred_element_type=f32), 0.0
    ).astype(bf16)                                            # (256, 32)  16x16

    def conv_block(a, s_ref, w_ref, o_rows, c_in, c_out):
        # a:     (S, c_in)        bf16 activations, rows = spatial positions (row-major)
        # s_ref: (16*o_rows, S)   0/1 gather matrix, rows grouped by tap k = ki*4+kj
        # w_ref: (16*c_in, c_out) conv weight, row index k*c_in + c
        # 1 gather matmul -> tap->lane relayout (concatenate) -> 1 big-K conv matmul.
        p = jnp.dot(s_ref[...], a, preferred_element_type=f32).astype(bf16)  # (16*o_rows, c_in)
        im = jnp.concatenate(
            [p[k * o_rows:(k + 1) * o_rows, :] for k in range(16)], axis=1)  # (o_rows, 16*c_in)
        y = jnp.dot(im, w_ref[...], preferred_element_type=f32)              # (o_rows, c_out)
        return jnp.maximum(y, 0.0).astype(bf16)

    a2 = conv_block(a1, s2_ref, w2c_ref, 64, 32, 64)     # (64, 64)   8x8,  K=512
    a3 = conv_block(a2, s3_ref, w3c_ref, 16, 64, 128)    # (16, 128)  4x4,  K=1024
    a4 = conv_block(a3, s4_ref, w4c_ref, 8, 128, 256)    # (8, 256)   2x2 (+4 zero pad rows), K=2048

    # fc1: flatten the 4 valid (h,w) rows into one K=1024 operand; wf1 rows were
    # permuted at init to this (o*256 + c) order, so no runtime transpose.
    h_flat = jnp.concatenate([a4[o:o + 1, :] for o in range(4)], axis=1)     # (1, 1024)
    h1 = jnp.maximum(
        jnp.dot(h_flat, wf1_ref[...], preferred_element_type=f32) + b1_ref[...], 0.0)
    # TODO(synk): nn.Dropout(0.1) is identity in eval mode; training-mode mask omitted.
    stats = jnp.dot(h1.astype(bf16), wf2_ref[...],
                    preferred_element_type=f32) + b2_ref[...]                # (1, 128)
    stats_ref[0] = stats

    # std only over logvar columns [Z_PRIVATE, 2*Z_PRIVATE); other lanes masked
    # to 0 so exp() never overflows in discarded columns.
    col = jax.lax.broadcasted_iota(jnp.int32, stats.shape, 1)
    logvar = jnp.where((col >= Z_PRIVATE) & (col < 2 * Z_PRIVATE), stats, 0.0)
    std_ref[0] = jnp.sqrt(jnp.exp(logvar) + EPS)


def _fused_forward(patches_bf16, params, batch):
    args = (patches_bf16, params["w1c"], params["s2"], params["w2c"],
            params["s3"], params["w3c"], params["s4"], params["w4c"],
            params["wf1"], params["b1"], params["wf2"], params["b2"])
    # Weights: full-array blocks with a constant index map -> DMA'd once,
    # VMEM-resident across grid steps. Patches / outputs indexed by batch.
    in_specs = [pl.BlockSpec((1, 256, K1_PAD), lambda b: (b, 0, 0))]
    in_specs += [pl.BlockSpec(a.shape, lambda b: (0, 0)) for a in args[1:]]
    out_shape = (jax.ShapeDtypeStruct((batch, 1, N_PAD), jnp.float32),
                 jax.ShapeDtypeStruct((batch, 1, N_PAD), jnp.float32))
    out_specs = (pl.BlockSpec((1, 1, N_PAD), lambda b: (b, 0, 0)),
                 pl.BlockSpec((1, 1, N_PAD), lambda b: (b, 0, 0)))
    return pl.pallas_call(
        _encoder_fused_kernel,
        out_shape=out_shape,
        grid=(batch,),
        in_specs=in_specs,
        out_specs=out_specs,
        compiler_params=pltpu.CompilerParams(
            # "parallel" -> v7x megacore splits the batch over both TensorCores.
            dimension_semantics=("parallel",),
            vmem_limit_bytes=32 * 1024 * 1024,   # ~3 MB resident weights; safe on v5e/v6e/v7x
        ),
    )(*args)


# ----------------------------------------------------------------------------
# Plain-JAX glue (conv1 im2col on the tiny input image) and parameter init.
# ----------------------------------------------------------------------------
def _im2col(x_nhwc, kh, kw, stride, pad):
    b, h, w, c = x_nhwc.shape
    xp = jnp.pad(x_nhwc, ((0, 0), (pad, pad), (pad, pad), (0, 0)))
    ho = (h + 2 * pad - kh) // stride + 1
    wo = (w + 2 * pad - kw) // stride + 1
    cols = []
    for i in range(kh):
        for j in range(kw):
            cols.append(xp[:, i:i + stride * ho:stride, j:j + stride * wo:stride, :])
    patches = jnp.stack(cols, axis=3)                  # (b, ho, wo, kh*kw, c)
    return patches.reshape(b, ho * wo, kh * kw * c), ho, wo


def _gather_matrix(h, w, o_pad=None):
    """0/1 matrix S (16*O, H*W): row k*O+o selects the input pixel read by conv
    tap k=(ki*4+kj) at output position o=(oy*WO+ox), for kernel 4, stride 2,
    pad 1; out-of-range (padding) taps are all-zero rows."""
    ho, wo = h // 2, w // 2
    o = ho * wo
    op = o if o_pad is None else o_pad                 # pad rows-per-tap for sublane alignment
    s = np.zeros((16 * op, h * w), np.float32)
    for ki in range(4):
        for kj in range(4):
            k = ki * 4 + kj
            for oy in range(ho):
                iy = 2 * oy + ki - 1
                if not (0 <= iy < h):
                    continue
                for ox in range(wo):
                    ix = 2 * ox + kj - 1
                    if 0 <= ix < w:
                        s[k * op + oy * wo + ox, iy * w + ix] = 1.0
    return jnp.asarray(s, dtype=jnp.bfloat16)          # 0/1 is exact in bf16


def _kaiming_normal(key, shape, fan_in):
    return (jnp.sqrt(2.0 / fan_in) * jax.random.normal(key, shape)).astype(jnp.float32)


def init_params(seed=0):
    keys = jax.random.split(jax.random.PRNGKey(seed), 6)
    conv_cfg = [(3, 32), (32, 64), (64, 128), (128, 256)]   # Conv2d(.,.,4,2,1,bias=False)
    conv_ws = []
    for k, (cin, cout) in zip(keys[:4], conv_cfg):
        w = _kaiming_normal(k, (4, 4, cin, cout), fan_in=cin * 16)
        conv_ws.append(w.reshape(16 * cin, cout))

    # conv1 weight zero-padded K=48 -> 64 (matches the padded patch matrix).
    w1c = jnp.pad(conv_ws[0], ((0, K1_PAD - 48), (0, 0))).astype(jnp.bfloat16)

    # fc1 generated in PyTorch NCHW-flatten row order (c*4 + o), then permuted
    # once at init to the kernel's (o*256 + c) row order -> no runtime transpose.
    w1_pt = _kaiming_normal(keys[4], (256 * 2 * 2, 512), fan_in=256 * 2 * 2)
    wf1 = (w1_pt.reshape(256, 4, 512).transpose(1, 0, 2)
           .reshape(1024, 512).astype(jnp.bfloat16))
    b1 = jnp.zeros((1, 512), jnp.float32)

    out_dim = 2 * Z_PRIVATE + Z_SHARED                       # 110
    w2 = _kaiming_normal(keys[5], (512, out_dim), fan_in=512)
    wf2 = jnp.pad(w2, ((0, 0), (0, N_PAD - out_dim))).astype(jnp.bfloat16)
    b2 = jnp.zeros((1, N_PAD), jnp.float32)

    return dict(
        w1c=w1c,
        w2c=conv_ws[1].astype(jnp.bfloat16),   # (512, 64)
        w3c=conv_ws[2].astype(jnp.bfloat16),   # (1024, 128)
        w4c=conv_ws[3].astype(jnp.bfloat16),   # (2048, 256)
        s2=_gather_matrix(16, 16),             # (1024, 256)
        s3=_gather_matrix(8, 8),               # (256, 64)
        s4=_gather_matrix(4, 4, o_pad=8),      # (128, 16), rows-per-tap padded 4->8
        wf1=wf1, b1=b1, wf2=wf2, b2=b2,
    )


# ----------------------------------------------------------------------------
# Forward
# ----------------------------------------------------------------------------
def encoder_a_forward(x_nchw, params):
    x = jnp.transpose(x_nchw, (0, 2, 3, 1))                  # NCHW -> NHWC
    b = x.shape[0]
    patches, ho, wo = _im2col(x, 4, 4, stride=2, pad=1)      # (B, 256, 48), tiny
    patches = jnp.pad(patches, ((0, 0), (0, 0), (0, K1_PAD - patches.shape[-1])))
    patches = patches.astype(jnp.bfloat16)                   # (B, 256, 64)

    stats_pad, std_pad = _fused_forward(patches, params, b)  # (B, 1, 128) each

    stats = stats_pad[:, 0, :2 * Z_PRIVATE + Z_SHARED][None]         # unsqueeze(0) -> (1, B, 110)
    mu_private = stats[:, :, :Z_PRIVATE]
    std_private = std_pad[:, 0, Z_PRIVATE:2 * Z_PRIVATE][None]       # sqrt(exp(logvar)+EPS)
    shared_logit = stats[:, :, 2 * Z_PRIVATE:]
    # TODO(synk): probtorch.Trace q.normal / q.concrete (reparameterized sampling +
    # trace bookkeeping) has no Pallas equivalent; distribution parameters are
    # returned instead (loc, scale, logits, temperature).
    return mu_private, std_private, shared_logit, jnp.float32(TEMP)


if __name__ == "__main__":
    params = init_params(seed=0)
    # SVHN-sized input: the 4x stride-2 conv stack + fc(256*2*2) requires 32x32.
    x = jax.random.normal(jax.random.PRNGKey(0), (2, 3, 32, 32), dtype=jnp.float32)

    forward = jax.jit(encoder_a_forward)
    mu, std, logits, temp = forward(x, params)
    jax.block_until_ready((mu, std, logits))

    assert mu.shape == (1, 2, Z_PRIVATE)
    assert std.shape == (1, 2, Z_PRIVATE)
    assert logits.shape == (1, 2, Z_SHARED)
    assert bool(jnp.all(jnp.isfinite(mu)))
    assert bool(jnp.all(jnp.isfinite(logits)))
    assert bool(jnp.all(std > 0.0))
    print("KERNEL_OK")
</pallas_src>

<mosaic_0001>
module attributes {stable_mosaic.version = 11 : i64} {
  func.func @_encoder_fused_kernel(%arg0: i32, %arg1: memref<1x256x64xbf16, #tpu.memory_space<vmem>>, %arg2: memref<64x32xbf16, #tpu.memory_space<vmem>>, %arg3: memref<1024x256xbf16, #tpu.memory_space<vmem>>, %arg4: memref<512x64xbf16, #tpu.memory_space<vmem>>, %arg5: memref<256x64xbf16, #tpu.memory_space<vmem>>, %arg6: memref<1024x128xbf16, #tpu.memory_space<vmem>>, %arg7: memref<128x16xbf16, #tpu.memory_space<vmem>>, %arg8: memref<2048x256xbf16, #tpu.memory_space<vmem>>, %arg9: memref<1024x512xbf16, #tpu.memory_space<vmem>>, %arg10: memref<1x512xf32, #tpu.memory_space<vmem>>, %arg11: memref<512x128xbf16, #tpu.memory_space<vmem>>, %arg12: memref<1x128xf32, #tpu.memory_space<vmem>>, %arg13: memref<1x1x128xf32, #tpu.memory_space<vmem>>, %arg14: memref<1x1x128xf32, #tpu.memory_space<vmem>>) attributes {dimension_semantics = [#tpu.dimension_semantics<parallel>], iteration_bounds = array<i64: 2>, scalar_prefetch = 0 : i64, scratch_operands = 0 : i64, tpu.core_type = #tpu.core_type<tc>, window_params = [{transform_indices = @transform_0, window_bounds = array<i64: 1, 256, 64>}, {pipeline_mode = #tpu.pipeline_mode<synchronous>, transform_indices = @transform_1, window_bounds = array<i64: 64, 32>}, {pipeline_mode = #tpu.pipeline_mode<synchronous>, transform_indices = @transform_2, window_bounds = array<i64: 1024, 256>}, {pipeline_mode = #tpu.pipeline_mode<synchronous>, transform_indices = @transform_3, window_bounds = array<i64: 512, 64>}, {pipeline_mode = #tpu.pipeline_mode<synchronous>, transform_indices = @transform_4, window_bounds = array<i64: 256, 64>}, {pipeline_mode = #tpu.pipeline_mode<synchronous>, transform_indices = @transform_5, window_bounds = array<i64: 1024, 128>}, {pipeline_mode = #tpu.pipeline_mode<synchronous>, transform_indices = @transform_6, window_bounds = array<i64: 128, 16>}, {pipeline_mode = #tpu.pipeline_mode<synchronous>, transform_indices = @transform_7, window_bounds = array<i64: 2048, 256>}, {pipeline_mode = #tpu.pipeline_mode<synchronous>, transform_indices = @transform_8, window_bounds = array<i64: 1024, 512>}, {pipeline_mode = #tpu.pipeline_mode<synchronous>, transform_indices = @transform_9, window_bounds = array<i64: 1, 512>}, {pipeline_mode = #tpu.pipeline_mode<synchronous>, transform_indices = @transform_10, window_bounds = array<i64: 512, 128>}, {pipeline_mode = #tpu.pipeline_mode<synchronous>, transform_indices = @transform_11, window_bounds = array<i64: 1, 128>}, {transform_indices = @transform_12, window_bounds = array<i64: 1, 1, 128>}, {transform_indices = @transform_13, window_bounds = array<i64: 1, 1, 128>}]} {
    %c0 = arith.constant 0 : index
    %c0_0 = arith.constant 0 : index
    %c0_1 = arith.constant 0 : index
    %0 = vector.load %arg1[%c0, %c0_0, %c0_1] : memref<1x256x64xbf16, #tpu.memory_space<vmem>>, vector<1x256x64xbf16>
    %1 = vector.shape_cast %0 : vector<1x256x64xbf16> to vector<256x64xbf16>
    %c0_2 = arith.constant 0 : index
    %c0_3 = arith.constant 0 : index
    %2 = vector.load %arg2[%c0_2, %c0_3] : memref<64x32xbf16, #tpu.memory_space<vmem>>, vector<64x32xbf16>
    %cst = arith.constant dense<0.000000e+00> : vector<256x32xf32>
    %3 = tpu.matmul %1, %2, %cst {dimension_numbers = #tpu.dot_dimension_numbers<[1], [0], [0], [1], [0, 0, 1, 1], [], []>} : vector<256x64xbf16>, vector<64x32xbf16>, vector<256x32xf32> -> vector<256x32xf32>
    %cst_4 = arith.constant 0.000000e+00 : f32
    %4 = vector.broadcast %cst_4 : f32 to vector<256x32xf32>
    %5 = arith.maximumf %3, %4 : vector<256x32xf32>
    %6 = arith.truncf %5 : vector<256x32xf32> to vector<256x32xbf16>
    %c0_5 = arith.constant 0 : index
    %c0_6 = arith.constant 0 : index
    %7 = vector.load %arg3[%c0_5, %c0_6] : memref<1024x256xbf16, #tpu.memory_space<vmem>>, vector<1024x256xbf16>
    %cst_7 = arith.constant dense<0.000000e+00> : vector<1024x32xf32>
    %8 = tpu.matmul %7, %6, %cst_7 {dimension_numbers = #tpu.dot_dimension_numbers<[1], [0], [0], [1], [0, 0, 1, 1], [], []>} : vector<1024x256xbf16>, vector<256x32xbf16>, vector<1024x32xf32> -> vector<1024x32xf32>
    %9 = arith.truncf %8 : vector<1024x32xf32> to vector<1024x32xbf16>
    %10 = vector.extract_strided_slice %9 {offsets = [0, 0], sizes = [64, 32], strides = [1, 1]} : vector<1024x32xbf16> to vector<64x32xbf16>
    %11 = vector.extract_strided_slice %9 {offsets = [64, 0], sizes = [64, 32], strides = [1, 1]} : vector<1024x32xbf16> to vector<64x32xbf16>
    %12 = vector.extract_strided_slice %9 {offsets = [128, 0], sizes = [64, 32], strides = [1, 1]} : vector<1024x32xbf16> to vector<64x32xbf16>
    %13 = vector.extract_strided_slice %9 {offsets = [192, 0], sizes = [64, 32], strides = [1, 1]} : vector<1024x32xbf16> to vector<64x32xbf16>
    %14 = vector.extract_strided_slice %9 {offsets = [256, 0], sizes = [64, 32], strides = [1, 1]} : vector<1024x32xbf16> to vector<64x32xbf16>
    %15 = vector.extract_strided_slice %9 {offsets = [320, 0], sizes = [64, 32], strides = [1, 1]} : vector<1024x32xbf16> to vector<64x32xbf16>
    %16 = vector.extract_strided_slice %9 {offsets = [384, 0], sizes = [64, 32], strides = [1, 1]} : vector<1024x32xbf16> to vector<64x32xbf16>
    %17 = vector.extract_strided_slice %9 {offsets = [448, 0], sizes = [64, 32], strides = [1, 1]} : vector<1024x32xbf16> to vector<64x32xbf16>
    %18 = vector.extract_strided_slice %9 {offsets = [512, 0], sizes = [64, 32], strides = [1, 1]} : vector<1024x32xbf16> to vector<64x32xbf16>
    %19 = vector.extract_strided_slice %9 {offsets = [576, 0], sizes = [64, 32], strides = [1, 1]} : vector<1024x32xbf16> to vector<64x32xbf16>
    %20 = vector.extract_strided_slice %9 {offsets = [640, 0], sizes = [64, 32], strides = [1, 1]} : vector<1024x32xbf16> to vector<64x32xbf16>
    %21 = vector.extract_strided_slice %9 {offsets = [704, 0], sizes = [64, 32], strides = [1, 1]} : vector<1024x32xbf16> to vector<64x32xbf16>
    %22 = vector.extract_strided_slice %9 {offsets = [768, 0], sizes = [64, 32], strides = [1, 1]} : vector<1024x32xbf16> to vector<64x32xbf16>
    %23 = vector.extract_strided_slice %9 {offsets = [832, 0], sizes = [64, 32], strides = [1, 1]} : vector<1024x32xbf16> to vector<64x32xbf16>
    %24 = vector.extract_strided_slice %9 {offsets = [896, 0], sizes = [64, 32], strides = [1, 1]} : vector<1024x32xbf16> to vector<64x32xbf16>
    %25 = vector.extract_strided_slice %9 {offsets = [960, 0], sizes = [64, 32], strides = [1, 1]} : vector<1024x32xbf16> to vector<64x32xbf16>
    %26 = tpu.concatenate %10, %11, %12, %13, %14, %15, %16, %17, %18, %19, %20, %21, %22, %23, %24, %25 in 1 : vector<64x32xbf16>, vector<64x32xbf16>, vector<64x32xbf16>, vector<64x32xbf16>, vector<64x32xbf16>, vector<64x32xbf16>, vector<64x32xbf16>, vector<64x32xbf16>, vector<64x32xbf16>, vector<64x32xbf16>, vector<64x32xbf16>, vector<64x32xbf16>, vector<64x32xbf16>, vector<64x32xbf16>, vector<64x32xbf16>, vector<64x32xbf16> -> vector<64x512xbf16>
    %c0_8 = arith.constant 0 : index
    %c0_9 = arith.constant 0 : index
    %27 = vector.load %arg4[%c0_8, %c0_9] : memref<512x64xbf16, #tpu.memory_space<vmem>>, vector<512x64xbf16>
    %cst_10 = arith.constant dense<0.000000e+00> : vector<64x64xf32>
    %28 = tpu.matmul %26, %27, %cst_10 {dimension_numbers = #tpu.dot_dimension_numbers<[1], [0], [0], [1], [0, 0, 1, 1], [], []>} : vector<64x512xbf16>, vector<512x64xbf16>, vector<64x64xf32> -> vector<64x64xf32>
    %cst_11 = arith.constant 0.000000e+00 : f32
    %29 = vector.broadcast %cst_11 : f32 to vector<64x64xf32>
    %30 = arith.maximumf %28, %29 : vector<64x64xf32>
    %31 = arith.truncf %30 : vector<64x64xf32> to vector<64x64xbf16>
    %c0_12 = arith.constant 0 : index
    %c0_13 = arith.constant 0 : index
    %32 = vector.load %arg5[%c0_12, %c0_13] : memref<256x64xbf16, #tpu.memory_space<vmem>>, vector<256x64xbf16>
    %cst_14 = arith.constant dense<0.000000e+00> : vector<256x64xf32>
    %33 = tpu.matmul %32, %31, %cst_14 {dimension_numbers = #tpu.dot_dimension_numbers<[1], [0], [0], [1], [0, 0, 1, 1], [], []>} : vector<256x64xbf16>, vector<64x64xbf16>, vector<256x64xf32> -> vector<256x64xf32>
    %34 = arith.truncf %33 : vector<256x64xf32> to vector<256x64xbf16>
    %35 = vector.extract_strided_slice %34 {offsets = [0, 0], sizes = [16, 64], strides = [1, 1]} : vector<256x64xbf16> to vector<16x64xbf16>
    %36 = vector.extract_strided_slice %34 {offsets = [16, 0], sizes = [16, 64], strides = [1, 1]} : vector<256x64xbf16> to vector<16x64xbf16>
    %37 = vector.extract_strided_slice %34 {offsets = [32, 0], sizes = [16, 64], strides = [1, 1]} : vector<256x64xbf16> to vector<16x64xbf16>
    %38 = vector.extract_strided_slice %34 {offsets = [48, 0], sizes = [16, 64], strides = [1, 1]} : vector<256x64xbf16> to vector<16x64xbf16>
    %39 = vector.extract_strided_slice %34 {offsets = [64, 0], sizes = [16, 64], strides = [1, 1]} : vector<256x64xbf16> to vector<16x64xbf16>
    %40 = vector.extract_strided_slice %34 {offsets = [80, 0], sizes = [16, 64], strides = [1, 1]} : vector<256x64xbf16> to vector<16x64xbf16>
    %41 = vector.extract_strided_slice %34 {offsets = [96, 0], sizes = [16, 64], strides = [1, 1]} : vector<256x64xbf16> to vector<16x64xbf16>
    %42 = vector.extract_strided_slice %34 {offsets = [112, 0], sizes = [16, 64], strides = [1, 1]} : vector<256x64xbf16> to vector<16x64xbf16>
    %43 = vector.extract_strided_slice %34 {offsets = [128, 0], sizes = [16, 64], strides = [1, 1]} : vector<256x64xbf16> to vector<16x64xbf16>
    %44 = vector.extract_strided_slice %34 {offsets = [144, 0], sizes = [16, 64], strides = [1, 1]} : vector<256x64xbf16> to vector<16x64xbf16>
    %45 = vector.extract_strided_slice %34 {offsets = [160, 0], sizes = [16, 64], strides = [1, 1]} : vector<256x64xbf16> to vector<16x64xbf16>
    %46 = vector.extract_strided_slice %34 {offsets = [176, 0], sizes = [16, 64], strides = [1, 1]} : vector<256x64xbf16> to vector<16x64xbf16>
    %47 = vector.extract_strided_slice %34 {offsets = [192, 0], sizes = [16, 64], strides = [1, 1]} : vector<256x64xbf16> to vector<16x64xbf16>
    %48 = vector.extract_strided_slice %34 {offsets = [208, 0], sizes = [16, 64], strides = [1, 1]} : vector<256x64xbf16> to vector<16x64xbf16>
    %49 = vector.extract_strided_slice %34 {offsets = [224, 0], sizes = [16, 64], strides = [1, 1]} : vector<256x64xbf16> to vector<16x64xbf16>
    %50 = vector.extract_strided_slice %34 {offsets = [240, 0], sizes = [16, 64], strides = [1, 1]} : vector<256x64xbf16> to vector<16x64xbf16>
    %51 = tpu.concatenate %35, %36, %37, %38, %39, %40, %41, %42, %43, %44, %45, %46, %47, %48, %49, %50 in 1 : vector<16x64xbf16>, vector<16x64xbf16>, vector<16x64xbf16>, vector<16x64xbf16>, vector<16x64xbf16>, vector<16x64xbf16>, vector<16x64xbf16>, vector<16x64xbf16>, vector<16x64xbf16>, vector<16x64xbf16>, vector<16x64xbf16>, vector<16x64xbf16>, vector<16x64xbf16>, vector<16x64xbf16>, vector<16x64xbf16>, vector<16x64xbf16> -> vector<16x1024xbf16>
    %c0_15 = arith.constant 0 : index
    %c0_16 = arith.constant 0 : index
    %52 = vector.load %arg6[%c0_15, %c0_16] : memref<1024x128xbf16, #tpu.memory_space<vmem>>, vector<1024x128xbf16>
    %cst_17 = arith.constant dense<0.000000e+00> : vector<16x128xf32>
    %53 = tpu.matmul %51, %52, %cst_17 {dimension_numbers = #tpu.dot_dimension_numbers<[1], [0], [0], [1], [0, 0, 1, 1], [], []>} : vector<16x1024xbf16>, vector<1024x128xbf16>, vector<16x128xf32> -> vector<16x128xf32>
    %cst_18 = arith.constant 0.000000e+00 : f32
    %54 = vector.broadcast %cst_18 : f32 to vector<16x128xf32>
    %55 = arith.maximumf %53, %54 : vector<16x128xf32>
    %56 = arith.truncf %55 : vector<16x128xf32> to vector<16x128xbf16>
    %c0_19 = arith.constant 0 : index
    %c0_20 = arith.constant 0 : index
    %57 = vector.load %arg7[%c0_19, %c0_20] : memref<128x16xbf16, #tpu.memory_space<vmem>>, vector<128x16xbf16>
    %cst_21 = arith.constant dense<0.000000e+00> : vector<128x128xf32>
    %58 = tpu.matmul %57, %56, %cst_21 {dimension_numbers = #tpu.dot_dimension_numbers<[1], [0], [0], [1], [0, 0, 1, 1], [], []>} : vector<128x16xbf16>, vector<16x128xbf16>, vector<128x128xf32> -> vector<128x128xf32>
    %59 = arith.truncf %58 : vector<128x128xf32> to vector<128x128xbf16>
    %60 = vector.extract_strided_slice %59 {offsets = [0, 0], sizes = [8, 128], strides = [1, 1]} : vector<128x128xbf16> to vector<8x128xbf16>
    %61 = vector.extract_strided_slice %59 {offsets = [8, 0], sizes = [8, 128], strides = [1, 1]} : vector<128x128xbf16> to vector<8x128xbf16>
    %62 = vector.extract_strided_slice %59 {offsets = [16, 0], sizes = [8, 128], strides = [1, 1]} : vector<128x128xbf16> to vector<8x128xbf16>
    %63 = vector.extract_strided_slice %59 {offsets = [24, 0], sizes = [8, 128], strides = [1, 1]} : vector<128x128xbf16> to vector<8x128xbf16>
    %64 = vector.extract_strided_slice %59 {offsets = [32, 0], sizes = [8, 128], strides = [1, 1]} : vector<128x128xbf16> to vector<8x128xbf16>
    %65 = vector.extract_strided_slice %59 {offsets = [40, 0], sizes = [8, 128], strides = [1, 1]} : vector<128x128xbf16> to vector<8x128xbf16>
    %66 = vector.extract_strided_slice %59 {offsets = [48, 0], sizes = [8, 128], strides = [1, 1]} : vector<128x128xbf16> to vector<8x128xbf16>
    %67 = vector.extract_strided_slice %59 {offsets = [56, 0], sizes = [8, 128], strides = [1, 1]} : vector<128x128xbf16> to vector<8x128xbf16>
    %68 = vector.extract_strided_slice %59 {offsets = [64, 0], sizes = [8, 128], strides = [1, 1]} : vector<128x128xbf16> to vector<8x128xbf16>
    %69 = vector.extract_strided_slice %59 {offsets = [72, 0], sizes = [8, 128], strides = [1, 1]} : vector<128x128xbf16> to vector<8x128xbf16>
    %70 = vector.extract_strided_slice %59 {offsets = [80, 0], sizes = [8, 128], strides = [1, 1]} : vector<128x128xbf16> to vector<8x128xbf16>
    %71 = vector.extract_strided_slice %59 {offsets = [88, 0], sizes = [8, 128], strides = [1, 1]} : vector<128x128xbf16> to vector<8x128xbf16>
    %72 = vector.extract_strided_slice %59 {offsets = [96, 0], sizes = [8, 128], strides = [1, 1]} : vector<128x128xbf16> to vector<8x128xbf16>
    %73 = vector.extract_strided_slice %59 {offsets = [104, 0], sizes = [8, 128], strides = [1, 1]} : vector<128x128xbf16> to vector<8x128xbf16>
    %74 = vector.extract_strided_slice %59 {offsets = [112, 0], sizes = [8, 128], strides = [1, 1]} : vector<128x128xbf16> to vector<8x128xbf16>
    %75 = vector.extract_strided_slice %59 {offsets = [120, 0], sizes = [8, 128], strides = [1, 1]} : vector<128x128xbf16> to vector<8x128xbf16>
    %76 = tpu.concatenate %60, %61, %62, %63, %64, %65, %66, %67, %68, %69, %70, %71, %72, %73, %74, %75 in 1 : vector<8x128xbf16>, vector<8x128xbf16>, vector<8x128xbf16>, vector<8x128xbf16>, vector<8x128xbf16>, vector<8x128xbf16>, vector<8x128xbf16>, vector<8x128xbf16>, vector<8x128xbf16>, vector<8x128xbf16>, vector<8x128xbf16>, vector<8x128xbf16>, vector<8x128xbf16>, vector<8x128xbf16>, vector<8x128xbf16>, vector<8x128xbf16> -> vector<8x2048xbf16>
    %c0_22 = arith.constant 0 : index
    %c0_23 = arith.constant 0 : index
    %77 = vector.load %arg8[%c0_22, %c0_23] : memref<2048x256xbf16, #tpu.memory_space<vmem>>, vector<2048x256xbf16>
    %cst_24 = arith.constant dense<0.000000e+00> : vector<8x256xf32>
    %78 = tpu.matmul %76, %77, %cst_24 {dimension_numbers = #tpu.dot_dimension_numbers<[1], [0], [0], [1], [0, 0, 1, 1], [], []>} : vector<8x2048xbf16>, vector<2048x256xbf16>, vector<8x256xf32> -> vector<8x256xf32>
    %cst_25 = arith.constant 0.000000e+00 : f32
    %79 = vector.broadcast %cst_25 : f32 to vector<8x256xf32>
    %80 = arith.maximumf %78, %79 : vector<8x256xf32>
    %81 = arith.truncf %80 : vector<8x256xf32> to vector<8x256xbf16>
    %82 = vector.extract_strided_slice %81 {offsets = [0, 0], sizes = [1, 256], strides = [1, 1]} : vector<8x256xbf16> to vector<1x256xbf16>
    %83 = vector.extract_strided_slice %81 {offsets = [1, 0], sizes = [1, 256], strides = [1, 1]} : vector<8x256xbf16> to vector<1x256xbf16>
    %84 = vector.extract_strided_slice %81 {offsets = [2, 0], sizes = [1, 256], strides = [1, 1]} : vector<8x256xbf16> to vector<1x256xbf16>
    %85 = vector.extract_strided_slice %81 {offsets = [3, 0], sizes = [1, 256], strides = [1, 1]} : vector<8x256xbf16> to vector<1x256xbf16>
    %86 = tpu.concatenate %82, %83, %84, %85 in 1 : vector<1x256xbf16>, vector<1x256xbf16>, vector<1x256xbf16>, vector<1x256xbf16> -> vector<1x1024xbf16>
    %c0_26 = arith.constant 0 : index
    %c0_27 = arith.constant 0 : index
    %87 = vector.load %arg9[%c0_26, %c0_27] : memref<1024x512xbf16, #tpu.memory_space<vmem>>, vector<1024x512xbf16>
    %cst_28 = arith.constant dense<0.000000e+00> : vector<1x512xf32>
    %88 = tpu.matmul %86, %87, %cst_28 {dimension_numbers = #tpu.dot_dimension_numbers<[1], [0], [0], [1], [0, 0, 1, 1], [], []>} : vector<1x1024xbf16>, vector<1024x512xbf16>, vector<1x512xf32> -> vector<1x512xf32>
    %c0_29 = arith.constant 0 : index
    %c0_30 = arith.constant 0 : index
    %89 = vector.load %arg10[%c0_29, %c0_30] : memref<1x512xf32, #tpu.memory_space<vmem>>, vector<1x512xf32>
    %90 = arith.addf %88, %89 : vector<1x512xf32>
    %cst_31 = arith.constant 0.000000e+00 : f32
    %91 = vector.broadcast %cst_31 : f32 to vector<1x512xf32>
    %92 = arith.maximumf %90, %91 : vector<1x512xf32>
    %93 = arith.truncf %92 : vector<1x512xf32> to vector<1x512xbf16>
    %c0_32 = arith.constant 0 : index
    %c0_33 = arith.constant 0 : index
    %94 = vector.load %arg11[%c0_32, %c0_33] : memref<512x128xbf16, #tpu.memory_space<vmem>>, vector<512x128xbf16>
    %cst_34 = arith.constant dense<0.000000e+00> : vector<1x128xf32>
    %95 = tpu.matmul %93, %94, %cst_34 {dimension_numbers = #tpu.dot_dimension_numbers<[1], [0], [0], [1], [0, 0, 1, 1], [], []>} : vector<1x512xbf16>, vector<512x128xbf16>, vector<1x128xf32> -> vector<1x128xf32>
    %c0_35 = arith.constant 0 : index
    %c0_36 = arith.constant 0 : index
    %96 = vector.load %arg12[%c0_35, %c0_36] : memref<1x128xf32, #tpu.memory_space<vmem>>, vector<1x128xf32>
    %97 = arith.addf %95, %96 : vector<1x128xf32>
    %c0_37 = arith.constant 0 : index
    %c0_38 = arith.constant 0 : index
    %c0_39 = arith.constant 0 : index
    %98 = vector.load %arg13[%c0_37, %c0_38, %c0_39] : memref<1x1x128xf32, #tpu.memory_space<vmem>>, vector<1x1x128xf32>
    %99 = vector.shape_cast %98 : vector<1x1x128xf32> to vector<1x128xf32>
    %100 = vector.shape_cast %97 : vector<1x128xf32> to vector<1x1x128xf32>
    tpu.vector_store %arg13[%c0_37, %c0_38, %c0_39], %100 {strides = array<i32>} : memref<1x1x128xf32, #tpu.memory_space<vmem>>, vector<1x1x128xf32>,
    %101 = tpu.iota {dimensions = array<i32: 1>} : vector<1x128xi32>
    %c50_i32 = arith.constant 50 : i32
    %102 = vector.broadcast %c50_i32 : i32 to vector<1x128xi32>
    %103 = arith.cmpi sge, %101, %102 : vector<1x128xi32>
    %c100_i32 = arith.constant 100 : i32
    %104 = vector.broadcast %c100_i32 : i32 to vector<1x128xi32>
    %105 = arith.cmpi slt, %101, %104 : vector<1x128xi32>
    %106 = arith.andi %103, %105 : vector<1x128xi1>
    %cst_40 = arith.constant 0.000000e+00 : f32
    %107 = vector.broadcast %cst_40 : f32 to vector<1x128xf32>
    %108 = arith.select %106, %97, %107 : vector<1x128xi1>, vector<1x128xf32>
    %109 = math.exp %108 : vector<1x128xf32>
    %cst_41 = arith.constant 9.99999971E-10 : f32
    %110 = vector.broadcast %cst_41 : f32 to vector<1x128xf32>
    %111 = arith.addf %109, %110 : vector<1x128xf32>
    %112 = math.sqrt %111 : vector<1x128xf32>
    %c0_42 = arith.constant 0 : index
    %c0_43 = arith.constant 0 : index
    %c0_44 = arith.constant 0 : index
    %113 = vector.load %arg14[%c0_42, %c0_43, %c0_44] : memref<1x1x128xf32, #tpu.memory_space<vmem>>, vector<1x1x128xf32>
    %114 = vector.shape_cast %113 : vector<1x1x128xf32> to vector<1x128xf32>
    %115 = vector.shape_cast %112 : vector<1x128xf32> to vector<1x1x128xf32>
    tpu.vector_store %arg14[%c0_42, %c0_43, %c0_44], %115 {strides = array<i32>} : memref<1x1x128xf32, #tpu.memory_space<vmem>>, vector<1x1x128xf32>,
    return
  }
  func.func @transform_0(%arg0: i32) -> (i32, i32, i32) {
    %c0_i32 = arith.constant 0 : i32
    %c0_i32_0 = arith.constant 0 : i32
    %c0_i32_1 = arith.constant 0 : i32
    return %arg0, %c0_i32, %c0_i32_0 : i32, i32, i32
  }
  func.func @transform_1(%arg0: i32) -> (i32, i32) {
    %c0_i32 = arith.constant 0 : i32
    %c0_i32_0 = arith.constant 0 : i32
    %c0_i32_1 = arith.constant 0 : i32
    return %c0_i32, %c0_i32_0 : i32, i32
  }
  func.func @transform_2(%arg0: i32) -> (i32, i32) {
    %c0_i32 = arith.constant 0 : i32
    %c0_i32_0 = arith.constant 0 : i32
    %c0_i32_1 = arith.constant 0 : i32
    return %c0_i32, %c0_i32_0 : i32, i32
  }
  func.func @transform_3(%arg0: i32) -> (i32, i32) {
    %c0_i32 = arith.constant 0 : i32
    %c0_i32_0 = arith.constant 0 : i32
    %c0_i32_1 = arith.constant 0 : i32
    return %c0_i32, %c0_i32_0 : i32, i32
  }
  func.func @transform_4(%arg0: i32) -> (i32, i32) {
    %c0_i32 = arith.constant 0 : i32
    %c0_i32_0 = arith.constant 0 : i32
    %c0_i32_1 = arith.constant 0 : i32
    return %c0_i32, %c0_i32_0 : i32, i32
  }
  func.func @transform_5(%arg0: i32) -> (i32, i32) {
    %c0_i32 = arith.constant 0 : i32
    %c0_i32_0 = arith.constant 0 : i32
    %c0_i32_1 = arith.constant 0 : i32
    return %c0_i32, %c0_i32_0 : i32, i32
  }
  func.func @transform_6(%arg0: i32) -> (i32, i32) {
    %c0_i32 = arith.constant 0 : i32
    %c0_i32_0 = arith.constant 0 : i32
    %c0_i32_1 = arith.constant 0 : i32
    return %c0_i32, %c0_i32_0 : i32, i32
  }
  func.func @transform_7(%arg0: i32) -> (i32, i32) {
    %c0_i32 = arith.constant 0 : i32
    %c0_i32_0 = arith.constant 0 : i32
    %c0_i32_1 = arith.constant 0 : i32
    return %c0_i32, %c0_i32_0 : i32, i32
  }
  func.func @transform_8(%arg0: i32) -> (i32, i32) {
    %c0_i32 = arith.constant 0 : i32
    %c0_i32_0 = arith.constant 0 : i32
    %c0_i32_1 = arith.constant 0 : i32
    return %c0_i32, %c0_i32_0 : i32, i32
  }
  func.func @transform_9(%arg0: i32) -> (i32, i32) {
    %c0_i32 = arith.constant 0 : i32
    %c0_i32_0 = arith.constant 0 : i32
    %c0_i32_1 = arith.constant 0 : i32
    return %c0_i32, %c0_i32_0 : i32, i32
  }
  func.func @transform_10(%arg0: i32) -> (i32, i32) {
    %c0_i32 = arith.constant 0 : i32
    %c0_i32_0 = arith.constant 0 : i32
    %c0_i32_1 = arith.constant 0 : i32
    return %c0_i32, %c0_i32_0 : i32, i32
  }
  func.func @transform_11(%arg0: i32) -> (i32, i32) {
    %c0_i32 = arith.constant 0 : i32
    %c0_i32_0 = arith.constant 0 : i32
    %c0_i32_1 = arith.constant 0 : i32
    return %c0_i32, %c0_i32_0 : i32, i32
  }
  func.func @transform_12(%arg0: i32) -> (i32, i32, i32) {
    %c0_i32 = arith.constant 0 : i32
    %c0_i32_0 = arith.constant 0 : i32
    %c0_i32_1 = arith.constant 0 : i32
    return %arg0, %c0_i32, %c0_i32_0 : i32, i32, i32
  }
  func.func @transform_13(%arg0: i32) -> (i32, i32, i32) {
    %c0_i32 = arith.constant 0 : i32
    %c0_i32_0 = arith.constant 0 : i32
    %c0_i32_1 = arith.constant 0 : i32
    return %arg0, %c0_i32, %c0_i32_0 : i32, i32, i32
  }
}

</mosaic_0001>

<llo_original>
// kernel: encoder_a_forward.1
$region0: #{encoder_a_forward.1}
  #allocation0 [shape = 'u32[]', space=smem, size = 0x4, offset = 0x4, fixed_abs, tag = 'smem constant byte address 0x4 - core index']
  #allocation1 [shape = 'u32[72,128]{1,0:T(1,128)}', space=vmem, size = 0x9000, scoped, tag = 'internal scratch']
  %s0 = inlined_call_operand.vmem [shape: bf16[2,256,64], index: 0, kind: input, shape index: {}]
  %s1 = inlined_call_operand.vmem [shape: bf16[64,32], index: 1, kind: input, shape index: {}]
  %s2 = inlined_call_operand.vmem [shape: bf16[1024,256], index: 2, kind: input, shape index: {}]
  %s3 = inlined_call_operand.vmem [shape: bf16[512,64], index: 3, kind: input, shape index: {}]
  %s4 = inlined_call_operand.vmem [shape: bf16[256,64], index: 4, kind: input, shape index: {}]
  %s5 = inlined_call_operand.vmem [shape: bf16[1024,128], index: 5, kind: input, shape index: {}]
  %s6 = inlined_call_operand.vmem [shape: bf16[128,16], index: 6, kind: input, shape index: {}]
  %s7 = inlined_call_operand.vmem [shape: bf16[2048,256], index: 7, kind: input, shape index: {}]
  %s8 = inlined_call_operand.vmem [shape: bf16[1024,512], index: 8, kind: input, shape index: {}]
  %s9 = inlined_call_operand.vmem [shape: f32[1,512], index: 9, kind: input, shape index: {}]
  %s10 = inlined_call_operand.vmem [shape: bf16[512,128], index: 10, kind: input, shape index: {}]
  %s11 = inlined_call_operand.vmem [shape: f32[1,128], index: 11, kind: input, shape index: {}]
  %s12 = inlined_call_operand.vmem [shape: f32[2,1,128], index: 12, kind: output, shape index: {0}]
  %s13 = inlined_call_operand.vmem [shape: f32[2,1,128], index: 13, kind: output, shape index: {1}]
  %14 = xla_tuple %s12, %s13
  %s15 = sld [smem:[#allocation0]]
  $region89: #{encoder_a_forward.1} parent=0
    _
  %s17 = ssub.s32 1, %s15
  %s18 = scalar_select 0, %s17, %s15
  loop: start=0, step=1, limit=4
  $region2: #{encoder_a_forward.1} parent=0 // loop_pre_header
    _
  $region3: #{encoder_a_forward.1} parent=0 // loop_header
    %s20 = sphi 0, %s24
    %p21 = scmp.ge.s32.totalorder %s20, 4
    %s30 = sphi 0, %s32
    %s33 = sphi 0, %s30
    %s34 = sphi 0, %s33
    %s50 = sphi 0, %s34
    %s54 = sphi 0, %s54
    %s56 = sphi 0, %s54
    %s57 = sphi 0, %s56
    %s71 = sphi 0, %s57
    %s75 = sphi 0, %s75
    %s77 = sphi 0, %s75
    %s78 = sphi 0, %s77
    %s92 = sphi 0, %s78
    %s96 = sphi 0, %s96
    %s98 = sphi 0, %s96
    %s99 = sphi 0, %s98
    %s113 = sphi 0, %s99
    %s117 = sphi 0, %s117
    %s119 = sphi 0, %s117
    %s120 = sphi 0, %s119
    %s134 = sphi 0, %s120
    %s138 = sphi 0, %s138
    %s140 = sphi 0, %s138
    %s141 = sphi 0, %s140
    %s155 = sphi 0, %s141
    %s159 = sphi 0, %s159
    %s161 = sphi 0, %s159
    %s162 = sphi 0, %s161
    %s176 = sphi 0, %s162
    %s180 = sphi 0, %s180
    %s182 = sphi 0, %s180
    %s183 = sphi 0, %s182
    %s197 = sphi 0, %s183
    %s201 = sphi 0, %s201
    %s203 = sphi 0, %s201
    %s204 = sphi 0, %s203
    %s218 = sphi 0, %s204
    %s222 = sphi 0, %s222
    %s224 = sphi 0, %s222
    %s225 = sphi 0, %s224
    %s239 = sphi 0, %s225
    %s243 = sphi 0, %s243
    %s245 = sphi 0, %s243
    %s246 = sphi 0, %s245
    %s260 = sphi 0, %s246
    %s264 = sphi 0, %s264
    %s266 = sphi 0, %s264
    %s267 = sphi 0, %s266
    %s281 = sphi 0, %s267
    %s287 = sphi 0, %s289
    %s290 = sphi 0, %s287
    %s291 = sphi 0, %s290
    %s307 = sphi 0, %s291
    %s313 = sphi 0, %s315
    %s316 = sphi 0, %s313
    %s317 = sphi 0, %s316
    %s333 = sphi 0, %s317
  $region4: #{encoder_a_forward.1} parent=0 // loop_header_branch
    %23 = sbr.rel (%p21) target = $region8
  $region5: #{encoder_a_forward.1} parent=0 // loop_body
    %s25 = ssub.s32 %s20, 1
    %s26 = ssub.s32 %s20, 2
    %s27 = sadd.s32 %s20, 1
    %s28 = ssub.s32 %s20, %s27
    %p29 = scmp.eq.s32.totalorder %s28, 0
    %s31 = sadd.s32 %s30, 1
    %s32 = scalar_select %p29, %s30, %s31
    %p35 = pneg %p29
    %p36 = scmp.eq.s32.totalorder %s20, 1
    %p37 = por %p35, %p36
    %p38 = scmp.ne.s32.totalorder %s30, %s33
    %p39 = scmp.eq.s32.totalorder %s20, 0
    %p40 = por %p38, %p39
    %p41 = scmp.ne.s32.totalorder %s30, %s33
    %p42 = scmp.eq.s32.totalorder %s25, 1
    %p43 = por %p41, %p42
    %p44 = scmp.ne.s32.totalorder %s33, %s34
    %p45 = scmp.eq.s32.totalorder %s25, 0
    %p46 = por %p44, %p45
    %p47 = scmp.ne.s32.totalorder %s33, %s34
    %p48 = scmp.eq.s32.totalorder %s26, 1
    %p49 = por %p47, %p48
    %p51 = scmp.ne.s32.totalorder %s34, %s50
    %p52 = scmp.eq.s32.totalorder %s26, 0
    %p53 = por %p51, %p52
    %s55 = sadd.s32 %s54, 1
    %p58 = scmp.eq.s32.totalorder %s20, 1
    %p59 = scmp.ne.s32.totalorder %s54, %s56
    %p60 = scmp.eq.s32.totalorder %s20, 0
    %p61 = por %p59, %p60
    %p62 = scmp.ne.s32.totalorder %s54, %s56
    %p63 = scmp.eq.s32.totalorder %s25, 1
    %p64 = por %p62, %p63
    %p65 = scmp.ne.s32.totalorder %s56, %s57
    %p66 = scmp.eq.s32.totalorder %s25, 0
    %p67 = por %p65, %p66
    %p68 = scmp.ne.s32.totalorder %s56, %s57
    %p69 = scmp.eq.s32.totalorder %s26, 1
    %p70 = por %p68, %p69
    %p72 = scmp.ne.s32.totalorder %s57, %s71
    %p73 = scmp.eq.s32.totalorder %s26, 0
    %p74 = por %p72, %p73
    %s76 = sadd.s32 %s75, 1
    %p79 = scmp.eq.s32.totalorder %s20, 1
    %p80 = scmp.ne.s32.totalorder %s75, %s77
    %p81 = scmp.eq.s32.totalorder %s20, 0
    %p82 = por %p80, %p81
    %p83 = scmp.ne.s32.totalorder %s75, %s77
    %p84 = scmp.eq.s32.totalorder %s25, 1
    %p85 = por %p83, %p84
    %p86 = scmp.ne.s32.totalorder %s77, %s78
    %p87 = scmp.eq.s32.totalorder %s25, 0
    %p88 = por %p86, %p87
    %p89 = scmp.ne.s32.totalorder %s77, %s78
    %p90 = scmp.eq.s32.totalorder %s26, 1
    %p91 = por %p89, %p90
    %p93 = scmp.ne.s32.totalorder %s78, %s92
    %p94 = scmp.eq.s32.totalorder %s26, 0
    %p95 = por %p93, %p94
    %s97 = sadd.s32 %s96, 1
    %p100 = scmp.eq.s32.totalorder %s20, 1
    %p101 = scmp.ne.s32.totalorder %s96, %s98
    %p102 = scmp.eq.s32.totalorder %s20, 0
    %p103 = por %p101, %p102
    %p104 = scmp.ne.s32.totalorder %s96, %s98
    %p105 = scmp.eq.s32.totalorder %s25, 1
    %p106 = por %p104, %p105
    %p107 = scmp.ne.s32.totalorder %s98, %s99
    %p108 = scmp.eq.s32.totalorder %s25, 0
    %p109 = por %p107, %p108
    %p110 = scmp.ne.s32.totalorder %s98, %s99
    %p111 = scmp.eq.s32.totalorder %s26, 1
    %p112 = por %p110, %p111
    %p114 = scmp.ne.s32.totalorder %s99, %s113
    %p115 = scmp.eq.s32.totalorder %s26, 0
    %p116 = por %p114, %p115
    %s118 = sadd.s32 %s117, 1
    %p121 = scmp.eq.s32.totalorder %s20, 1
    %p122 = scmp.ne.s32.totalorder %s117, %s119
    %p123 = scmp.eq.s32.totalorder %s20, 0
    %p124 = por %p122, %p123
    %p125 = scmp.ne.s32.totalorder %s117, %s119
    %p126 = scmp.eq.s32.totalorder %s25, 1
    %p127 = por %p125, %p126
    %p128 = scmp.ne.s32.totalorder %s119, %s120
    %p129 = scmp.eq.s32.totalorder %s25, 0
    %p130 = por %p128, %p129
    %p131 = scmp.ne.s32.totalorder %s119, %s120
    %p132 = scmp.eq.s32.totalorder %s26, 1
    %p133 = por %p131, %p132
    %p135 = scmp.ne.s32.totalorder %s120, %s134
    %p136 = scmp.eq.s32.totalorder %s26, 0
    %p137 = por %p135, %p136
    %s139 = sadd.s32 %s138, 1
    %p142 = scmp.eq.s32.totalorder %s20, 1
    %p143 = scmp.ne.s32.totalorder %s138, %s140
    %p144 = scmp.eq.s32.totalorder %s20, 0
    %p145 = por %p143, %p144
    %p146 = scmp.ne.s32.totalorder %s138, %s140
    %p147 = scmp.eq.s32.totalorder %s25, 1
    %p148 = por %p146, %p147
    %p149 = scmp.ne.s32.totalorder %s140, %s141
    %p150 = scmp.eq.s32.totalorder %s25, 0
    %p151 = por %p149, %p150
    %p152 = scmp.ne.s32.totalorder %s140, %s141
    %p153 = scmp.eq.s32.totalorder %s26, 1
    %p154 = por %p152, %p153
    %p156 = scmp.ne.s32.totalorder %s141, %s155
    %p157 = scmp.eq.s32.totalorder %s26, 0
    %p158 = por %p156, %p157
    %s160 = sadd.s32 %s159, 1
    %p163 = scmp.eq.s32.totalorder %s20, 1
    %p164 = scmp.ne.s32.totalorder %s159, %s161
    %p165 = scmp.eq.s32.totalorder %s20, 0
    %p166 = por %p164, %p165
    %p167 = scmp.ne.s32.totalorder %s159, %s161
    %p168 = scmp.eq.s32.totalorder %s25, 1
    %p169 = por %p167, %p168
    %p170 = scmp.ne.s32.totalorder %s161, %s162
    %p171 = scmp.eq.s32.totalorder %s25, 0
    %p172 = por %p170, %p171
    %p173 = scmp.ne.s32.totalorder %s161, %s162
    %p174 = scmp.eq.s32.totalorder %s26, 1
    %p175 = por %p173, %p174
    %p177 = scmp.ne.s32.totalorder %s162, %s176
    %p178 = scmp.eq.s32.totalorder %s26, 0
    %p179 = por %p177, %p178
    %s181 = sadd.s32 %s180, 1
    %p184 = scmp.eq.s32.totalorder %s20, 1
    %p185 = scmp.ne.s32.totalorder %s180, %s182
    %p186 = scmp.eq.s32.totalorder %s20, 0
    %p187 = por %p185, %p186
    %p188 = scmp.ne.s32.totalorder %s180, %s182
    %p189 = scmp.eq.s32.totalorder %s25, 1
    %p190 = por %p188, %p189
    %p191 = scmp.ne.s32.totalorder %s182, %s183
    %p192 = scmp.eq.s32.totalorder %s25, 0
    %p193 = por %p191, %p192
    %p194 = scmp.ne.s32.totalorder %s182, %s183
    %p195 = scmp.eq.s32.totalorder %s26, 1
    %p196 = por %p194, %p195
    %p198 = scmp.ne.s32.totalorder %s183, %s197
    %p199 = scmp.eq.s32.totalorder %s26, 0
    %p200 = por %p198, %p199
    %s202 = sadd.s32 %s201, 1
    %p205 = scmp.eq.s32.totalorder %s20, 1
    %p206 = scmp.ne.s32.totalorder %s201, %s203
    %p207 = scmp.eq.s32.totalorder %s20, 0
    %p208 = por %p206, %p207
    %p209 = scmp.ne.s32.totalorder %s201, %s203
    %p210 = scmp.eq.s32.totalorder %s25, 1
    %p211 = por %p209, %p210
    %p212 = scmp.ne.s32.totalorder %s203, %s204
    %p213 = scmp.eq.s32.totalorder %s25, 0
    %p214 = por %p212, %p213
    %p215 = scmp.ne.s32.totalorder %s203, %s204
    %p216 = scmp.eq.s32.totalorder %s26, 1
    %p217 = por %p215, %p216
    %p219 = scmp.ne.s32.totalorder %s204, %s218
    %p220 = scmp.eq.s32.totalorder %s26, 0
    %p221 = por %p219, %p220
    %s223 = sadd.s32 %s222, 1
    %p226 = scmp.eq.s32.totalorder %s20, 1
    %p227 = scmp.ne.s32.totalorder %s222, %s224
    %p228 = scmp.eq.s32.totalorder %s20, 0
    %p229 = por %p227, %p228
    %p230 = scmp.ne.s32.totalorder %s222, %s224
    %p231 = scmp.eq.s32.totalorder %s25, 1
    %p232 = por %p230, %p231
    %p233 = scmp.ne.s32.totalorder %s224, %s225
    %p234 = scmp.eq.s32.totalorder %s25, 0
    %p235 = por %p233, %p234
    %p236 = scmp.ne.s32.totalorder %s224, %s225
    %p237 = scmp.eq.s32.totalorder %s26, 1
    %p238 = por %p236, %p237
    %p240 = scmp.ne.s32.totalorder %s225, %s239
    %p241 = scmp.eq.s32.totalorder %s26, 0
    %p242 = por %p240, %p241
    %s244 = sadd.s32 %s243, 1
    %p247 = scmp.eq.s32.totalorder %s20, 1
    %p248 = scmp.ne.s32.totalorder %s243, %s245
    %p249 = scmp.eq.s32.totalorder %s20, 0
    %p250 = por %p248, %p249
    %p251 = scmp.ne.s32.totalorder %s243, %s245
    %p252 = scmp.eq.s32.totalorder %s25, 1
    %p253 = por %p251, %p252
    %p254 = scmp.ne.s32.totalorder %s245, %s246
    %p255 = scmp.eq.s32.totalorder %s25, 0
    %p256 = por %p254, %p255
    %p257 = scmp.ne.s32.totalorder %s245, %s246
    %p258 = scmp.eq.s32.totalorder %s26, 1
    %p259 = por %p257, %p258
    %p261 = scmp.ne.s32.totalorder %s246, %s260
    %p262 = scmp.eq.s32.totalorder %s26, 0
    %p263 = por %p261, %p262
    %s265 = sadd.s32 %s264, 1
    %p268 = scmp.eq.s32.totalorder %s20, 1
    %p269 = scmp.ne.s32.totalorder %s264, %s266
    %p270 = scmp.eq.s32.totalorder %s20, 0
    %p271 = por %p269, %p270
    %p272 = scmp.ne.s32.totalorder %s264, %s266
    %p273 = scmp.eq.s32.totalorder %s25, 1
    %p274 = por %p272, %p273
    %p275 = scmp.ne.s32.totalorder %s266, %s267
    %p276 = scmp.eq.s32.totalorder %s25, 0
    %p277 = por %p275, %p276
    %p278 = scmp.ne.s32.totalorder %s266, %s267
    %p279 = scmp.eq.s32.totalorder %s26, 1
    %p280 = por %p278, %p279
    %p282 = scmp.ne.s32.totalorder %s267, %s281
    %p283 = scmp.eq.s32.totalorder %s26, 0
    %p284 = por %p282, %p283
    %s285 = ssub.s32 %s20, %s27
    %p286 = scmp.eq.s32.totalorder %s285, 0
    %s288 = sadd.s32 %s287, 1
    %s289 = scalar_select %p286, %s287, %s288
    %p292 = pneg %p286
    %p293 = scmp.eq.s32.totalorder %s20, 1
    %p294 = por %p292, %p293
    %p295 = scmp.ne.s32.totalorder %s287, %s290
    %p296 = scmp.eq.s32.totalorder %s20, 0
    %p297 = por %p295, %p296
    %p298 = scmp.ne.s32.totalorder %s287, %s290
    %p299 = scmp.eq.s32.totalorder %s25, 1
    %p300 = por %p298, %p299
    %p301 = scmp.ne.s32.totalorder %s290, %s291
    %p302 = scmp.eq.s32.totalorder %s25, 0
    %p303 = por %p301, %p302
    %p304 = scmp.ne.s32.totalorder %s290, %s291
    %p305 = scmp.eq.s32.totalorder %s26, 1
    %p306 = por %p304, %p305
    %p308 = scmp.ne.s32.totalorder %s291, %s307
    %p309 = scmp.eq.s32.totalorder %s26, 0
    %p310 = por %p308, %p309
    %s311 = ssub.s32 %s20, %s27
    %p312 = scmp.eq.s32.totalorder %s311, 0
    %s314 = sadd.s32 %s313, 1
    %s315 = scalar_select %p312, %s313, %s314
    %p318 = pneg %p312
    %p319 = scmp.eq.s32.totalorder %s20, 1
    %p320 = por %p318, %p319
    %p321 = scmp.ne.s32.totalorder %s313, %s316
    %p322 = scmp.eq.s32.totalorder %s20, 0
    %p323 = por %p321, %p322
    %p324 = scmp.ne.s32.totalorder %s313, %s316
    %p325 = scmp.eq.s32.totalorder %s25, 1
    %p326 = por %p324, %p325
    %p327 = scmp.ne.s32.totalorder %s316, %s317
    %p328 = scmp.eq.s32.totalorder %s25, 0
    %p329 = por %p327, %p328
    %p330 = scmp.ne.s32.totalorder %s316, %s317
    %p331 = scmp.eq.s32.totalorder %s26, 1
    %p332 = por %p330, %p331
    %p334 = scmp.ne.s32.totalorder %s317, %s333
    %p335 = scmp.eq.s32.totalorder %s26, 0
    %p336 = por %p334, %p335
    %p337 = scmp.le.s32.totalorder 1, %s20
    %p338 = scmp.lt.s32.totalorder %s20, 3
    %p339 = pnand %p337, %p338
    %p340 = pneg %p339
    // Predicated region
    $region9: #{encoder_a_forward.1} parent=5 // pred_check
      _
    $region10: #{encoder_a_forward.1} parent=5 // pred_check_branch
      %342 = sbr.rel (%p339) target = $region12
    $region11: #{encoder_a_forward.1} parent=5 // pred_region
      %s343 = ssub.s32 %s20, 1
      // Predicated region
      $region13: #{encoder_a_forward.1} parent=11 // pred_check
        %p344 = pneg %p67
      $region14: #{encoder_a_forward.1} parent=11 // pred_check_branch
        %346 = sbr.rel (%p344) target = $region16
      $region15: #{encoder_a_forward.1} parent=11 // pred_region
        _
      $region16: #{encoder_a_forward.1} parent=11 // pred_fallthru
        _
      // Predicated region
      $region17: #{encoder_a_forward.1} parent=11 // pred_check
        %p347 = pneg %p88
      $region18: #{encoder_a_forward.1} parent=11 // pred_check_branch
        %349 = sbr.rel (%p347) target = $region20
      $region19: #{encoder_a_forward.1} parent=11 // pred_region
        _
      $region20: #{encoder_a_forward.1} parent=11 // pred_fallthru
        _
      // Predicated region
      $region21: #{encoder_a_forward.1} parent=11 // pred_check
        %p350 = pneg %p109
      $region22: #{encoder_a_forward.1} parent=11 // pred_check_branch
        %352 = sbr.rel (%p350) target = $region24
      $region23: #{encoder_a_forward.1} parent=11 // pred_region
        _
      $region24: #{encoder_a_forward.1} parent=11 // pred_fallthru
        _
      // Predicated region
      $region25: #{encoder_a_forward.1} parent=11 // pred_check
        %p353 = pneg %p130
      $region26: #{encoder_a_forward.1} parent=11 // pred_check_branch
        %355 = sbr.rel (%p353) target = $region28
      $region27: #{encoder_a_forward.1} parent=11 // pred_region
        _
      $region28: #{encoder_a_forward.1} parent=11 // pred_fallthru
        _
      // Predicated region
      $region29: #{encoder_a_forward.1} parent=11 // pred_check
        %p356 = pneg %p151
      $region30: #{encoder_a_forward.1} parent=11 // pred_check_branch
        %358 = sbr.rel (%p356) target = $region32
      $region31: #{encoder_a_forward.1} parent=11 // pred_region
        _
      $region32: #{encoder_a_forward.1} parent=11 // pred_fallthru
        _
      // Predicated region
      $region33: #{encoder_a_forward.1} parent=11 // pred_check
        %p359 = pneg %p172
      $region34: #{encoder_a_forward.1} parent=11 // pred_check_branch
        %361 = sbr.rel (%p359) target = $region36
      $region35: #{encoder_a_forward.1} parent=11 // pred_region
        _
      $region36: #{encoder_a_forward.1} parent=11 // pred_fallthru
        _
      // Predicated region
      $region37: #{encoder_a_forward.1} parent=11 // pred_check
        %p362 = pneg %p193
      $region38: #{encoder_a_forward.1} parent=11 // pred_check_branch
        %364 = sbr.rel (%p362) target = $region40
      $region39: #{encoder_a_forward.1} parent=11 // pred_region
        _
      $region40: #{encoder_a_forward.1} parent=11 // pred_fallthru
        _
      // Predicated region
      $region41: #{encoder_a_forward.1} parent=11 // pred_check
        %p365 = pneg %p214
      $region42: #{encoder_a_forward.1} parent=11 // pred_check_branch
        %367 = sbr.rel (%p365) target = $region44
      $region43: #{encoder_a_forward.1} parent=11 // pred_region
        _
      $region44: #{encoder_a_forward.1} parent=11 // pred_fallthru
        _
      // Predicated region
      $region45: #{encoder_a_forward.1} parent=11 // pred_check
        %p368 = pneg %p235
      $region46: #{encoder_a_forward.1} parent=11 // pred_check_branch
        %370 = sbr.rel (%p368) target = $region48
      $region47: #{encoder_a_forward.1} parent=11 // pred_region
        _
      $region48: #{encoder_a_forward.1} parent=11 // pred_fallthru
        _
      // Predicated region
      $region49: #{encoder_a_forward.1} parent=11 // pred_check
        %p371 = pneg %p256
      $region50: #{encoder_a_forward.1} parent=11 // pred_check_branch
        %373 = sbr.rel (%p371) target = $region52
      $region51: #{encoder_a_forward.1} parent=11 // pred_region
        _
      $region52: #{encoder_a_forward.1} parent=11 // pred_fallthru
        _
      // Predicated region
      $region53: #{encoder_a_forward.1} parent=11 // pred_check
        %p374 = pneg %p277
      $region54: #{encoder_a_forward.1} parent=11 // pred_check_branch
        %376 = sbr.rel (%p374) target = $region56
      $region55: #{encoder_a_forward.1} parent=11 // pred_region
        _
      $region56: #{encoder_a_forward.1} parent=11 // pred_fallthru
        _
    $region12: #{encoder_a_forward.1} parent=5 // pred_fallthru
      _
    %p377 = scmp.lt.s32.totalorder %s20, 2
    // Predicated region
    $region57: #{encoder_a_forward.1} parent=5 // pred_check
      %p378 = pneg %p377
    $region58: #{encoder_a_forward.1} parent=5 // pred_check_branch
      %380 = sbr.rel (%p378) target = $region60
    $region59: #{encoder_a_forward.1} parent=5 // pred_region
      // Predicated region
      $region61: #{encoder_a_forward.1} parent=59 // pred_check
        %p381 = pneg %p40
      $region62: #{encoder_a_forward.1} parent=59 // pred_check_branch
        %383 = sbr.rel (%p381) target = $region64
      $region63: #{encoder_a_forward.1} parent=59 // pred_region
        %p384 = scmp.lt.s32.totalorder %s20, 1
        %s385 = scalar_select %p384, %s20, 1
        %s386 = smul.addr %s385, 32
        %s387 = smul.addr %s386, 4
        %s388 = scalar_lea.vmem %s0, %s387
      $region64: #{encoder_a_forward.1} parent=59 // pred_fallthru
        _
    $region60: #{encoder_a_forward.1} parent=5 // pred_fallthru
      _
    %p389 = scmp.le.s32.totalorder 1, %s20
    %p390 = scmp.lt.s32.totalorder %s20, 3
    %p391 = pnand %p389, %p390
    %p392 = pneg %p391
    // Predicated region
    $region65: #{encoder_a_forward.1} parent=5 // pred_check
      _
    $region66: #{encoder_a_forward.1} parent=5 // pred_check_branch
      %394 = sbr.rel (%p391) target = $region68
    $region67: #{encoder_a_forward.1} parent=5 // pred_region
      %s395 = ssub.s32 %s20, 1
      %p396 = scmp.lt.s32.totalorder %s25, 1
      %s397 = scalar_select %p396, %s25, 1
      %s398 = smul.addr %s397, 32
      %s399 = smul.addr %s398, 4
      %s400 = scalar_lea.vmem %s0, %s399
      %p401 = pneg %p46
      %p402 = pneg %p43
      %p403 = pneg %p67
      %p404 = pneg %p64
      %p405 = pneg %p88
      %p406 = pneg %p85
      %p407 = pneg %p109
      %p408 = pneg %p106
      %p409 = pneg %p130
      %p410 = pneg %p127
      %p411 = pneg %p151
      %p412 = pneg %p148
      %p413 = pneg %p172
      %p414 = pneg %p169
      %p415 = pneg %p193
      %p416 = pneg %p190
      %p417 = pneg %p214
      %p418 = pneg %p211
      %p419 = pneg %p235
      %p420 = pneg %p232
      %p421 = pneg %p256
      %p422 = pneg %p253
      %p423 = pneg %p277
      %p424 = pneg %p274
      %p425 = pneg %p303
      %p426 = pneg %p300
      %p427 = scmp.lt.s32.totalorder %s25, 1
      %s428 = scalar_select %p427, %s25, 1
      %s429 = scalar_lea.vmem %s12, %s428
      %p430 = pneg %p329
      %p431 = pneg %p326
      %p432 = scmp.lt.s32.totalorder %s25, 1
      %s433 = scalar_select %p432, %s25, 1
      %s434 = scalar_lea.vmem %s13, %s433
      %p435 = scmp.lt.s32.totalorder %s25, 1
      %s436 = scalar_select %p435, %s25, 1
      %s437 = smul.addr %s436, 32
      %s438 = smul.addr %s437, 4
      %s439 = scalar_lea.vmem %s0, %s438
      %p440 = scmp.lt.s32.totalorder %s25, 1
      %s441 = scalar_select %p440, %s25, 1
      %s442 = scalar_lea.vmem %s12, %s441
      %p443 = scmp.lt.s32.totalorder %s25, 1
      %s444 = scalar_select %p443, %s25, 1
      %s445 = scalar_lea.vmem %s13, %s444
      %v447 = vld [vmem:[%s439] sm:$0xf]
      %v448 = vld [vmem:[%s439 + $0x4] sm:$0xf]
      %v449 = vld [vmem:[%s439 + $0x8] sm:$0xf]
      %v450 = vld [vmem:[%s439 + $0xc] sm:$0xf]
      %v451 = vld [vmem:[%s439 + $0x10] sm:$0xf]
      %v452 = vld [vmem:[%s439 + $0x14] sm:$0xf]
      %v453 = vld [vmem:[%s439 + $0x18] sm:$0xf]
      %v454 = vld [vmem:[%s439 + $0x1c] sm:$0xf]
      %v455 = vld [vmem:[%s439 + $0x20] sm:$0xf]
      %v456 = vld [vmem:[%s439 + $0x24] sm:$0xf]
      %v457 = vld [vmem:[%s439 + $0x28] sm:$0xf]
      %v458 = vld [vmem:[%s439 + $0x2c] sm:$0xf]
      %v459 = vld [vmem:[%s439 + $0x30] sm:$0xf]
      %v460 = vld [vmem:[%s439 + $0x34] sm:$0xf]
      %v461 = vld [vmem:[%s439 + $0x38] sm:$0xf]
      %v462 = vld [vmem:[%s439 + $0x3c] sm:$0xf]
      %v463 = vld [vmem:[%s439 + $0x40] sm:$0xf]
      %v464 = vld [vmem:[%s439 + $0x44] sm:$0xf]
      %v465 = vld [vmem:[%s439 + $0x48] sm:$0xf]
      %v466 = vld [vmem:[%s439 + $0x4c] sm:$0xf]
      %v467 = vld [vmem:[%s439 + $0x50] sm:$0xf]
      %v468 = vld [vmem:[%s439 + $0x54] sm:$0xf]
      %v469 = vld [vmem:[%s439 + $0x58] sm:$0xf]
      %v470 = vld [vmem:[%s439 + $0x5c] sm:$0xf]
      %v471 = vld [vmem:[%s439 + $0x60] sm:$0xf]
      %v472 = vld [vmem:[%s439 + $0x64] sm:$0xf]
      %v473 = vld [vmem:[%s439 + $0x68] sm:$0xf]
      %v474 = vld [vmem:[%s439 + $0x6c] sm:$0xf]
      %v475 = vld [vmem:[%s439 + $0x70] sm:$0xf]
      %v476 = vld [vmem:[%s439 + $0x74] sm:$0xf]
      %v477 = vld [vmem:[%s439 + $0x78] sm:$0xf]
      %v478 = vld [vmem:[%s439 + $0x7c] sm:$0xf]
      %v479 = vld [vmem:[%s1] sm:$0xf]
      %v480 = vld [vmem:[%s1 + $0x4] sm:$0xf]
      %v481 = vld [vmem:[%s1 + $0x8] sm:$0xf]
      %v482 = vld [vmem:[%s1 + $0xc] sm:$0xf]
      %v483 = vld [vmem:[%s1 + $0x10] sm:$0xf]
      %v484 = vld [vmem:[%s1 + $0x14] sm:$0xf]
      %v485 = vld [vmem:[%s1 + $0x18] sm:$0xf]
      %v486 = vld [vmem:[%s1 + $0x1c] sm:$0xf]
      %v519 = vunpack.c.l.b16 %v447
      %v520 = vunpack.c.l.b16 %v448
      %v521 = vunpack.c.l.b16 %v449
      %v522 = vunpack.c.l.b16 %v450
      %v523 = vunpack.c.l.b16 %v451
      %v524 = vunpack.c.l.b16 %v452
      %v525 = vunpack.c.l.b16 %v453
      %v526 = vunpack.c.l.b16 %v454
      %v527 = vunpack.c.l.b16 %v455
      %v528 = vunpack.c.l.b16 %v456
      %v529 = vunpack.c.l.b16 %v457
      %v530 = vunpack.c.l.b16 %v458
      %v531 = vunpack.c.l.b16 %v459
      %v532 = vunpack.c.l.b16 %v460
      %v533 = vunpack.c.l.b16 %v461
      %v534 = vunpack.c.l.b16 %v462
      %v535 = vunpack.c.l.b16 %v463
      %v536 = vunpack.c.l.b16 %v464
      %v537 = vunpack.c.l.b16 %v465
      %v538 = vunpack.c.l.b16 %v466
      %v539 = vunpack.c.l.b16 %v467
      %v540 = vunpack.c.l.b16 %v468
      %v541 = vunpack.c.l.b16 %v469
      %v542 = vunpack.c.l.b16 %v470
      %v543 = vunpack.c.l.b16 %v471
      %v544 = vunpack.c.l.b16 %v472
      %v545 = vunpack.c.l.b16 %v473
      %v546 = vunpack.c.l.b16 %v474
      %v547 = vunpack.c.l.b16 %v475
      %v548 = vunpack.c.l.b16 %v476
      %v549 = vunpack.c.l.b16 %v477
      %v550 = vunpack.c.l.b16 %v478
      %v551 = vpack.c.b16 %v520, %v519
      %v552 = vpack.c.b16 %v522, %v521
      %v553 = vpack.c.b16 %v524, %v523
      %v554 = vpack.c.b16 %v526, %v525
      %v555 = vpack.c.b16 %v528, %v527
      %v556 = vpack.c.b16 %v530, %v529
      %v557 = vpack.c.b16 %v532, %v531
      %v558 = vpack.c.b16 %v534, %v533
      %v559 = vpack.c.b16 %v536, %v535
      %v560 = vpack.c.b16 %v538, %v537
      %v561 = vpack.c.b16 %v540, %v539
      %v562 = vpack.c.b16 %v542, %v541
      %v563 = vpack.c.b16 %v544, %v543
      %v564 = vpack.c.b16 %v546, %v545
      %v565 = vpack.c.b16 %v548, %v547
      %v566 = vpack.c.b16 %v550, %v549
      %v575 = vunpack.c.l.b16 %v479
      %v576 = vunpack.c.l.b16 %v480
      %v577 = vunpack.c.l.b16 %v481
      %v578 = vunpack.c.l.b16 %v482
      %v579 = vunpack.c.l.b16 %v483
      %v580 = vunpack.c.l.b16 %v484
      %v581 = vunpack.c.l.b16 %v485
      %v582 = vunpack.c.l.b16 %v486
      %v583 = vpack.c.b16 %v576, %v575
      %v584 = vpack.c.b16 %v578, %v577
      %v585 = vpack.c.b16 %v580, %v579
      %v586 = vpack.c.b16 %v582, %v581
      %vm591 = vcmask 523264
      %v593 = vsel %vm591, %v551, 0
      %v596 = vsel %vm591, %v552, 0
      %v599 = vsel %vm591, %v553, 0
      %v602 = vsel %vm591, %v554, 0
      %v605 = vsel %vm591, %v555, 0
      %v608 = vsel %vm591, %v556, 0
      %v611 = vsel %vm591, %v557, 0
      %v614 = vsel %vm591, %v558, 0
      %v617 = vsel %vm591, %v559, 0
      %v620 = vsel %vm591, %v560, 0
      %v623 = vsel %vm591, %v561, 0
      %v626 = vsel %vm591, %v562, 0
      %v629 = vsel %vm591, %v563, 0
      %v632 = vsel %vm591, %v564, 0
      %v635 = vsel %vm591, %v565, 0
      %v638 = vsel %vm591, %v566, 0
      %640 = vmatpush.bf16.msra.mxu0 0
      %641 = vmatpush.bf16.msra.mxu0 0
      %642 = vmatpush.bf16.msra.mxu0 0
      %643 = vmatpush.bf16.msra.mxu0 0
      %644 = vmatpush.bf16.msra.mxu0 %v586
      %645 = vmatpush.bf16.msra.mxu0 %v585
      %646 = vmatpush.bf16.msra.mxu0 %v584
      %647 = vmatpush.bf16.msra.mxu0 %v583
      %648 = vmatmul.bf16.gmra.mxu0 %v593
      %v649 = vpop.f32.mrf.mxu0
      %v650 = vadd.f32 0.0, %v649
      %v651 = vpop.f32.mrf.mxu0
      %v652 = vadd.f32 0.0, %v651
      %653 = vmatmul.bf16.gmra.mxu0 %v596
      %v654 = vpop.f32.mrf.mxu0
      %v655 = vadd.f32 0.0, %v654
      %v656 = vpop.f32.mrf.mxu0
      %v657 = vadd.f32 0.0, %v656
      %658 = vmatmul.bf16.gmra.mxu0 %v599
      %v659 = vpop.f32.mrf.mxu0
      %v660 = vadd.f32 0.0, %v659
      %v661 = vpop.f32.mrf.mxu0
      %v662 = vadd.f32 0.0, %v661
      %663 = vmatmul.bf16.gmra.mxu0 %v602
      %v664 = vpop.f32.mrf.mxu0
      %v665 = vadd.f32 0.0, %v664
      %v666 = vpop.f32.mrf.mxu0
      %v667 = vadd.f32 0.0, %v666
      %668 = vmatmul.bf16.gmra.mxu0 %v605
      %v669 = vpop.f32.mrf.mxu0
      %v670 = vadd.f32 0.0, %v669
      %v671 = vpop.f32.mrf.mxu0
      %v672 = vadd.f32 0.0, %v671
      %673 = vmatmul.bf16.gmra.mxu0 %v608
      %v674 = vpop.f32.mrf.mxu0
      %v675 = vadd.f32 0.0, %v674
      %v676 = vpop.f32.mrf.mxu0
      %v677 = vadd.f32 0.0, %v676
      %678 = vmatmul.bf16.gmra.mxu0 %v611
      %v679 = vpop.f32.mrf.mxu0
      %v680 = vadd.f32 0.0, %v679
      %v681 = vpop.f32.mrf.mxu0
      %v682 = vadd.f32 0.0, %v681
      %683 = vmatmul.bf16.gmra.mxu0 %v614
      %v684 = vpop.f32.mrf.mxu0
      %v685 = vadd.f32 0.0, %v684
      %v686 = vpop.f32.mrf.mxu0
      %v687 = vadd.f32 0.0, %v686
      %688 = vmatmul.bf16.gmra.mxu0 %v617
      %v689 = vpop.f32.mrf.mxu0
      %v690 = vadd.f32 0.0, %v689
      %v691 = vpop.f32.mrf.mxu0
      %v692 = vadd.f32 0.0, %v691
      %693 = vmatmul.bf16.gmra.mxu0 %v620
      %v694 = vpop.f32.mrf.mxu0
      %v695 = vadd.f32 0.0, %v694
      %v696 = vpop.f32.mrf.mxu0
      %v697 = vadd.f32 0.0, %v696
      %698 = vmatmul.bf16.gmra.mxu0 %v623
      %v699 = vpop.f32.mrf.mxu0
      %v700 = vadd.f32 0.0, %v699
      %v701 = vpop.f32.mrf.mxu0
      %v702 = vadd.f32 0.0, %v701
      %703 = vmatmul.bf16.gmra.mxu0 %v626
      %v704 = vpop.f32.mrf.mxu0
      %v705 = vadd.f32 0.0, %v704
      %v706 = vpop.f32.mrf.mxu0
      %v707 = vadd.f32 0.0, %v706
      %708 = vmatmul.bf16.gmra.mxu0 %v629
      %v709 = vpop.f32.mrf.mxu0
      %v710 = vadd.f32 0.0, %v709
      %v711 = vpop.f32.mrf.mxu0
      %v712 = vadd.f32 0.0, %v711
      %713 = vmatmul.bf16.gmra.mxu0 %v632
      %v714 = vpop.f32.mrf.mxu0
      %v715 = vadd.f32 0.0, %v714
      %v716 = vpop.f32.mrf.mxu0
      %v717 = vadd.f32 0.0, %v716
      %718 = vmatmul.bf16.gmra.mxu0 %v635
      %v719 = vpop.f32.mrf.mxu0
      %v720 = vadd.f32 0.0, %v719
      %v721 = vpop.f32.mrf.mxu0
      %v722 = vadd.f32 0.0, %v721
      %723 = vmatmul.bf16.gmra.mxu0 %v638
      %v724 = vpop.f32.mrf.mxu0
      %v725 = vadd.f32 0.0, %v724
      %v726 = vpop.f32.mrf.mxu0
      %v727 = vadd.f32 0.0, %v726
      %728 = vdwg.mxu0
      %v729 = vmax.f32 %v650, 0.0
      %v730 = vmax.f32 %v652, 0.0
      %v731 = vmax.f32 %v655, 0.0
      %v732 = vmax.f32 %v657, 0.0
      %v733 = vmax.f32 %v660, 0.0
      %v734 = vmax.f32 %v662, 0.0
      %v735 = vmax.f32 %v665, 0.0
      %v736 = vmax.f32 %v667, 0.0
      %v737 = vmax.f32 %v670, 0.0
      %v738 = vmax.f32 %v672, 0.0
      %v739 = vmax.f32 %v675, 0.0
      %v740 = vmax.f32 %v677, 0.0
      %v741 = vmax.f32 %v680, 0.0
      %v742 = vmax.f32 %v682, 0.0
      %v743 = vmax.f32 %v685, 0.0
      %v744 = vmax.f32 %v687, 0.0
      %v745 = vmax.f32 %v690, 0.0
      %v746 = vmax.f32 %v692, 0.0
      %v747 = vmax.f32 %v695, 0.0
      %v748 = vmax.f32 %v697, 0.0
      %v749 = vmax.f32 %v700, 0.0
      %v750 = vmax.f32 %v702, 0.0
      %v751 = vmax.f32 %v705, 0.0
      %v752 = vmax.f32 %v707, 0.0
      %v753 = vmax.f32 %v710, 0.0
      %v754 = vmax.f32 %v712, 0.0
      %v755 = vmax.f32 %v715, 0.0
      %v756 = vmax.f32 %v717, 0.0
      %v757 = vmax.f32 %v720, 0.0
      %v758 = vmax.f32 %v722, 0.0
      %v759 = vmax.f32 %v725, 0.0
      %v760 = vmax.f32 %v727, 0.0
      %v761 = vpack.c.bf16 %v730, %v729
      %v762 = vpack.c.bf16 %v732, %v731
      %v763 = vpack.c.bf16 %v734, %v733
      %v764 = vpack.c.bf16 %v736, %v735
      %v765 = vpack.c.bf16 %v738, %v737
      %v766 = vpack.c.bf16 %v740, %v739
      %v767 = vpack.c.bf16 %v742, %v741
      %v768 = vpack.c.bf16 %v744, %v743
      %v769 = vpack.c.bf16 %v746, %v745
      %v770 = vpack.c.bf16 %v748, %v747
      %v771 = vpack.c.bf16 %v750, %v749
      %v772 = vpack.c.bf16 %v752, %v751
      %v773 = vpack.c.bf16 %v754, %v753
      %v774 = vpack.c.bf16 %v756, %v755
      %v775 = vpack.c.bf16 %v758, %v757
      %v776 = vpack.c.bf16 %v760, %v759
      %v777 = vld [vmem:[%s2] sm:$0xff]
      %v778 = vld [vmem:[%s2 + $0x8] sm:$0xff]
      %v779 = vld [vmem:[%s2 + $0x10] sm:$0xff]
      %v780 = vld [vmem:[%s2 + $0x18] sm:$0xff]
      %v781 = vld [vmem:[%s2 + $0x20] sm:$0xff]
      %v782 = vld [vmem:[%s2 + $0x28] sm:$0xff]
      %v783 = vld [vmem:[%s2 + $0x30] sm:$0xff]
      %v784 = vld [vmem:[%s2 + $0x38] sm:$0xff]
      %v785 = vld [vmem:[%s2 + $0x40] sm:$0xff]
      %v786 = vld [vmem:[%s2 + $0x48] sm:$0xff]
      %v787 = vld [vmem:[%s2 + $0x50] sm:$0xff]
      %v788 = vld [vmem:[%s2 + $0x58] sm:$0xff]
      %v789 = vld [vmem:[%s2 + $0x60] sm:$0xff]
      %v790 = vld [vmem:[%s2 + $0x68] sm:$0xff]
      %v791 = vld [vmem:[%s2 + $0x70] sm:$0xff]
      %v792 = vld [vmem:[%s2 + $0x78] sm:$0xff]
      %v793 = vld [vmem:[%s2 + $0x80] sm:$0xff]
      %v794 = vld [vmem:[%s2 + $0x88] sm:$0xff]
      %v795 = vld [vmem:[%s2 + $0x90] sm:$0xff]
      %v796 = vld [vmem:[%s2 + $0x98] sm:$0xff]
      %v797 = vld [vmem:[%s2 + $0xa0] sm:$0xff]
      %v798 = vld [vmem:[%s2 + $0xa8] sm:$0xff]
      %v799 = vld [vmem:[%s2 + $0xb0] sm:$0xff]
      %v800 = vld [vmem:[%s2 + $0xb8] sm:$0xff]
      %v801 = vld [vmem:[%s2 + $0xc0] sm:$0xff]
      %v802 = vld [vmem:[%s2 + $0xc8] sm:$0xff]
      %v803 = vld [vmem:[%s2 + $0xd0] sm:$0xff]
      %v804 = vld [vmem:[%s2 + $0xd8] sm:$0xff]
      %v805 = vld [vmem:[%s2 + $0xe0] sm:$0xff]
      %v806 = vld [vmem:[%s2 + $0xe8] sm:$0xff]
      %v807 = vld [vmem:[%s2 + $0xf0] sm:$0xff]
      %v808 = vld [vmem:[%s2 + $0xf8] sm:$0xff]
      %v809 = vld [vmem:[%s2 + $0x100] sm:$0xff]
      %v810 = vld [vmem:[%s2 + $0x108] sm:$0xff]
      %v811 = vld [vmem:[%s2 + $0x110] sm:$0xff]
      %v812 = vld [vmem:[%s2 + $0x118] sm:$0xff]
      %v813 = vld [vmem:[%s2 + $0x120] sm:$0xff]
      %v814 = vld [vmem:[%s2 + $0x128] sm:$0xff]
      %v815 = vld [vmem:[%s2 + $0x130] sm:$0xff]
      %v816 = vld [vmem:[%s2 + $0x138] sm:$0xff]
      %v817 = vld [vmem:[%s2 + $0x140] sm:$0xff]
      %v818 = vld [vmem:[%s2 + $0x148] sm:$0xff]
      %v819 = vld [vmem:[%s2 + $0x150] sm:$0xff]
      %v820 = vld [vmem:[%s2 + $0x158] sm:$0xff]
      %v821 = vld [vmem:[%s2 + $0x160] sm:$0xff]
      %v822 = vld [vmem:[%s2 + $0x168] sm:$0xff]
      %v823 = vld [vmem:[%s2 + $0x170] sm:$0xff]
      %v824 = vld [vmem:[%s2 + $0x178] sm:$0xff]
      %v825 = vld [vmem:[%s2 + $0x180] sm:$0xff]
      %v826 = vld [vmem:[%s2 + $0x188] sm:$0xff]
      %v827 = vld [vmem:[%s2 + $0x190] sm:$0xff]
      %v828 = vld [vmem:[%s2 + $0x198] sm:$0xff]
      %v829 = vld [vmem:[%s2 + $0x1a0] sm:$0xff]
      %v830 = vld [vmem:[%s2 + $0x1a8] sm:$0xff]
      %v831 = vld [vmem:[%s2 + $0x1b0] sm:$0xff]
      %v832 = vld [vmem:[%s2 + $0x1b8] sm:$0xff]
      %v833 = vld [vmem:[%s2 + $0x1c0] sm:$0xff]
      %v834 = vld [vmem:[%s2 + $0x1c8] sm:$0xff]
      %v835 = vld [vmem:[%s2 + $0x1d0] sm:$0xff]
      %v836 = vld [vmem:[%s2 + $0x1d8] sm:$0xff]
      %v837 = vld [vmem:[%s2 + $0x1e0] sm:$0xff]
      %v838 = vld [vmem:[%s2 + $0x1e8] sm:$0xff]
      %v839 = vld [vmem:[%s2 + $0x1f0] sm:$0xff]
      %v840 = vld [vmem:[%s2 + $0x1f8] sm:$0xff]
      %v841 = vld [vmem:[%s2 + $0x200] sm:$0xff]
      %v842 = vld [vmem:[%s2 + $0x208] sm:$0xff]
      %v843 = vld [vmem:[%s2 + $0x210] sm:$0xff]
      %v844 = vld [vmem:[%s2 + $0x218] sm:$0xff]
      %v845 = vld [vmem:[%s2 + $0x220] sm:$0xff]
      %v846 = vld [vmem:[%s2 + $0x228] sm:$0xff]
      %v847 = vld [vmem:[%s2 + $0x230] sm:$0xff]
      %v848 = vld [vmem:[%s2 + $0x238] sm:$0xff]
      %v849 = vld [vmem:[%s2 + $0x240] sm:$0xff]
      %v850 = vld [vmem:[%s2 + $0x248] sm:$0xff]
      %v851 = vld [vmem:[%s2 + $0x250] sm:$0xff]
      %v852 = vld [vmem:[%s2 + $0x258] sm:$0xff]
      %v853 = vld [vmem:[%s2 + $0x260] sm:$0xff]
      %v854 = vld [vmem:[%s2 + $0x268] sm:$0xff]
      %v855 = vld [vmem:[%s2 + $0x270] sm:$0xff]
      %v856 = vld [vmem:[%s2 + $0x278] sm:$0xff]
      %v857 = vld [vmem:[%s2 + $0x280] sm:$0xff]
      %v858 = vld [vmem:[%s2 + $0x288] sm:$0xff]
      %v859 = vld [vmem:[%s2 + $0x290] sm:$0xff]
      %v860 = vld [vmem:[%s2 + $0x298] sm:$0xff]
      %v861 = vld [vmem:[%s2 + $0x2a0] sm:$0xff]
      %v862 = vld [vmem:[%s2 + $0x2a8] sm:$0xff]
      %v863 = vld [vmem:[%s2 + $0x2b0] sm:$0xff]
      %v864 = vld [vmem:[%s2 + $0x2b8] sm:$0xff]
      %v865 = vld [vmem:[%s2 + $0x2c0] sm:$0xff]
      %v866 = vld [vmem:[%s2 + $0x2c8] sm:$0xff]
      %v867 = vld [vmem:[%s2 + $0x2d0] sm:$0xff]
      %v868 = vld [vmem:[%s2 + $0x2d8] sm:$0xff]
      %v869 = vld [vmem:[%s2 + $0x2e0] sm:$0xff]
      %v870 = vld [vmem:[%s2 + $0x2e8] sm:$0xff]
      %v871 = vld [vmem:[%s2 + $0x2f0] sm:$0xff]
      %v872 = vld [vmem:[%s2 + $0x2f8] sm:$0xff]
      %v873 = vld [vmem:[%s2 + $0x300] sm:$0xff]
      %v874 = vld [vmem:[%s2 + $0x308] sm:$0xff]
      %v875 = vld [vmem:[%s2 + $0x310] sm:$0xff]
      %v876 = vld [vmem:[%s2 + $0x318] sm:$0xff]
      %v877 = vld [vmem:[%s2 + $0x320] sm:$0xff]
      %v878 = vld [vmem:[%s2 + $0x328] sm:$0xff]
      %v879 = vld [vmem:[%s2 + $0x330] sm:$0xff]
      %v880 = vld [vmem:[%s2 + $0x338] sm:$0xff]
      %v881 = vld [vmem:[%s2 + $0x340] sm:$0xff]
      %v882 = vld [vmem:[%s2 + $0x348] sm:$0xff]
      %v883 = vld [vmem:[%s2 + $0x350] sm:$0xff]
      %v884 = vld [vmem:[%s2 + $0x358] sm:$0xff]
      %v885 = vld [vmem:[%s2 + $0x360] sm:$0xff]
      %v886 = vld [vmem:[%s2 + $0x368] sm:$0xff]
      %v887 = vld [vmem:[%s2 + $0x370] sm:$0xff]
      %v888 = vld [vmem:[%s2 + $0x378] sm:$0xff]
      %v889 = vld [vmem:[%s2 + $0x380] sm:$0xff]
      %v890 = vld [vmem:[%s2 + $0x388] sm:$0xff]
      %v891 = vld [vmem:[%s2 + $0x390] sm:$0xff]
      %v892 = vld [vmem:[%s2 + $0x398] sm:$0xff]
      %v893 = vld [vmem:[%s2 + $0x3a0] sm:$0xff]
      %v894 = vld [vmem:[%s2 + $0x3a8] sm:$0xff]
      %v895 = vld [vmem:[%s2 + $0x3b0] sm:$0xff]
      %v896 = vld [vmem:[%s2 + $0x3b8] sm:$0xff]
      %v897 = vld [vmem:[%s2 + $0x3c0] sm:$0xff]
      %v898 = vld [vmem:[%s2 + $0x3c8] sm:$0xff]
      %v899 = vld [vmem:[%s2 + $0x3d0] sm:$0xff]
      %v900 = vld [vmem:[%s2 + $0x3d8] sm:$0xff]
      %v901 = vld [vmem:[%s2 + $0x3e0] sm:$0xff]
      %v902 = vld [vmem:[%s2 + $0x3e8] sm:$0xff]
      %v903 = vld [vmem:[%s2 + $0x3f0] sm:$0xff]
      %v904 = vld [vmem:[%s2 + $0x3f8] sm:$0xff]
      %v1033 = vunpack.c.l.b16 %v777
      %v1034 = vunpack.c.h.b16 %v777
      %v1035 = vunpack.c.l.b16 %v778
      %v1036 = vunpack.c.h.b16 %v778
      %v1037 = vunpack.c.l.b16 %v779
      %v1038 = vunpack.c.h.b16 %v779
      %v1039 = vunpack.c.l.b16 %v780
      %v1040 = vunpack.c.h.b16 %v780
      %v1041 = vunpack.c.l.b16 %v781
      %v1042 = vunpack.c.h.b16 %v781
      %v1043 = vunpack.c.l.b16 %v782
      %v1044 = vunpack.c.h.b16 %v782
      %v1045 = vunpack.c.l.b16 %v783
      %v1046 = vunpack.c.h.b16 %v783
      %v1047 = vunpack.c.l.b16 %v784
      %v1048 = vunpack.c.h.b16 %v784
      %v1049 = vunpack.c.l.b16 %v785
      %v1050 = vunpack.c.h.b16 %v785
      %v1051 = vunpack.c.l.b16 %v786
      %v1052 = vunpack.c.h.b16 %v786
      %v1053 = vunpack.c.l.b16 %v787
      %v1054 = vunpack.c.h.b16 %v787
      %v1055 = vunpack.c.l.b16 %v788
      %v1056 = vunpack.c.h.b16 %v788
      %v1057 = vunpack.c.l.b16 %v789
      %v1058 = vunpack.c.h.b16 %v789
      %v1059 = vunpack.c.l.b16 %v790
      %v1060 = vunpack.c.h.b16 %v790
      %v1061 = vunpack.c.l.b16 %v791
      %v1062 = vunpack.c.h.b16 %v791
      %v1063 = vunpack.c.l.b16 %v792
      %v1064 = vunpack.c.h.b16 %v792
      %v1065 = vunpack.c.l.b16 %v793
      %v1066 = vunpack.c.h.b16 %v793
      %v1067 = vunpack.c.l.b16 %v794
      %v1068 = vunpack.c.h.b16 %v794
      %v1069 = vunpack.c.l.b16 %v795
      %v1070 = vunpack.c.h.b16 %v795
      %v1071 = vunpack.c.l.b16 %v796
      %v1072 = vunpack.c.h.b16 %v796
      %v1073 = vunpack.c.l.b16 %v797
      %v1074 = vunpack.c.h.b16 %v797
      %v1075 = vunpack.c.l.b16 %v798
      %v1076 = vunpack.c.h.b16 %v798
      %v1077 = vunpack.c.l.b16 %v799
      %v1078 = vunpack.c.h.b16 %v799
      %v1079 = vunpack.c.l.b16 %v800
      %v1080 = vunpack.c.h.b16 %v800
      %v1081 = vunpack.c.l.b16 %v801
      %v1082 = vunpack.c.h.b16 %v801
      %v1083 = vunpack.c.l.b16 %v802
      %v1084 = vunpack.c.h.b16 %v802
      %v1085 = vunpack.c.l.b16 %v803
      %v1086 = vunpack.c.h.b16 %v803
      %v1087 = vunpack.c.l.b16 %v804
      %v1088 = vunpack.c.h.b16 %v804
      %v1089 = vunpack.c.l.b16 %v805
      %v1090 = vunpack.c.h.b16 %v805
      %v1091 = vunpack.c.l.b16 %v806
      %v1092 = vunpack.c.h.b16 %v806
      %v1093 = vunpack.c.l.b16 %v807
      %v1094 = vunpack.c.h.b16 %v807
      %v1095 = vunpack.c.l.b16 %v808
      %v1096 = vunpack.c.h.b16 %v808
      %v1097 = vunpack.c.l.b16 %v809
      %v1098 = vunpack.c.h.b16 %v809
      %v1099 = vunpack.c.l.b16 %v810
      %v1100 = vunpack.c.h.b16 %v810
      %v1101 = vunpack.c.l.b16 %v811
      %v1102 = vunpack.c.h.b16 %v811
      %v1103 = vunpack.c.l.b16 %v812
      %v1104 = vunpack.c.h.b16 %v812
      %v1105 = vunpack.c.l.b16 %v813
      %v1106 = vunpack.c.h.b16 %v813
      %v1107 = vunpack.c.l.b16 %v814
      %v1108 = vunpack.c.h.b16 %v814
      %v1109 = vunpack.c.l.b16 %v815
      %v1110 = vunpack.c.h.b16 %v815
      %v1111 = vunpack.c.l.b16 %v816
      %v1112 = vunpack.c.h.b16 %v816
      %v1113 = vunpack.c.l.b16 %v817
      %v1114 = vunpack.c.h.b16 %v817
      %v1115 = vunpack.c.l.b16 %v818
      %v1116 = vunpack.c.h.b16 %v818
      %v1117 = vunpack.c.l.b16 %v819
      %v1118 = vunpack.c.h.b16 %v819
      %v1119 = vunpack.c.l.b16 %v820
      %v1120 = vunpack.c.h.b16 %v820
      %v1121 = vunpack.c.l.b16 %v821
      %v1122 = vunpack.c.h.b16 %v821
      %v1123 = vunpack.c.l.b16 %v822
      %v1124 = vunpack.c.h.b16 %v822
      %v1125 = vunpack.c.l.b16 %v823
      %v1126 = vunpack.c.h.b16 %v823
      %v1127 = vunpack.c.l.b16 %v824
      %v1128 = vunpack.c.h.b16 %v824
      %v1129 = vunpack.c.l.b16 %v825
      %v1130 = vunpack.c.h.b16 %v825
      %v1131 = vunpack.c.l.b16 %v826
      %v1132 = vunpack.c.h.b16 %v826
      %v1133 = vunpack.c.l.b16 %v827
      %v1134 = vunpack.c.h.b16 %v827
      %v1135 = vunpack.c.l.b16 %v828
      %v1136 = vunpack.c.h.b16 %v828
      %v1137 = vunpack.c.l.b16 %v829
      %v1138 = vunpack.c.h.b16 %v829
      %v1139 = vunpack.c.l.b16 %v830
      %v1140 = vunpack.c.h.b16 %v830
      %v1141 = vunpack.c.l.b16 %v831
      %v1142 = vunpack.c.h.b16 %v831
      %v1143 = vunpack.c.l.b16 %v832
      %v1144 = vunpack.c.h.b16 %v832
      %v1145 = vunpack.c.l.b16 %v833
      %v1146 = vunpack.c.h.b16 %v833
      %v1147 = vunpack.c.l.b16 %v834
      %v1148 = vunpack.c.h.b16 %v834
      %v1149 = vunpack.c.l.b16 %v835
      %v1150 = vunpack.c.h.b16 %v835
      %v1151 = vunpack.c.l.b16 %v836
      %v1152 = vunpack.c.h.b16 %v836
      %v1153 = vunpack.c.l.b16 %v837
      %v1154 = vunpack.c.h.b16 %v837
      %v1155 = vunpack.c.l.b16 %v838
      %v1156 = vunpack.c.h.b16 %v838
      %v1157 = vunpack.c.l.b16 %v839
      %v1158 = vunpack.c.h.b16 %v839
      %v1159 = vunpack.c.l.b16 %v840
      %v1160 = vunpack.c.h.b16 %v840
      %v1161 = vunpack.c.l.b16 %v841
      %v1162 = vunpack.c.h.b16 %v841
      %v1163 = vunpack.c.l.b16 %v842
      %v1164 = vunpack.c.h.b16 %v842
      %v1165 = vunpack.c.l.b16 %v843
      %v1166 = vunpack.c.h.b16 %v843
      %v1167 = vunpack.c.l.b16 %v844
      %v1168 = vunpack.c.h.b16 %v844
      %v1169 = vunpack.c.l.b16 %v845
      %v1170 = vunpack.c.h.b16 %v845
      %v1171 = vunpack.c.l.b16 %v846
      %v1172 = vunpack.c.h.b16 %v846
      %v1173 = vunpack.c.l.b16 %v847
      %v1174 = vunpack.c.h.b16 %v847
      %v1175 = vunpack.c.l.b16 %v848
      %v1176 = vunpack.c.h.b16 %v848
      %v1177 = vunpack.c.l.b16 %v849
      %v1178 = vunpack.c.h.b16 %v849
      %v1179 = vunpack.c.l.b16 %v850
      %v1180 = vunpack.c.h.b16 %v850
      %v1181 = vunpack.c.l.b16 %v851
      %v1182 = vunpack.c.h.b16 %v851
      %v1183 = vunpack.c.l.b16 %v852
      %v1184 = vunpack.c.h.b16 %v852
      %v1185 = vunpack.c.l.b16 %v853
      %v1186 = vunpack.c.h.b16 %v853
      %v1187 = vunpack.c.l.b16 %v854
      %v1188 = vunpack.c.h.b16 %v854
      %v1189 = vunpack.c.l.b16 %v855
      %v1190 = vunpack.c.h.b16 %v855
      %v1191 = vunpack.c.l.b16 %v856
      %v1192 = vunpack.c.h.b16 %v856
      %v1193 = vunpack.c.l.b16 %v857
      %v1194 = vunpack.c.h.b16 %v857
      %v1195 = vunpack.c.l.b16 %v858
      %v1196 = vunpack.c.h.b16 %v858
      %v1197 = vunpack.c.l.b16 %v859
      %v1198 = vunpack.c.h.b16 %v859
      %v1199 = vunpack.c.l.b16 %v860
      %v1200 = vunpack.c.h.b16 %v860
      %v1201 = vunpack.c.l.b16 %v861
      %v1202 = vunpack.c.h.b16 %v861
      %v1203 = vunpack.c.l.b16 %v862
      %v1204 = vunpack.c.h.b16 %v862
      %v1205 = vunpack.c.l.b16 %v863
      %v1206 = vunpack.c.h.b16 %v863
      %v1207 = vunpack.c.l.b16 %v864
      %v1208 = vunpack.c.h.b16 %v864
      %v1209 = vunpack.c.l.b16 %v865
      %v1210 = vunpack.c.h.b16 %v865
      %v1211 = vunpack.c.l.b16 %v866
      %v1212 = vunpack.c.h.b16 %v866
      %v1213 = vunpack.c.l.b16 %v867
      %v1214 = vunpack.c.h.b16 %v867
      %v1215 = vunpack.c.l.b16 %v868
      %v1216 = vunpack.c.h.b16 %v868
      %v1217 = vunpack.c.l.b16 %v869
      %v1218 = vunpack.c.h.b16 %v869
      %v1219 = vunpack.c.l.b16 %v870
      %v1220 = vunpack.c.h.b16 %v870
      %v1221 = vunpack.c.l.b16 %v871
      %v1222 = vunpack.c.h.b16 %v871
      %v1223 = vunpack.c.l.b16 %v872
      %v1224 = vunpack.c.h.b16 %v872
      %v1225 = vunpack.c.l.b16 %v873
      %v1226 = vunpack.c.h.b16 %v873
      %v1227 = vunpack.c.l.b16 %v874
      %v1228 = vunpack.c.h.b16 %v874
      %v1229 = vunpack.c.l.b16 %v875
      %v1230 = vunpack.c.h.b16 %v875
      %v1231 = vunpack.c.l.b16 %v876
      %v1232 = vunpack.c.h.b16 %v876
      %v1233 = vunpack.c.l.b16 %v877
      %v1234 = vunpack.c.h.b16 %v877
      %v1235 = vunpack.c.l.b16 %v878
      %v1236 = vunpack.c.h.b16 %v878
      %v1237 = vunpack.c.l.b16 %v879
      %v1238 = vunpack.c.h.b16 %v879
      %v1239 = vunpack.c.l.b16 %v880
      %v1240 = vunpack.c.h.b16 %v880
      %v1241 = vunpack.c.l.b16 %v881
      %v1242 = vunpack.c.h.b16 %v881
      %v1243 = vunpack.c.l.b16 %v882
      %v1244 = vunpack.c.h.b16 %v882
      %v1245 = vunpack.c.l.b16 %v883
      %v1246 = vunpack.c.h.b16 %v883
      %v1247 = vunpack.c.l.b16 %v884
      %v1248 = vunpack.c.h.b16 %v884
      %v1249 = vunpack.c.l.b16 %v885
      %v1250 = vunpack.c.h.b16 %v885
      %v1251 = vunpack.c.l.b16 %v886
      %v1252 = vunpack.c.h.b16 %v886
      %v1253 = vunpack.c.l.b16 %v887
      %v1254 = vunpack.c.h.b16 %v887
      %v1255 = vunpack.c.l.b16 %v888
      %v1256 = vunpack.c.h.b16 %v888
      %v1257 = vunpack.c.l.b16 %v889
      %v1258 = vunpack.c.h.b16 %v889
      %v1259 = vunpack.c.l.b16 %v890
      %v1260 = vunpack.c.h.b16 %v890
      %v1261 = vunpack.c.l.b16 %v891
      %v1262 = vunpack.c.h.b16 %v891
      %v1263 = vunpack.c.l.b16 %v892
      %v1264 = vunpack.c.h.b16 %v892
      %v1265 = vunpack.c.l.b16 %v893
      %v1266 = vunpack.c.h.b16 %v893
      %v1267 = vunpack.c.l.b16 %v894
      %v1268 = vunpack.c.h.b16 %v894
      %v1269 = vunpack.c.l.b16 %v895
      %v1270 = vunpack.c.h.b16 %v895
      %v1271 = vunpack.c.l.b16 %v896
      %v1272 = vunpack.c.h.b16 %v896
      %v1273 = vunpack.c.l.b16 %v897
      %v1274 = vunpack.c.h.b16 %v897
      %v1275 = vunpack.c.l.b16 %v898
      %v1276 = vunpack.c.h.b16 %v898
      %v1277 = vunpack.c.l.b16 %v899
      %v1278 = vunpack.c.h.b16 %v899
      %v1279 = vunpack.c.l.b16 %v900
      %v1280 = vunpack.c.h.b16 %v900
      %v1281 = vunpack.c.l.b16 %v901
      %v1282 = vunpack.c.h.b16 %v901
      %v1283 = vunpack.c.l.b16 %v902
      %v1284 = vunpack.c.h.b16 %v902
      %v1285 = vunpack.c.l.b16 %v903
      %v1286 = vunpack.c.h.b16 %v903
      %v1287 = vunpack.c.l.b16 %v904
      %v1288 = vunpack.c.h.b16 %v904
      %v1289 = vpack.c.b16 %v1035, %v1033
      %v1290 = vpack.c.b16 %v1036, %v1034
      %v1291 = vpack.c.b16 %v1039, %v1037
      %v1292 = vpack.c.b16 %v1040, %v1038
      %v1293 = vpack.c.b16 %v1043, %v1041
      %v1294 = vpack.c.b16 %v1044, %v1042
      %v1295 = vpack.c.b16 %v1047, %v1045
      %v1296 = vpack.c.b16 %v1048, %v1046
      %v1297 = vpack.c.b16 %v1051, %v1049
      %v1298 = vpack.c.b16 %v1052, %v1050
      %v1299 = vpack.c.b16 %v1055, %v1053
      %v1300 = vpack.c.b16 %v1056, %v1054
      %v1301 = vpack.c.b16 %v1059, %v1057
      %v1302 = vpack.c.b16 %v1060, %v1058
      %v1303 = vpack.c.b16 %v1063, %v1061
      %v1304 = vpack.c.b16 %v1064, %v1062
      %v1305 = vpack.c.b16 %v1067, %v1065
      %v1306 = vpack.c.b16 %v1068, %v1066
      %v1307 = vpack.c.b16 %v1071, %v1069
      %v1308 = vpack.c.b16 %v1072, %v1070
      %v1309 = vpack.c.b16 %v1075, %v1073
      %v1310 = vpack.c.b16 %v1076, %v1074
      %v1311 = vpack.c.b16 %v1079, %v1077
      %v1312 = vpack.c.b16 %v1080, %v1078
      %v1313 = vpack.c.b16 %v1083, %v1081
      %v1314 = vpack.c.b16 %v1084, %v1082
      %v1315 = vpack.c.b16 %v1087, %v1085
      %v1316 = vpack.c.b16 %v1088, %v1086
      %v1317 = vpack.c.b16 %v1091, %v1089
      %v1318 = vpack.c.b16 %v1092, %v1090
      %v1319 = vpack.c.b16 %v1095, %v1093
      %v1320 = vpack.c.b16 %v1096, %v1094
      %v1321 = vpack.c.b16 %v1099, %v1097
      %v1322 = vpack.c.b16 %v1100, %v1098
      %v1323 = vpack.c.b16 %v1103, %v1101
      %v1324 = vpack.c.b16 %v1104, %v1102
      %v1325 = vpack.c.b16 %v1107, %v1105
      %v1326 = vpack.c.b16 %v1108, %v1106
      %v1327 = vpack.c.b16 %v1111, %v1109
      %v1328 = vpack.c.b16 %v1112, %v1110
      %v1329 = vpack.c.b16 %v1115, %v1113
      %v1330 = vpack.c.b16 %v1116, %v1114
      %v1331 = vpack.c.b16 %v1119, %v1117
      %v1332 = vpack.c.b16 %v1120, %v1118
      %v1333 = vpack.c.b16 %v1123, %v1121
      %v1334 = vpack.c.b16 %v1124, %v1122
      %v1335 = vpack.c.b16 %v1127, %v1125
      %v1336 = vpack.c.b16 %v1128, %v1126
      %v1337 = vpack.c.b16 %v1131, %v1129
      %v1338 = vpack.c.b16 %v1132, %v1130
      %v1339 = vpack.c.b16 %v1135, %v1133
      %v1340 = vpack.c.b16 %v1136, %v1134
      %v1341 = vpack.c.b16 %v1139, %v1137
      %v1342 = vpack.c.b16 %v1140, %v1138
      %v1343 = vpack.c.b16 %v1143, %v1141
      %v1344 = vpack.c.b16 %v1144, %v1142
      %v1345 = vpack.c.b16 %v1147, %v1145
      %v1346 = vpack.c.b16 %v1148, %v1146
      %v1347 = vpack.c.b16 %v1151, %v1149
      %v1348 = vpack.c.b16 %v1152, %v1150
      %v1349 = vpack.c.b16 %v1155, %v1153
      %v1350 = vpack.c.b16 %v1156, %v1154
      %v1351 = vpack.c.b16 %v1159, %v1157
      %v1352 = vpack.c.b16 %v1160, %v1158
      %v1353 = vpack.c.b16 %v1163, %v1161
      %v1354 = vpack.c.b16 %v1164, %v1162
      %v1355 = vpack.c.b16 %v1167, %v1165
      %v1356 = vpack.c.b16 %v1168, %v1166
      %v1357 = vpack.c.b16 %v1171, %v1169
      %v1358 = vpack.c.b16 %v1172, %v1170
      %v1359 = vpack.c.b16 %v1175, %v1173
      %v1360 = vpack.c.b16 %v1176, %v1174
      %v1361 = vpack.c.b16 %v1179, %v1177
      %v1362 = vpack.c.b16 %v1180, %v1178
      %v1363 = vpack.c.b16 %v1183, %v1181
      %v1364 = vpack.c.b16 %v1184, %v1182
      %v1365 = vpack.c.b16 %v1187, %v1185
      %v1366 = vpack.c.b16 %v1188, %v1186
      %v1367 = vpack.c.b16 %v1191, %v1189
      %v1368 = vpack.c.b16 %v1192, %v1190
      %v1369 = vpack.c.b16 %v1195, %v1193
      %v1370 = vpack.c.b16 %v1196, %v1194
      %v1371 = vpack.c.b16 %v1199, %v1197
      %v1372 = vpack.c.b16 %v1200, %v1198
      %v1373 = vpack.c.b16 %v1203, %v1201
      %v1374 = vpack.c.b16 %v1204, %v1202
      %v1375 = vpack.c.b16 %v1207, %v1205
      %v1376 = vpack.c.b16 %v1208, %v1206
      %v1377 = vpack.c.b16 %v1211, %v1209
      %v1378 = vpack.c.b16 %v1212, %v1210
      %v1379 = vpack.c.b16 %v1215, %v1213
      %v1380 = vpack.c.b16 %v1216, %v1214
      %v1381 = vpack.c.b16 %v1219, %v1217
      %v1382 = vpack.c.b16 %v1220, %v1218
      %v1383 = vpack.c.b16 %v1223, %v1221
      %v1384 = vpack.c.b16 %v1224, %v1222
      %v1385 = vpack.c.b16 %v1227, %v1225
      %v1386 = vpack.c.b16 %v1228, %v1226
      %v1387 = vpack.c.b16 %v1231, %v1229
      %v1388 = vpack.c.b16 %v1232, %v1230
      %v1389 = vpack.c.b16 %v1235, %v1233
      %v1390 = vpack.c.b16 %v1236, %v1234
      %v1391 = vpack.c.b16 %v1239, %v1237
      %v1392 = vpack.c.b16 %v1240, %v1238
      %v1393 = vpack.c.b16 %v1243, %v1241
      %v1394 = vpack.c.b16 %v1244, %v1242
      %v1395 = vpack.c.b16 %v1247, %v1245
      %v1396 = vpack.c.b16 %v1248, %v1246
      %v1397 = vpack.c.b16 %v1251, %v1249
      %v1398 = vpack.c.b16 %v1252, %v1250
      %v1399 = vpack.c.b16 %v1255, %v1253
      %v1400 = vpack.c.b16 %v1256, %v1254
      %v1401 = vpack.c.b16 %v1259, %v1257
      %v1402 = vpack.c.b16 %v1260, %v1258
      %v1403 = vpack.c.b16 %v1263, %v1261
      %v1404 = vpack.c.b16 %v1264, %v1262
      %v1405 = vpack.c.b16 %v1267, %v1265
      %v1406 = vpack.c.b16 %v1268, %v1266
      %v1407 = vpack.c.b16 %v1271, %v1269
      %v1408 = vpack.c.b16 %v1272, %v1270
      %v1409 = vpack.c.b16 %v1275, %v1273
      %v1410 = vpack.c.b16 %v1276, %v1274
      %v1411 = vpack.c.b16 %v1279, %v1277
      %v1412 = vpack.c.b16 %v1280, %v1278
      %v1413 = vpack.c.b16 %v1283, %v1281
      %v1414 = vpack.c.b16 %v1284, %v1282
      %v1415 = vpack.c.b16 %v1287, %v1285
      %v1416 = vpack.c.b16 %v1288, %v1286
      %1545 = vmatpush.bf16.msra.mxu0 %v768
      %1546 = vmatpush.bf16.msra.mxu0 %v767
      %1547 = vmatpush.bf16.msra.mxu0 %v766
      %1548 = vmatpush.bf16.msra.mxu0 %v765
      %1549 = vmatpush.bf16.msra.mxu0 %v764
      %1550 = vmatpush.bf16.msra.mxu0 %v763
      %1551 = vmatpush.bf16.msra.mxu0 %v762
      %1552 = vmatpush.bf16.msra.mxu0 %v761
      %1553 = vmatmul.bf16.gmra.mxu0 %v1289
      %v1554 = vpop.f32.mrf.mxu0
      %v1555 = vadd.f32 0.0, %v1554
      %v1556 = vpop.f32.mrf.mxu0
      %v1557 = vadd.f32 0.0, %v1556
      %1558 = vmatmul.bf16.gmra.mxu0 %v1291
      %v1559 = vpop.f32.mrf.mxu0
      %v1560 = vadd.f32 0.0, %v1559
      %v1561 = vpop.f32.mrf.mxu0
      %v1562 = vadd.f32 0.0, %v1561
      %1563 = vmatmul.bf16.gmra.mxu0 %v1293
      %v1564 = vpop.f32.mrf.mxu0
      %v1565 = vadd.f32 0.0, %v1564
      %v1566 = vpop.f32.mrf.mxu0
      %v1567 = vadd.f32 0.0, %v1566
      %1568 = vmatmul.bf16.gmra.mxu0 %v1295
      %v1569 = vpop.f32.mrf.mxu0
      %v1570 = vadd.f32 0.0, %v1569
      %v1571 = vpop.f32.mrf.mxu0
      %v1572 = vadd.f32 0.0, %v1571
      %1573 = vmatmul.bf16.gmra.mxu0 %v1297
      %v1574 = vpop.f32.mrf.mxu0
      %v1575 = vadd.f32 0.0, %v1574
      %v1576 = vpop.f32.mrf.mxu0
      %v1577 = vadd.f32 0.0, %v1576
      %1578 = vmatmul.bf16.gmra.mxu0 %v1299
      %v1579 = vpop.f32.mrf.mxu0
      %v1580 = vadd.f32 0.0, %v1579
      %v1581 = vpop.f32.mrf.mxu0
      %v1582 = vadd.f32 0.0, %v1581
      %1583 = vmatmul.bf16.gmra.mxu0 %v1301
      %v1584 = vpop.f32.mrf.mxu0
      %v1585 = vadd.f32 0.0, %v1584
      %v1586 = vpop.f32.mrf.mxu0
      %v1587 = vadd.f32 0.0, %v1586
      %1588 = vmatmul.bf16.gmra.mxu0 %v1303
      %v1589 = vpop.f32.mrf.mxu0
      %v1590 = vadd.f32 0.0, %v1589
      %v1591 = vpop.f32.mrf.mxu0
      %v1592 = vadd.f32 0.0, %v1591
      %1593 = vmatmul.bf16.gmra.mxu0 %v1305
      %v1594 = vpop.f32.mrf.mxu0
      %v1595 = vadd.f32 0.0, %v1594
      %v1596 = vpop.f32.mrf.mxu0
      %v1597 = vadd.f32 0.0, %v1596
      %1598 = vmatmul.bf16.gmra.mxu0 %v1307
      %v1599 = vpop.f32.mrf.mxu0
      %v1600 = vadd.f32 0.0, %v1599
      %v1601 = vpop.f32.mrf.mxu0
      %v1602 = vadd.f32 0.0, %v1601
      %1603 = vmatmul.bf16.gmra.mxu0 %v1309
      %v1604 = vpop.f32.mrf.mxu0
      %v1605 = vadd.f32 0.0, %v1604
      %v1606 = vpop.f32.mrf.mxu0
      %v1607 = vadd.f32 0.0, %v1606
      %1608 = vmatmul.bf16.gmra.mxu0 %v1311
      %v1609 = vpop.f32.mrf.mxu0
      %v1610 = vadd.f32 0.0, %v1609
      %v1611 = vpop.f32.mrf.mxu0
      %v1612 = vadd.f32 0.0, %v1611
      %1613 = vmatmul.bf16.gmra.mxu0 %v1313
      %v1614 = vpop.f32.mrf.mxu0
      %v1615 = vadd.f32 0.0, %v1614
      %v1616 = vpop.f32.mrf.mxu0
      %v1617 = vadd.f32 0.0, %v1616
      %1618 = vmatmul.bf16.gmra.mxu0 %v1315
      %v1619 = vpop.f32.mrf.mxu0
      %v1620 = vadd.f32 0.0, %v1619
      %v1621 = vpop.f32.mrf.mxu0
      %v1622 = vadd.f32 0.0, %v1621
      %1623 = vmatmul.bf16.gmra.mxu0 %v1317
      %v1624 = vpop.f32.mrf.mxu0
      %v1625 = vadd.f32 0.0, %v1624
      %v1626 = vpop.f32.mrf.mxu0
      %v1627 = vadd.f32 0.0, %v1626
      %1628 = vmatmul.bf16.gmra.mxu0 %v1319
      %v1629 = vpop.f32.mrf.mxu0
      %v1630 = vadd.f32 0.0, %v1629
      %v1631 = vpop.f32.mrf.mxu0
      %v1632 = vadd.f32 0.0, %v1631
      %1633 = vmatmul.bf16.gmra.mxu0 %v1321
      %v1634 = vpop.f32.mrf.mxu0
      %v1635 = vadd.f32 0.0, %v1634
      %v1636 = vpop.f32.mrf.mxu0
      %v1637 = vadd.f32 0.0, %v1636
      %1638 = vmatmul.bf16.gmra.mxu0 %v1323
      %v1639 = vpop.f32.mrf.mxu0
      %v1640 = vadd.f32 0.0, %v1639
      %v1641 = vpop.f32.mrf.mxu0
      %v1642 = vadd.f32 0.0, %v1641
      %1643 = vmatmul.bf16.gmra.mxu0 %v1325
      %v1644 = vpop.f32.mrf.mxu0
      %v1645 = vadd.f32 0.0, %v1644
      %v1646 = vpop.f32.mrf.mxu0
      %v1647 = vadd.f32 0.0, %v1646
      %1648 = vmatmul.bf16.gmra.mxu0 %v1327
      %v1649 = vpop.f32.mrf.mxu0
      %v1650 = vadd.f32 0.0, %v1649
      %v1651 = vpop.f32.mrf.mxu0
      %v1652 = vadd.f32 0.0, %v1651
      %1653 = vmatmul.bf16.gmra.mxu0 %v1329
      %v1654 = vpop.f32.mrf.mxu0
      %v1655 = vadd.f32 0.0, %v1654
      %v1656 = vpop.f32.mrf.mxu0
      %v1657 = vadd.f32 0.0, %v1656
      %1658 = vmatmul.bf16.gmra.mxu0 %v1331
      %v1659 = vpop.f32.mrf.mxu0
      %v1660 = vadd.f32 0.0, %v1659
      %v1661 = vpop.f32.mrf.mxu0
      %v1662 = vadd.f32 0.0, %v1661
      %1663 = vmatmul.bf16.gmra.mxu0 %v1333
      %v1664 = vpop.f32.mrf.mxu0
      %v1665 = vadd.f32 0.0, %v1664
      %v1666 = vpop.f32.mrf.mxu0
      %v1667 = vadd.f32 0.0, %v1666
      %1668 = vmatmul.bf16.gmra.mxu0 %v1335
      %v1669 = vpop.f32.mrf.mxu0
      %v1670 = vadd.f32 0.0, %v1669
      %v1671 = vpop.f32.mrf.mxu0
      %v1672 = vadd.f32 0.0, %v1671
      %1673 = vmatmul.bf16.gmra.mxu0 %v1337
      %v1674 = vpop.f32.mrf.mxu0
      %v1675 = vadd.f32 0.0, %v1674
      %v1676 = vpop.f32.mrf.mxu0
      %v1677 = vadd.f32 0.0, %v1676
      %1678 = vmatmul.bf16.gmra.mxu0 %v1339
      %v1679 = vpop.f32.mrf.mxu0
      %v1680 = vadd.f32 0.0, %v1679
      %v1681 = vpop.f32.mrf.mxu0
      %v1682 = vadd.f32 0.0, %v1681
      %1683 = vmatmul.bf16.gmra.mxu0 %v1341
      %v1684 = vpop.f32.mrf.mxu0
      %v1685 = vadd.f32 0.0, %v1684
      %v1686 = vpop.f32.mrf.mxu0
      %v1687 = vadd.f32 0.0, %v1686
      %1688 = vmatmul.bf16.gmra.mxu0 %v1343
      %v1689 = vpop.f32.mrf.mxu0
      %v1690 = vadd.f32 0.0, %v1689
      %v1691 = vpop.f32.mrf.mxu0
      %v1692 = vadd.f32 0.0, %v1691
      %1693 = vmatmul.bf16.gmra.mxu0 %v1345
      %v1694 = vpop.f32.mrf.mxu0
      %v1695 = vadd.f32 0.0, %v1694
      %v1696 = vpop.f32.mrf.mxu0
      %v1697 = vadd.f32 0.0, %v1696
      %1698 = vmatmul.bf16.gmra.mxu0 %v1347
      %v1699 = vpop.f32.mrf.mxu0
      %v1700 = vadd.f32 0.0, %v1699
      %v1701 = vpop.f32.mrf.mxu0
      %v1702 = vadd.f32 0.0, %v1701
      %1703 = vmatmul.bf16.gmra.mxu0 %v1349
      %v1704 = vpop.f32.mrf.mxu0
      %v1705 = vadd.f32 0.0, %v1704
      %v1706 = vpop.f32.mrf.mxu0
      %v1707 = vadd.f32 0.0, %v1706
      %1708 = vmatmul.bf16.gmra.mxu0 %v1351
      %v1709 = vpop.f32.mrf.mxu0
      %v1710 = vadd.f32 0.0, %v1709
      %v1711 = vpop.f32.mrf.mxu0
      %v1712 = vadd.f32 0.0, %v1711
      %1713 = vmatmul.bf16.gmra.mxu0 %v1353
      %v1714 = vpop.f32.mrf.mxu0
      %v1715 = vadd.f32 0.0, %v1714
      %v1716 = vpop.f32.mrf.mxu0
      %v1717 = vadd.f32 0.0, %v1716
      %1718 = vmatmul.bf16.gmra.mxu0 %v1355
      %v1719 = vpop.f32.mrf.mxu0
      %v1720 = vadd.f32 0.0, %v1719
      %v1721 = vpop.f32.mrf.mxu0
      %v1722 = vadd.f32 0.0, %v1721
      %1723 = vmatmul.bf16.gmra.mxu0 %v1357
      %v1724 = vpop.f32.mrf.mxu0
      %v1725 = vadd.f32 0.0, %v1724
      %v1726 = vpop.f32.mrf.mxu0
      %v1727 = vadd.f32 0.0, %v1726
      %1728 = vmatmul.bf16.gmra.mxu0 %v1359
      %v1729 = vpop.f32.mrf.mxu0
      %v1730 = vadd.f32 0.0, %v1729
      %v1731 = vpop.f32.mrf.mxu0
      %v1732 = vadd.f32 0.0, %v1731
      %1733 = vmatmul.bf16.gmra.mxu0 %v1361
      %v1734 = vpop.f32.mrf.mxu0
      %v1735 = vadd.f32 0.0, %v1734
      %v1736 = vpop.f32.mrf.mxu0
      %v1737 = vadd.f32 0.0, %v1736
      %1738 = vmatmul.bf16.gmra.mxu0 %v1363
      %v1739 = vpop.f32.mrf.mxu0
      %v1740 = vadd.f32 0.0, %v1739
      %v1741 = vpop.f32.mrf.mxu0
      %v1742 = vadd.f32 0.0, %v1741
      %1743 = vmatmul.bf16.gmra.mxu0 %v1365
      %v1744 = vpop.f32.mrf.mxu0
      %v1745 = vadd.f32 0.0, %v1744
      %v1746 = vpop.f32.mrf.mxu0
      %v1747 = vadd.f32 0.0, %v1746
      %1748 = vmatmul.bf16.gmra.mxu0 %v1367
      %v1749 = vpop.f32.mrf.mxu0
      %v1750 = vadd.f32 0.0, %v1749
      %v1751 = vpop.f32.mrf.mxu0
      %v1752 = vadd.f32 0.0, %v1751
      %1753 = vmatmul.bf16.gmra.mxu0 %v1369
      %v1754 = vpop.f32.mrf.mxu0
      %v1755 = vadd.f32 0.0, %v1754
      %v1756 = vpop.f32.mrf.mxu0
      %v1757 = vadd.f32 0.0, %v1756
      %1758 = vmatmul.bf16.gmra.mxu0 %v1371
      %v1759 = vpop.f32.mrf.mxu0
      %v1760 = vadd.f32 0.0, %v1759
      %v1761 = vpop.f32.mrf.mxu0
      %v1762 = vadd.f32 0.0, %v1761
      %1763 = vmatmul.bf16.gmra.mxu0 %v1373
      %v1764 = vpop.f32.mrf.mxu0
      %v1765 = vadd.f32 0.0, %v1764
      %v1766 = vpop.f32.mrf.mxu0
      %v1767 = vadd.f32 0.0, %v1766
      %1768 = vmatmul.bf16.gmra.mxu0 %v1375
      %v1769 = vpop.f32.mrf.mxu0
      %v1770 = vadd.f32 0.0, %v1769
      %v1771 = vpop.f32.mrf.mxu0
      %v1772 = vadd.f32 0.0, %v1771
      %1773 = vmatmul.bf16.gmra.mxu0 %v1377
      %v1774 = vpop.f32.mrf.mxu0
      %v1775 = vadd.f32 0.0, %v1774
      %v1776 = vpop.f32.mrf.mxu0
      %v1777 = vadd.f32 0.0, %v1776
      %1778 = vmatmul.bf16.gmra.mxu0 %v1379
      %v1779 = vpop.f32.mrf.mxu0
      %v1780 = vadd.f32 0.0, %v1779
      %v1781 = vpop.f32.mrf.mxu0
      %v1782 = vadd.f32 0.0, %v1781
      %1783 = vmatmul.bf16.gmra.mxu0 %v1381
      %v1784 = vpop.f32.mrf.mxu0
      %v1785 = vadd.f32 0.0, %v1784
      %v1786 = vpop.f32.mrf.mxu0
      %v1787 = vadd.f32 0.0, %v1786
      %1788 = vmatmul.bf16.gmra.mxu0 %v1383
      %v1789 = vpop.f32.mrf.mxu0
      %v1790 = vadd.f32 0.0, %v1789
      %v1791 = vpop.f32.mrf.mxu0
      %v1792 = vadd.f32 0.0, %v1791
      %1793 = vmatmul.bf16.gmra.mxu0 %v1385
      %v1794 = vpop.f32.mrf.mxu0
      %v1795 = vadd.f32 0.0, %v1794
      %v1796 = vpop.f32.mrf.mxu0
      %v1797 = vadd.f32 0.0, %v1796
      %1798 = vmatmul.bf16.gmra.mxu0 %v1387
      %v1799 = vpop.f32.mrf.mxu0
      %v1800 = vadd.f32 0.0, %v1799
      %v1801 = vpop.f32.mrf.mxu0
      %v1802 = vadd.f32 0.0, %v1801
      %1803 = vmatmul.bf16.gmra.mxu0 %v1389
      %v1804 = vpop.f32.mrf.mxu0
      %v1805 = vadd.f32 0.0, %v1804
      %v1806 = vpop.f32.mrf.mxu0
      %v1807 = vadd.f32 0.0, %v1806
      %1808 = vmatmul.bf16.gmra.mxu0 %v1391
      %v1809 = vpop.f32.mrf.mxu0
      %v1810 = vadd.f32 0.0, %v1809
      %v1811 = vpop.f32.mrf.mxu0
      %v1812 = vadd.f32 0.0, %v1811
      %1813 = vmatmul.bf16.gmra.mxu0 %v1393
      %v1814 = vpop.f32.mrf.mxu0
      %v1815 = vadd.f32 0.0, %v1814
      %v1816 = vpop.f32.mrf.mxu0
      %v1817 = vadd.f32 0.0, %v1816
      %1818 = vmatmul.bf16.gmra.mxu0 %v1395
      %v1819 = vpop.f32.mrf.mxu0
      %v1820 = vadd.f32 0.0, %v1819
      %v1821 = vpop.f32.mrf.mxu0
      %v1822 = vadd.f32 0.0, %v1821
      %1823 = vmatmul.bf16.gmra.mxu0 %v1397
      %v1824 = vpop.f32.mrf.mxu0
      %v1825 = vadd.f32 0.0, %v1824
      %v1826 = vpop.f32.mrf.mxu0
      %v1827 = vadd.f32 0.0, %v1826
      %1828 = vmatmul.bf16.gmra.mxu0 %v1399
      %v1829 = vpop.f32.mrf.mxu0
      %v1830 = vadd.f32 0.0, %v1829
      %v1831 = vpop.f32.mrf.mxu0
      %v1832 = vadd.f32 0.0, %v1831
      %1833 = vmatmul.bf16.gmra.mxu0 %v1401
      %v1834 = vpop.f32.mrf.mxu0
      %v1835 = vadd.f32 0.0, %v1834
      %v1836 = vpop.f32.mrf.mxu0
      %v1837 = vadd.f32 0.0, %v1836
      %1838 = vmatmul.bf16.gmra.mxu0 %v1403
      %v1839 = vpop.f32.mrf.mxu0
      %v1840 = vadd.f32 0.0, %v1839
      %v1841 = vpop.f32.mrf.mxu0
      %v1842 = vadd.f32 0.0, %v1841
      %1843 = vmatmul.bf16.gmra.mxu0 %v1405
      %v1844 = vpop.f32.mrf.mxu0
      %v1845 = vadd.f32 0.0, %v1844
      %v1846 = vpop.f32.mrf.mxu0
      %v1847 = vadd.f32 0.0, %v1846
      %1848 = vmatmul.bf16.gmra.mxu0 %v1407
      %v1849 = vpop.f32.mrf.mxu0
      %v1850 = vadd.f32 0.0, %v1849
      %v1851 = vpop.f32.mrf.mxu0
      %v1852 = vadd.f32 0.0, %v1851
      %1853 = vmatmul.bf16.gmra.mxu0 %v1409
      %v1854 = vpop.f32.mrf.mxu0
      %v1855 = vadd.f32 0.0, %v1854
      %v1856 = vpop.f32.mrf.mxu0
      %v1857 = vadd.f32 0.0, %v1856
      %1858 = vmatmul.bf16.gmra.mxu0 %v1411
      %v1859 = vpop.f32.mrf.mxu0
      %v1860 = vadd.f32 0.0, %v1859
      %v1861 = vpop.f32.mrf.mxu0
      %v1862 = vadd.f32 0.0, %v1861
      %1863 = vmatmul.bf16.gmra.mxu0 %v1413
      %v1864 = vpop.f32.mrf.mxu0
      %v1865 = vadd.f32 0.0, %v1864
      %v1866 = vpop.f32.mrf.mxu0
      %v1867 = vadd.f32 0.0, %v1866
      %1868 = vmatmul.bf16.gmra.mxu0 %v1415
      %v1869 = vpop.f32.mrf.mxu0
      %v1870 = vadd.f32 0.0, %v1869
      %v1871 = vpop.f32.mrf.mxu0
      %v1872 = vadd.f32 0.0, %v1871
      %1873 = vdwg.mxu0
      %1874 = vmatpush.bf16.msra.mxu0 %v776
      %1875 = vmatpush.bf16.msra.mxu0 %v775
      %1876 = vmatpush.bf16.msra.mxu0 %v774
      %1877 = vmatpush.bf16.msra.mxu0 %v773
      %1878 = vmatpush.bf16.msra.mxu0 %v772
      %1879 = vmatpush.bf16.msra.mxu0 %v771
      %1880 = vmatpush.bf16.msra.mxu0 %v770
      %1881 = vmatpush.bf16.msra.mxu0 %v769
      %1882 = vmatmul.bf16.gmra.mxu0 %v1290
      %v1883 = vpop.f32.mrf.mxu0
      %v1884 = vadd.f32 %v1555, %v1883
      %v1885 = vpop.f32.mrf.mxu0
      %v1886 = vadd.f32 %v1557, %v1885
      %1887 = vmatmul.bf16.gmra.mxu0 %v1292
      %v1888 = vpop.f32.mrf.mxu0
      %v1889 = vadd.f32 %v1560, %v1888
      %v1890 = vpop.f32.mrf.mxu0
      %v1891 = vadd.f32 %v1562, %v1890
      %1892 = vmatmul.bf16.gmra.mxu0 %v1294
      %v1893 = vpop.f32.mrf.mxu0
      %v1894 = vadd.f32 %v1565, %v1893
      %v1895 = vpop.f32.mrf.mxu0
      %v1896 = vadd.f32 %v1567, %v1895
      %1897 = vmatmul.bf16.gmra.mxu0 %v1296
      %v1898 = vpop.f32.mrf.mxu0
      %v1899 = vadd.f32 %v1570, %v1898
      %v1900 = vpop.f32.mrf.mxu0
      %v1901 = vadd.f32 %v1572, %v1900
      %1902 = vmatmul.bf16.gmra.mxu0 %v1298
      %v1903 = vpop.f32.mrf.mxu0
      %v1904 = vadd.f32 %v1575, %v1903
      %v1905 = vpop.f32.mrf.mxu0
      %v1906 = vadd.f32 %v1577, %v1905
      %1907 = vmatmul.bf16.gmra.mxu0 %v1300
      %v1908 = vpop.f32.mrf.mxu0
      %v1909 = vadd.f32 %v1580, %v1908
      %v1910 = vpop.f32.mrf.mxu0
      %v1911 = vadd.f32 %v1582, %v1910
      %1912 = vmatmul.bf16.gmra.mxu0 %v1302
      %v1913 = vpop.f32.mrf.mxu0
      %v1914 = vadd.f32 %v1585, %v1913
      %v1915 = vpop.f32.mrf.mxu0
      %v1916 = vadd.f32 %v1587, %v1915
      %1917 = vmatmul.bf16.gmra.mxu0 %v1304
      %v1918 = vpop.f32.mrf.mxu0
      %v1919 = vadd.f32 %v1590, %v1918
      %v1920 = vpop.f32.mrf.mxu0
      %v1921 = vadd.f32 %v1592, %v1920
      %1922 = vmatmul.bf16.gmra.mxu0 %v1306
      %v1923 = vpop.f32.mrf.mxu0
      %v1924 = vadd.f32 %v1595, %v1923
      %v1925 = vpop.f32.mrf.mxu0
      %v1926 = vadd.f32 %v1597, %v1925
      %1927 = vmatmul.bf16.gmra.mxu0 %v1308
      %v1928 = vpop.f32.mrf.mxu0
      %v1929 = vadd.f32 %v1600, %v1928
      %v1930 = vpop.f32.mrf.mxu0
      %v1931 = vadd.f32 %v1602, %v1930
      %1932 = vmatmul.bf16.gmra.mxu0 %v1310
      %v1933 = vpop.f32.mrf.mxu0
      %v1934 = vadd.f32 %v1605, %v1933
      %v1935 = vpop.f32.mrf.mxu0
      %v1936 = vadd.f32 %v1607, %v1935
      %1937 = vmatmul.bf16.gmra.mxu0 %v1312
      %v1938 = vpop.f32.mrf.mxu0
      %v1939 = vadd.f32 %v1610, %v1938
      %v1940 = vpop.f32.mrf.mxu0
      %v1941 = vadd.f32 %v1612, %v1940
      %1942 = vmatmul.bf16.gmra.mxu0 %v1314
      %v1943 = vpop.f32.mrf.mxu0
      %v1944 = vadd.f32 %v1615, %v1943
      %v1945 = vpop.f32.mrf.mxu0
      %v1946 = vadd.f32 %v1617, %v1945
      %1947 = vmatmul.bf16.gmra.mxu0 %v1316
      %v1948 = vpop.f32.mrf.mxu0
      %v1949 = vadd.f32 %v1620, %v1948
      %v1950 = vpop.f32.mrf.mxu0
      %v1951 = vadd.f32 %v1622, %v1950
      %1952 = vmatmul.bf16.gmra.mxu0 %v1318
      %v1953 = vpop.f32.mrf.mxu0
      %v1954 = vadd.f32 %v1625, %v1953
      %v1955 = vpop.f32.mrf.mxu0
      %v1956 = vadd.f32 %v1627, %v1955
      %1957 = vmatmul.bf16.gmra.mxu0 %v1320
      %v1958 = vpop.f32.mrf.mxu0
      %v1959 = vadd.f32 %v1630, %v1958
      %v1960 = vpop.f32.mrf.mxu0
      %v1961 = vadd.f32 %v1632, %v1960
      %1962 = vmatmul.bf16.gmra.mxu0 %v1322
      %v1963 = vpop.f32.mrf.mxu0
      %v1964 = vadd.f32 %v1635, %v1963
      %v1965 = vpop.f32.mrf.mxu0
      %v1966 = vadd.f32 %v1637, %v1965
      %1967 = vmatmul.bf16.gmra.mxu0 %v1324
      %v1968 = vpop.f32.mrf.mxu0
      %v1969 = vadd.f32 %v1640, %v1968
      %v1970 = vpop.f32.mrf.mxu0
      %v1971 = vadd.f32 %v1642, %v1970
      %1972 = vmatmul.bf16.gmra.mxu0 %v1326
      %v1973 = vpop.f32.mrf.mxu0
      %v1974 = vadd.f32 %v1645, %v1973
      %v1975 = vpop.f32.mrf.mxu0
      %v1976 = vadd.f32 %v1647, %v1975
      %1977 = vmatmul.bf16.gmra.mxu0 %v1328
      %v1978 = vpop.f32.mrf.mxu0
      %v1979 = vadd.f32 %v1650, %v1978
      %v1980 = vpop.f32.mrf.mxu0
      %v1981 = vadd.f32 %v1652, %v1980
      %1982 = vmatmul.bf16.gmra.mxu0 %v1330
      %v1983 = vpop.f32.mrf.mxu0
      %v1984 = vadd.f32 %v1655, %v1983
      %v1985 = vpop.f32.mrf.mxu0
      %v1986 = vadd.f32 %v1657, %v1985
      %1987 = vmatmul.bf16.gmra.mxu0 %v1332
      %v1988 = vpop.f32.mrf.mxu0
      %v1989 = vadd.f32 %v1660, %v1988
      %v1990 = vpop.f32.mrf.mxu0
      %v1991 = vadd.f32 %v1662, %v1990
      %1992 = vmatmul.bf16.gmra.mxu0 %v1334
      %v1993 = vpop.f32.mrf.mxu0
      %v1994 = vadd.f32 %v1665, %v1993
      %v1995 = vpop.f32.mrf.mxu0
      %v1996 = vadd.f32 %v1667, %v1995
      %1997 = vmatmul.bf16.gmra.mxu0 %v1336
      %v1998 = vpop.f32.mrf.mxu0
      %v1999 = vadd.f32 %v1670, %v1998
      %v2000 = vpop.f32.mrf.mxu0
      %v2001 = vadd.f32 %v1672, %v2000
      %2002 = vmatmul.bf16.gmra.mxu0 %v1338
      %v2003 = vpop.f32.mrf.mxu0
      %v2004 = vadd.f32 %v1675, %v2003
      %v2005 = vpop.f32.mrf.mxu0
      %v2006 = vadd.f32 %v1677, %v2005
      %2007 = vmatmul.bf16.gmra.mxu0 %v1340
      %v2008 = vpop.f32.mrf.mxu0
      %v2009 = vadd.f32 %v1680, %v2008
      %v2010 = vpop.f32.mrf.mxu0
      %v2011 = vadd.f32 %v1682, %v2010
      %2012 = vmatmul.bf16.gmra.mxu0 %v1342
      %v2013 = vpop.f32.mrf.mxu0
      %v2014 = vadd.f32 %v1685, %v2013
      %v2015 = vpop.f32.mrf.mxu0
      %v2016 = vadd.f32 %v1687, %v2015
      %2017 = vmatmul.bf16.gmra.mxu0 %v1344
      %v2018 = vpop.f32.mrf.mxu0
      %v2019 = vadd.f32 %v1690, %v2018
      %v2020 = vpop.f32.mrf.mxu0
      %v2021 = vadd.f32 %v1692, %v2020
      %2022 = vmatmul.bf16.gmra.mxu0 %v1346
      %v2023 = vpop.f32.mrf.mxu0
      %v2024 = vadd.f32 %v1695, %v2023
      %v2025 = vpop.f32.mrf.mxu0
      %v2026 = vadd.f32 %v1697, %v2025
      %2027 = vmatmul.bf16.gmra.mxu0 %v1348
      %v2028 = vpop.f32.mrf.mxu0
      %v2029 = vadd.f32 %v1700, %v2028
      %v2030 = vpop.f32.mrf.mxu0
      %v2031 = vadd.f32 %v1702, %v2030
      %2032 = vmatmul.bf16.gmra.mxu0 %v1350
      %v2033 = vpop.f32.mrf.mxu0
      %v2034 = vadd.f32 %v1705, %v2033
      %v2035 = vpop.f32.mrf.mxu0
      %v2036 = vadd.f32 %v1707, %v2035
      %2037 = vmatmul.bf16.gmra.mxu0 %v1352
      %v2038 = vpop.f32.mrf.mxu0
      %v2039 = vadd.f32 %v1710, %v2038
      %v2040 = vpop.f32.mrf.mxu0
      %v2041 = vadd.f32 %v1712, %v2040
      %2042 = vmatmul.bf16.gmra.mxu0 %v1354
      %v2043 = vpop.f32.mrf.mxu0
      %v2044 = vadd.f32 %v1715, %v2043
      %v2045 = vpop.f32.mrf.mxu0
      %v2046 = vadd.f32 %v1717, %v2045
      %2047 = vmatmul.bf16.gmra.mxu0 %v1356
      %v2048 = vpop.f32.mrf.mxu0
      %v2049 = vadd.f32 %v1720, %v2048
      %v2050 = vpop.f32.mrf.mxu0
      %v2051 = vadd.f32 %v1722, %v2050
      %2052 = vmatmul.bf16.gmra.mxu0 %v1358
      %v2053 = vpop.f32.mrf.mxu0
      %v2054 = vadd.f32 %v1725, %v2053
      %v2055 = vpop.f32.mrf.mxu0
      %v2056 = vadd.f32 %v1727, %v2055
      %2057 = vmatmul.bf16.gmra.mxu0 %v1360
      %v2058 = vpop.f32.mrf.mxu0
      %v2059 = vadd.f32 %v1730, %v2058
      %v2060 = vpop.f32.mrf.mxu0
      %v2061 = vadd.f32 %v1732, %v2060
      %2062 = vmatmul.bf16.gmra.mxu0 %v1362
      %v2063 = vpop.f32.mrf.mxu0
      %v2064 = vadd.f32 %v1735, %v2063
      %v2065 = vpop.f32.mrf.mxu0
      %v2066 = vadd.f32 %v1737, %v2065
      %2067 = vmatmul.bf16.gmra.mxu0 %v1364
      %v2068 = vpop.f32.mrf.mxu0
      %v2069 = vadd.f32 %v1740, %v2068
      %v2070 = vpop.f32.mrf.mxu0
      %v2071 = vadd.f32 %v1742, %v2070
      %2072 = vmatmul.bf16.gmra.mxu0 %v1366
      %v2073 = vpop.f32.mrf.mxu0
      %v2074 = vadd.f32 %v1745, %v2073
      %v2075 = vpop.f32.mrf.mxu0
      %v2076 = vadd.f32 %v1747, %v2075
      %2077 = vmatmul.bf16.gmra.mxu0 %v1368
      %v2078 = vpop.f32.mrf.mxu0
      %v2079 = vadd.f32 %v1750, %v2078
      %v2080 = vpop.f32.mrf.mxu0
      %v2081 = vadd.f32 %v1752, %v2080
      %2082 = vmatmul.bf16.gmra.mxu0 %v1370
      %v2083 = vpop.f32.mrf.mxu0
      %v2084 = vadd.f32 %v1755, %v2083
      %v2085 = vpop.f32.mrf.mxu0
      %v2086 = vadd.f32 %v1757, %v2085
      %2087 = vmatmul.bf16.gmra.mxu0 %v1372
      %v2088 = vpop.f32.mrf.mxu0
      %v2089 = vadd.f32 %v1760, %v2088
      %v2090 = vpop.f32.mrf.mxu0
      %v2091 = vadd.f32 %v1762, %v2090
      %2092 = vmatmul.bf16.gmra.mxu0 %v1374
      %v2093 = vpop.f32.mrf.mxu0
      %v2094 = vadd.f32 %v1765, %v2093
      %v2095 = vpop.f32.mrf.mxu0
      %v2096 = vadd.f32 %v1767, %v2095
      %2097 = vmatmul.bf16.gmra.mxu0 %v1376
      %v2098 = vpop.f32.mrf.mxu0
      %v2099 = vadd.f32 %v1770, %v2098
      %v2100 = vpop.f32.mrf.mxu0
      %v2101 = vadd.f32 %v1772, %v2100
      %2102 = vmatmul.bf16.gmra.mxu0 %v1378
      %v2103 = vpop.f32.mrf.mxu0
      %v2104 = vadd.f32 %v1775, %v2103
      %v2105 = vpop.f32.mrf.mxu0
      %v2106 = vadd.f32 %v1777, %v2105
      %2107 = vmatmul.bf16.gmra.mxu0 %v1380
      %v2108 = vpop.f32.mrf.mxu0
      %v2109 = vadd.f32 %v1780, %v2108
      %v2110 = vpop.f32.mrf.mxu0
      %v2111 = vadd.f32 %v1782, %v2110
      %2112 = vmatmul.bf16.gmra.mxu0 %v1382
      %v2113 = vpop.f32.mrf.mxu0
      %v2114 = vadd.f32 %v1785, %v2113
      %v2115 = vpop.f32.mrf.mxu0
      %v2116 = vadd.f32 %v1787, %v2115
      %2117 = vmatmul.bf16.gmra.mxu0 %v1384
      %v2118 = vpop.f32.mrf.mxu0
      %v2119 = vadd.f32 %v1790, %v2118
      %v2120 = vpop.f32.mrf.mxu0
      %v2121 = vadd.f32 %v1792, %v2120
      %2122 = vmatmul.bf16.gmra.mxu0 %v1386
      %v2123 = vpop.f32.mrf.mxu0
      %v2124 = vadd.f32 %v1795, %v2123
      %v2125 = vpop.f32.mrf.mxu0
      %v2126 = vadd.f32 %v1797, %v2125
      %2127 = vmatmul.bf16.gmra.mxu0 %v1388
      %v2128 = vpop.f32.mrf.mxu0
      %v2129 = vadd.f32 %v1800, %v2128
      %v2130 = vpop.f32.mrf.mxu0
      %v2131 = vadd.f32 %v1802, %v2130
      %2132 = vmatmul.bf16.gmra.mxu0 %v1390
      %v2133 = vpop.f32.mrf.mxu0
      %v2134 = vadd.f32 %v1805, %v2133
      %v2135 = vpop.f32.mrf.mxu0
      %v2136 = vadd.f32 %v1807, %v2135
      %2137 = vmatmul.bf16.gmra.mxu0 %v1392
      %v2138 = vpop.f32.mrf.mxu0
      %v2139 = vadd.f32 %v1810, %v2138
      %v2140 = vpop.f32.mrf.mxu0
      %v2141 = vadd.f32 %v1812, %v2140
      %2142 = vmatmul.bf16.gmra.mxu0 %v1394
      %v2143 = vpop.f32.mrf.mxu0
      %v2144 = vadd.f32 %v1815, %v2143
      %v2145 = vpop.f32.mrf.mxu0
      %v2146 = vadd.f32 %v1817, %v2145
      %2147 = vmatmul.bf16.gmra.mxu0 %v1396
      %v2148 = vpop.f32.mrf.mxu0
      %v2149 = vadd.f32 %v1820, %v2148
      %v2150 = vpop.f32.mrf.mxu0
      %v2151 = vadd.f32 %v1822, %v2150
      %2152 = vmatmul.bf16.gmra.mxu0 %v1398
      %v2153 = vpop.f32.mrf.mxu0
      %v2154 = vadd.f32 %v1825, %v2153
      %v2155 = vpop.f32.mrf.mxu0
      %v2156 = vadd.f32 %v1827, %v2155
      %2157 = vmatmul.bf16.gmra.mxu0 %v1400
      %v2158 = vpop.f32.mrf.mxu0
      %v2159 = vadd.f32 %v1830, %v2158
      %v2160 = vpop.f32.mrf.mxu0
      %v2161 = vadd.f32 %v1832, %v2160
      %2162 = vmatmul.bf16.gmra.mxu0 %v1402
      %v2163 = vpop.f32.mrf.mxu0
      %v2164 = vadd.f32 %v1835, %v2163
      %v2165 = vpop.f32.mrf.mxu0
      %v2166 = vadd.f32 %v1837, %v2165
      %2167 = vmatmul.bf16.gmra.mxu0 %v1404
      %v2168 = vpop.f32.mrf.mxu0
      %v2169 = vadd.f32 %v1840, %v2168
      %v2170 = vpop.f32.mrf.mxu0
      %v2171 = vadd.f32 %v1842, %v2170
      %2172 = vmatmul.bf16.gmra.mxu0 %v1406
      %v2173 = vpop.f32.mrf.mxu0
      %v2174 = vadd.f32 %v1845, %v2173
      %v2175 = vpop.f32.mrf.mxu0
      %v2176 = vadd.f32 %v1847, %v2175
      %2177 = vmatmul.bf16.gmra.mxu0 %v1408
      %v2178 = vpop.f32.mrf.mxu0
      %v2179 = vadd.f32 %v1850, %v2178
      %v2180 = vpop.f32.mrf.mxu0
      %v2181 = vadd.f32 %v1852, %v2180
      %2182 = vmatmul.bf16.gmra.mxu0 %v1410
      %v2183 = vpop.f32.mrf.mxu0
      %v2184 = vadd.f32 %v1855, %v2183
      %v2185 = vpop.f32.mrf.mxu0
      %v2186 = vadd.f32 %v1857, %v2185
      %2187 = vmatmul.bf16.gmra.mxu0 %v1412
      %v2188 = vpop.f32.mrf.mxu0
      %v2189 = vadd.f32 %v1860, %v2188
      %v2190 = vpop.f32.mrf.mxu0
      %v2191 = vadd.f32 %v1862, %v2190
      %2192 = vmatmul.bf16.gmra.mxu0 %v1414
      %v2193 = vpop.f32.mrf.mxu0
      %v2194 = vadd.f32 %v1865, %v2193
      %v2195 = vpop.f32.mrf.mxu0
      %v2196 = vadd.f32 %v1867, %v2195
      %2197 = vmatmul.bf16.gmra.mxu0 %v1416
      %v2198 = vpop.f32.mrf.mxu0
      %v2199 = vadd.f32 %v1870, %v2198
      %v2200 = vpop.f32.mrf.mxu0
      %v2201 = vadd.f32 %v1872, %v2200
      %2202 = vdwg.mxu0
      %v2203 = vpack.c.bf16 %v1884, %v1884
      %v2204 = vpack.c.bf16 %v1886, %v1886
      %v2205 = vpack.c.bf16 %v1889, %v1889
      %v2206 = vpack.c.bf16 %v1891, %v1891
      %v2207 = vpack.c.bf16 %v1894, %v1894
      %v2208 = vpack.c.bf16 %v1896, %v1896
      %v2209 = vpack.c.bf16 %v1899, %v1899
      %v2210 = vpack.c.bf16 %v1901, %v1901
      %v2211 = vpack.c.bf16 %v1904, %v1904
      %v2212 = vpack.c.bf16 %v1906, %v1906
      %v2213 = vpack.c.bf16 %v1909, %v1909
      %v2214 = vpack.c.bf16 %v1911, %v1911
      %v2215 = vpack.c.bf16 %v1914, %v1914
      %v2216 = vpack.c.bf16 %v1916, %v1916
      %v2217 = vpack.c.bf16 %v1919, %v1919
      %v2218 = vpack.c.bf16 %v1921, %v1921
      %v2219 = vpack.c.bf16 %v1924, %v1924
      %v2220 = vpack.c.bf16 %v1926, %v1926
      %v2221 = vpack.c.bf16 %v1929, %v1929
      %v2222 = vpack.c.bf16 %v1931, %v1931
      %v2223 = vpack.c.bf16 %v1934, %v1934
      %v2224 = vpack.c.bf16 %v1936, %v1936
      %v2225 = vpack.c.bf16 %v1939, %v1939
      %v2226 = vpack.c.bf16 %v1941, %v1941
      %v2227 = vpack.c.bf16 %v1944, %v1944
      %v2228 = vpack.c.bf16 %v1946, %v1946
      %v2229 = vpack.c.bf16 %v1949, %v1949
      %v2230 = vpack.c.bf16 %v1951, %v1951
      %v2231 = vpack.c.bf16 %v1954, %v1954
      %v2232 = vpack.c.bf16 %v1956, %v1956
      %v2233 = vpack.c.bf16 %v1959, %v1959
      %v2234 = vpack.c.bf16 %v1961, %v1961
      %v2235 = vpack.c.bf16 %v1964, %v1964
      %v2236 = vpack.c.bf16 %v1966, %v1966
      %v2237 = vpack.c.bf16 %v1969, %v1969
      %v2238 = vpack.c.bf16 %v1971, %v1971
      %v2239 = vpack.c.bf16 %v1974, %v1974
      %v2240 = vpack.c.bf16 %v1976, %v1976
      %v2241 = vpack.c.bf16 %v1979, %v1979
      %v2242 = vpack.c.bf16 %v1981, %v1981
      %v2243 = vpack.c.bf16 %v1984, %v1984
      %v2244 = vpack.c.bf16 %v1986, %v1986
      %v2245 = vpack.c.bf16 %v1989, %v1989
      %v2246 = vpack.c.bf16 %v1991, %v1991
      %v2247 = vpack.c.bf16 %v1994, %v1994
      %v2248 = vpack.c.bf16 %v1996, %v1996
      %v2249 = vpack.c.bf16 %v1999, %v1999
      %v2250 = vpack.c.bf16 %v2001, %v2001
      %v2251 = vpack.c.bf16 %v2004, %v2004
      %v2252 = vpack.c.bf16 %v2006, %v2006
      %v2253 = vpack.c.bf16 %v2009, %v2009
      %v2254 = vpack.c.bf16 %v2011, %v2011
      %v2255 = vpack.c.bf16 %v2014, %v2014
      %v2256 = vpack.c.bf16 %v2016, %v2016
      %v2257 = vpack.c.bf16 %v2019, %v2019
      %v2258 = vpack.c.bf16 %v2021, %v2021
      %v2259 = vpack.c.bf16 %v2024, %v2024
      %v2260 = vpack.c.bf16 %v2026, %v2026
      %v2261 = vpack.c.bf16 %v2029, %v2029
      %v2262 = vpack.c.bf16 %v2031, %v2031
      %v2263 = vpack.c.bf16 %v2034, %v2034
      %v2264 = vpack.c.bf16 %v2036, %v2036
      %v2265 = vpack.c.bf16 %v2039, %v2039
      %v2266 = vpack.c.bf16 %v2041, %v2041
      %v2267 = vpack.c.bf16 %v2044, %v2044
      %v2268 = vpack.c.bf16 %v2046, %v2046
      %v2269 = vpack.c.bf16 %v2049, %v2049
      %v2270 = vpack.c.bf16 %v2051, %v2051
      %v2271 = vpack.c.bf16 %v2054, %v2054
      %v2272 = vpack.c.bf16 %v2056, %v2056
      %v2273 = vpack.c.bf16 %v2059, %v2059
      %v2274 = vpack.c.bf16 %v2061, %v2061
      %v2275 = vpack.c.bf16 %v2064, %v2064
      %v2276 = vpack.c.bf16 %v2066, %v2066
      %v2277 = vpack.c.bf16 %v2069, %v2069
      %v2278 = vpack.c.bf16 %v2071, %v2071
      %v2279 = vpack.c.bf16 %v2074, %v2074
      %v2280 = vpack.c.bf16 %v2076, %v2076
      %v2281 = vpack.c.bf16 %v2079, %v2079
      %v2282 = vpack.c.bf16 %v2081, %v2081
      %v2283 = vpack.c.bf16 %v2084, %v2084
      %v2284 = vpack.c.bf16 %v2086, %v2086
      %v2285 = vpack.c.bf16 %v2089, %v2089
      %v2286 = vpack.c.bf16 %v2091, %v2091
      %v2287 = vpack.c.bf16 %v2094, %v2094
      %v2288 = vpack.c.bf16 %v2096, %v2096
      %v2289 = vpack.c.bf16 %v2099, %v2099
      %v2290 = vpack.c.bf16 %v2101, %v2101
      %v2291 = vpack.c.bf16 %v2104, %v2104
      %v2292 = vpack.c.bf16 %v2106, %v2106
      %v2293 = vpack.c.bf16 %v2109, %v2109
      %v2294 = vpack.c.bf16 %v2111, %v2111
      %v2295 = vpack.c.bf16 %v2114, %v2114
      %v2296 = vpack.c.bf16 %v2116, %v2116
      %v2297 = vpack.c.bf16 %v2119, %v2119
      %v2298 = vpack.c.bf16 %v2121, %v2121
      %v2299 = vpack.c.bf16 %v2124, %v2124
      %v2300 = vpack.c.bf16 %v2126, %v2126
      %v2301 = vpack.c.bf16 %v2129, %v2129
      %v2302 = vpack.c.bf16 %v2131, %v2131
      %v2303 = vpack.c.bf16 %v2134, %v2134
      %v2304 = vpack.c.bf16 %v2136, %v2136
      %v2305 = vpack.c.bf16 %v2139, %v2139
      %v2306 = vpack.c.bf16 %v2141, %v2141
      %v2307 = vpack.c.bf16 %v2144, %v2144
      %v2308 = vpack.c.bf16 %v2146, %v2146
      %v2309 = vpack.c.bf16 %v2149, %v2149
      %v2310 = vpack.c.bf16 %v2151, %v2151
      %v2311 = vpack.c.bf16 %v2154, %v2154
      %v2312 = vpack.c.bf16 %v2156, %v2156
      %v2313 = vpack.c.bf16 %v2159, %v2159
      %v2314 = vpack.c.bf16 %v2161, %v2161
      %v2315 = vpack.c.bf16 %v2164, %v2164
      %v2316 = vpack.c.bf16 %v2166, %v2166
      %v2317 = vpack.c.bf16 %v2169, %v2169
      %v2318 = vpack.c.bf16 %v2171, %v2171
      %v2319 = vpack.c.bf16 %v2174, %v2174
      %v2320 = vpack.c.bf16 %v2176, %v2176
      %v2321 = vpack.c.bf16 %v2179, %v2179
      %v2322 = vpack.c.bf16 %v2181, %v2181
      %v2323 = vpack.c.bf16 %v2184, %v2184
      %v2324 = vpack.c.bf16 %v2186, %v2186
      %v2325 = vpack.c.bf16 %v2189, %v2189
      %v2326 = vpack.c.bf16 %v2191, %v2191
      %v2327 = vpack.c.bf16 %v2194, %v2194
      %v2328 = vpack.c.bf16 %v2196, %v2196
      %v2329 = vpack.c.bf16 %v2199, %v2199
      %v2330 = vpack.c.bf16 %v2201, %v2201
      %v2339 = vunpack.c.l.b16 %v2203
      %v2340 = vunpack.c.l.b16 %v2204
      %v2341 = vunpack.c.l.b16 %v2205
      %v2342 = vunpack.c.l.b16 %v2206
      %v2343 = vunpack.c.l.b16 %v2207
      %v2344 = vunpack.c.l.b16 %v2208
      %v2345 = vunpack.c.l.b16 %v2209
      %v2346 = vunpack.c.l.b16 %v2210
      %v2347 = vpack.c.b16 %v2340, %v2339
      %v2348 = vpack.c.b16 %v2342, %v2341
      %v2349 = vpack.c.b16 %v2344, %v2343
      %v2350 = vpack.c.b16 %v2346, %v2345
      %v2359 = vunpack.c.l.b16 %v2211
      %v2360 = vunpack.c.l.b16 %v2212
      %v2361 = vunpack.c.l.b16 %v2213
      %v2362 = vunpack.c.l.b16 %v2214
      %v2363 = vunpack.c.l.b16 %v2215
      %v2364 = vunpack.c.l.b16 %v2216
      %v2365 = vunpack.c.l.b16 %v2217
      %v2366 = vunpack.c.l.b16 %v2218
      %v2367 = vpack.c.b16 %v2360, %v2359
      %v2368 = vpack.c.b16 %v2362, %v2361
      %v2369 = vpack.c.b16 %v2364, %v2363
      %v2370 = vpack.c.b16 %v2366, %v2365
      %2371 = vrot.lane.b32.xlu0 %v2367, 32
      %v2372 = vpop.permute.xlu0 %2371
      %2373 = vrot.lane.b32.xlu0 %v2368, 32
      %v2374 = vpop.permute.xlu0 %2373
      %2375 = vrot.lane.b32.xlu0 %v2369, 32
      %v2376 = vpop.permute.xlu0 %2375
      %2377 = vrot.lane.b32.xlu0 %v2370, 32
      %v2378 = vpop.permute.xlu0 %2377
      %v2387 = vunpack.c.l.b16 %v2219
      %v2388 = vunpack.c.l.b16 %v2220
      %v2389 = vunpack.c.l.b16 %v2221
      %v2390 = vunpack.c.l.b16 %v2222
      %v2391 = vunpack.c.l.b16 %v2223
      %v2392 = vunpack.c.l.b16 %v2224
      %v2393 = vunpack.c.l.b16 %v2225
      %v2394 = vunpack.c.l.b16 %v2226
      %v2395 = vpack.c.b16 %v2388, %v2387
      %v2396 = vpack.c.b16 %v2390, %v2389
      %v2397 = vpack.c.b16 %v2392, %v2391
      %v2398 = vpack.c.b16 %v2394, %v2393
      %2399 = vrot.lane.b32.xlu0 %v2395, 64
      %v2400 = vpop.permute.xlu0 %2399
      %2401 = vrot.lane.b32.xlu0 %v2396, 64
      %v2402 = vpop.permute.xlu0 %2401
      %2403 = vrot.lane.b32.xlu0 %v2397, 64
      %v2404 = vpop.permute.xlu0 %2403
      %2405 = vrot.lane.b32.xlu0 %v2398, 64
      %v2406 = vpop.permute.xlu0 %2405
      %v2415 = vunpack.c.l.b16 %v2227
      %v2416 = vunpack.c.l.b16 %v2228
      %v2417 = vunpack.c.l.b16 %v2229
      %v2418 = vunpack.c.l.b16 %v2230
      %v2419 = vunpack.c.l.b16 %v2231
      %v2420 = vunpack.c.l.b16 %v2232
      %v2421 = vunpack.c.l.b16 %v2233
      %v2422 = vunpack.c.l.b16 %v2234
      %v2423 = vpack.c.b16 %v2416, %v2415
      %v2424 = vpack.c.b16 %v2418, %v2417
      %v2425 = vpack.c.b16 %v2420, %v2419
      %v2426 = vpack.c.b16 %v2422, %v2421
      %2427 = vrot.lane.b32.xlu0 %v2423, 96
      %v2428 = vpop.permute.xlu0 %2427
      %2429 = vrot.lane.b32.xlu0 %v2424, 96
      %v2430 = vpop.permute.xlu0 %2429
      %2431 = vrot.lane.b32.xlu0 %v2425, 96
      %v2432 = vpop.permute.xlu0 %2431
      %2433 = vrot.lane.b32.xlu0 %v2426, 96
      %v2434 = vpop.permute.xlu0 %2433
      %v2443 = vunpack.c.l.b16 %v2235
      %v2444 = vunpack.c.l.b16 %v2236
      %v2445 = vunpack.c.l.b16 %v2237
      %v2446 = vunpack.c.l.b16 %v2238
      %v2447 = vunpack.c.l.b16 %v2239
      %v2448 = vunpack.c.l.b16 %v2240
      %v2449 = vunpack.c.l.b16 %v2241
      %v2450 = vunpack.c.l.b16 %v2242
      %v2451 = vpack.c.b16 %v2444, %v2443
      %v2452 = vpack.c.b16 %v2446, %v2445
      %v2453 = vpack.c.b16 %v2448, %v2447
      %v2454 = vpack.c.b16 %v2450, %v2449
      %v2463 = vunpack.c.l.b16 %v2243
      %v2464 = vunpack.c.l.b16 %v2244
      %v2465 = vunpack.c.l.b16 %v2245
      %v2466 = vunpack.c.l.b16 %v2246
      %v2467 = vunpack.c.l.b16 %v2247
      %v2468 = vunpack.c.l.b16 %v2248
      %v2469 = vunpack.c.l.b16 %v2249
      %v2470 = vunpack.c.l.b16 %v2250
      %v2471 = vpack.c.b16 %v2464, %v2463
      %v2472 = vpack.c.b16 %v2466, %v2465
      %v2473 = vpack.c.b16 %v2468, %v2467
      %v2474 = vpack.c.b16 %v2470, %v2469
      %2475 = vrot.lane.b32.xlu0 %v2471, 32
      %v2476 = vpop.permute.xlu0 %2475
      %2477 = vrot.lane.b32.xlu0 %v2472, 32
      %v2478 = vpop.permute.xlu0 %2477
      %2479 = vrot.lane.b32.xlu0 %v2473, 32
      %v2480 = vpop.permute.xlu0 %2479
      %2481 = vrot.lane.b32.xlu0 %v2474, 32
      %v2482 = vpop.permute.xlu0 %2481
      %v2491 = vunpack.c.l.b16 %v2251
      %v2492 = vunpack.c.l.b16 %v2252
      %v2493 = vunpack.c.l.b16 %v2253
      %v2494 = vunpack.c.l.b16 %v2254
      %v2495 = vunpack.c.l.b16 %v2255
      %v2496 = vunpack.c.l.b16 %v2256
      %v2497 = vunpack.c.l.b16 %v2257
      %v2498 = vunpack.c.l.b16 %v2258
      %v2499 = vpack.c.b16 %v2492, %v2491
      %v2500 = vpack.c.b16 %v2494, %v2493
      %v2501 = vpack.c.b16 %v2496, %v2495
      %v2502 = vpack.c.b16 %v2498, %v2497
      %2503 = vrot.lane.b32.xlu0 %v2499, 64
      %v2504 = vpop.permute.xlu0 %2503
      %2505 = vrot.lane.b32.xlu0 %v2500, 64
      %v2506 = vpop.permute.xlu0 %2505
      %2507 = vrot.lane.b32.xlu0 %v2501, 64
      %v2508 = vpop.permute.xlu0 %2507
      %2509 = vrot.lane.b32.xlu0 %v2502, 64
      %v2510 = vpop.permute.xlu0 %2509
      %v2519 = vunpack.c.l.b16 %v2259
      %v2520 = vunpack.c.l.b16 %v2260
      %v2521 = vunpack.c.l.b16 %v2261
      %v2522 = vunpack.c.l.b16 %v2262
      %v2523 = vunpack.c.l.b16 %v2263
      %v2524 = vunpack.c.l.b16 %v2264
      %v2525 = vunpack.c.l.b16 %v2265
      %v2526 = vunpack.c.l.b16 %v2266
      %v2527 = vpack.c.b16 %v2520, %v2519
      %v2528 = vpack.c.b16 %v2522, %v2521
      %v2529 = vpack.c.b16 %v2524, %v2523
      %v2530 = vpack.c.b16 %v2526, %v2525
      %2531 = vrot.lane.b32.xlu0 %v2527, 96
      %v2532 = vpop.permute.xlu0 %2531
      %2533 = vrot.lane.b32.xlu0 %v2528, 96
      %v2534 = vpop.permute.xlu0 %2533
      %2535 = vrot.lane.b32.xlu0 %v2529, 96
      %v2536 = vpop.permute.xlu0 %2535
      %2537 = vrot.lane.b32.xlu0 %v2530, 96
      %v2538 = vpop.permute.xlu0 %2537
      %v2547 = vunpack.c.l.b16 %v2267
      %v2548 = vunpack.c.l.b16 %v2268
      %v2549 = vunpack.c.l.b16 %v2269
      %v2550 = vunpack.c.l.b16 %v2270
      %v2551 = vunpack.c.l.b16 %v2271
      %v2552 = vunpack.c.l.b16 %v2272
      %v2553 = vunpack.c.l.b16 %v2273
      %v2554 = vunpack.c.l.b16 %v2274
      %v2555 = vpack.c.b16 %v2548, %v2547
      %v2556 = vpack.c.b16 %v2550, %v2549
      %v2557 = vpack.c.b16 %v2552, %v2551
      %v2558 = vpack.c.b16 %v2554, %v2553
      %v2567 = vunpack.c.l.b16 %v2275
      %v2568 = vunpack.c.l.b16 %v2276
      %v2569 = vunpack.c.l.b16 %v2277
      %v2570 = vunpack.c.l.b16 %v2278
      %v2571 = vunpack.c.l.b16 %v2279
      %v2572 = vunpack.c.l.b16 %v2280
      %v2573 = vunpack.c.l.b16 %v2281
      %v2574 = vunpack.c.l.b16 %v2282
      %v2575 = vpack.c.b16 %v2568, %v2567
      %v2576 = vpack.c.b16 %v2570, %v2569
      %v2577 = vpack.c.b16 %v2572, %v2571
      %v2578 = vpack.c.b16 %v2574, %v2573
      %2579 = vrot.lane.b32.xlu0 %v2575, 32
      %v2580 = vpop.permute.xlu0 %2579
      %2581 = vrot.lane.b32.xlu0 %v2576, 32
      %v2582 = vpop.permute.xlu0 %2581
      %2583 = vrot.lane.b32.xlu0 %v2577, 32
      %v2584 = vpop.permute.xlu0 %2583
      %2585 = vrot.lane.b32.xlu0 %v2578, 32
      %v2586 = vpop.permute.xlu0 %2585
      %v2595 = vunpack.c.l.b16 %v2283
      %v2596 = vunpack.c.l.b16 %v2284
      %v2597 = vunpack.c.l.b16 %v2285
      %v2598 = vunpack.c.l.b16 %v2286
      %v2599 = vunpack.c.l.b16 %v2287
      %v2600 = vunpack.c.l.b16 %v2288
      %v2601 = vunpack.c.l.b16 %v2289
      %v2602 = vunpack.c.l.b16 %v2290
      %v2603 = vpack.c.b16 %v2596, %v2595
      %v2604 = vpack.c.b16 %v2598, %v2597
      %v2605 = vpack.c.b16 %v2600, %v2599
      %v2606 = vpack.c.b16 %v2602, %v2601
      %2607 = vrot.lane.b32.xlu0 %v2603, 64
      %v2608 = vpop.permute.xlu0 %2607
      %2609 = vrot.lane.b32.xlu0 %v2604, 64
      %v2610 = vpop.permute.xlu0 %2609
      %2611 = vrot.lane.b32.xlu0 %v2605, 64
      %v2612 = vpop.permute.xlu0 %2611
      %2613 = vrot.lane.b32.xlu0 %v2606, 64
      %v2614 = vpop.permute.xlu0 %2613
      %v2623 = vunpack.c.l.b16 %v2291
      %v2624 = vunpack.c.l.b16 %v2292
      %v2625 = vunpack.c.l.b16 %v2293
      %v2626 = vunpack.c.l.b16 %v2294
      %v2627 = vunpack.c.l.b16 %v2295
      %v2628 = vunpack.c.l.b16 %v2296
      %v2629 = vunpack.c.l.b16 %v2297
      %v2630 = vunpack.c.l.b16 %v2298
      %v2631 = vpack.c.b16 %v2624, %v2623
      %v2632 = vpack.c.b16 %v2626, %v2625
      %v2633 = vpack.c.b16 %v2628, %v2627
      %v2634 = vpack.c.b16 %v2630, %v2629
      %2635 = vrot.lane.b32.xlu0 %v2631, 96
      %v2636 = vpop.permute.xlu0 %2635
      %2637 = vrot.lane.b32.xlu0 %v2632, 96
      %v2638 = vpop.permute.xlu0 %2637
      %2639 = vrot.lane.b32.xlu0 %v2633, 96
      %v2640 = vpop.permute.xlu0 %2639
      %2641 = vrot.lane.b32.xlu0 %v2634, 96
      %v2642 = vpop.permute.xlu0 %2641
      %v2651 = vunpack.c.l.b16 %v2299
      %v2652 = vunpack.c.l.b16 %v2300
      %v2653 = vunpack.c.l.b16 %v2301
      %v2654 = vunpack.c.l.b16 %v2302
      %v2655 = vunpack.c.l.b16 %v2303
      %v2656 = vunpack.c.l.b16 %v2304
      %v2657 = vunpack.c.l.b16 %v2305
      %v2658 = vunpack.c.l.b16 %v2306
      %v2659 = vpack.c.b16 %v2652, %v2651
      %v2660 = vpack.c.b16 %v2654, %v2653
      %v2661 = vpack.c.b16 %v2656, %v2655
      %v2662 = vpack.c.b16 %v2658, %v2657
      %v2671 = vunpack.c.l.b16 %v2307
      %v2672 = vunpack.c.l.b16 %v2308
      %v2673 = vunpack.c.l.b16 %v2309
      %v2674 = vunpack.c.l.b16 %v2310
      %v2675 = vunpack.c.l.b16 %v2311
      %v2676 = vunpack.c.l.b16 %v2312
      %v2677 = vunpack.c.l.b16 %v2313
      %v2678 = vunpack.c.l.b16 %v2314
      %v2679 = vpack.c.b16 %v2672, %v2671
      %v2680 = vpack.c.b16 %v2674, %v2673
      %v2681 = vpack.c.b16 %v2676, %v2675
      %v2682 = vpack.c.b16 %v2678, %v2677
      %2683 = vrot.lane.b32.xlu0 %v2679, 32
      %v2684 = vpop.permute.xlu0 %2683
      %2685 = vrot.lane.b32.xlu0 %v2680, 32
      %v2686 = vpop.permute.xlu0 %2685
      %2687 = vrot.lane.b32.xlu0 %v2681, 32
      %v2688 = vpop.permute.xlu0 %2687
      %2689 = vrot.lane.b32.xlu0 %v2682, 32
      %v2690 = vpop.permute.xlu0 %2689
      %v2699 = vunpack.c.l.b16 %v2315
      %v2700 = vunpack.c.l.b16 %v2316
      %v2701 = vunpack.c.l.b16 %v2317
      %v2702 = vunpack.c.l.b16 %v2318
      %v2703 = vunpack.c.l.b16 %v2319
      %v2704 = vunpack.c.l.b16 %v2320
      %v2705 = vunpack.c.l.b16 %v2321
      %v2706 = vunpack.c.l.b16 %v2322
      %v2707 = vpack.c.b16 %v2700, %v2699
      %v2708 = vpack.c.b16 %v2702, %v2701
      %v2709 = vpack.c.b16 %v2704, %v2703
      %v2710 = vpack.c.b16 %v2706, %v2705
      %2711 = vrot.lane.b32.xlu0 %v2707, 64
      %v2712 = vpop.permute.xlu0 %2711
      %2713 = vrot.lane.b32.xlu0 %v2708, 64
      %v2714 = vpop.permute.xlu0 %2713
      %2715 = vrot.lane.b32.xlu0 %v2709, 64
      %v2716 = vpop.permute.xlu0 %2715
      %2717 = vrot.lane.b32.xlu0 %v2710, 64
      %v2718 = vpop.permute.xlu0 %2717
      %v2727 = vunpack.c.l.b16 %v2323
      %v2728 = vunpack.c.l.b16 %v2324
      %v2729 = vunpack.c.l.b16 %v2325
      %v2730 = vunpack.c.l.b16 %v2326
      %v2731 = vunpack.c.l.b16 %v2327
      %v2732 = vunpack.c.l.b16 %v2328
      %v2733 = vunpack.c.l.b16 %v2329
      %v2734 = vunpack.c.l.b16 %v2330
      %v2735 = vpack.c.b16 %v2728, %v2727
      %v2736 = vpack.c.b16 %v2730, %v2729
      %v2737 = vpack.c.b16 %v2732, %v2731
      %v2738 = vpack.c.b16 %v2734, %v2733
      %2739 = vrot.lane.b32.xlu0 %v2735, 96
      %v2740 = vpop.permute.xlu0 %2739
      %2741 = vrot.lane.b32.xlu0 %v2736, 96
      %v2742 = vpop.permute.xlu0 %2741
      %2743 = vrot.lane.b32.xlu0 %v2737, 96
      %v2744 = vpop.permute.xlu0 %2743
      %2745 = vrot.lane.b32.xlu0 %v2738, 96
      %v2746 = vpop.permute.xlu0 %2745
      %vm2747 = vcmask 261120
      %v2750 = vsel %vm2747, %v2347, %v2372
      %v2753 = vsel %vm2747, %v2348, %v2374
      %v2756 = vsel %vm2747, %v2349, %v2376
      %v2759 = vsel %vm2747, %v2350, %v2378
      %v2761 = vsel %vm591, %v2750, %v2400
      %v2763 = vsel %vm591, %v2753, %v2402
      %v2765 = vsel %vm591, %v2756, %v2404
      %v2767 = vsel %vm591, %v2759, %v2406
      %vm2768 = vcmask 785408
      %v2770 = vsel %vm2768, %v2761, %v2428
      %v2773 = vsel %vm2768, %v2763, %v2430
      %v2776 = vsel %vm2768, %v2765, %v2432
      %v2779 = vsel %vm2768, %v2767, %v2434
      %v2783 = vsel %vm2747, %v2451, %v2476
      %v2786 = vsel %vm2747, %v2452, %v2478
      %v2789 = vsel %vm2747, %v2453, %v2480
      %v2792 = vsel %vm2747, %v2454, %v2482
      %v2794 = vsel %vm591, %v2783, %v2504
      %v2796 = vsel %vm591, %v2786, %v2506
      %v2798 = vsel %vm591, %v2789, %v2508
      %v2800 = vsel %vm591, %v2792, %v2510
      %v2802 = vsel %vm2768, %v2794, %v2532
      %v2805 = vsel %vm2768, %v2796, %v2534
      %v2808 = vsel %vm2768, %v2798, %v2536
      %v2811 = vsel %vm2768, %v2800, %v2538
      %v2815 = vsel %vm2747, %v2555, %v2580
      %v2818 = vsel %vm2747, %v2556, %v2582
      %v2821 = vsel %vm2747, %v2557, %v2584
      %v2824 = vsel %vm2747, %v2558, %v2586
      %v2826 = vsel %vm591, %v2815, %v2608
      %v2828 = vsel %vm591, %v2818, %v2610
      %v2830 = vsel %vm591, %v2821, %v2612
      %v2832 = vsel %vm591, %v2824, %v2614
      %v2834 = vsel %vm2768, %v2826, %v2636
      %v2837 = vsel %vm2768, %v2828, %v2638
      %v2840 = vsel %vm2768, %v2830, %v2640
      %v2843 = vsel %vm2768, %v2832, %v2642
      %v2847 = vsel %vm2747, %v2659, %v2684
      %v2850 = vsel %vm2747, %v2660, %v2686
      %v2853 = vsel %vm2747, %v2661, %v2688
      %v2856 = vsel %vm2747, %v2662, %v2690
      %v2858 = vsel %vm591, %v2847, %v2712
      %v2860 = vsel %vm591, %v2850, %v2714
      %v2862 = vsel %vm591, %v2853, %v2716
      %v2864 = vsel %vm591, %v2856, %v2718
      %v2866 = vsel %vm2768, %v2858, %v2740
      %v2869 = vsel %vm2768, %v2860, %v2742
      %v2872 = vsel %vm2768, %v2862, %v2744
      %v2875 = vsel %vm2768, %v2864, %v2746
      %v2877 = vld [vmem:[%s3] sm:$0xf]
      %v2878 = vld [vmem:[%s3 + $0x4] sm:$0xf]
      %v2879 = vld [vmem:[%s3 + $0x8] sm:$0xf]
      %v2880 = vld [vmem:[%s3 + $0xc] sm:$0xf]
      %v2881 = vld [vmem:[%s3 + $0x10] sm:$0xf]
      %v2882 = vld [vmem:[%s3 + $0x14] sm:$0xf]
      %v2883 = vld [vmem:[%s3 + $0x18] sm:$0xf]
      %v2884 = vld [vmem:[%s3 + $0x1c] sm:$0xf]
      %v2885 = vld [vmem:[%s3 + $0x20] sm:$0xf]
      %v2886 = vld [vmem:[%s3 + $0x24] sm:$0xf]
      %v2887 = vld [vmem:[%s3 + $0x28] sm:$0xf]
      %v2888 = vld [vmem:[%s3 + $0x2c] sm:$0xf]
      %v2889 = vld [vmem:[%s3 + $0x30] sm:$0xf]
      %v2890 = vld [vmem:[%s3 + $0x34] sm:$0xf]
      %v2891 = vld [vmem:[%s3 + $0x38] sm:$0xf]
      %v2892 = vld [vmem:[%s3 + $0x3c] sm:$0xf]
      %v2893 = vld [vmem:[%s3 + $0x40] sm:$0xf]
      %v2894 = vld [vmem:[%s3 + $0x44] sm:$0xf]
      %v2895 = vld [vmem:[%s3 + $0x48] sm:$0xf]
      %v2896 = vld [vmem:[%s3 + $0x4c] sm:$0xf]
      %v2897 = vld [vmem:[%s3 + $0x50] sm:$0xf]
      %v2898 = vld [vmem:[%s3 + $0x54] sm:$0xf]
      %v2899 = vld [vmem:[%s3 + $0x58] sm:$0xf]
      %v2900 = vld [vmem:[%s3 + $0x5c] sm:$0xf]
      %v2901 = vld [vmem:[%s3 + $0x60] sm:$0xf]
      %v2902 = vld [vmem:[%s3 + $0x64] sm:$0xf]
      %v2903 = vld [vmem:[%s3 + $0x68] sm:$0xf]
      %v2904 = vld [vmem:[%s3 + $0x6c] sm:$0xf]
      %v2905 = vld [vmem:[%s3 + $0x70] sm:$0xf]
      %v2906 = vld [vmem:[%s3 + $0x74] sm:$0xf]
      %v2907 = vld [vmem:[%s3 + $0x78] sm:$0xf]
      %v2908 = vld [vmem:[%s3 + $0x7c] sm:$0xf]
      %v2909 = vld [vmem:[%s3 + $0x80] sm:$0xf]
      %v2910 = vld [vmem:[%s3 + $0x84] sm:$0xf]
      %v2911 = vld [vmem:[%s3 + $0x88] sm:$0xf]
      %v2912 = vld [vmem:[%s3 + $0x8c] sm:$0xf]
      %v2913 = vld [vmem:[%s3 + $0x90] sm:$0xf]
      %v2914 = vld [vmem:[%s3 + $0x94] sm:$0xf]
      %v2915 = vld [vmem:[%s3 + $0x98] sm:$0xf]
      %v2916 = vld [vmem:[%s3 + $0x9c] sm:$0xf]
      %v2917 = vld [vmem:[%s3 + $0xa0] sm:$0xf]
      %v2918 = vld [vmem:[%s3 + $0xa4] sm:$0xf]
      %v2919 = vld [vmem:[%s3 + $0xa8] sm:$0xf]
      %v2920 = vld [vmem:[%s3 + $0xac] sm:$0xf]
      %v2921 = vld [vmem:[%s3 + $0xb0] sm:$0xf]
      %v2922 = vld [vmem:[%s3 + $0xb4] sm:$0xf]
      %v2923 = vld [vmem:[%s3 + $0xb8] sm:$0xf]
      %v2924 = vld [vmem:[%s3 + $0xbc] sm:$0xf]
      %v2925 = vld [vmem:[%s3 + $0xc0] sm:$0xf]
      %v2926 = vld [vmem:[%s3 + $0xc4] sm:$0xf]
      %v2927 = vld [vmem:[%s3 + $0xc8] sm:$0xf]
      %v2928 = vld [vmem:[%s3 + $0xcc] sm:$0xf]
      %v2929 = vld [vmem:[%s3 + $0xd0] sm:$0xf]
      %v2930 = vld [vmem:[%s3 + $0xd4] sm:$0xf]
      %v2931 = vld [vmem:[%s3 + $0xd8] sm:$0xf]
      %v2932 = vld [vmem:[%s3 + $0xdc] sm:$0xf]
      %v2933 = vld [vmem:[%s3 + $0xe0] sm:$0xf]
      %v2934 = vld [vmem:[%s3 + $0xe4] sm:$0xf]
      %v2935 = vld [vmem:[%s3 + $0xe8] sm:$0xf]
      %v2936 = vld [vmem:[%s3 + $0xec] sm:$0xf]
      %v2937 = vld [vmem:[%s3 + $0xf0] sm:$0xf]
      %v2938 = vld [vmem:[%s3 + $0xf4] sm:$0xf]
      %v2939 = vld [vmem:[%s3 + $0xf8] sm:$0xf]
      %v2940 = vld [vmem:[%s3 + $0xfc] sm:$0xf]
      %v3005 = vunpack.c.l.b16 %v2877
      %v3006 = vunpack.c.l.b16 %v2878
      %v3007 = vunpack.c.l.b16 %v2879
      %v3008 = vunpack.c.l.b16 %v2880
      %v3009 = vunpack.c.l.b16 %v2881
      %v3010 = vunpack.c.l.b16 %v2882
      %v3011 = vunpack.c.l.b16 %v2883
      %v3012 = vunpack.c.l.b16 %v2884
      %v3013 = vunpack.c.l.b16 %v2885
      %v3014 = vunpack.c.l.b16 %v2886
      %v3015 = vunpack.c.l.b16 %v2887
      %v3016 = vunpack.c.l.b16 %v2888
      %v3017 = vunpack.c.l.b16 %v2889
      %v3018 = vunpack.c.l.b16 %v2890
      %v3019 = vunpack.c.l.b16 %v2891
      %v3020 = vunpack.c.l.b16 %v2892
      %v3021 = vunpack.c.l.b16 %v2893
      %v3022 = vunpack.c.l.b16 %v2894
      %v3023 = vunpack.c.l.b16 %v2895
      %v3024 = vunpack.c.l.b16 %v2896
      %v3025 = vunpack.c.l.b16 %v2897
      %v3026 = vunpack.c.l.b16 %v2898
      %v3027 = vunpack.c.l.b16 %v2899
      %v3028 = vunpack.c.l.b16 %v2900
      %v3029 = vunpack.c.l.b16 %v2901
      %v3030 = vunpack.c.l.b16 %v2902
      %v3031 = vunpack.c.l.b16 %v2903
      %v3032 = vunpack.c.l.b16 %v2904
      %v3033 = vunpack.c.l.b16 %v2905
      %v3034 = vunpack.c.l.b16 %v2906
      %v3035 = vunpack.c.l.b16 %v2907
      %v3036 = vunpack.c.l.b16 %v2908
      %v3037 = vunpack.c.l.b16 %v2909
      %v3038 = vunpack.c.l.b16 %v2910
      %v3039 = vunpack.c.l.b16 %v2911
      %v3040 = vunpack.c.l.b16 %v2912
      %v3041 = vunpack.c.l.b16 %v2913
      %v3042 = vunpack.c.l.b16 %v2914
      %v3043 = vunpack.c.l.b16 %v2915
      %v3044 = vunpack.c.l.b16 %v2916
      %v3045 = vunpack.c.l.b16 %v2917
      %v3046 = vunpack.c.l.b16 %v2918
      %v3047 = vunpack.c.l.b16 %v2919
      %v3048 = vunpack.c.l.b16 %v2920
      %v3049 = vunpack.c.l.b16 %v2921
      %v3050 = vunpack.c.l.b16 %v2922
      %v3051 = vunpack.c.l.b16 %v2923
      %v3052 = vunpack.c.l.b16 %v2924
      %v3053 = vunpack.c.l.b16 %v2925
      %v3054 = vunpack.c.l.b16 %v2926
      %v3055 = vunpack.c.l.b16 %v2927
      %v3056 = vunpack.c.l.b16 %v2928
      %v3057 = vunpack.c.l.b16 %v2929
      %v3058 = vunpack.c.l.b16 %v2930
      %v3059 = vunpack.c.l.b16 %v2931
      %v3060 = vunpack.c.l.b16 %v2932
      %v3061 = vunpack.c.l.b16 %v2933
      %v3062 = vunpack.c.l.b16 %v2934
      %v3063 = vunpack.c.l.b16 %v2935
      %v3064 = vunpack.c.l.b16 %v2936
      %v3065 = vunpack.c.l.b16 %v2937
      %v3066 = vunpack.c.l.b16 %v2938
      %v3067 = vunpack.c.l.b16 %v2939
      %v3068 = vunpack.c.l.b16 %v2940
      %v3069 = vpack.c.b16 %v3006, %v3005
      %v3070 = vpack.c.b16 %v3008, %v3007
      %v3071 = vpack.c.b16 %v3010, %v3009
      %v3072 = vpack.c.b16 %v3012, %v3011
      %v3073 = vpack.c.b16 %v3014, %v3013
      %v3074 = vpack.c.b16 %v3016, %v3015
      %v3075 = vpack.c.b16 %v3018, %v3017
      %v3076 = vpack.c.b16 %v3020, %v3019
      %v3077 = vpack.c.b16 %v3022, %v3021
      %v3078 = vpack.c.b16 %v3024, %v3023
      %v3079 = vpack.c.b16 %v3026, %v3025
      %v3080 = vpack.c.b16 %v3028, %v3027
      %v3081 = vpack.c.b16 %v3030, %v3029
      %v3082 = vpack.c.b16 %v3032, %v3031
      %v3083 = vpack.c.b16 %v3034, %v3033
      %v3084 = vpack.c.b16 %v3036, %v3035
      %v3085 = vpack.c.b16 %v3038, %v3037
      %v3086 = vpack.c.b16 %v3040, %v3039
      %v3087 = vpack.c.b16 %v3042, %v3041
      %v3088 = vpack.c.b16 %v3044, %v3043
      %v3089 = vpack.c.b16 %v3046, %v3045
      %v3090 = vpack.c.b16 %v3048, %v3047
      %v3091 = vpack.c.b16 %v3050, %v3049
      %v3092 = vpack.c.b16 %v3052, %v3051
      %v3093 = vpack.c.b16 %v3054, %v3053
      %v3094 = vpack.c.b16 %v3056, %v3055
      %v3095 = vpack.c.b16 %v3058, %v3057
      %v3096 = vpack.c.b16 %v3060, %v3059
      %v3097 = vpack.c.b16 %v3062, %v3061
      %v3098 = vpack.c.b16 %v3064, %v3063
      %v3099 = vpack.c.b16 %v3066, %v3065
      %v3100 = vpack.c.b16 %v3068, %v3067
      %3133 = vmatpush.bf16.msra.mxu0 %v3076
      %3134 = vmatpush.bf16.msra.mxu0 %v3075
      %3135 = vmatpush.bf16.msra.mxu0 %v3074
      %3136 = vmatpush.bf16.msra.mxu0 %v3073
      %3137 = vmatpush.bf16.msra.mxu0 %v3072
      %3138 = vmatpush.bf16.msra.mxu0 %v3071
      %3139 = vmatpush.bf16.msra.mxu0 %v3070
      %3140 = vmatpush.bf16.msra.mxu0 %v3069
      %3141 = vmatmul.bf16.gmra.mxu0 %v2770
      %v3142 = vpop.f32.mrf.mxu0
      %v3143 = vadd.f32 0.0, %v3142
      %v3144 = vpop.f32.mrf.mxu0
      %v3145 = vadd.f32 0.0, %v3144
      %3146 = vmatmul.bf16.gmra.mxu0 %v2773
      %v3147 = vpop.f32.mrf.mxu0
      %v3148 = vadd.f32 0.0, %v3147
      %v3149 = vpop.f32.mrf.mxu0
      %v3150 = vadd.f32 0.0, %v3149
      %3151 = vmatmul.bf16.gmra.mxu0 %v2776
      %v3152 = vpop.f32.mrf.mxu0
      %v3153 = vadd.f32 0.0, %v3152
      %v3154 = vpop.f32.mrf.mxu0
      %v3155 = vadd.f32 0.0, %v3154
      %3156 = vmatmul.bf16.gmra.mxu0 %v2779
      %v3157 = vpop.f32.mrf.mxu0
      %v3158 = vadd.f32 0.0, %v3157
      %v3159 = vpop.f32.mrf.mxu0
      %v3160 = vadd.f32 0.0, %v3159
      %3161 = vdwg.mxu0
      %3162 = vmatpush.bf16.msra.mxu0 %v3084
      %3163 = vmatpush.bf16.msra.mxu0 %v3083
      %3164 = vmatpush.bf16.msra.mxu0 %v3082
      %3165 = vmatpush.bf16.msra.mxu0 %v3081
      %3166 = vmatpush.bf16.msra.mxu0 %v3080
      %3167 = vmatpush.bf16.msra.mxu0 %v3079
      %3168 = vmatpush.bf16.msra.mxu0 %v3078
      %3169 = vmatpush.bf16.msra.mxu0 %v3077
      %3170 = vmatmul.bf16.gmra.mxu0 %v2802
      %v3171 = vpop.f32.mrf.mxu0
      %v3172 = vadd.f32 %v3143, %v3171
      %v3173 = vpop.f32.mrf.mxu0
      %v3174 = vadd.f32 %v3145, %v3173
      %3175 = vmatmul.bf16.gmra.mxu0 %v2805
      %v3176 = vpop.f32.mrf.mxu0
      %v3177 = vadd.f32 %v3148, %v3176
      %v3178 = vpop.f32.mrf.mxu0
      %v3179 = vadd.f32 %v3150, %v3178
      %3180 = vmatmul.bf16.gmra.mxu0 %v2808
      %v3181 = vpop.f32.mrf.mxu0
      %v3182 = vadd.f32 %v3153, %v3181
      %v3183 = vpop.f32.mrf.mxu0
      %v3184 = vadd.f32 %v3155, %v3183
      %3185 = vmatmul.bf16.gmra.mxu0 %v2811
      %v3186 = vpop.f32.mrf.mxu0
      %v3187 = vadd.f32 %v3158, %v3186
      %v3188 = vpop.f32.mrf.mxu0
      %v3189 = vadd.f32 %v3160, %v3188
      %3190 = vdwg.mxu0
      %3191 = vmatpush.bf16.msra.mxu0 %v3092
      %3192 = vmatpush.bf16.msra.mxu0 %v3091
      %3193 = vmatpush.bf16.msra.mxu0 %v3090
      %3194 = vmatpush.bf16.msra.mxu0 %v3089
      %3195 = vmatpush.bf16.msra.mxu0 %v3088
      %3196 = vmatpush.bf16.msra.mxu0 %v3087
      %3197 = vmatpush.bf16.msra.mxu0 %v3086
      %3198 = vmatpush.bf16.msra.mxu0 %v3085
      %3199 = vmatmul.bf16.gmra.mxu0 %v2834
      %v3200 = vpop.f32.mrf.mxu0
      %v3201 = vadd.f32 %v3172, %v3200
      %v3202 = vpop.f32.mrf.mxu0
      %v3203 = vadd.f32 %v3174, %v3202
      %3204 = vmatmul.bf16.gmra.mxu0 %v2837
      %v3205 = vpop.f32.mrf.mxu0
      %v3206 = vadd.f32 %v3177, %v3205
      %v3207 = vpop.f32.mrf.mxu0
      %v3208 = vadd.f32 %v3179, %v3207
      %3209 = vmatmul.bf16.gmra.mxu0 %v2840
      %v3210 = vpop.f32.mrf.mxu0
      %v3211 = vadd.f32 %v3182, %v3210
      %v3212 = vpop.f32.mrf.mxu0
      %v3213 = vadd.f32 %v3184, %v3212
      %3214 = vmatmul.bf16.gmra.mxu0 %v2843
      %v3215 = vpop.f32.mrf.mxu0
      %v3216 = vadd.f32 %v3187, %v3215
      %v3217 = vpop.f32.mrf.mxu0
      %v3218 = vadd.f32 %v3189, %v3217
      %3219 = vdwg.mxu0
      %3220 = vmatpush.bf16.msra.mxu0 %v3100
      %3221 = vmatpush.bf16.msra.mxu0 %v3099
      %3222 = vmatpush.bf16.msra.mxu0 %v3098
      %3223 = vmatpush.bf16.msra.mxu0 %v3097
      %3224 = vmatpush.bf16.msra.mxu0 %v3096
      %3225 = vmatpush.bf16.msra.mxu0 %v3095
      %3226 = vmatpush.bf16.msra.mxu0 %v3094
      %3227 = vmatpush.bf16.msra.mxu0 %v3093
      %3228 = vmatmul.bf16.gmra.mxu0 %v2866
      %v3229 = vpop.f32.mrf.mxu0
      %v3230 = vadd.f32 %v3201, %v3229
      %v3231 = vpop.f32.mrf.mxu0
      %v3232 = vadd.f32 %v3203, %v3231
      %3233 = vmatmul.bf16.gmra.mxu0 %v2869
      %v3234 = vpop.f32.mrf.mxu0
      %v3235 = vadd.f32 %v3206, %v3234
      %v3236 = vpop.f32.mrf.mxu0
      %v3237 = vadd.f32 %v3208, %v3236
      %3238 = vmatmul.bf16.gmra.mxu0 %v2872
      %v3239 = vpop.f32.mrf.mxu0
      %v3240 = vadd.f32 %v3211, %v3239
      %v3241 = vpop.f32.mrf.mxu0
      %v3242 = vadd.f32 %v3213, %v3241
      %3243 = vmatmul.bf16.gmra.mxu0 %v2875
      %v3244 = vpop.f32.mrf.mxu0
      %v3245 = vadd.f32 %v3216, %v3244
      %v3246 = vpop.f32.mrf.mxu0
      %v3247 = vadd.f32 %v3218, %v3246
      %3248 = vdwg.mxu0
      %v3249 = vmax.f32 %v3230, 0.0
      %v3250 = vmax.f32 %v3232, 0.0
      %v3251 = vmax.f32 %v3235, 0.0
      %v3252 = vmax.f32 %v3237, 0.0
      %v3253 = vmax.f32 %v3240, 0.0
      %v3254 = vmax.f32 %v3242, 0.0
      %v3255 = vmax.f32 %v3245, 0.0
      %v3256 = vmax.f32 %v3247, 0.0
      %v3257 = vpack.c.bf16 %v3250, %v3249
      %v3258 = vpack.c.bf16 %v3252, %v3251
      %v3259 = vpack.c.bf16 %v3254, %v3253
      %v3260 = vpack.c.bf16 %v3256, %v3255
      %v3261 = vld [vmem:[%s4] sm:$0xf]
      %v3262 = vld [vmem:[%s4 + $0x4] sm:$0xf]
      %v3263 = vld [vmem:[%s4 + $0x8] sm:$0xf]
      %v3264 = vld [vmem:[%s4 + $0xc] sm:$0xf]
      %v3265 = vld [vmem:[%s4 + $0x10] sm:$0xf]
      %v3266 = vld [vmem:[%s4 + $0x14] sm:$0xf]
      %v3267 = vld [vmem:[%s4 + $0x18] sm:$0xf]
      %v3268 = vld [vmem:[%s4 + $0x1c] sm:$0xf]
      %v3269 = vld [vmem:[%s4 + $0x20] sm:$0xf]
      %v3270 = vld [vmem:[%s4 + $0x24] sm:$0xf]
      %v3271 = vld [vmem:[%s4 + $0x28] sm:$0xf]
      %v3272 = vld [vmem:[%s4 + $0x2c] sm:$0xf]
      %v3273 = vld [vmem:[%s4 + $0x30] sm:$0xf]
      %v3274 = vld [vmem:[%s4 + $0x34] sm:$0xf]
      %v3275 = vld [vmem:[%s4 + $0x38] sm:$0xf]
      %v3276 = vld [vmem:[%s4 + $0x3c] sm:$0xf]
      %v3277 = vld [vmem:[%s4 + $0x40] sm:$0xf]
      %v3278 = vld [vmem:[%s4 + $0x44] sm:$0xf]
      %v3279 = vld [vmem:[%s4 + $0x48] sm:$0xf]
      %v3280 = vld [vmem:[%s4 + $0x4c] sm:$0xf]
      %v3281 = vld [vmem:[%s4 + $0x50] sm:$0xf]
      %v3282 = vld [vmem:[%s4 + $0x54] sm:$0xf]
      %v3283 = vld [vmem:[%s4 + $0x58] sm:$0xf]
      %v3284 = vld [vmem:[%s4 + $0x5c] sm:$0xf]
      %v3285 = vld [vmem:[%s4 + $0x60] sm:$0xf]
      %v3286 = vld [vmem:[%s4 + $0x64] sm:$0xf]
      %v3287 = vld [vmem:[%s4 + $0x68] sm:$0xf]
      %v3288 = vld [vmem:[%s4 + $0x6c] sm:$0xf]
      %v3289 = vld [vmem:[%s4 + $0x70] sm:$0xf]
      %v3290 = vld [vmem:[%s4 + $0x74] sm:$0xf]
      %v3291 = vld [vmem:[%s4 + $0x78] sm:$0xf]
      %v3292 = vld [vmem:[%s4 + $0x7c] sm:$0xf]
      %v3325 = vunpack.c.l.b16 %v3261
      %v3326 = vunpack.c.l.b16 %v3262
      %v3327 = vunpack.c.l.b16 %v3263
      %v3328 = vunpack.c.l.b16 %v3264
      %v3329 = vunpack.c.l.b16 %v3265
      %v3330 = vunpack.c.l.b16 %v3266
      %v3331 = vunpack.c.l.b16 %v3267
      %v3332 = vunpack.c.l.b16 %v3268
      %v3333 = vunpack.c.l.b16 %v3269
      %v3334 = vunpack.c.l.b16 %v3270
      %v3335 = vunpack.c.l.b16 %v3271
      %v3336 = vunpack.c.l.b16 %v3272
      %v3337 = vunpack.c.l.b16 %v3273
      %v3338 = vunpack.c.l.b16 %v3274
      %v3339 = vunpack.c.l.b16 %v3275
      %v3340 = vunpack.c.l.b16 %v3276
      %v3341 = vunpack.c.l.b16 %v3277
      %v3342 = vunpack.c.l.b16 %v3278
      %v3343 = vunpack.c.l.b16 %v3279
      %v3344 = vunpack.c.l.b16 %v3280
      %v3345 = vunpack.c.l.b16 %v3281
      %v3346 = vunpack.c.l.b16 %v3282
      %v3347 = vunpack.c.l.b16 %v3283
      %v3348 = vunpack.c.l.b16 %v3284
      %v3349 = vunpack.c.l.b16 %v3285
      %v3350 = vunpack.c.l.b16 %v3286
      %v3351 = vunpack.c.l.b16 %v3287
      %v3352 = vunpack.c.l.b16 %v3288
      %v3353 = vunpack.c.l.b16 %v3289
      %v3354 = vunpack.c.l.b16 %v3290
      %v3355 = vunpack.c.l.b16 %v3291
      %v3356 = vunpack.c.l.b16 %v3292
      %v3357 = vpack.c.b16 %v3326, %v3325
      %v3358 = vpack.c.b16 %v3328, %v3327
      %v3359 = vpack.c.b16 %v3330, %v3329
      %v3360 = vpack.c.b16 %v3332, %v3331
      %v3361 = vpack.c.b16 %v3334, %v3333
      %v3362 = vpack.c.b16 %v3336, %v3335
      %v3363 = vpack.c.b16 %v3338, %v3337
      %v3364 = vpack.c.b16 %v3340, %v3339
      %v3365 = vpack.c.b16 %v3342, %v3341
      %v3366 = vpack.c.b16 %v3344, %v3343
      %v3367 = vpack.c.b16 %v3346, %v3345
      %v3368 = vpack.c.b16 %v3348, %v3347
      %v3369 = vpack.c.b16 %v3350, %v3349
      %v3370 = vpack.c.b16 %v3352, %v3351
      %v3371 = vpack.c.b16 %v3354, %v3353
      %v3372 = vpack.c.b16 %v3356, %v3355
      %v3374 = vsel %vm591, %v3357, 0
      %v3377 = vsel %vm591, %v3358, 0
      %v3380 = vsel %vm591, %v3359, 0
      %v3383 = vsel %vm591, %v3360, 0
      %v3386 = vsel %vm591, %v3361, 0
      %v3389 = vsel %vm591, %v3362, 0
      %v3392 = vsel %vm591, %v3363, 0
      %v3395 = vsel %vm591, %v3364, 0
      %v3398 = vsel %vm591, %v3365, 0
      %v3401 = vsel %vm591, %v3366, 0
      %v3404 = vsel %vm591, %v3367, 0
      %v3407 = vsel %vm591, %v3368, 0
      %v3410 = vsel %vm591, %v3369, 0
      %v3413 = vsel %vm591, %v3370, 0
      %v3416 = vsel %vm591, %v3371, 0
      %v3419 = vsel %vm591, %v3372, 0
      %3421 = vmatpush.bf16.msra.mxu0 0
      %3422 = vmatpush.bf16.msra.mxu0 0
      %3423 = vmatpush.bf16.msra.mxu0 0
      %3424 = vmatpush.bf16.msra.mxu0 0
      %3425 = vmatpush.bf16.msra.mxu0 %v3260
      %3426 = vmatpush.bf16.msra.mxu0 %v3259
      %3427 = vmatpush.bf16.msra.mxu0 %v3258
      %3428 = vmatpush.bf16.msra.mxu0 %v3257
      %3429 = vmatmul.bf16.gmra.mxu0 %v3374
      %v3430 = vpop.f32.mrf.mxu0
      %v3431 = vadd.f32 0.0, %v3430
      %v3432 = vpop.f32.mrf.mxu0
      %v3433 = vadd.f32 0.0, %v3432
      %3434 = vmatmul.bf16.gmra.mxu0 %v3377
      %v3435 = vpop.f32.mrf.mxu0
      %v3436 = vadd.f32 0.0, %v3435
      %v3437 = vpop.f32.mrf.mxu0
      %v3438 = vadd.f32 0.0, %v3437
      %3439 = vmatmul.bf16.gmra.mxu0 %v3380
      %v3440 = vpop.f32.mrf.mxu0
      %v3441 = vadd.f32 0.0, %v3440
      %v3442 = vpop.f32.mrf.mxu0
      %v3443 = vadd.f32 0.0, %v3442
      %3444 = vmatmul.bf16.gmra.mxu0 %v3383
      %v3445 = vpop.f32.mrf.mxu0
      %v3446 = vadd.f32 0.0, %v3445
      %v3447 = vpop.f32.mrf.mxu0
      %v3448 = vadd.f32 0.0, %v3447
      %3449 = vmatmul.bf16.gmra.mxu0 %v3386
      %v3450 = vpop.f32.mrf.mxu0
      %v3451 = vadd.f32 0.0, %v3450
      %v3452 = vpop.f32.mrf.mxu0
      %v3453 = vadd.f32 0.0, %v3452
      %3454 = vmatmul.bf16.gmra.mxu0 %v3389
      %v3455 = vpop.f32.mrf.mxu0
      %v3456 = vadd.f32 0.0, %v3455
      %v3457 = vpop.f32.mrf.mxu0
      %v3458 = vadd.f32 0.0, %v3457
      %3459 = vmatmul.bf16.gmra.mxu0 %v3392
      %v3460 = vpop.f32.mrf.mxu0
      %v3461 = vadd.f32 0.0, %v3460
      %v3462 = vpop.f32.mrf.mxu0
      %v3463 = vadd.f32 0.0, %v3462
      %3464 = vmatmul.bf16.gmra.mxu0 %v3395
      %v3465 = vpop.f32.mrf.mxu0
      %v3466 = vadd.f32 0.0, %v3465
      %v3467 = vpop.f32.mrf.mxu0
      %v3468 = vadd.f32 0.0, %v3467
      %3469 = vmatmul.bf16.gmra.mxu0 %v3398
      %v3470 = vpop.f32.mrf.mxu0
      %v3471 = vadd.f32 0.0, %v3470
      %v3472 = vpop.f32.mrf.mxu0
      %v3473 = vadd.f32 0.0, %v3472
      %3474 = vmatmul.bf16.gmra.mxu0 %v3401
      %v3475 = vpop.f32.mrf.mxu0
      %v3476 = vadd.f32 0.0, %v3475
      %v3477 = vpop.f32.mrf.mxu0
      %v3478 = vadd.f32 0.0, %v3477
      %3479 = vmatmul.bf16.gmra.mxu0 %v3404
      %v3480 = vpop.f32.mrf.mxu0
      %v3481 = vadd.f32 0.0, %v3480
      %v3482 = vpop.f32.mrf.mxu0
      %v3483 = vadd.f32 0.0, %v3482
      %3484 = vmatmul.bf16.gmra.mxu0 %v3407
      %v3485 = vpop.f32.mrf.mxu0
      %v3486 = vadd.f32 0.0, %v3485
      %v3487 = vpop.f32.mrf.mxu0
      %v3488 = vadd.f32 0.0, %v3487
      %3489 = vmatmul.bf16.gmra.mxu0 %v3410
      %v3490 = vpop.f32.mrf.mxu0
      %v3491 = vadd.f32 0.0, %v3490
      %v3492 = vpop.f32.mrf.mxu0
      %v3493 = vadd.f32 0.0, %v3492
      %3494 = vmatmul.bf16.gmra.mxu0 %v3413
      %v3495 = vpop.f32.mrf.mxu0
      %v3496 = vadd.f32 0.0, %v3495
      %v3497 = vpop.f32.mrf.mxu0
      %v3498 = vadd.f32 0.0, %v3497
      %3499 = vmatmul.bf16.gmra.mxu0 %v3416
      %v3500 = vpop.f32.mrf.mxu0
      %v3501 = vadd.f32 0.0, %v3500
      %v3502 = vpop.f32.mrf.mxu0
      %v3503 = vadd.f32 0.0, %v3502
      %3504 = vmatmul.bf16.gmra.mxu0 %v3419
      %v3505 = vpop.f32.mrf.mxu0
      %v3506 = vadd.f32 0.0, %v3505
      %v3507 = vpop.f32.mrf.mxu0
      %v3508 = vadd.f32 0.0, %v3507
      %3509 = vdwg.mxu0
      %v3510 = vpack.c.bf16 %v3431, %v3431
      %v3511 = vpack.c.bf16 %v3433, %v3433
      %v3512 = vpack.c.bf16 %v3436, %v3436
      %v3513 = vpack.c.bf16 %v3438, %v3438
      %v3514 = vpack.c.bf16 %v3441, %v3441
      %v3515 = vpack.c.bf16 %v3443, %v3443
      %v3516 = vpack.c.bf16 %v3446, %v3446
      %v3517 = vpack.c.bf16 %v3448, %v3448
      %v3518 = vpack.c.bf16 %v3451, %v3451
      %v3519 = vpack.c.bf16 %v3453, %v3453
      %v3520 = vpack.c.bf16 %v3456, %v3456
      %v3521 = vpack.c.bf16 %v3458, %v3458
      %v3522 = vpack.c.bf16 %v3461, %v3461
      %v3523 = vpack.c.bf16 %v3463, %v3463
      %v3524 = vpack.c.bf16 %v3466, %v3466
      %v3525 = vpack.c.bf16 %v3468, %v3468
      %v3526 = vpack.c.bf16 %v3471, %v3471
      %v3527 = vpack.c.bf16 %v3473, %v3473
      %v3528 = vpack.c.bf16 %v3476, %v3476
      %v3529 = vpack.c.bf16 %v3478, %v3478
      %v3530 = vpack.c.bf16 %v3481, %v3481
      %v3531 = vpack.c.bf16 %v3483, %v3483
      %v3532 = vpack.c.bf16 %v3486, %v3486
      %v3533 = vpack.c.bf16 %v3488, %v3488
      %v3534 = vpack.c.bf16 %v3491, %v3491
      %v3535 = vpack.c.bf16 %v3493, %v3493
      %v3536 = vpack.c.bf16 %v3496, %v3496
      %v3537 = vpack.c.bf16 %v3498, %v3498
      %v3538 = vpack.c.bf16 %v3501, %v3501
      %v3539 = vpack.c.bf16 %v3503, %v3503
      %v3540 = vpack.c.bf16 %v3506, %v3506
      %v3541 = vpack.c.bf16 %v3508, %v3508
      %v3544 = vunpack.c.l.b16 %v3510
      %v3545 = vunpack.c.l.b16 %v3511
      %v3546 = vpack.c.b16 %v3545, %v3544
      %v3549 = vunpack.c.l.b16 %v3512
      %v3550 = vunpack.c.l.b16 %v3513
      %v3551 = vpack.c.b16 %v3550, %v3549
      %3552 = vrot.lane.b32.xlu0 %v3551, 64
      %v3553 = vpop.permute.xlu0 %3552
      %v3556 = vunpack.c.l.b16 %v3514
      %v3557 = vunpack.c.l.b16 %v3515
      %v3558 = vpack.c.b16 %v3557, %v3556
      %v3561 = vunpack.c.l.b16 %v3516
      %v3562 = vunpack.c.l.b16 %v3517
      %v3563 = vpack.c.b16 %v3562, %v3561
      %3564 = vrot.lane.b32.xlu0 %v3563, 64
      %v3565 = vpop.permute.xlu0 %3564
      %v3568 = vunpack.c.l.b16 %v3518
      %v3569 = vunpack.c.l.b16 %v3519
      %v3570 = vpack.c.b16 %v3569, %v3568
      %v3573 = vunpack.c.l.b16 %v3520
      %v3574 = vunpack.c.l.b16 %v3521
      %v3575 = vpack.c.b16 %v3574, %v3573
      %3576 = vrot.lane.b32.xlu0 %v3575, 64
      %v3577 = vpop.permute.xlu0 %3576
      %v3580 = vunpack.c.l.b16 %v3522
      %v3581 = vunpack.c.l.b16 %v3523
      %v3582 = vpack.c.b16 %v3581, %v3580
      %v3585 = vunpack.c.l.b16 %v3524
      %v3586 = vunpack.c.l.b16 %v3525
      %v3587 = vpack.c.b16 %v3586, %v3585
      %3588 = vrot.lane.b32.xlu0 %v3587, 64
      %v3589 = vpop.permute.xlu0 %3588
      %v3592 = vunpack.c.l.b16 %v3526
      %v3593 = vunpack.c.l.b16 %v3527
      %v3594 = vpack.c.b16 %v3593, %v3592
      %v3597 = vunpack.c.l.b16 %v3528
      %v3598 = vunpack.c.l.b16 %v3529
      %v3599 = vpack.c.b16 %v3598, %v3597
      %3600 = vrot.lane.b32.xlu0 %v3599, 64
      %v3601 = vpop.permute.xlu0 %3600
      %v3604 = vunpack.c.l.b16 %v3530
      %v3605 = vunpack.c.l.b16 %v3531
      %v3606 = vpack.c.b16 %v3605, %v3604
      %v3609 = vunpack.c.l.b16 %v3532
      %v3610 = vunpack.c.l.b16 %v3533
      %v3611 = vpack.c.b16 %v3610, %v3609
      %3612 = vrot.lane.b32.xlu0 %v3611, 64
      %v3613 = vpop.permute.xlu0 %3612
      %v3616 = vunpack.c.l.b16 %v3534
      %v3617 = vunpack.c.l.b16 %v3535
      %v3618 = vpack.c.b16 %v3617, %v3616
      %v3621 = vunpack.c.l.b16 %v3536
      %v3622 = vunpack.c.l.b16 %v3537
      %v3623 = vpack.c.b16 %v3622, %v3621
      %3624 = vrot.lane.b32.xlu0 %v3623, 64
      %v3625 = vpop.permute.xlu0 %3624
      %v3628 = vunpack.c.l.b16 %v3538
      %v3629 = vunpack.c.l.b16 %v3539
      %v3630 = vpack.c.b16 %v3629, %v3628
      %v3633 = vunpack.c.l.b16 %v3540
      %v3634 = vunpack.c.l.b16 %v3541
      %v3635 = vpack.c.b16 %v3634, %v3633
      %3636 = vrot.lane.b32.xlu0 %v3635, 64
      %v3637 = vpop.permute.xlu0 %3636
      %v3640 = vsel %vm591, %v3546, %v3553
      %v3644 = vsel %vm591, %v3558, %v3565
      %v3648 = vsel %vm591, %v3570, %v3577
      %v3652 = vsel %vm591, %v3582, %v3589
      %v3656 = vsel %vm591, %v3594, %v3601
      %v3660 = vsel %vm591, %v3606, %v3613
      %v3664 = vsel %vm591, %v3618, %v3625
      %v3668 = vsel %vm591, %v3630, %v3637
      %v3670 = vld [vmem:[%s5] sm:$0xf]
      %v3671 = vld [vmem:[%s5 + $0x4] sm:$0xf]
      %v3672 = vld [vmem:[%s5 + $0x8] sm:$0xf]
      %v3673 = vld [vmem:[%s5 + $0xc] sm:$0xf]
      %v3674 = vld [vmem:[%s5 + $0x10] sm:$0xf]
      %v3675 = vld [vmem:[%s5 + $0x14] sm:$0xf]
      %v3676 = vld [vmem:[%s5 + $0x18] sm:$0xf]
      %v3677 = vld [vmem:[%s5 + $0x1c] sm:$0xf]
      %v3678 = vld [vmem:[%s5 + $0x20] sm:$0xf]
      %v3679 = vld [vmem:[%s5 + $0x24] sm:$0xf]
      %v3680 = vld [vmem:[%s5 + $0x28] sm:$0xf]
      %v3681 = vld [vmem:[%s5 + $0x2c] sm:$0xf]
      %v3682 = vld [vmem:[%s5 + $0x30] sm:$0xf]
      %v3683 = vld [vmem:[%s5 + $0x34] sm:$0xf]
      %v3684 = vld [vmem:[%s5 + $0x38] sm:$0xf]
      %v3685 = vld [vmem:[%s5 + $0x3c] sm:$0xf]
      %v3686 = vld [vmem:[%s5 + $0x40] sm:$0xf]
      %v3687 = vld [vmem:[%s5 + $0x44] sm:$0xf]
      %v3688 = vld [vmem:[%s5 + $0x48] sm:$0xf]
      %v3689 = vld [vmem:[%s5 + $0x4c] sm:$0xf]
      %v3690 = vld [vmem:[%s5 + $0x50] sm:$0xf]
      %v3691 = vld [vmem:[%s5 + $0x54] sm:$0xf]
      %v3692 = vld [vmem:[%s5 + $0x58] sm:$0xf]
      %v3693 = vld [vmem:[%s5 + $0x5c] sm:$0xf]
      %v3694 = vld [vmem:[%s5 + $0x60] sm:$0xf]
      %v3695 = vld [vmem:[%s5 + $0x64] sm:$0xf]
      %v3696 = vld [vmem:[%s5 + $0x68] sm:$0xf]
      %v3697 = vld [vmem:[%s5 + $0x6c] sm:$0xf]
      %v3698 = vld [vmem:[%s5 + $0x70] sm:$0xf]
      %v3699 = vld [vmem:[%s5 + $0x74] sm:$0xf]
      %v3700 = vld [vmem:[%s5 + $0x78] sm:$0xf]
      %v3701 = vld [vmem:[%s5 + $0x7c] sm:$0xf]
      %v3702 = vld [vmem:[%s5 + $0x80] sm:$0xf]
      %v3703 = vld [vmem:[%s5 + $0x84] sm:$0xf]
      %v3704 = vld [vmem:[%s5 + $0x88] sm:$0xf]
      %v3705 = vld [vmem:[%s5 + $0x8c] sm:$0xf]
      %v3706 = vld [vmem:[%s5 + $0x90] sm:$0xf]
      %v3707 = vld [vmem:[%s5 + $0x94] sm:$0xf]
      %v3708 = vld [vmem:[%s5 + $0x98] sm:$0xf]
      %v3709 = vld [vmem:[%s5 + $0x9c] sm:$0xf]
      %v3710 = vld [vmem:[%s5 + $0xa0] sm:$0xf]
      %v3711 = vld [vmem:[%s5 + $0xa4] sm:$0xf]
      %v3712 = vld [vmem:[%s5 + $0xa8] sm:$0xf]
      %v3713 = vld [vmem:[%s5 + $0xac] sm:$0xf]
      %v3714 = vld [vmem:[%s5 + $0xb0] sm:$0xf]
      %v3715 = vld [vmem:[%s5 + $0xb4] sm:$0xf]
      %v3716 = vld [vmem:[%s5 + $0xb8] sm:$0xf]
      %v3717 = vld [vmem:[%s5 + $0xbc] sm:$0xf]
      %v3718 = vld [vmem:[%s5 + $0xc0] sm:$0xf]
      %v3719 = vld [vmem:[%s5 + $0xc4] sm:$0xf]
      %v3720 = vld [vmem:[%s5 + $0xc8] sm:$0xf]
      %v3721 = vld [vmem:[%s5 + $0xcc] sm:$0xf]
      %v3722 = vld [vmem:[%s5 + $0xd0] sm:$0xf]
      %v3723 = vld [vmem:[%s5 + $0xd4] sm:$0xf]
      %v3724 = vld [vmem:[%s5 + $0xd8] sm:$0xf]
      %v3725 = vld [vmem:[%s5 + $0xdc] sm:$0xf]
      %v3726 = vld [vmem:[%s5 + $0xe0] sm:$0xf]
      %v3727 = vld [vmem:[%s5 + $0xe4] sm:$0xf]
      %v3728 = vld [vmem:[%s5 + $0xe8] sm:$0xf]
      %v3729 = vld [vmem:[%s5 + $0xec] sm:$0xf]
      %v3730 = vld [vmem:[%s5 + $0xf0] sm:$0xf]
      %v3731 = vld [vmem:[%s5 + $0xf4] sm:$0xf]
      %v3732 = vld [vmem:[%s5 + $0xf8] sm:$0xf]
      %v3733 = vld [vmem:[%s5 + $0xfc] sm:$0xf]
      %v3734 = vld [vmem:[%s5 + $0x100] sm:$0xf]
      %v3735 = vld [vmem:[%s5 + $0x104] sm:$0xf]
      %v3736 = vld [vmem:[%s5 + $0x108] sm:$0xf]
      %v3737 = vld [vmem:[%s5 + $0x10c] sm:$0xf]
      %v3738 = vld [vmem:[%s5 + $0x110] sm:$0xf]
      %v3739 = vld [vmem:[%s5 + $0x114] sm:$0xf]
      %v3740 = vld [vmem:[%s5 + $0x118] sm:$0xf]
      %v3741 = vld [vmem:[%s5 + $0x11c] sm:$0xf]
      %v3742 = vld [vmem:[%s5 + $0x120] sm:$0xf]
      %v3743 = vld [vmem:[%s5 + $0x124] sm:$0xf]
      %v3744 = vld [vmem:[%s5 + $0x128] sm:$0xf]
      %v3745 = vld [vmem:[%s5 + $0x12c] sm:$0xf]
      %v3746 = vld [vmem:[%s5 + $0x130] sm:$0xf]
      %v3747 = vld [vmem:[%s5 + $0x134] sm:$0xf]
      %v3748 = vld [vmem:[%s5 + $0x138] sm:$0xf]
      %v3749 = vld [vmem:[%s5 + $0x13c] sm:$0xf]
      %v3750 = vld [vmem:[%s5 + $0x140] sm:$0xf]
      %v3751 = vld [vmem:[%s5 + $0x144] sm:$0xf]
      %v3752 = vld [vmem:[%s5 + $0x148] sm:$0xf]
      %v3753 = vld [vmem:[%s5 + $0x14c] sm:$0xf]
      %v3754 = vld [vmem:[%s5 + $0x150] sm:$0xf]
      %v3755 = vld [vmem:[%s5 + $0x154] sm:$0xf]
      %v3756 = vld [vmem:[%s5 + $0x158] sm:$0xf]
      %v3757 = vld [vmem:[%s5 + $0x15c] sm:$0xf]
      %v3758 = vld [vmem:[%s5 + $0x160] sm:$0xf]
      %v3759 = vld [vmem:[%s5 + $0x164] sm:$0xf]
      %v3760 = vld [vmem:[%s5 + $0x168] sm:$0xf]
      %v3761 = vld [vmem:[%s5 + $0x16c] sm:$0xf]
      %v3762 = vld [vmem:[%s5 + $0x170] sm:$0xf]
      %v3763 = vld [vmem:[%s5 + $0x174] sm:$0xf]
      %v3764 = vld [vmem:[%s5 + $0x178] sm:$0xf]
      %v3765 = vld [vmem:[%s5 + $0x17c] sm:$0xf]
      %v3766 = vld [vmem:[%s5 + $0x180] sm:$0xf]
      %v3767 = vld [vmem:[%s5 + $0x184] sm:$0xf]
      %v3768 = vld [vmem:[%s5 + $0x188] sm:$0xf]
      %v3769 = vld [vmem:[%s5 + $0x18c] sm:$0xf]
      %v3770 = vld [vmem:[%s5 + $0x190] sm:$0xf]
      %v3771 = vld [vmem:[%s5 + $0x194] sm:$0xf]
      %v3772 = vld [vmem:[%s5 + $0x198] sm:$0xf]
      %v3773 = vld [vmem:[%s5 + $0x19c] sm:$0xf]
      %v3774 = vld [vmem:[%s5 + $0x1a0] sm:$0xf]
      %v3775 = vld [vmem:[%s5 + $0x1a4] sm:$0xf]
      %v3776 = vld [vmem:[%s5 + $0x1a8] sm:$0xf]
      %v3777 = vld [vmem:[%s5 + $0x1ac] sm:$0xf]
      %v3778 = vld [vmem:[%s5 + $0x1b0] sm:$0xf]
      %v3779 = vld [vmem:[%s5 + $0x1b4] sm:$0xf]
      %v3780 = vld [vmem:[%s5 + $0x1b8] sm:$0xf]
      %v3781 = vld [vmem:[%s5 + $0x1bc] sm:$0xf]
      %v3782 = vld [vmem:[%s5 + $0x1c0] sm:$0xf]
      %v3783 = vld [vmem:[%s5 + $0x1c4] sm:$0xf]
      %v3784 = vld [vmem:[%s5 + $0x1c8] sm:$0xf]
      %v3785 = vld [vmem:[%s5 + $0x1cc] sm:$0xf]
      %v3786 = vld [vmem:[%s5 + $0x1d0] sm:$0xf]
      %v3787 = vld [vmem:[%s5 + $0x1d4] sm:$0xf]
      %v3788 = vld [vmem:[%s5 + $0x1d8] sm:$0xf]
      %v3789 = vld [vmem:[%s5 + $0x1dc] sm:$0xf]
      %v3790 = vld [vmem:[%s5 + $0x1e0] sm:$0xf]
      %v3791 = vld [vmem:[%s5 + $0x1e4] sm:$0xf]
      %v3792 = vld [vmem:[%s5 + $0x1e8] sm:$0xf]
      %v3793 = vld [vmem:[%s5 + $0x1ec] sm:$0xf]
      %v3794 = vld [vmem:[%s5 + $0x1f0] sm:$0xf]
      %v3795 = vld [vmem:[%s5 + $0x1f4] sm:$0xf]
      %v3796 = vld [vmem:[%s5 + $0x1f8] sm:$0xf]
      %v3797 = vld [vmem:[%s5 + $0x1fc] sm:$0xf]
      %v3926 = vunpack.c.l.b16 %v3670
      %v3927 = vunpack.c.l.b16 %v3671
      %v3928 = vunpack.c.l.b16 %v3672
      %v3929 = vunpack.c.l.b16 %v3673
      %v3930 = vunpack.c.l.b16 %v3674
      %v3931 = vunpack.c.l.b16 %v3675
      %v3932 = vunpack.c.l.b16 %v3676
      %v3933 = vunpack.c.l.b16 %v3677
      %v3934 = vunpack.c.l.b16 %v3678
      %v3935 = vunpack.c.l.b16 %v3679
      %v3936 = vunpack.c.l.b16 %v3680
      %v3937 = vunpack.c.l.b16 %v3681
      %v3938 = vunpack.c.l.b16 %v3682
      %v3939 = vunpack.c.l.b16 %v3683
      %v3940 = vunpack.c.l.b16 %v3684
      %v3941 = vunpack.c.l.b16 %v3685
      %v3942 = vunpack.c.l.b16 %v3686
      %v3943 = vunpack.c.l.b16 %v3687
      %v3944 = vunpack.c.l.b16 %v3688
      %v3945 = vunpack.c.l.b16 %v3689
      %v3946 = vunpack.c.l.b16 %v3690
      %v3947 = vunpack.c.l.b16 %v3691
      %v3948 = vunpack.c.l.b16 %v3692
      %v3949 = vunpack.c.l.b16 %v3693
      %v3950 = vunpack.c.l.b16 %v3694
      %v3951 = vunpack.c.l.b16 %v3695
      %v3952 = vunpack.c.l.b16 %v3696
      %v3953 = vunpack.c.l.b16 %v3697
      %v3954 = vunpack.c.l.b16 %v3698
      %v3955 = vunpack.c.l.b16 %v3699
      %v3956 = vunpack.c.l.b16 %v3700
      %v3957 = vunpack.c.l.b16 %v3701
      %v3958 = vunpack.c.l.b16 %v3702
      %v3959 = vunpack.c.l.b16 %v3703
      %v3960 = vunpack.c.l.b16 %v3704
      %v3961 = vunpack.c.l.b16 %v3705
      %v3962 = vunpack.c.l.b16 %v3706
      %v3963 = vunpack.c.l.b16 %v3707
      %v3964 = vunpack.c.l.b16 %v3708
      %v3965 = vunpack.c.l.b16 %v3709
      %v3966 = vunpack.c.l.b16 %v3710
      %v3967 = vunpack.c.l.b16 %v3711
      %v3968 = vunpack.c.l.b16 %v3712
      %v3969 = vunpack.c.l.b16 %v3713
      %v3970 = vunpack.c.l.b16 %v3714
      %v3971 = vunpack.c.l.b16 %v3715
      %v3972 = vunpack.c.l.b16 %v3716
      %v3973 = vunpack.c.l.b16 %v3717
      %v3974 = vunpack.c.l.b16 %v3718
      %v3975 = vunpack.c.l.b16 %v3719
      %v3976 = vunpack.c.l.b16 %v3720
      %v3977 = vunpack.c.l.b16 %v3721
      %v3978 = vunpack.c.l.b16 %v3722
      %v3979 = vunpack.c.l.b16 %v3723
      %v3980 = vunpack.c.l.b16 %v3724
      %v3981 = vunpack.c.l.b16 %v3725
      %v3982 = vunpack.c.l.b16 %v3726
      %v3983 = vunpack.c.l.b16 %v3727
      %v3984 = vunpack.c.l.b16 %v3728
      %v3985 = vunpack.c.l.b16 %v3729
      %v3986 = vunpack.c.l.b16 %v3730
      %v3987 = vunpack.c.l.b16 %v3731
      %v3988 = vunpack.c.l.b16 %v3732
      %v3989 = vunpack.c.l.b16 %v3733
      %v3990 = vunpack.c.l.b16 %v3734
      %v3991 = vunpack.c.l.b16 %v3735
      %v3992 = vunpack.c.l.b16 %v3736
      %v3993 = vunpack.c.l.b16 %v3737
      %v3994 = vunpack.c.l.b16 %v3738
      %v3995 = vunpack.c.l.b16 %v3739
      %v3996 = vunpack.c.l.b16 %v3740
      %v3997 = vunpack.c.l.b16 %v3741
      %v3998 = vunpack.c.l.b16 %v3742
      %v3999 = vunpack.c.l.b16 %v3743
      %v4000 = vunpack.c.l.b16 %v3744
      %v4001 = vunpack.c.l.b16 %v3745
      %v4002 = vunpack.c.l.b16 %v3746
      %v4003 = vunpack.c.l.b16 %v3747
      %v4004 = vunpack.c.l.b16 %v3748
      %v4005 = vunpack.c.l.b16 %v3749
      %v4006 = vunpack.c.l.b16 %v3750
      %v4007 = vunpack.c.l.b16 %v3751
      %v4008 = vunpack.c.l.b16 %v3752
      %v4009 = vunpack.c.l.b16 %v3753
      %v4010 = vunpack.c.l.b16 %v3754
      %v4011 = vunpack.c.l.b16 %v3755
      %v4012 = vunpack.c.l.b16 %v3756
      %v4013 = vunpack.c.l.b16 %v3757
      %v4014 = vunpack.c.l.b16 %v3758
      %v4015 = vunpack.c.l.b16 %v3759
      %v4016 = vunpack.c.l.b16 %v3760
      %v4017 = vunpack.c.l.b16 %v3761
      %v4018 = vunpack.c.l.b16 %v3762
      %v4019 = vunpack.c.l.b16 %v3763
      %v4020 = vunpack.c.l.b16 %v3764
      %v4021 = vunpack.c.l.b16 %v3765
      %v4022 = vunpack.c.l.b16 %v3766
      %v4023 = vunpack.c.l.b16 %v3767
      %v4024 = vunpack.c.l.b16 %v3768
      %v4025 = vunpack.c.l.b16 %v3769
      %v4026 = vunpack.c.l.b16 %v3770
      %v4027 = vunpack.c.l.b16 %v3771
      %v4028 = vunpack.c.l.b16 %v3772
      %v4029 = vunpack.c.l.b16 %v3773
      %v4030 = vunpack.c.l.b16 %v3774
      %v4031 = vunpack.c.l.b16 %v3775
      %v4032 = vunpack.c.l.b16 %v3776
      %v4033 = vunpack.c.l.b16 %v3777
      %v4034 = vunpack.c.l.b16 %v3778
      %v4035 = vunpack.c.l.b16 %v3779
      %v4036 = vunpack.c.l.b16 %v3780
      %v4037 = vunpack.c.l.b16 %v3781
      %v4038 = vunpack.c.l.b16 %v3782
      %v4039 = vunpack.c.l.b16 %v3783
      %v4040 = vunpack.c.l.b16 %v3784
      %v4041 = vunpack.c.l.b16 %v3785
      %v4042 = vunpack.c.l.b16 %v3786
      %v4043 = vunpack.c.l.b16 %v3787
      %v4044 = vunpack.c.l.b16 %v3788
      %v4045 = vunpack.c.l.b16 %v3789
      %v4046 = vunpack.c.l.b16 %v3790
      %v4047 = vunpack.c.l.b16 %v3791
      %v4048 = vunpack.c.l.b16 %v3792
      %v4049 = vunpack.c.l.b16 %v3793
      %v4050 = vunpack.c.l.b16 %v3794
      %v4051 = vunpack.c.l.b16 %v3795
      %v4052 = vunpack.c.l.b16 %v3796
      %v4053 = vunpack.c.l.b16 %v3797
      %v4054 = vpack.c.b16 %v3927, %v3926
      %v4055 = vpack.c.b16 %v3929, %v3928
      %v4056 = vpack.c.b16 %v3931, %v3930
      %v4057 = vpack.c.b16 %v3933, %v3932
      %v4058 = vpack.c.b16 %v3935, %v3934
      %v4059 = vpack.c.b16 %v3937, %v3936
      %v4060 = vpack.c.b16 %v3939, %v3938
      %v4061 = vpack.c.b16 %v3941, %v3940
      %v4062 = vpack.c.b16 %v3943, %v3942
      %v4063 = vpack.c.b16 %v3945, %v3944
      %v4064 = vpack.c.b16 %v3947, %v3946
      %v4065 = vpack.c.b16 %v3949, %v3948
      %v4066 = vpack.c.b16 %v3951, %v3950
      %v4067 = vpack.c.b16 %v3953, %v3952
      %v4068 = vpack.c.b16 %v3955, %v3954
      %v4069 = vpack.c.b16 %v3957, %v3956
      %v4070 = vpack.c.b16 %v3959, %v3958
      %v4071 = vpack.c.b16 %v3961, %v3960
      %v4072 = vpack.c.b16 %v3963, %v3962
      %v4073 = vpack.c.b16 %v3965, %v3964
      %v4074 = vpack.c.b16 %v3967, %v3966
      %v4075 = vpack.c.b16 %v3969, %v3968
      %v4076 = vpack.c.b16 %v3971, %v3970
      %v4077 = vpack.c.b16 %v3973, %v3972
      %v4078 = vpack.c.b16 %v3975, %v3974
      %v4079 = vpack.c.b16 %v3977, %v3976
      %v4080 = vpack.c.b16 %v3979, %v3978
      %v4081 = vpack.c.b16 %v3981, %v3980
      %v4082 = vpack.c.b16 %v3983, %v3982
      %v4083 = vpack.c.b16 %v3985, %v3984
      %v4084 = vpack.c.b16 %v3987, %v3986
      %v4085 = vpack.c.b16 %v3989, %v3988
      %v4086 = vpack.c.b16 %v3991, %v3990
      %v4087 = vpack.c.b16 %v3993, %v3992
      %v4088 = vpack.c.b16 %v3995, %v3994
      %v4089 = vpack.c.b16 %v3997, %v3996
      %v4090 = vpack.c.b16 %v3999, %v3998
      %v4091 = vpack.c.b16 %v4001, %v4000
      %v4092 = vpack.c.b16 %v4003, %v4002
      %v4093 = vpack.c.b16 %v4005, %v4004
      %v4094 = vpack.c.b16 %v4007, %v4006
      %v4095 = vpack.c.b16 %v4009, %v4008
      %v4096 = vpack.c.b16 %v4011, %v4010
      %v4097 = vpack.c.b16 %v4013, %v4012
      %v4098 = vpack.c.b16 %v4015, %v4014
      %v4099 = vpack.c.b16 %v4017, %v4016
      %v4100 = vpack.c.b16 %v4019, %v4018
      %v4101 = vpack.c.b16 %v4021, %v4020
      %v4102 = vpack.c.b16 %v4023, %v4022
      %v4103 = vpack.c.b16 %v4025, %v4024
      %v4104 = vpack.c.b16 %v4027, %v4026
      %v4105 = vpack.c.b16 %v4029, %v4028
      %v4106 = vpack.c.b16 %v4031, %v4030
      %v4107 = vpack.c.b16 %v4033, %v4032
      %v4108 = vpack.c.b16 %v4035, %v4034
      %v4109 = vpack.c.b16 %v4037, %v4036
      %v4110 = vpack.c.b16 %v4039, %v4038
      %v4111 = vpack.c.b16 %v4041, %v4040
      %v4112 = vpack.c.b16 %v4043, %v4042
      %v4113 = vpack.c.b16 %v4045, %v4044
      %v4114 = vpack.c.b16 %v4047, %v4046
      %v4115 = vpack.c.b16 %v4049, %v4048
      %v4116 = vpack.c.b16 %v4051, %v4050
      %v4117 = vpack.c.b16 %v4053, %v4052
      %4182 = vmatpush.bf16.msra.mxu0 %v4061
      %4183 = vmatpush.bf16.msra.mxu0 %v4060
      %4184 = vmatpush.bf16.msra.mxu0 %v4059
      %4185 = vmatpush.bf16.msra.mxu0 %v4058
      %4186 = vmatpush.bf16.msra.mxu0 %v4057
      %4187 = vmatpush.bf16.msra.mxu0 %v4056
      %4188 = vmatpush.bf16.msra.mxu0 %v4055
      %4189 = vmatpush.bf16.msra.mxu0 %v4054
      %4190 = vmatmul.bf16.gmra.mxu0 %v3640
      %v4191 = vpop.f32.mrf.mxu0
      %v4192 = vadd.f32 0.0, %v4191
      %v4193 = vpop.f32.mrf.mxu0
      %v4194 = vadd.f32 0.0, %v4193
      %4195 = vdwg.mxu0
      %4196 = vmatpush.bf16.msra.mxu0 %v4069
      %4197 = vmatpush.bf16.msra.mxu0 %v4068
      %4198 = vmatpush.bf16.msra.mxu0 %v4067
      %4199 = vmatpush.bf16.msra.mxu0 %v4066
      %4200 = vmatpush.bf16.msra.mxu0 %v4065
      %4201 = vmatpush.bf16.msra.mxu0 %v4064
      %4202 = vmatpush.bf16.msra.mxu0 %v4063
      %4203 = vmatpush.bf16.msra.mxu0 %v4062
      %4204 = vmatmul.bf16.gmra.mxu0 %v3644
      %v4205 = vpop.f32.mrf.mxu0
      %v4206 = vadd.f32 %v4192, %v4205
      %v4207 = vpop.f32.mrf.mxu0
      %v4208 = vadd.f32 %v4194, %v4207
      %4209 = vdwg.mxu0
      %4210 = vmatpush.bf16.msra.mxu0 %v4077
      %4211 = vmatpush.bf16.msra.mxu0 %v4076
      %4212 = vmatpush.bf16.msra.mxu0 %v4075
      %4213 = vmatpush.bf16.msra.mxu0 %v4074
      %4214 = vmatpush.bf16.msra.mxu0 %v4073
      %4215 = vmatpush.bf16.msra.mxu0 %v4072
      %4216 = vmatpush.bf16.msra.mxu0 %v4071
      %4217 = vmatpush.bf16.msra.mxu0 %v4070
      %4218 = vmatmul.bf16.gmra.mxu0 %v3648
      %v4219 = vpop.f32.mrf.mxu0
      %v4220 = vadd.f32 %v4206, %v4219
      %v4221 = vpop.f32.mrf.mxu0
      %v4222 = vadd.f32 %v4208, %v4221
      %4223 = vdwg.mxu0
      %4224 = vmatpush.bf16.msra.mxu0 %v4085
      %4225 = vmatpush.bf16.msra.mxu0 %v4084
      %4226 = vmatpush.bf16.msra.mxu0 %v4083
      %4227 = vmatpush.bf16.msra.mxu0 %v4082
      %4228 = vmatpush.bf16.msra.mxu0 %v4081
      %4229 = vmatpush.bf16.msra.mxu0 %v4080
      %4230 = vmatpush.bf16.msra.mxu0 %v4079
      %4231 = vmatpush.bf16.msra.mxu0 %v4078
      %4232 = vmatmul.bf16.gmra.mxu0 %v3652
      %v4233 = vpop.f32.mrf.mxu0
      %v4234 = vadd.f32 %v4220, %v4233
      %v4235 = vpop.f32.mrf.mxu0
      %v4236 = vadd.f32 %v4222, %v4235
      %4237 = vdwg.mxu0
      %4238 = vmatpush.bf16.msra.mxu0 %v4093
      %4239 = vmatpush.bf16.msra.mxu0 %v4092
      %4240 = vmatpush.bf16.msra.mxu0 %v4091
      %4241 = vmatpush.bf16.msra.mxu0 %v4090
      %4242 = vmatpush.bf16.msra.mxu0 %v4089
      %4243 = vmatpush.bf16.msra.mxu0 %v4088
      %4244 = vmatpush.bf16.msra.mxu0 %v4087
      %4245 = vmatpush.bf16.msra.mxu0 %v4086
      %4246 = vmatmul.bf16.gmra.mxu0 %v3656
      %v4247 = vpop.f32.mrf.mxu0
      %v4248 = vadd.f32 %v4234, %v4247
      %v4249 = vpop.f32.mrf.mxu0
      %v4250 = vadd.f32 %v4236, %v4249
      %4251 = vdwg.mxu0
      %4252 = vmatpush.bf16.msra.mxu0 %v4101
      %4253 = vmatpush.bf16.msra.mxu0 %v4100
      %4254 = vmatpush.bf16.msra.mxu0 %v4099
      %4255 = vmatpush.bf16.msra.mxu0 %v4098
      %4256 = vmatpush.bf16.msra.mxu0 %v4097
      %4257 = vmatpush.bf16.msra.mxu0 %v4096
      %4258 = vmatpush.bf16.msra.mxu0 %v4095
      %4259 = vmatpush.bf16.msra.mxu0 %v4094
      %4260 = vmatmul.bf16.gmra.mxu0 %v3660
      %v4261 = vpop.f32.mrf.mxu0
      %v4262 = vadd.f32 %v4248, %v4261
      %v4263 = vpop.f32.mrf.mxu0
      %v4264 = vadd.f32 %v4250, %v4263
      %4265 = vdwg.mxu0
      %4266 = vmatpush.bf16.msra.mxu0 %v4109
      %4267 = vmatpush.bf16.msra.mxu0 %v4108
      %4268 = vmatpush.bf16.msra.mxu0 %v4107
      %4269 = vmatpush.bf16.msra.mxu0 %v4106
      %4270 = vmatpush.bf16.msra.mxu0 %v4105
      %4271 = vmatpush.bf16.msra.mxu0 %v4104
      %4272 = vmatpush.bf16.msra.mxu0 %v4103
      %4273 = vmatpush.bf16.msra.mxu0 %v4102
      %4274 = vmatmul.bf16.gmra.mxu0 %v3664
      %v4275 = vpop.f32.mrf.mxu0
      %v4276 = vadd.f32 %v4262, %v4275
      %v4277 = vpop.f32.mrf.mxu0
      %v4278 = vadd.f32 %v4264, %v4277
      %4279 = vdwg.mxu0
      %4280 = vmatpush.bf16.msra.mxu0 %v4117
      %4281 = vmatpush.bf16.msra.mxu0 %v4116
      %4282 = vmatpush.bf16.msra.mxu0 %v4115
      %4283 = vmatpush.bf16.msra.mxu0 %v4114
      %4284 = vmatpush.bf16.msra.mxu0 %v4113
      %4285 = vmatpush.bf16.msra.mxu0 %v4112
      %4286 = vmatpush.bf16.msra.mxu0 %v4111
      %4287 = vmatpush.bf16.msra.mxu0 %v4110
      %4288 = vmatmul.bf16.gmra.mxu0 %v3668
      %v4289 = vpop.f32.mrf.mxu0
      %v4290 = vadd.f32 %v4276, %v4289
      %v4291 = vpop.f32.mrf.mxu0
      %v4292 = vadd.f32 %v4278, %v4291
      %4293 = vdwg.mxu0
      %v4294 = vmax.f32 %v4290, 0.0
      %v4295 = vmax.f32 %v4292, 0.0
      %v4296 = vpack.c.bf16 %v4295, %v4294
      %v4297 = vld [vmem:[%s6] sm:$0xf]
      %v4298 = vld [vmem:[%s6 + $0x4] sm:$0xf]
      %v4299 = vld [vmem:[%s6 + $0x8] sm:$0xf]
      %v4300 = vld [vmem:[%s6 + $0xc] sm:$0xf]
      %v4301 = vld [vmem:[%s6 + $0x10] sm:$0xf]
      %v4302 = vld [vmem:[%s6 + $0x14] sm:$0xf]
      %v4303 = vld [vmem:[%s6 + $0x18] sm:$0xf]
      %v4304 = vld [vmem:[%s6 + $0x1c] sm:$0xf]
      %v4305 = vld [vmem:[%s6 + $0x20] sm:$0xf]
      %v4306 = vld [vmem:[%s6 + $0x24] sm:$0xf]
      %v4307 = vld [vmem:[%s6 + $0x28] sm:$0xf]
      %v4308 = vld [vmem:[%s6 + $0x2c] sm:$0xf]
      %v4309 = vld [vmem:[%s6 + $0x30] sm:$0xf]
      %v4310 = vld [vmem:[%s6 + $0x34] sm:$0xf]
      %v4311 = vld [vmem:[%s6 + $0x38] sm:$0xf]
      %v4312 = vld [vmem:[%s6 + $0x3c] sm:$0xf]
      %v4329 = vunpack.c.l.b16 %v4297
      %v4330 = vunpack.c.l.b16 %v4298
      %v4331 = vunpack.c.l.b16 %v4299
      %v4332 = vunpack.c.l.b16 %v4300
      %v4333 = vunpack.c.l.b16 %v4301
      %v4334 = vunpack.c.l.b16 %v4302
      %v4335 = vunpack.c.l.b16 %v4303
      %v4336 = vunpack.c.l.b16 %v4304
      %v4337 = vunpack.c.l.b16 %v4305
      %v4338 = vunpack.c.l.b16 %v4306
      %v4339 = vunpack.c.l.b16 %v4307
      %v4340 = vunpack.c.l.b16 %v4308
      %v4341 = vunpack.c.l.b16 %v4309
      %v4342 = vunpack.c.l.b16 %v4310
      %v4343 = vunpack.c.l.b16 %v4311
      %v4344 = vunpack.c.l.b16 %v4312
      %v4345 = vpack.c.b16 %v4330, %v4329
      %v4346 = vpack.c.b16 %v4332, %v4331
      %v4347 = vpack.c.b16 %v4334, %v4333
      %v4348 = vpack.c.b16 %v4336, %v4335
      %v4349 = vpack.c.b16 %v4338, %v4337
      %v4350 = vpack.c.b16 %v4340, %v4339
      %v4351 = vpack.c.b16 %v4342, %v4341
      %v4352 = vpack.c.b16 %v4344, %v4343
      %vm4353 = vcmask 130048
      %v4355 = vsel %vm4353, %v4345, 0
      %v4358 = vsel %vm4353, %v4346, 0
      %v4361 = vsel %vm4353, %v4347, 0
      %v4364 = vsel %vm4353, %v4348, 0
      %v4367 = vsel %vm4353, %v4349, 0
      %v4370 = vsel %vm4353, %v4350, 0
      %v4373 = vsel %vm4353, %v4351, 0
      %v4376 = vsel %vm4353, %v4352, 0
      %4378 = vmatpush.bf16.msra.mxu0 0
      %4379 = vmatpush.bf16.msra.mxu0 0
      %4380 = vmatpush.bf16.msra.mxu0 0
      %4381 = vmatpush.bf16.msra.mxu0 0
      %4382 = vmatpush.bf16.msra.mxu0 0
      %4383 = vmatpush.bf16.msra.mxu0 0
      %4384 = vmatpush.bf16.msra.mxu0 0
      %4385 = vmatpush.bf16.msra.mxu0 %v4296
      %4386 = vmatmul.bf16.gmra.mxu0 %v4355
      %v4387 = vpop.f32.mrf.mxu0
      %v4388 = vadd.f32 0.0, %v4387
      %v4389 = vpop.f32.mrf.mxu0
      %v4390 = vadd.f32 0.0, %v4389
      %4391 = vmatmul.bf16.gmra.mxu0 %v4358
      %v4392 = vpop.f32.mrf.mxu0
      %v4393 = vadd.f32 0.0, %v4392
      %v4394 = vpop.f32.mrf.mxu0
      %v4395 = vadd.f32 0.0, %v4394
      %4396 = vmatmul.bf16.gmra.mxu0 %v4361
      %v4397 = vpop.f32.mrf.mxu0
      %v4398 = vadd.f32 0.0, %v4397
      %v4399 = vpop.f32.mrf.mxu0
      %v4400 = vadd.f32 0.0, %v4399
      %4401 = vmatmul.bf16.gmra.mxu0 %v4364
      %v4402 = vpop.f32.mrf.mxu0
      %v4403 = vadd.f32 0.0, %v4402
      %v4404 = vpop.f32.mrf.mxu0
      %v4405 = vadd.f32 0.0, %v4404
      %4406 = vmatmul.bf16.gmra.mxu0 %v4367
      %v4407 = vpop.f32.mrf.mxu0
      %v4408 = vadd.f32 0.0, %v4407
      %v4409 = vpop.f32.mrf.mxu0
      %v4410 = vadd.f32 0.0, %v4409
      %4411 = vmatmul.bf16.gmra.mxu0 %v4370
      %v4412 = vpop.f32.mrf.mxu0
      %v4413 = vadd.f32 0.0, %v4412
      %v4414 = vpop.f32.mrf.mxu0
      %v4415 = vadd.f32 0.0, %v4414
      %4416 = vmatmul.bf16.gmra.mxu0 %v4373
      %v4417 = vpop.f32.mrf.mxu0
      %v4418 = vadd.f32 0.0, %v4417
      %v4419 = vpop.f32.mrf.mxu0
      %v4420 = vadd.f32 0.0, %v4419
      %4421 = vmatmul.bf16.gmra.mxu0 %v4376
      %v4422 = vpop.f32.mrf.mxu0
      %v4423 = vadd.f32 0.0, %v4422
      %v4424 = vpop.f32.mrf.mxu0
      %v4425 = vadd.f32 0.0, %v4424
      %4426 = vdwg.mxu0
      %v4427 = vpack.c.bf16 %v4388, %v4388
      %v4428 = vpack.c.bf16 %v4390, %v4390
      %v4429 = vpack.c.bf16 %v4393, %v4393
      %v4430 = vpack.c.bf16 %v4395, %v4395
      %v4431 = vpack.c.bf16 %v4398, %v4398
      %v4432 = vpack.c.bf16 %v4400, %v4400
      %v4433 = vpack.c.bf16 %v4403, %v4403
      %v4434 = vpack.c.bf16 %v4405, %v4405
      %v4435 = vpack.c.bf16 %v4408, %v4408
      %v4436 = vpack.c.bf16 %v4410, %v4410
      %v4437 = vpack.c.bf16 %v4413, %v4413
      %v4438 = vpack.c.bf16 %v4415, %v4415
      %v4439 = vpack.c.bf16 %v4418, %v4418
      %v4440 = vpack.c.bf16 %v4420, %v4420
      %v4441 = vpack.c.bf16 %v4423, %v4423
      %v4442 = vpack.c.bf16 %v4425, %v4425
      %v4443 = vld [vmem:[%s7] sm:$0xff]
      %v4444 = vld [vmem:[%s7 + $0x8] sm:$0xff]
      %v4445 = vld [vmem:[%s7 + $0x10] sm:$0xff]
      %v4446 = vld [vmem:[%s7 + $0x18] sm:$0xff]
      %v4447 = vld [vmem:[%s7 + $0x20] sm:$0xff]
      %v4448 = vld [vmem:[%s7 + $0x28] sm:$0xff]
      %v4449 = vld [vmem:[%s7 + $0x30] sm:$0xff]
      %v4450 = vld [vmem:[%s7 + $0x38] sm:$0xff]
      %v4451 = vld [vmem:[%s7 + $0x40] sm:$0xff]
      %v4452 = vld [vmem:[%s7 + $0x48] sm:$0xff]
      %v4453 = vld [vmem:[%s7 + $0x50] sm:$0xff]
      %v4454 = vld [vmem:[%s7 + $0x58] sm:$0xff]
      %v4455 = vld [vmem:[%s7 + $0x60] sm:$0xff]
      %v4456 = vld [vmem:[%s7 + $0x68] sm:$0xff]
      %v4457 = vld [vmem:[%s7 + $0x70] sm:$0xff]
      %v4458 = vld [vmem:[%s7 + $0x78] sm:$0xff]
      %v4459 = vld [vmem:[%s7 + $0x80] sm:$0xff]
      %v4460 = vld [vmem:[%s7 + $0x88] sm:$0xff]
      %v4461 = vld [vmem:[%s7 + $0x90] sm:$0xff]
      %v4462 = vld [vmem:[%s7 + $0x98] sm:$0xff]
      %v4463 = vld [vmem:[%s7 + $0xa0] sm:$0xff]
      %v4464 = vld [vmem:[%s7 + $0xa8] sm:$0xff]
      %v4465 = vld [vmem:[%s7 + $0xb0] sm:$0xff]
      %v4466 = vld [vmem:[%s7 + $0xb8] sm:$0xff]
      %v4467 = vld [vmem:[%s7 + $0xc0] sm:$0xff]
      %v4468 = vld [vmem:[%s7 + $0xc8] sm:$0xff]
      %v4469 = vld [vmem:[%s7 + $0xd0] sm:$0xff]
      %v4470 = vld [vmem:[%s7 + $0xd8] sm:$0xff]
      %v4471 = vld [vmem:[%s7 + $0xe0] sm:$0xff]
      %v4472 = vld [vmem:[%s7 + $0xe8] sm:$0xff]
      %v4473 = vld [vmem:[%s7 + $0xf0] sm:$0xff]
      %v4474 = vld [vmem:[%s7 + $0xf8] sm:$0xff]
      %v4475 = vld [vmem:[%s7 + $0x100] sm:$0xff]
      %v4476 = vld [vmem:[%s7 + $0x108] sm:$0xff]
      %v4477 = vld [vmem:[%s7 + $0x110] sm:$0xff]
      %v4478 = vld [vmem:[%s7 + $0x118] sm:$0xff]
      %v4479 = vld [vmem:[%s7 + $0x120] sm:$0xff]
      %v4480 = vld [vmem:[%s7 + $0x128] sm:$0xff]
      %v4481 = vld [vmem:[%s7 + $0x130] sm:$0xff]
      %v4482 = vld [vmem:[%s7 + $0x138] sm:$0xff]
      %v4483 = vld [vmem:[%s7 + $0x140] sm:$0xff]
      %v4484 = vld [vmem:[%s7 + $0x148] sm:$0xff]
      %v4485 = vld [vmem:[%s7 + $0x150] sm:$0xff]
      %v4486 = vld [vmem:[%s7 + $0x158] sm:$0xff]
      %v4487 = vld [vmem:[%s7 + $0x160] sm:$0xff]
      %v4488 = vld [vmem:[%s7 + $0x168] sm:$0xff]
      %v4489 = vld [vmem:[%s7 + $0x170] sm:$0xff]
      %v4490 = vld [vmem:[%s7 + $0x178] sm:$0xff]
      %v4491 = vld [vmem:[%s7 + $0x180] sm:$0xff]
      %v4492 = vld [vmem:[%s7 + $0x188] sm:$0xff]
      %v4493 = vld [vmem:[%s7 + $0x190] sm:$0xff]
      %v4494 = vld [vmem:[%s7 + $0x198] sm:$0xff]
      %v4495 = vld [vmem:[%s7 + $0x1a0] sm:$0xff]
      %v4496 = vld [vmem:[%s7 + $0x1a8] sm:$0xff]
      %v4497 = vld [vmem:[%s7 + $0x1b0] sm:$0xff]
      %v4498 = vld [vmem:[%s7 + $0x1b8] sm:$0xff]
      %v4499 = vld [vmem:[%s7 + $0x1c0] sm:$0xff]
      %v4500 = vld [vmem:[%s7 + $0x1c8] sm:$0xff]
      %v4501 = vld [vmem:[%s7 + $0x1d0] sm:$0xff]
      %v4502 = vld [vmem:[%s7 + $0x1d8] sm:$0xff]
      %v4503 = vld [vmem:[%s7 + $0x1e0] sm:$0xff]
      %v4504 = vld [vmem:[%s7 + $0x1e8] sm:$0xff]
      %v4505 = vld [vmem:[%s7 + $0x1f0] sm:$0xff]
      %v4506 = vld [vmem:[%s7 + $0x1f8] sm:$0xff]
      %v4507 = vld [vmem:[%s7 + $0x200] sm:$0xff]
      %v4508 = vld [vmem:[%s7 + $0x208] sm:$0xff]
      %v4509 = vld [vmem:[%s7 + $0x210] sm:$0xff]
      %v4510 = vld [vmem:[%s7 + $0x218] sm:$0xff]
      %v4511 = vld [vmem:[%s7 + $0x220] sm:$0xff]
      %v4512 = vld [vmem:[%s7 + $0x228] sm:$0xff]
      %v4513 = vld [vmem:[%s7 + $0x230] sm:$0xff]
      %v4514 = vld [vmem:[%s7 + $0x238] sm:$0xff]
      %v4515 = vld [vmem:[%s7 + $0x240] sm:$0xff]
      %v4516 = vld [vmem:[%s7 + $0x248] sm:$0xff]
      %v4517 = vld [vmem:[%s7 + $0x250] sm:$0xff]
      %v4518 = vld [vmem:[%s7 + $0x258] sm:$0xff]
      %v4519 = vld [vmem:[%s7 + $0x260] sm:$0xff]
      %v4520 = vld [vmem:[%s7 + $0x268] sm:$0xff]
      %v4521 = vld [vmem:[%s7 + $0x270] sm:$0xff]
      %v4522 = vld [vmem:[%s7 + $0x278] sm:$0xff]
      %v4523 = vld [vmem:[%s7 + $0x280] sm:$0xff]
      %v4524 = vld [vmem:[%s7 + $0x288] sm:$0xff]
      %v4525 = vld [vmem:[%s7 + $0x290] sm:$0xff]
      %v4526 = vld [vmem:[%s7 + $0x298] sm:$0xff]
      %v4527 = vld [vmem:[%s7 + $0x2a0] sm:$0xff]
      %v4528 = vld [vmem:[%s7 + $0x2a8] sm:$0xff]
      %v4529 = vld [vmem:[%s7 + $0x2b0] sm:$0xff]
      %v4530 = vld [vmem:[%s7 + $0x2b8] sm:$0xff]
      %v4531 = vld [vmem:[%s7 + $0x2c0] sm:$0xff]
      %v4532 = vld [vmem:[%s7 + $0x2c8] sm:$0xff]
      %v4533 = vld [vmem:[%s7 + $0x2d0] sm:$0xff]
      %v4534 = vld [vmem:[%s7 + $0x2d8] sm:$0xff]
      %v4535 = vld [vmem:[%s7 + $0x2e0] sm:$0xff]
      %v4536 = vld [vmem:[%s7 + $0x2e8] sm:$0xff]
      %v4537 = vld [vmem:[%s7 + $0x2f0] sm:$0xff]
      %v4538 = vld [vmem:[%s7 + $0x2f8] sm:$0xff]
      %v4539 = vld [vmem:[%s7 + $0x300] sm:$0xff]
      %v4540 = vld [vmem:[%s7 + $0x308] sm:$0xff]
      %v4541 = vld [vmem:[%s7 + $0x310] sm:$0xff]
      %v4542 = vld [vmem:[%s7 + $0x318] sm:$0xff]
      %v4543 = vld [vmem:[%s7 + $0x320] sm:$0xff]
      %v4544 = vld [vmem:[%s7 + $0x328] sm:$0xff]
      %v4545 = vld [vmem:[%s7 + $0x330] sm:$0xff]
      %v4546 = vld [vmem:[%s7 + $0x338] sm:$0xff]
      %v4547 = vld [vmem:[%s7 + $0x340] sm:$0xff]
      %v4548 = vld [vmem:[%s7 + $0x348] sm:$0xff]
      %v4549 = vld [vmem:[%s7 + $0x350] sm:$0xff]
      %v4550 = vld [vmem:[%s7 + $0x358] sm:$0xff]
      %v4551 = vld [vmem:[%s7 + $0x360] sm:$0xff]
      %v4552 = vld [vmem:[%s7 + $0x368] sm:$0xff]
      %v4553 = vld [vmem:[%s7 + $0x370] sm:$0xff]
      %v4554 = vld [vmem:[%s7 + $0x378] sm:$0xff]
      %v4555 = vld [vmem:[%s7 + $0x380] sm:$0xff]
      %v4556 = vld [vmem:[%s7 + $0x388] sm:$0xff]
      %v4557 = vld [vmem:[%s7 + $0x390] sm:$0xff]
      %v4558 = vld [vmem:[%s7 + $0x398] sm:$0xff]
      %v4559 = vld [vmem:[%s7 + $0x3a0] sm:$0xff]
      %v4560 = vld [vmem:[%s7 + $0x3a8] sm:$0xff]
      %v4561 = vld [vmem:[%s7 + $0x3b0] sm:$0xff]
      %v4562 = vld [vmem:[%s7 + $0x3b8] sm:$0xff]
      %v4563 = vld [vmem:[%s7 + $0x3c0] sm:$0xff]
      %v4564 = vld [vmem:[%s7 + $0x3c8] sm:$0xff]
      %v4565 = vld [vmem:[%s7 + $0x3d0] sm:$0xff]
      %v4566 = vld [vmem:[%s7 + $0x3d8] sm:$0xff]
      %v4567 = vld [vmem:[%s7 + $0x3e0] sm:$0xff]
      %v4568 = vld [vmem:[%s7 + $0x3e8] sm:$0xff]
      %v4569 = vld [vmem:[%s7 + $0x3f0] sm:$0xff]
      %v4570 = vld [vmem:[%s7 + $0x3f8] sm:$0xff]
      %v4571 = vld [vmem:[%s7 + $0x400] sm:$0xff]
      %v4572 = vld [vmem:[%s7 + $0x408] sm:$0xff]
      %v4573 = vld [vmem:[%s7 + $0x410] sm:$0xff]
      %v4574 = vld [vmem:[%s7 + $0x418] sm:$0xff]
      %v4575 = vld [vmem:[%s7 + $0x420] sm:$0xff]
      %v4576 = vld [vmem:[%s7 + $0x428] sm:$0xff]
      %v4577 = vld [vmem:[%s7 + $0x430] sm:$0xff]
      %v4578 = vld [vmem:[%s7 + $0x438] sm:$0xff]
      %v4579 = vld [vmem:[%s7 + $0x440] sm:$0xff]
      %v4580 = vld [vmem:[%s7 + $0x448] sm:$0xff]
      %v4581 = vld [vmem:[%s7 + $0x450] sm:$0xff]
      %v4582 = vld [vmem:[%s7 + $0x458] sm:$0xff]
      %v4583 = vld [vmem:[%s7 + $0x460] sm:$0xff]
      %v4584 = vld [vmem:[%s7 + $0x468] sm:$0xff]
      %v4585 = vld [vmem:[%s7 + $0x470] sm:$0xff]
      %v4586 = vld [vmem:[%s7 + $0x478] sm:$0xff]
      %v4587 = vld [vmem:[%s7 + $0x480] sm:$0xff]
      %v4588 = vld [vmem:[%s7 + $0x488] sm:$0xff]
      %v4589 = vld [vmem:[%s7 + $0x490] sm:$0xff]
      %v4590 = vld [vmem:[%s7 + $0x498] sm:$0xff]
      %v4591 = vld [vmem:[%s7 + $0x4a0] sm:$0xff]
      %v4592 = vld [vmem:[%s7 + $0x4a8] sm:$0xff]
      %v4593 = vld [vmem:[%s7 + $0x4b0] sm:$0xff]
      %v4594 = vld [vmem:[%s7 + $0x4b8] sm:$0xff]
      %v4595 = vld [vmem:[%s7 + $0x4c0] sm:$0xff]
      %v4596 = vld [vmem:[%s7 + $0x4c8] sm:$0xff]
      %v4597 = vld [vmem:[%s7 + $0x4d0] sm:$0xff]
      %v4598 = vld [vmem:[%s7 + $0x4d8] sm:$0xff]
      %v4599 = vld [vmem:[%s7 + $0x4e0] sm:$0xff]
      %v4600 = vld [vmem:[%s7 + $0x4e8] sm:$0xff]
      %v4601 = vld [vmem:[%s7 + $0x4f0] sm:$0xff]
      %v4602 = vld [vmem:[%s7 + $0x4f8] sm:$0xff]
      %v4603 = vld [vmem:[%s7 + $0x500] sm:$0xff]
      %v4604 = vld [vmem:[%s7 + $0x508] sm:$0xff]
      %v4605 = vld [vmem:[%s7 + $0x510] sm:$0xff]
      %v4606 = vld [vmem:[%s7 + $0x518] sm:$0xff]
      %v4607 = vld [vmem:[%s7 + $0x520] sm:$0xff]
      %v4608 = vld [vmem:[%s7 + $0x528] sm:$0xff]
      %v4609 = vld [vmem:[%s7 + $0x530] sm:$0xff]
      %v4610 = vld [vmem:[%s7 + $0x538] sm:$0xff]
      %v4611 = vld [vmem:[%s7 + $0x540] sm:$0xff]
      %v4612 = vld [vmem:[%s7 + $0x548] sm:$0xff]
      %v4613 = vld [vmem:[%s7 + $0x550] sm:$0xff]
      %v4614 = vld [vmem:[%s7 + $0x558] sm:$0xff]
      %v4615 = vld [vmem:[%s7 + $0x560] sm:$0xff]
      %v4616 = vld [vmem:[%s7 + $0x568] sm:$0xff]
      %v4617 = vld [vmem:[%s7 + $0x570] sm:$0xff]
      %v4618 = vld [vmem:[%s7 + $0x578] sm:$0xff]
      %v4619 = vld [vmem:[%s7 + $0x580] sm:$0xff]
      %v4620 = vld [vmem:[%s7 + $0x588] sm:$0xff]
      %v4621 = vld [vmem:[%s7 + $0x590] sm:$0xff]
      %v4622 = vld [vmem:[%s7 + $0x598] sm:$0xff]
      %v4623 = vld [vmem:[%s7 + $0x5a0] sm:$0xff]
      %v4624 = vld [vmem:[%s7 + $0x5a8] sm:$0xff]
      %v4625 = vld [vmem:[%s7 + $0x5b0] sm:$0xff]
      %v4626 = vld [vmem:[%s7 + $0x5b8] sm:$0xff]
      %v4627 = vld [vmem:[%s7 + $0x5c0] sm:$0xff]
      %v4628 = vld [vmem:[%s7 + $0x5c8] sm:$0xff]
      %v4629 = vld [vmem:[%s7 + $0x5d0] sm:$0xff]
      %v4630 = vld [vmem:[%s7 + $0x5d8] sm:$0xff]
      %v4631 = vld [vmem:[%s7 + $0x5e0] sm:$0xff]
      %v4632 = vld [vmem:[%s7 + $0x5e8] sm:$0xff]
      %v4633 = vld [vmem:[%s7 + $0x5f0] sm:$0xff]
      %v4634 = vld [vmem:[%s7 + $0x5f8] sm:$0xff]
      %v4635 = vld [vmem:[%s7 + $0x600] sm:$0xff]
      %v4636 = vld [vmem:[%s7 + $0x608] sm:$0xff]
      %v4637 = vld [vmem:[%s7 + $0x610] sm:$0xff]
      %v4638 = vld [vmem:[%s7 + $0x618] sm:$0xff]
      %v4639 = vld [vmem:[%s7 + $0x620] sm:$0xff]
      %v4640 = vld [vmem:[%s7 + $0x628] sm:$0xff]
      %v4641 = vld [vmem:[%s7 + $0x630] sm:$0xff]
      %v4642 = vld [vmem:[%s7 + $0x638] sm:$0xff]
      %v4643 = vld [vmem:[%s7 + $0x640] sm:$0xff]
      %v4644 = vld [vmem:[%s7 + $0x648] sm:$0xff]
      %v4645 = vld [vmem:[%s7 + $0x650] sm:$0xff]
      %v4646 = vld [vmem:[%s7 + $0x658] sm:$0xff]
      %v4647 = vld [vmem:[%s7 + $0x660] sm:$0xff]
      %v4648 = vld [vmem:[%s7 + $0x668] sm:$0xff]
      %v4649 = vld [vmem:[%s7 + $0x670] sm:$0xff]
      %v4650 = vld [vmem:[%s7 + $0x678] sm:$0xff]
      %v4651 = vld [vmem:[%s7 + $0x680] sm:$0xff]
      %v4652 = vld [vmem:[%s7 + $0x688] sm:$0xff]
      %v4653 = vld [vmem:[%s7 + $0x690] sm:$0xff]
      %v4654 = vld [vmem:[%s7 + $0x698] sm:$0xff]
      %v4655 = vld [vmem:[%s7 + $0x6a0] sm:$0xff]
      %v4656 = vld [vmem:[%s7 + $0x6a8] sm:$0xff]
      %v4657 = vld [vmem:[%s7 + $0x6b0] sm:$0xff]
      %v4658 = vld [vmem:[%s7 + $0x6b8] sm:$0xff]
      %v4659 = vld [vmem:[%s7 + $0x6c0] sm:$0xff]
      %v4660 = vld [vmem:[%s7 + $0x6c8] sm:$0xff]
      %v4661 = vld [vmem:[%s7 + $0x6d0] sm:$0xff]
      %v4662 = vld [vmem:[%s7 + $0x6d8] sm:$0xff]
      %v4663 = vld [vmem:[%s7 + $0x6e0] sm:$0xff]
      %v4664 = vld [vmem:[%s7 + $0x6e8] sm:$0xff]
      %v4665 = vld [vmem:[%s7 + $0x6f0] sm:$0xff]
      %v4666 = vld [vmem:[%s7 + $0x6f8] sm:$0xff]
      %v4667 = vld [vmem:[%s7 + $0x700] sm:$0xff]
      %v4668 = vld [vmem:[%s7 + $0x708] sm:$0xff]
      %v4669 = vld [vmem:[%s7 + $0x710] sm:$0xff]
      %v4670 = vld [vmem:[%s7 + $0x718] sm:$0xff]
      %v4671 = vld [vmem:[%s7 + $0x720] sm:$0xff]
      %v4672 = vld [vmem:[%s7 + $0x728] sm:$0xff]
      %v4673 = vld [vmem:[%s7 + $0x730] sm:$0xff]
      %v4674 = vld [vmem:[%s7 + $0x738] sm:$0xff]
      %v4675 = vld [vmem:[%s7 + $0x740] sm:$0xff]
      %v4676 = vld [vmem:[%s7 + $0x748] sm:$0xff]
      %v4677 = vld [vmem:[%s7 + $0x750] sm:$0xff]
      %v4678 = vld [vmem:[%s7 + $0x758] sm:$0xff]
      %v4679 = vld [vmem:[%s7 + $0x760] sm:$0xff]
      %v4680 = vld [vmem:[%s7 + $0x768] sm:$0xff]
      %v4681 = vld [vmem:[%s7 + $0x770] sm:$0xff]
      %v4682 = vld [vmem:[%s7 + $0x778] sm:$0xff]
      %v4683 = vld [vmem:[%s7 + $0x780] sm:$0xff]
      %v4684 = vld [vmem:[%s7 + $0x788] sm:$0xff]
      %v4685 = vld [vmem:[%s7 + $0x790] sm:$0xff]
      %v4686 = vld [vmem:[%s7 + $0x798] sm:$0xff]
      %v4687 = vld [vmem:[%s7 + $0x7a0] sm:$0xff]
      %v4688 = vld [vmem:[%s7 + $0x7a8] sm:$0xff]
      %v4689 = vld [vmem:[%s7 + $0x7b0] sm:$0xff]
      %v4690 = vld [vmem:[%s7 + $0x7b8] sm:$0xff]
      %v4691 = vld [vmem:[%s7 + $0x7c0] sm:$0xff]
      %v4692 = vld [vmem:[%s7 + $0x7c8] sm:$0xff]
      %v4693 = vld [vmem:[%s7 + $0x7d0] sm:$0xff]
      %v4694 = vld [vmem:[%s7 + $0x7d8] sm:$0xff]
      %v4695 = vld [vmem:[%s7 + $0x7e0] sm:$0xff]
      %v4696 = vld [vmem:[%s7 + $0x7e8] sm:$0xff]
      %v4697 = vld [vmem:[%s7 + $0x7f0] sm:$0xff]
      %v4698 = vld [vmem:[%s7 + $0x7f8] sm:$0xff]
      %v4955 = vunpack.c.l.b16 %v4443
      %v4956 = vunpack.c.h.b16 %v4443
      %v4957 = vunpack.c.l.b16 %v4444
      %v4958 = vunpack.c.h.b16 %v4444
      %v4959 = vunpack.c.l.b16 %v4445
      %v4960 = vunpack.c.h.b16 %v4445
      %v4961 = vunpack.c.l.b16 %v4446
      %v4962 = vunpack.c.h.b16 %v4446
      %v4963 = vunpack.c.l.b16 %v4447
      %v4964 = vunpack.c.h.b16 %v4447
      %v4965 = vunpack.c.l.b16 %v4448
      %v4966 = vunpack.c.h.b16 %v4448
      %v4967 = vunpack.c.l.b16 %v4449
      %v4968 = vunpack.c.h.b16 %v4449
      %v4969 = vunpack.c.l.b16 %v4450
      %v4970 = vunpack.c.h.b16 %v4450
      %v4971 = vunpack.c.l.b16 %v4451
      %v4972 = vunpack.c.h.b16 %v4451
      %v4973 = vunpack.c.l.b16 %v4452
      %v4974 = vunpack.c.h.b16 %v4452
      %v4975 = vunpack.c.l.b16 %v4453
      %v4976 = vunpack.c.h.b16 %v4453
      %v4977 = vunpack.c.l.b16 %v4454
      %v4978 = vunpack.c.h.b16 %v4454
      %v4979 = vunpack.c.l.b16 %v4455
      %v4980 = vunpack.c.h.b16 %v4455
      %v4981 = vunpack.c.l.b16 %v4456
      %v4982 = vunpack.c.h.b16 %v4456
      %v4983 = vunpack.c.l.b16 %v4457
      %v4984 = vunpack.c.h.b16 %v4457
      %v4985 = vunpack.c.l.b16 %v4458
      %v4986 = vunpack.c.h.b16 %v4458
      %v4987 = vunpack.c.l.b16 %v4459
      %v4988 = vunpack.c.h.b16 %v4459
      %v4989 = vunpack.c.l.b16 %v4460
      %v4990 = vunpack.c.h.b16 %v4460
      %v4991 = vunpack.c.l.b16 %v4461
      %v4992 = vunpack.c.h.b16 %v4461
      %v4993 = vunpack.c.l.b16 %v4462
      %v4994 = vunpack.c.h.b16 %v4462
      %v4995 = vunpack.c.l.b16 %v4463
      %v4996 = vunpack.c.h.b16 %v4463
      %v4997 = vunpack.c.l.b16 %v4464
      %v4998 = vunpack.c.h.b16 %v4464
      %v4999 = vunpack.c.l.b16 %v4465
      %v5000 = vunpack.c.h.b16 %v4465
      %v5001 = vunpack.c.l.b16 %v4466
      %v5002 = vunpack.c.h.b16 %v4466
      %v5003 = vunpack.c.l.b16 %v4467
      %v5004 = vunpack.c.h.b16 %v4467
      %v5005 = vunpack.c.l.b16 %v4468
      %v5006 = vunpack.c.h.b16 %v4468
      %v5007 = vunpack.c.l.b16 %v4469
      %v5008 = vunpack.c.h.b16 %v4469
      %v5009 = vunpack.c.l.b16 %v4470
      %v5010 = vunpack.c.h.b16 %v4470
      %v5011 = vunpack.c.l.b16 %v4471
      %v5012 = vunpack.c.h.b16 %v4471
      %v5013 = vunpack.c.l.b16 %v4472
      %v5014 = vunpack.c.h.b16 %v4472
      %v5015 = vunpack.c.l.b16 %v4473
      %v5016 = vunpack.c.h.b16 %v4473
      %v5017 = vunpack.c.l.b16 %v4474
      %v5018 = vunpack.c.h.b16 %v4474
      %v5019 = vunpack.c.l.b16 %v4475
      %v5020 = vunpack.c.h.b16 %v4475
      %v5021 = vunpack.c.l.b16 %v4476
      %v5022 = vunpack.c.h.b16 %v4476
      %v5023 = vunpack.c.l.b16 %v4477
      %v5024 = vunpack.c.h.b16 %v4477
      %v5025 = vunpack.c.l.b16 %v4478
      %v5026 = vunpack.c.h.b16 %v4478
      %v5027 = vunpack.c.l.b16 %v4479
      %v5028 = vunpack.c.h.b16 %v4479
      %v5029 = vunpack.c.l.b16 %v4480
      %v5030 = vunpack.c.h.b16 %v4480
      %v5031 = vunpack.c.l.b16 %v4481
      %v5032 = vunpack.c.h.b16 %v4481
      %v5033 = vunpack.c.l.b16 %v4482
      %v5034 = vunpack.c.h.b16 %v4482
      %v5035 = vunpack.c.l.b16 %v4483
      %v5036 = vunpack.c.h.b16 %v4483
      %v5037 = vunpack.c.l.b16 %v4484
      %v5038 = vunpack.c.h.b16 %v4484
      %v5039 = vunpack.c.l.b16 %v4485
      %v5040 = vunpack.c.h.b16 %v4485
      %v5041 = vunpack.c.l.b16 %v4486
      %v5042 = vunpack.c.h.b16 %v4486
      %v5043 = vunpack.c.l.b16 %v4487
      %v5044 = vunpack.c.h.b16 %v4487
      %v5045 = vunpack.c.l.b16 %v4488
      %v5046 = vunpack.c.h.b16 %v4488
      %v5047 = vunpack.c.l.b16 %v4489
      %v5048 = vunpack.c.h.b16 %v4489
      %v5049 = vunpack.c.l.b16 %v4490
      %v5050 = vunpack.c.h.b16 %v4490
      %v5051 = vunpack.c.l.b16 %v4491
      %v5052 = vunpack.c.h.b16 %v4491
      %v5053 = vunpack.c.l.b16 %v4492
      %v5054 = vunpack.c.h.b16 %v4492
      %v5055 = vunpack.c.l.b16 %v4493
      %v5056 = vunpack.c.h.b16 %v4493
      %v5057 = vunpack.c.l.b16 %v4494
      %v5058 = vunpack.c.h.b16 %v4494
      %v5059 = vunpack.c.l.b16 %v4495
      %v5060 = vunpack.c.h.b16 %v4495
      %v5061 = vunpack.c.l.b16 %v4496
      %v5062 = vunpack.c.h.b16 %v4496
      %v5063 = vunpack.c.l.b16 %v4497
      %v5064 = vunpack.c.h.b16 %v4497
      %v5065 = vunpack.c.l.b16 %v4498
      %v5066 = vunpack.c.h.b16 %v4498
      %v5067 = vunpack.c.l.b16 %v4499
      %v5068 = vunpack.c.h.b16 %v4499
      %v5069 = vunpack.c.l.b16 %v4500
      %v5070 = vunpack.c.h.b16 %v4500
      %v5071 = vunpack.c.l.b16 %v4501
      %v5072 = vunpack.c.h.b16 %v4501
      %v5073 = vunpack.c.l.b16 %v4502
      %v5074 = vunpack.c.h.b16 %v4502
      %v5075 = vunpack.c.l.b16 %v4503
      %v5076 = vunpack.c.h.b16 %v4503
      %v5077 = vunpack.c.l.b16 %v4504
      %v5078 = vunpack.c.h.b16 %v4504
      %v5079 = vunpack.c.l.b16 %v4505
      %v5080 = vunpack.c.h.b16 %v4505
      %v5081 = vunpack.c.l.b16 %v4506
      %v5082 = vunpack.c.h.b16 %v4506
      %v5083 = vunpack.c.l.b16 %v4507
      %v5084 = vunpack.c.h.b16 %v4507
      %v5085 = vunpack.c.l.b16 %v4508
      %v5086 = vunpack.c.h.b16 %v4508
      %v5087 = vunpack.c.l.b16 %v4509
      %v5088 = vunpack.c.h.b16 %v4509
      %v5089 = vunpack.c.l.b16 %v4510
      %v5090 = vunpack.c.h.b16 %v4510
      %v5091 = vunpack.c.l.b16 %v4511
      %v5092 = vunpack.c.h.b16 %v4511
      %v5093 = vunpack.c.l.b16 %v4512
      %v5094 = vunpack.c.h.b16 %v4512
      %v5095 = vunpack.c.l.b16 %v4513
      %v5096 = vunpack.c.h.b16 %v4513
      %v5097 = vunpack.c.l.b16 %v4514
      %v5098 = vunpack.c.h.b16 %v4514
      %v5099 = vunpack.c.l.b16 %v4515
      %v5100 = vunpack.c.h.b16 %v4515
      %v5101 = vunpack.c.l.b16 %v4516
      %v5102 = vunpack.c.h.b16 %v4516
      %v5103 = vunpack.c.l.b16 %v4517
      %v5104 = vunpack.c.h.b16 %v4517
      %v5105 = vunpack.c.l.b16 %v4518
      %v5106 = vunpack.c.h.b16 %v4518
      %v5107 = vunpack.c.l.b16 %v4519
      %v5108 = vunpack.c.h.b16 %v4519
      %v5109 = vunpack.c.l.b16 %v4520
      %v5110 = vunpack.c.h.b16 %v4520
      %v5111 = vunpack.c.l.b16 %v4521
      %v5112 = vunpack.c.h.b16 %v4521
      %v5113 = vunpack.c.l.b16 %v4522
      %v5114 = vunpack.c.h.b16 %v4522
      %v5115 = vunpack.c.l.b16 %v4523
      %v5116 = vunpack.c.h.b16 %v4523
      %v5117 = vunpack.c.l.b16 %v4524
      %v5118 = vunpack.c.h.b16 %v4524
      %v5119 = vunpack.c.l.b16 %v4525
      %v5120 = vunpack.c.h.b16 %v4525
      %v5121 = vunpack.c.l.b16 %v4526
      %v5122 = vunpack.c.h.b16 %v4526
      %v5123 = vunpack.c.l.b16 %v4527
      %v5124 = vunpack.c.h.b16 %v4527
      %v5125 = vunpack.c.l.b16 %v4528
      %v5126 = vunpack.c.h.b16 %v4528
      %v5127 = vunpack.c.l.b16 %v4529
      %v5128 = vunpack.c.h.b16 %v4529
      %v5129 = vunpack.c.l.b16 %v4530
      %v5130 = vunpack.c.h.b16 %v4530
      %v5131 = vunpack.c.l.b16 %v4531
      %v5132 = vunpack.c.h.b16 %v4531
      %v5133 = vunpack.c.l.b16 %v4532
      %v5134 = vunpack.c.h.b16 %v4532
      %v5135 = vunpack.c.l.b16 %v4533
      %v5136 = vunpack.c.h.b16 %v4533
      %v5137 = vunpack.c.l.b16 %v4534
      %v5138 = vunpack.c.h.b16 %v4534
      %v5139 = vunpack.c.l.b16 %v4535
      %v5140 = vunpack.c.h.b16 %v4535
      %v5141 = vunpack.c.l.b16 %v4536
      %v5142 = vunpack.c.h.b16 %v4536
      %v5143 = vunpack.c.l.b16 %v4537
      %v5144 = vunpack.c.h.b16 %v4537
      %v5145 = vunpack.c.l.b16 %v4538
      %v5146 = vunpack.c.h.b16 %v4538
      %v5147 = vunpack.c.l.b16 %v4539
      %v5148 = vunpack.c.h.b16 %v4539
      %v5149 = vunpack.c.l.b16 %v4540
      %v5150 = vunpack.c.h.b16 %v4540
      %v5151 = vunpack.c.l.b16 %v4541
      %v5152 = vunpack.c.h.b16 %v4541
      %v5153 = vunpack.c.l.b16 %v4542
      %v5154 = vunpack.c.h.b16 %v4542
      %v5155 = vunpack.c.l.b16 %v4543
      %v5156 = vunpack.c.h.b16 %v4543
      %v5157 = vunpack.c.l.b16 %v4544
      %v5158 = vunpack.c.h.b16 %v4544
      %v5159 = vunpack.c.l.b16 %v4545
      %v5160 = vunpack.c.h.b16 %v4545
      %v5161 = vunpack.c.l.b16 %v4546
      %v5162 = vunpack.c.h.b16 %v4546
      %v5163 = vunpack.c.l.b16 %v4547
      %v5164 = vunpack.c.h.b16 %v4547
      %v5165 = vunpack.c.l.b16 %v4548
      %v5166 = vunpack.c.h.b16 %v4548
      %v5167 = vunpack.c.l.b16 %v4549
      %v5168 = vunpack.c.h.b16 %v4549
      %v5169 = vunpack.c.l.b16 %v4550
      %v5170 = vunpack.c.h.b16 %v4550
      %v5171 = vunpack.c.l.b16 %v4551
      %v5172 = vunpack.c.h.b16 %v4551
      %v5173 = vunpack.c.l.b16 %v4552
      %v5174 = vunpack.c.h.b16 %v4552
      %v5175 = vunpack.c.l.b16 %v4553
      %v5176 = vunpack.c.h.b16 %v4553
      %v5177 = vunpack.c.l.b16 %v4554
      %v5178 = vunpack.c.h.b16 %v4554
      %v5179 = vunpack.c.l.b16 %v4555
      %v5180 = vunpack.c.h.b16 %v4555
      %v5181 = vunpack.c.l.b16 %v4556
      %v5182 = vunpack.c.h.b16 %v4556
      %v5183 = vunpack.c.l.b16 %v4557
      %v5184 = vunpack.c.h.b16 %v4557
      %v5185 = vunpack.c.l.b16 %v4558
      %v5186 = vunpack.c.h.b16 %v4558
      %v5187 = vunpack.c.l.b16 %v4559
      %v5188 = vunpack.c.h.b16 %v4559
      %v5189 = vunpack.c.l.b16 %v4560
      %v5190 = vunpack.c.h.b16 %v4560
      %v5191 = vunpack.c.l.b16 %v4561
      %v5192 = vunpack.c.h.b16 %v4561
      %v5193 = vunpack.c.l.b16 %v4562
      %v5194 = vunpack.c.h.b16 %v4562
      %v5195 = vunpack.c.l.b16 %v4563
      %v5196 = vunpack.c.h.b16 %v4563
      %v5197 = vunpack.c.l.b16 %v4564
      %v5198 = vunpack.c.h.b16 %v4564
      %v5199 = vunpack.c.l.b16 %v4565
      %v5200 = vunpack.c.h.b16 %v4565
      %v5201 = vunpack.c.l.b16 %v4566
      %v5202 = vunpack.c.h.b16 %v4566
      %v5203 = vunpack.c.l.b16 %v4567
      %v5204 = vunpack.c.h.b16 %v4567
      %v5205 = vunpack.c.l.b16 %v4568
      %v5206 = vunpack.c.h.b16 %v4568
      %v5207 = vunpack.c.l.b16 %v4569
      %v5208 = vunpack.c.h.b16 %v4569
      %v5209 = vunpack.c.l.b16 %v4570
      %v5210 = vunpack.c.h.b16 %v4570
      %v5211 = vunpack.c.l.b16 %v4571
      %v5212 = vunpack.c.h.b16 %v4571
      %v5213 = vunpack.c.l.b16 %v4572
      %v5214 = vunpack.c.h.b16 %v4572
      %v5215 = vunpack.c.l.b16 %v4573
      %v5216 = vunpack.c.h.b16 %v4573
      %v5217 = vunpack.c.l.b16 %v4574
      %v5218 = vunpack.c.h.b16 %v4574
      %v5219 = vunpack.c.l.b16 %v4575
      %v5220 = vunpack.c.h.b16 %v4575
      %v5221 = vunpack.c.l.b16 %v4576
      %v5222 = vunpack.c.h.b16 %v4576
      %v5223 = vunpack.c.l.b16 %v4577
      %v5224 = vunpack.c.h.b16 %v4577
      %v5225 = vunpack.c.l.b16 %v4578
      %v5226 = vunpack.c.h.b16 %v4578
      %v5227 = vunpack.c.l.b16 %v4579
      %v5228 = vunpack.c.h.b16 %v4579
      %v5229 = vunpack.c.l.b16 %v4580
      %v5230 = vunpack.c.h.b16 %v4580
      %v5231 = vunpack.c.l.b16 %v4581
      %v5232 = vunpack.c.h.b16 %v4581
      %v5233 = vunpack.c.l.b16 %v4582
      %v5234 = vunpack.c.h.b16 %v4582
      %v5235 = vunpack.c.l.b16 %v4583
      %v5236 = vunpack.c.h.b16 %v4583
      %v5237 = vunpack.c.l.b16 %v4584
      %v5238 = vunpack.c.h.b16 %v4584
      %v5239 = vunpack.c.l.b16 %v4585
      %v5240 = vunpack.c.h.b16 %v4585
      %v5241 = vunpack.c.l.b16 %v4586
      %v5242 = vunpack.c.h.b16 %v4586
      %v5243 = vunpack.c.l.b16 %v4587
      %v5244 = vunpack.c.h.b16 %v4587
      %v5245 = vunpack.c.l.b16 %v4588
      %v5246 = vunpack.c.h.b16 %v4588
      %v5247 = vunpack.c.l.b16 %v4589
      %v5248 = vunpack.c.h.b16 %v4589
      %v5249 = vunpack.c.l.b16 %v4590
      %v5250 = vunpack.c.h.b16 %v4590
      %v5251 = vunpack.c.l.b16 %v4591
      %v5252 = vunpack.c.h.b16 %v4591
      %v5253 = vunpack.c.l.b16 %v4592
      %v5254 = vunpack.c.h.b16 %v4592
      %v5255 = vunpack.c.l.b16 %v4593
      %v5256 = vunpack.c.h.b16 %v4593
      %v5257 = vunpack.c.l.b16 %v4594
      %v5258 = vunpack.c.h.b16 %v4594
      %v5259 = vunpack.c.l.b16 %v4595
      %v5260 = vunpack.c.h.b16 %v4595
      %v5261 = vunpack.c.l.b16 %v4596
      %v5262 = vunpack.c.h.b16 %v4596
      %v5263 = vunpack.c.l.b16 %v4597
      %v5264 = vunpack.c.h.b16 %v4597
      %v5265 = vunpack.c.l.b16 %v4598
      %v5266 = vunpack.c.h.b16 %v4598
      %v5267 = vunpack.c.l.b16 %v4599
      %v5268 = vunpack.c.h.b16 %v4599
      %v5269 = vunpack.c.l.b16 %v4600
      %v5270 = vunpack.c.h.b16 %v4600
      %v5271 = vunpack.c.l.b16 %v4601
      %v5272 = vunpack.c.h.b16 %v4601
      %v5273 = vunpack.c.l.b16 %v4602
      %v5274 = vunpack.c.h.b16 %v4602
      %v5275 = vunpack.c.l.b16 %v4603
      %v5276 = vunpack.c.h.b16 %v4603
      %v5277 = vunpack.c.l.b16 %v4604
      %v5278 = vunpack.c.h.b16 %v4604
      %v5279 = vunpack.c.l.b16 %v4605
      %v5280 = vunpack.c.h.b16 %v4605
      %v5281 = vunpack.c.l.b16 %v4606
      %v5282 = vunpack.c.h.b16 %v4606
      %v5283 = vunpack.c.l.b16 %v4607
      %v5284 = vunpack.c.h.b16 %v4607
      %v5285 = vunpack.c.l.b16 %v4608
      %v5286 = vunpack.c.h.b16 %v4608
      %v5287 = vunpack.c.l.b16 %v4609
      %v5288 = vunpack.c.h.b16 %v4609
      %v5289 = vunpack.c.l.b16 %v4610
      %v5290 = vunpack.c.h.b16 %v4610
      %v5291 = vunpack.c.l.b16 %v4611
      %v5292 = vunpack.c.h.b16 %v4611
      %v5293 = vunpack.c.l.b16 %v4612
      %v5294 = vunpack.c.h.b16 %v4612
      %v5295 = vunpack.c.l.b16 %v4613
      %v5296 = vunpack.c.h.b16 %v4613
      %v5297 = vunpack.c.l.b16 %v4614
      %v5298 = vunpack.c.h.b16 %v4614
      %v5299 = vunpack.c.l.b16 %v4615
      %v5300 = vunpack.c.h.b16 %v4615
      %v5301 = vunpack.c.l.b16 %v4616
      %v5302 = vunpack.c.h.b16 %v4616
      %v5303 = vunpack.c.l.b16 %v4617
      %v5304 = vunpack.c.h.b16 %v4617
      %v5305 = vunpack.c.l.b16 %v4618
      %v5306 = vunpack.c.h.b16 %v4618
      %v5307 = vunpack.c.l.b16 %v4619
      %v5308 = vunpack.c.h.b16 %v4619
      %v5309 = vunpack.c.l.b16 %v4620
      %v5310 = vunpack.c.h.b16 %v4620
      %v5311 = vunpack.c.l.b16 %v4621
      %v5312 = vunpack.c.h.b16 %v4621
      %v5313 = vunpack.c.l.b16 %v4622
      %v5314 = vunpack.c.h.b16 %v4622
      %v5315 = vunpack.c.l.b16 %v4623
      %v5316 = vunpack.c.h.b16 %v4623
      %v5317 = vunpack.c.l.b16 %v4624
      %v5318 = vunpack.c.h.b16 %v4624
      %v5319 = vunpack.c.l.b16 %v4625
      %v5320 = vunpack.c.h.b16 %v4625
      %v5321 = vunpack.c.l.b16 %v4626
      %v5322 = vunpack.c.h.b16 %v4626
      %v5323 = vunpack.c.l.b16 %v4627
      %v5324 = vunpack.c.h.b16 %v4627
      %v5325 = vunpack.c.l.b16 %v4628
      %v5326 = vunpack.c.h.b16 %v4628
      %v5327 = vunpack.c.l.b16 %v4629
      %v5328 = vunpack.c.h.b16 %v4629
      %v5329 = vunpack.c.l.b16 %v4630
      %v5330 = vunpack.c.h.b16 %v4630
      %v5331 = vunpack.c.l.b16 %v4631
      %v5332 = vunpack.c.h.b16 %v4631
      %v5333 = vunpack.c.l.b16 %v4632
      %v5334 = vunpack.c.h.b16 %v4632
      %v5335 = vunpack.c.l.b16 %v4633
      %v5336 = vunpack.c.h.b16 %v4633
      %v5337 = vunpack.c.l.b16 %v4634
      %v5338 = vunpack.c.h.b16 %v4634
      %v5339 = vunpack.c.l.b16 %v4635
      %v5340 = vunpack.c.h.b16 %v4635
      %v5341 = vunpack.c.l.b16 %v4636
      %v5342 = vunpack.c.h.b16 %v4636
      %v5343 = vunpack.c.l.b16 %v4637
      %v5344 = vunpack.c.h.b16 %v4637
      %v5345 = vunpack.c.l.b16 %v4638
      %v5346 = vunpack.c.h.b16 %v4638
      %v5347 = vunpack.c.l.b16 %v4639
      %v5348 = vunpack.c.h.b16 %v4639
      %v5349 = vunpack.c.l.b16 %v4640
      %v5350 = vunpack.c.h.b16 %v4640
      %v5351 = vunpack.c.l.b16 %v4641
      %v5352 = vunpack.c.h.b16 %v4641
      %v5353 = vunpack.c.l.b16 %v4642
      %v5354 = vunpack.c.h.b16 %v4642
      %v5355 = vunpack.c.l.b16 %v4643
      %v5356 = vunpack.c.h.b16 %v4643
      %v5357 = vunpack.c.l.b16 %v4644
      %v5358 = vunpack.c.h.b16 %v4644
      %v5359 = vunpack.c.l.b16 %v4645
      %v5360 = vunpack.c.h.b16 %v4645
      %v5361 = vunpack.c.l.b16 %v4646
      %v5362 = vunpack.c.h.b16 %v4646
      %v5363 = vunpack.c.l.b16 %v4647
      %v5364 = vunpack.c.h.b16 %v4647
      %v5365 = vunpack.c.l.b16 %v4648
      %v5366 = vunpack.c.h.b16 %v4648
      %v5367 = vunpack.c.l.b16 %v4649
      %v5368 = vunpack.c.h.b16 %v4649
      %v5369 = vunpack.c.l.b16 %v4650
      %v5370 = vunpack.c.h.b16 %v4650
      %v5371 = vunpack.c.l.b16 %v4651
      %v5372 = vunpack.c.h.b16 %v4651
      %v5373 = vunpack.c.l.b16 %v4652
      %v5374 = vunpack.c.h.b16 %v4652
      %v5375 = vunpack.c.l.b16 %v4653
      %v5376 = vunpack.c.h.b16 %v4653
      %v5377 = vunpack.c.l.b16 %v4654
      %v5378 = vunpack.c.h.b16 %v4654
      %v5379 = vunpack.c.l.b16 %v4655
      %v5380 = vunpack.c.h.b16 %v4655
      %v5381 = vunpack.c.l.b16 %v4656
      %v5382 = vunpack.c.h.b16 %v4656
      %v5383 = vunpack.c.l.b16 %v4657
      %v5384 = vunpack.c.h.b16 %v4657
      %v5385 = vunpack.c.l.b16 %v4658
      %v5386 = vunpack.c.h.b16 %v4658
      %v5387 = vunpack.c.l.b16 %v4659
      %v5388 = vunpack.c.h.b16 %v4659
      %v5389 = vunpack.c.l.b16 %v4660
      %v5390 = vunpack.c.h.b16 %v4660
      %v5391 = vunpack.c.l.b16 %v4661
      %v5392 = vunpack.c.h.b16 %v4661
      %v5393 = vunpack.c.l.b16 %v4662
      %v5394 = vunpack.c.h.b16 %v4662
      %v5395 = vunpack.c.l.b16 %v4663
      %v5396 = vunpack.c.h.b16 %v4663
      %v5397 = vunpack.c.l.b16 %v4664
      %v5398 = vunpack.c.h.b16 %v4664
      %v5399 = vunpack.c.l.b16 %v4665
      %v5400 = vunpack.c.h.b16 %v4665
      %v5401 = vunpack.c.l.b16 %v4666
      %v5402 = vunpack.c.h.b16 %v4666
      %v5403 = vunpack.c.l.b16 %v4667
      %v5404 = vunpack.c.h.b16 %v4667
      %v5405 = vunpack.c.l.b16 %v4668
      %v5406 = vunpack.c.h.b16 %v4668
      %v5407 = vunpack.c.l.b16 %v4669
      %v5408 = vunpack.c.h.b16 %v4669
      %v5409 = vunpack.c.l.b16 %v4670
      %v5410 = vunpack.c.h.b16 %v4670
      %v5411 = vunpack.c.l.b16 %v4671
      %v5412 = vunpack.c.h.b16 %v4671
      %v5413 = vunpack.c.l.b16 %v4672
      %v5414 = vunpack.c.h.b16 %v4672
      %v5415 = vunpack.c.l.b16 %v4673
      %v5416 = vunpack.c.h.b16 %v4673
      %v5417 = vunpack.c.l.b16 %v4674
      %v5418 = vunpack.c.h.b16 %v4674
      %v5419 = vunpack.c.l.b16 %v4675
      %v5420 = vunpack.c.h.b16 %v4675
      %v5421 = vunpack.c.l.b16 %v4676
      %v5422 = vunpack.c.h.b16 %v4676
      %v5423 = vunpack.c.l.b16 %v4677
      %v5424 = vunpack.c.h.b16 %v4677
      %v5425 = vunpack.c.l.b16 %v4678
      %v5426 = vunpack.c.h.b16 %v4678
      %v5427 = vunpack.c.l.b16 %v4679
      %v5428 = vunpack.c.h.b16 %v4679
      %v5429 = vunpack.c.l.b16 %v4680
      %v5430 = vunpack.c.h.b16 %v4680
      %v5431 = vunpack.c.l.b16 %v4681
      %v5432 = vunpack.c.h.b16 %v4681
      %v5433 = vunpack.c.l.b16 %v4682
      %v5434 = vunpack.c.h.b16 %v4682
      %v5435 = vunpack.c.l.b16 %v4683
      %v5436 = vunpack.c.h.b16 %v4683
      %v5437 = vunpack.c.l.b16 %v4684
      %v5438 = vunpack.c.h.b16 %v4684
      %v5439 = vunpack.c.l.b16 %v4685
      %v5440 = vunpack.c.h.b16 %v4685
      %v5441 = vunpack.c.l.b16 %v4686
      %v5442 = vunpack.c.h.b16 %v4686
      %v5443 = vunpack.c.l.b16 %v4687
      %v5444 = vunpack.c.h.b16 %v4687
      %v5445 = vunpack.c.l.b16 %v4688
      %v5446 = vunpack.c.h.b16 %v4688
      %v5447 = vunpack.c.l.b16 %v4689
      %v5448 = vunpack.c.h.b16 %v4689
      %v5449 = vunpack.c.l.b16 %v4690
      %v5450 = vunpack.c.h.b16 %v4690
      %v5451 = vunpack.c.l.b16 %v4691
      %v5452 = vunpack.c.h.b16 %v4691
      %v5453 = vunpack.c.l.b16 %v4692
      %v5454 = vunpack.c.h.b16 %v4692
      %v5455 = vunpack.c.l.b16 %v4693
      %v5456 = vunpack.c.h.b16 %v4693
      %v5457 = vunpack.c.l.b16 %v4694
      %v5458 = vunpack.c.h.b16 %v4694
      %v5459 = vunpack.c.l.b16 %v4695
      %v5460 = vunpack.c.h.b16 %v4695
      %v5461 = vunpack.c.l.b16 %v4696
      %v5462 = vunpack.c.h.b16 %v4696
      %v5463 = vunpack.c.l.b16 %v4697
      %v5464 = vunpack.c.h.b16 %v4697
      %v5465 = vunpack.c.l.b16 %v4698
      %v5466 = vunpack.c.h.b16 %v4698
      %v5467 = vpack.c.b16 %v4957, %v4955
      %v5468 = vpack.c.b16 %v4958, %v4956
      %v5469 = vpack.c.b16 %v4961, %v4959
      %v5470 = vpack.c.b16 %v4962, %v4960
      %v5471 = vpack.c.b16 %v4965, %v4963
      %v5472 = vpack.c.b16 %v4966, %v4964
      %v5473 = vpack.c.b16 %v4969, %v4967
      %v5474 = vpack.c.b16 %v4970, %v4968
      %v5475 = vpack.c.b16 %v4973, %v4971
      %v5476 = vpack.c.b16 %v4974, %v4972
      %v5477 = vpack.c.b16 %v4977, %v4975
      %v5478 = vpack.c.b16 %v4978, %v4976
      %v5479 = vpack.c.b16 %v4981, %v4979
      %v5480 = vpack.c.b16 %v4982, %v4980
      %v5481 = vpack.c.b16 %v4985, %v4983
      %v5482 = vpack.c.b16 %v4986, %v4984
      %v5483 = vpack.c.b16 %v4989, %v4987
      %v5484 = vpack.c.b16 %v4990, %v4988
      %v5485 = vpack.c.b16 %v4993, %v4991
      %v5486 = vpack.c.b16 %v4994, %v4992
      %v5487 = vpack.c.b16 %v4997, %v4995
      %v5488 = vpack.c.b16 %v4998, %v4996
      %v5489 = vpack.c.b16 %v5001, %v4999
      %v5490 = vpack.c.b16 %v5002, %v5000
      %v5491 = vpack.c.b16 %v5005, %v5003
      %v5492 = vpack.c.b16 %v5006, %v5004
      %v5493 = vpack.c.b16 %v5009, %v5007
      %v5494 = vpack.c.b16 %v5010, %v5008
      %v5495 = vpack.c.b16 %v5013, %v5011
      %v5496 = vpack.c.b16 %v5014, %v5012
      %v5497 = vpack.c.b16 %v5017, %v5015
      %v5498 = vpack.c.b16 %v5018, %v5016
      %v5499 = vpack.c.b16 %v5021, %v5019
      %v5500 = vpack.c.b16 %v5022, %v5020
      %v5501 = vpack.c.b16 %v5025, %v5023
      %v5502 = vpack.c.b16 %v5026, %v5024
      %v5503 = vpack.c.b16 %v5029, %v5027
      %v5504 = vpack.c.b16 %v5030, %v5028
      %v5505 = vpack.c.b16 %v5033, %v5031
      %v5506 = vpack.c.b16 %v5034, %v5032
      %v5507 = vpack.c.b16 %v5037, %v5035
      %v5508 = vpack.c.b16 %v5038, %v5036
      %v5509 = vpack.c.b16 %v5041, %v5039
      %v5510 = vpack.c.b16 %v5042, %v5040
      %v5511 = vpack.c.b16 %v5045, %v5043
      %v5512 = vpack.c.b16 %v5046, %v5044
      %v5513 = vpack.c.b16 %v5049, %v5047
      %v5514 = vpack.c.b16 %v5050, %v5048
      %v5515 = vpack.c.b16 %v5053, %v5051
      %v5516 = vpack.c.b16 %v5054, %v5052
      %v5517 = vpack.c.b16 %v5057, %v5055
      %v5518 = vpack.c.b16 %v5058, %v5056
      %v5519 = vpack.c.b16 %v5061, %v5059
      %v5520 = vpack.c.b16 %v5062, %v5060
      %v5521 = vpack.c.b16 %v5065, %v5063
      %v5522 = vpack.c.b16 %v5066, %v5064
      %v5523 = vpack.c.b16 %v5069, %v5067
      %v5524 = vpack.c.b16 %v5070, %v5068
      %v5525 = vpack.c.b16 %v5073, %v5071
      %v5526 = vpack.c.b16 %v5074, %v5072
      %v5527 = vpack.c.b16 %v5077, %v5075
      %v5528 = vpack.c.b16 %v5078, %v5076
      %v5529 = vpack.c.b16 %v5081, %v5079
      %v5530 = vpack.c.b16 %v5082, %v5080
      %v5531 = vpack.c.b16 %v5085, %v5083
      %v5532 = vpack.c.b16 %v5086, %v5084
      %v5533 = vpack.c.b16 %v5089, %v5087
      %v5534 = vpack.c.b16 %v5090, %v5088
      %v5535 = vpack.c.b16 %v5093, %v5091
      %v5536 = vpack.c.b16 %v5094, %v5092
      %v5537 = vpack.c.b16 %v5097, %v5095
      %v5538 = vpack.c.b16 %v5098, %v5096
      %v5539 = vpack.c.b16 %v5101, %v5099
      %v5540 = vpack.c.b16 %v5102, %v5100
      %v5541 = vpack.c.b16 %v5105, %v5103
      %v5542 = vpack.c.b16 %v5106, %v5104
      %v5543 = vpack.c.b16 %v5109, %v5107
      %v5544 = vpack.c.b16 %v5110, %v5108
      %v5545 = vpack.c.b16 %v5113, %v5111
      %v5546 = vpack.c.b16 %v5114, %v5112
      %v5547 = vpack.c.b16 %v5117, %v5115
      %v5548 = vpack.c.b16 %v5118, %v5116
      %v5549 = vpack.c.b16 %v5121, %v5119
      %v5550 = vpack.c.b16 %v5122, %v5120
      %v5551 = vpack.c.b16 %v5125, %v5123
      %v5552 = vpack.c.b16 %v5126, %v5124
      %v5553 = vpack.c.b16 %v5129, %v5127
      %v5554 = vpack.c.b16 %v5130, %v5128
      %v5555 = vpack.c.b16 %v5133, %v5131
      %v5556 = vpack.c.b16 %v5134, %v5132
      %v5557 = vpack.c.b16 %v5137, %v5135
      %v5558 = vpack.c.b16 %v5138, %v5136
      %v5559 = vpack.c.b16 %v5141, %v5139
      %v5560 = vpack.c.b16 %v5142, %v5140
      %v5561 = vpack.c.b16 %v5145, %v5143
      %v5562 = vpack.c.b16 %v5146, %v5144
      %v5563 = vpack.c.b16 %v5149, %v5147
      %v5564 = vpack.c.b16 %v5150, %v5148
      %v5565 = vpack.c.b16 %v5153, %v5151
      %v5566 = vpack.c.b16 %v5154, %v5152
      %v5567 = vpack.c.b16 %v5157, %v5155
      %v5568 = vpack.c.b16 %v5158, %v5156
      %v5569 = vpack.c.b16 %v5161, %v5159
      %v5570 = vpack.c.b16 %v5162, %v5160
      %v5571 = vpack.c.b16 %v5165, %v5163
      %v5572 = vpack.c.b16 %v5166, %v5164
      %v5573 = vpack.c.b16 %v5169, %v5167
      %v5574 = vpack.c.b16 %v5170, %v5168
      %v5575 = vpack.c.b16 %v5173, %v5171
      %v5576 = vpack.c.b16 %v5174, %v5172
      %v5577 = vpack.c.b16 %v5177, %v5175
      %v5578 = vpack.c.b16 %v5178, %v5176
      %v5579 = vpack.c.b16 %v5181, %v5179
      %v5580 = vpack.c.b16 %v5182, %v5180
      %v5581 = vpack.c.b16 %v5185, %v5183
      %v5582 = vpack.c.b16 %v5186, %v5184
      %v5583 = vpack.c.b16 %v5189, %v5187
      %v5584 = vpack.c.b16 %v5190, %v5188
      %v5585 = vpack.c.b16 %v5193, %v5191
      %v5586 = vpack.c.b16 %v5194, %v5192
      %v5587 = vpack.c.b16 %v5197, %v5195
      %v5588 = vpack.c.b16 %v5198, %v5196
      %v5589 = vpack.c.b16 %v5201, %v5199
      %v5590 = vpack.c.b16 %v5202, %v5200
      %v5591 = vpack.c.b16 %v5205, %v5203
      %v5592 = vpack.c.b16 %v5206, %v5204
      %v5593 = vpack.c.b16 %v5209, %v5207
      %v5594 = vpack.c.b16 %v5210, %v5208
      %v5595 = vpack.c.b16 %v5213, %v5211
      %v5596 = vpack.c.b16 %v5214, %v5212
      %v5597 = vpack.c.b16 %v5217, %v5215
      %v5598 = vpack.c.b16 %v5218, %v5216
      %v5599 = vpack.c.b16 %v5221, %v5219
      %v5600 = vpack.c.b16 %v5222, %v5220
      %v5601 = vpack.c.b16 %v5225, %v5223
      %v5602 = vpack.c.b16 %v5226, %v5224
      %v5603 = vpack.c.b16 %v5229, %v5227
      %v5604 = vpack.c.b16 %v5230, %v5228
      %v5605 = vpack.c.b16 %v5233, %v5231
      %v5606 = vpack.c.b16 %v5234, %v5232
      %v5607 = vpack.c.b16 %v5237, %v5235
      %v5608 = vpack.c.b16 %v5238, %v5236
      %v5609 = vpack.c.b16 %v5241, %v5239
      %v5610 = vpack.c.b16 %v5242, %v5240
      %v5611 = vpack.c.b16 %v5245, %v5243
      %v5612 = vpack.c.b16 %v5246, %v5244
      %v5613 = vpack.c.b16 %v5249, %v5247
      %v5614 = vpack.c.b16 %v5250, %v5248
      %v5615 = vpack.c.b16 %v5253, %v5251
      %v5616 = vpack.c.b16 %v5254, %v5252
      %v5617 = vpack.c.b16 %v5257, %v5255
      %v5618 = vpack.c.b16 %v5258, %v5256
      %v5619 = vpack.c.b16 %v5261, %v5259
      %v5620 = vpack.c.b16 %v5262, %v5260
      %v5621 = vpack.c.b16 %v5265, %v5263
      %v5622 = vpack.c.b16 %v5266, %v5264
      %v5623 = vpack.c.b16 %v5269, %v5267
      %v5624 = vpack.c.b16 %v5270, %v5268
      %v5625 = vpack.c.b16 %v5273, %v5271
      %v5626 = vpack.c.b16 %v5274, %v5272
      %v5627 = vpack.c.b16 %v5277, %v5275
      %v5628 = vpack.c.b16 %v5278, %v5276
      %v5629 = vpack.c.b16 %v5281, %v5279
      %v5630 = vpack.c.b16 %v5282, %v5280
      %v5631 = vpack.c.b16 %v5285, %v5283
      %v5632 = vpack.c.b16 %v5286, %v5284
      %v5633 = vpack.c.b16 %v5289, %v5287
      %v5634 = vpack.c.b16 %v5290, %v5288
      %v5635 = vpack.c.b16 %v5293, %v5291
      %v5636 = vpack.c.b16 %v5294, %v5292
      %v5637 = vpack.c.b16 %v5297, %v5295
      %v5638 = vpack.c.b16 %v5298, %v5296
      %v5639 = vpack.c.b16 %v5301, %v5299
      %v5640 = vpack.c.b16 %v5302, %v5300
      %v5641 = vpack.c.b16 %v5305, %v5303
      %v5642 = vpack.c.b16 %v5306, %v5304
      %v5643 = vpack.c.b16 %v5309, %v5307
      %v5644 = vpack.c.b16 %v5310, %v5308
      %v5645 = vpack.c.b16 %v5313, %v5311
      %v5646 = vpack.c.b16 %v5314, %v5312
      %v5647 = vpack.c.b16 %v5317, %v5315
      %v5648 = vpack.c.b16 %v5318, %v5316
      %v5649 = vpack.c.b16 %v5321, %v5319
      %v5650 = vpack.c.b16 %v5322, %v5320
      %v5651 = vpack.c.b16 %v5325, %v5323
      %v5652 = vpack.c.b16 %v5326, %v5324
      %v5653 = vpack.c.b16 %v5329, %v5327
      %v5654 = vpack.c.b16 %v5330, %v5328
      %v5655 = vpack.c.b16 %v5333, %v5331
      %v5656 = vpack.c.b16 %v5334, %v5332
      %v5657 = vpack.c.b16 %v5337, %v5335
      %v5658 = vpack.c.b16 %v5338, %v5336
      %v5659 = vpack.c.b16 %v5341, %v5339
      %v5660 = vpack.c.b16 %v5342, %v5340
      %v5661 = vpack.c.b16 %v5345, %v5343
      %v5662 = vpack.c.b16 %v5346, %v5344
      %v5663 = vpack.c.b16 %v5349, %v5347
      %v5664 = vpack.c.b16 %v5350, %v5348
      %v5665 = vpack.c.b16 %v5353, %v5351
      %v5666 = vpack.c.b16 %v5354, %v5352
      %v5667 = vpack.c.b16 %v5357, %v5355
      %v5668 = vpack.c.b16 %v5358, %v5356
      %v5669 = vpack.c.b16 %v5361, %v5359
      %v5670 = vpack.c.b16 %v5362, %v5360
      %v5671 = vpack.c.b16 %v5365, %v5363
      %v5672 = vpack.c.b16 %v5366, %v5364
      %v5673 = vpack.c.b16 %v5369, %v5367
      %v5674 = vpack.c.b16 %v5370, %v5368
      %v5675 = vpack.c.b16 %v5373, %v5371
      %v5676 = vpack.c.b16 %v5374, %v5372
      %v5677 = vpack.c.b16 %v5377, %v5375
      %v5678 = vpack.c.b16 %v5378, %v5376
      %v5679 = vpack.c.b16 %v5381, %v5379
      %v5680 = vpack.c.b16 %v5382, %v5380
      %v5681 = vpack.c.b16 %v5385, %v5383
      %v5682 = vpack.c.b16 %v5386, %v5384
      %v5683 = vpack.c.b16 %v5389, %v5387
      %v5684 = vpack.c.b16 %v5390, %v5388
      %v5685 = vpack.c.b16 %v5393, %v5391
      %v5686 = vpack.c.b16 %v5394, %v5392
      %v5687 = vpack.c.b16 %v5397, %v5395
      %v5688 = vpack.c.b16 %v5398, %v5396
      %v5689 = vpack.c.b16 %v5401, %v5399
      %v5690 = vpack.c.b16 %v5402, %v5400
      %v5691 = vpack.c.b16 %v5405, %v5403
      %v5692 = vpack.c.b16 %v5406, %v5404
      %v5693 = vpack.c.b16 %v5409, %v5407
      %v5694 = vpack.c.b16 %v5410, %v5408
      %v5695 = vpack.c.b16 %v5413, %v5411
      %v5696 = vpack.c.b16 %v5414, %v5412
      %v5697 = vpack.c.b16 %v5417, %v5415
      %v5698 = vpack.c.b16 %v5418, %v5416
      %v5699 = vpack.c.b16 %v5421, %v5419
      %v5700 = vpack.c.b16 %v5422, %v5420
      %v5701 = vpack.c.b16 %v5425, %v5423
      %v5702 = vpack.c.b16 %v5426, %v5424
      %v5703 = vpack.c.b16 %v5429, %v5427
      %v5704 = vpack.c.b16 %v5430, %v5428
      %v5705 = vpack.c.b16 %v5433, %v5431
      %v5706 = vpack.c.b16 %v5434, %v5432
      %v5707 = vpack.c.b16 %v5437, %v5435
      %v5708 = vpack.c.b16 %v5438, %v5436
      %v5709 = vpack.c.b16 %v5441, %v5439
      %v5710 = vpack.c.b16 %v5442, %v5440
      %v5711 = vpack.c.b16 %v5445, %v5443
      %v5712 = vpack.c.b16 %v5446, %v5444
      %v5713 = vpack.c.b16 %v5449, %v5447
      %v5714 = vpack.c.b16 %v5450, %v5448
      %v5715 = vpack.c.b16 %v5453, %v5451
      %v5716 = vpack.c.b16 %v5454, %v5452
      %v5717 = vpack.c.b16 %v5457, %v5455
      %v5718 = vpack.c.b16 %v5458, %v5456
      %v5719 = vpack.c.b16 %v5461, %v5459
      %v5720 = vpack.c.b16 %v5462, %v5460
      %v5721 = vpack.c.b16 %v5465, %v5463
      %v5722 = vpack.c.b16 %v5466, %v5464
      %5979 = vmatpush.bf16.msra.mxu0 %v5481
      %5980 = vmatpush.bf16.msra.mxu0 %v5479
      %5981 = vmatpush.bf16.msra.mxu0 %v5477
      %5982 = vmatpush.bf16.msra.mxu0 %v5475
      %5983 = vmatpush.bf16.msra.mxu0 %v5473
      %5984 = vmatpush.bf16.msra.mxu0 %v5471
      %5985 = vmatpush.bf16.msra.mxu0 %v5469
      %5986 = vmatpush.bf16.msra.mxu0 %v5467
      %5987 = vmatmul.bf16.gmra.mxu0 %v4427
      %v5988 = vpop.f32.mrf.mxu0
      %v5989 = vadd.f32 0.0, %v5988
      %v5990 = vpop.f32.mrf.mxu0
      %5991 = vdwg.mxu0
      %5992 = vmatpush.bf16.msra.mxu0 %v5497
      %5993 = vmatpush.bf16.msra.mxu0 %v5495
      %5994 = vmatpush.bf16.msra.mxu0 %v5493
      %5995 = vmatpush.bf16.msra.mxu0 %v5491
      %5996 = vmatpush.bf16.msra.mxu0 %v5489
      %5997 = vmatpush.bf16.msra.mxu0 %v5487
      %5998 = vmatpush.bf16.msra.mxu0 %v5485
      %5999 = vmatpush.bf16.msra.mxu0 %v5483
      %6000 = vmatmul.bf16.gmra.mxu0 %v4428
      %v6001 = vpop.f32.mrf.mxu0
      %v6002 = vadd.f32 %v5989, %v6001
      %v6003 = vpop.f32.mrf.mxu0
      %6004 = vdwg.mxu0
      %6005 = vmatpush.bf16.msra.mxu0 %v5513
      %6006 = vmatpush.bf16.msra.mxu0 %v5511
      %6007 = vmatpush.bf16.msra.mxu0 %v5509
      %6008 = vmatpush.bf16.msra.mxu0 %v5507
      %6009 = vmatpush.bf16.msra.mxu0 %v5505
      %6010 = vmatpush.bf16.msra.mxu0 %v5503
      %6011 = vmatpush.bf16.msra.mxu0 %v5501
      %6012 = vmatpush.bf16.msra.mxu0 %v5499
      %6013 = vmatmul.bf16.gmra.mxu0 %v4429
      %v6014 = vpop.f32.mrf.mxu0
      %v6015 = vadd.f32 %v6002, %v6014
      %v6016 = vpop.f32.mrf.mxu0
      %6017 = vdwg.mxu0
      %6018 = vmatpush.bf16.msra.mxu0 %v5529
      %6019 = vmatpush.bf16.msra.mxu0 %v5527
      %6020 = vmatpush.bf16.msra.mxu0 %v5525
      %6021 = vmatpush.bf16.msra.mxu0 %v5523
      %6022 = vmatpush.bf16.msra.mxu0 %v5521
      %6023 = vmatpush.bf16.msra.mxu0 %v5519
      %6024 = vmatpush.bf16.msra.mxu0 %v5517
      %6025 = vmatpush.bf16.msra.mxu0 %v5515
      %6026 = vmatmul.bf16.gmra.mxu0 %v4430
      %v6027 = vpop.f32.mrf.mxu0
      %v6028 = vadd.f32 %v6015, %v6027
      %v6029 = vpop.f32.mrf.mxu0
      %6030 = vdwg.mxu0
      %6031 = vmatpush.bf16.msra.mxu0 %v5545
      %6032 = vmatpush.bf16.msra.mxu0 %v5543
      %6033 = vmatpush.bf16.msra.mxu0 %v5541
      %6034 = vmatpush.bf16.msra.mxu0 %v5539
      %6035 = vmatpush.bf16.msra.mxu0 %v5537
      %6036 = vmatpush.bf16.msra.mxu0 %v5535
      %6037 = vmatpush.bf16.msra.mxu0 %v5533
      %6038 = vmatpush.bf16.msra.mxu0 %v5531
      %6039 = vmatmul.bf16.gmra.mxu0 %v4431
      %v6040 = vpop.f32.mrf.mxu0
      %v6041 = vadd.f32 %v6028, %v6040
      %v6042 = vpop.f32.mrf.mxu0
      %6043 = vdwg.mxu0
      %6044 = vmatpush.bf16.msra.mxu0 %v5561
      %6045 = vmatpush.bf16.msra.mxu0 %v5559
      %6046 = vmatpush.bf16.msra.mxu0 %v5557
      %6047 = vmatpush.bf16.msra.mxu0 %v5555
      %6048 = vmatpush.bf16.msra.mxu0 %v5553
      %6049 = vmatpush.bf16.msra.mxu0 %v5551
      %6050 = vmatpush.bf16.msra.mxu0 %v5549
      %6051 = vmatpush.bf16.msra.mxu0 %v5547
      %6052 = vmatmul.bf16.gmra.mxu0 %v4432
      %v6053 = vpop.f32.mrf.mxu0
      %v6054 = vadd.f32 %v6041, %v6053
      %v6055 = vpop.f32.mrf.mxu0
      %6056 = vdwg.mxu0
      %6057 = vmatpush.bf16.msra.mxu0 %v5577
      %6058 = vmatpush.bf16.msra.mxu0 %v5575
      %6059 = vmatpush.bf16.msra.mxu0 %v5573
      %6060 = vmatpush.bf16.msra.mxu0 %v5571
      %6061 = vmatpush.bf16.msra.mxu0 %v5569
      %6062 = vmatpush.bf16.msra.mxu0 %v5567
      %6063 = vmatpush.bf16.msra.mxu0 %v5565
      %6064 = vmatpush.bf16.msra.mxu0 %v5563
      %6065 = vmatmul.bf16.gmra.mxu0 %v4433
      %v6066 = vpop.f32.mrf.mxu0
      %v6067 = vadd.f32 %v6054, %v6066
      %v6068 = vpop.f32.mrf.mxu0
      %6069 = vdwg.mxu0
      %6070 = vmatpush.bf16.msra.mxu0 %v5593
      %6071 = vmatpush.bf16.msra.mxu0 %v5591
      %6072 = vmatpush.bf16.msra.mxu0 %v5589
      %6073 = vmatpush.bf16.msra.mxu0 %v5587
      %6074 = vmatpush.bf16.msra.mxu0 %v5585
      %6075 = vmatpush.bf16.msra.mxu0 %v5583
      %6076 = vmatpush.bf16.msra.mxu0 %v5581
      %6077 = vmatpush.bf16.msra.mxu0 %v5579
      %6078 = vmatmul.bf16.gmra.mxu0 %v4434
      %v6079 = vpop.f32.mrf.mxu0
      %v6080 = vadd.f32 %v6067, %v6079
      %v6081 = vpop.f32.mrf.mxu0
      %6082 = vdwg.mxu0
      %6083 = vmatpush.bf16.msra.mxu0 %v5609
      %6084 = vmatpush.bf16.msra.mxu0 %v5607
      %6085 = vmatpush.bf16.msra.mxu0 %v5605
      %6086 = vmatpush.bf16.msra.mxu0 %v5603
      %6087 = vmatpush.bf16.msra.mxu0 %v5601
      %6088 = vmatpush.bf16.msra.mxu0 %v5599
      %6089 = vmatpush.bf16.msra.mxu0 %v5597
      %6090 = vmatpush.bf16.msra.mxu0 %v5595
      %6091 = vmatmul.bf16.gmra.mxu0 %v4435
      %v6092 = vpop.f32.mrf.mxu0
      %v6093 = vadd.f32 %v6080, %v6092
      %v6094 = vpop.f32.mrf.mxu0
      %6095 = vdwg.mxu0
      %6096 = vmatpush.bf16.msra.mxu0 %v5625
      %6097 = vmatpush.bf16.msra.mxu0 %v5623
      %6098 = vmatpush.bf16.msra.mxu0 %v5621
      %6099 = vmatpush.bf16.msra.mxu0 %v5619
      %6100 = vmatpush.bf16.msra.mxu0 %v5617
      %6101 = vmatpush.bf16.msra.mxu0 %v5615
      %6102 = vmatpush.bf16.msra.mxu0 %v5613
      %6103 = vmatpush.bf16.msra.mxu0 %v5611
      %6104 = vmatmul.bf16.gmra.mxu0 %v4436
      %v6105 = vpop.f32.mrf.mxu0
      %v6106 = vadd.f32 %v6093, %v6105
      %v6107 = vpop.f32.mrf.mxu0
      %6108 = vdwg.mxu0
      %6109 = vmatpush.bf16.msra.mxu0 %v5641
      %6110 = vmatpush.bf16.msra.mxu0 %v5639
      %6111 = vmatpush.bf16.msra.mxu0 %v5637
      %6112 = vmatpush.bf16.msra.mxu0 %v5635
      %6113 = vmatpush.bf16.msra.mxu0 %v5633
      %6114 = vmatpush.bf16.msra.mxu0 %v5631
      %6115 = vmatpush.bf16.msra.mxu0 %v5629
      %6116 = vmatpush.bf16.msra.mxu0 %v5627
      %6117 = vmatmul.bf16.gmra.mxu0 %v4437
      %v6118 = vpop.f32.mrf.mxu0
      %v6119 = vadd.f32 %v6106, %v6118
      %v6120 = vpop.f32.mrf.mxu0
      %6121 = vdwg.mxu0
      %6122 = vmatpush.bf16.msra.mxu0 %v5657
      %6123 = vmatpush.bf16.msra.mxu0 %v5655
      %6124 = vmatpush.bf16.msra.mxu0 %v5653
      %6125 = vmatpush.bf16.msra.mxu0 %v5651
      %6126 = vmatpush.bf16.msra.mxu0 %v5649
      %6127 = vmatpush.bf16.msra.mxu0 %v5647
      %6128 = vmatpush.bf16.msra.mxu0 %v5645
      %6129 = vmatpush.bf16.msra.mxu0 %v5643
      %6130 = vmatmul.bf16.gmra.mxu0 %v4438
      %v6131 = vpop.f32.mrf.mxu0
      %v6132 = vadd.f32 %v6119, %v6131
      %v6133 = vpop.f32.mrf.mxu0
      %6134 = vdwg.mxu0
      %6135 = vmatpush.bf16.msra.mxu0 %v5673
      %6136 = vmatpush.bf16.msra.mxu0 %v5671
      %6137 = vmatpush.bf16.msra.mxu0 %v5669
      %6138 = vmatpush.bf16.msra.mxu0 %v5667
      %6139 = vmatpush.bf16.msra.mxu0 %v5665
      %6140 = vmatpush.bf16.msra.mxu0 %v5663
      %6141 = vmatpush.bf16.msra.mxu0 %v5661
      %6142 = vmatpush.bf16.msra.mxu0 %v5659
      %6143 = vmatmul.bf16.gmra.mxu0 %v4439
      %v6144 = vpop.f32.mrf.mxu0
      %v6145 = vadd.f32 %v6132, %v6144
      %v6146 = vpop.f32.mrf.mxu0
      %6147 = vdwg.mxu0
      %6148 = vmatpush.bf16.msra.mxu0 %v5689
      %6149 = vmatpush.bf16.msra.mxu0 %v5687
      %6150 = vmatpush.bf16.msra.mxu0 %v5685
      %6151 = vmatpush.bf16.msra.mxu0 %v5683
      %6152 = vmatpush.bf16.msra.mxu0 %v5681
      %6153 = vmatpush.bf16.msra.mxu0 %v5679
      %6154 = vmatpush.bf16.msra.mxu0 %v5677
      %6155 = vmatpush.bf16.msra.mxu0 %v5675
      %6156 = vmatmul.bf16.gmra.mxu0 %v4440
      %v6157 = vpop.f32.mrf.mxu0
      %v6158 = vadd.f32 %v6145, %v6157
      %v6159 = vpop.f32.mrf.mxu0
      %6160 = vdwg.mxu0
      %6161 = vmatpush.bf16.msra.mxu0 %v5705
      %6162 = vmatpush.bf16.msra.mxu0 %v5703
      %6163 = vmatpush.bf16.msra.mxu0 %v5701
      %6164 = vmatpush.bf16.msra.mxu0 %v5699
      %6165 = vmatpush.bf16.msra.mxu0 %v5697
      %6166 = vmatpush.bf16.msra.mxu0 %v5695
      %6167 = vmatpush.bf16.msra.mxu0 %v5693
      %6168 = vmatpush.bf16.msra.mxu0 %v5691
      %6169 = vmatmul.bf16.gmra.mxu0 %v4441
      %v6170 = vpop.f32.mrf.mxu0
      %v6171 = vadd.f32 %v6158, %v6170
      %v6172 = vpop.f32.mrf.mxu0
      %6173 = vdwg.mxu0
      %6174 = vmatpush.bf16.msra.mxu0 %v5721
      %6175 = vmatpush.bf16.msra.mxu0 %v5719
      %6176 = vmatpush.bf16.msra.mxu0 %v5717
      %6177 = vmatpush.bf16.msra.mxu0 %v5715
      %6178 = vmatpush.bf16.msra.mxu0 %v5713
      %6179 = vmatpush.bf16.msra.mxu0 %v5711
      %6180 = vmatpush.bf16.msra.mxu0 %v5709
      %6181 = vmatpush.bf16.msra.mxu0 %v5707
      %6182 = vmatmul.bf16.gmra.mxu0 %v4442
      %v6183 = vpop.f32.mrf.mxu0
      %v6184 = vadd.f32 %v6171, %v6183
      %v6185 = vpop.f32.mrf.mxu0
      %6186 = vdwg.mxu0
      %6187 = vmatpush.bf16.msra.mxu0 %v5482
      %6188 = vmatpush.bf16.msra.mxu0 %v5480
      %6189 = vmatpush.bf16.msra.mxu0 %v5478
      %6190 = vmatpush.bf16.msra.mxu0 %v5476
      %6191 = vmatpush.bf16.msra.mxu0 %v5474
      %6192 = vmatpush.bf16.msra.mxu0 %v5472
      %6193 = vmatpush.bf16.msra.mxu0 %v5470
      %6194 = vmatpush.bf16.msra.mxu0 %v5468
      %6195 = vmatmul.bf16.gmra.mxu0 %v4427
      %v6196 = vpop.f32.mrf.mxu0
      %v6197 = vadd.f32 0.0, %v6196
      %v6198 = vpop.f32.mrf.mxu0
      %6199 = vdwg.mxu0
      %6200 = vmatpush.bf16.msra.mxu0 %v5498
      %6201 = vmatpush.bf16.msra.mxu0 %v5496
      %6202 = vmatpush.bf16.msra.mxu0 %v5494
      %6203 = vmatpush.bf16.msra.mxu0 %v5492
      %6204 = vmatpush.bf16.msra.mxu0 %v5490
      %6205 = vmatpush.bf16.msra.mxu0 %v5488
      %6206 = vmatpush.bf16.msra.mxu0 %v5486
      %6207 = vmatpush.bf16.msra.mxu0 %v5484
      %6208 = vmatmul.bf16.gmra.mxu0 %v4428
      %v6209 = vpop.f32.mrf.mxu0
      %v6210 = vadd.f32 %v6197, %v6209
      %v6211 = vpop.f32.mrf.mxu0
      %6212 = vdwg.mxu0
      %6213 = vmatpush.bf16.msra.mxu0 %v5514
      %6214 = vmatpush.bf16.msra.mxu0 %v5512
      %6215 = vmatpush.bf16.msra.mxu0 %v5510
      %6216 = vmatpush.bf16.msra.mxu0 %v5508
      %6217 = vmatpush.bf16.msra.mxu0 %v5506
      %6218 = vmatpush.bf16.msra.mxu0 %v5504
      %6219 = vmatpush.bf16.msra.mxu0 %v5502
      %6220 = vmatpush.bf16.msra.mxu0 %v5500
      %6221 = vmatmul.bf16.gmra.mxu0 %v4429
      %v6222 = vpop.f32.mrf.mxu0
      %v6223 = vadd.f32 %v6210, %v6222
      %v6224 = vpop.f32.mrf.mxu0
      %6225 = vdwg.mxu0
      %6226 = vmatpush.bf16.msra.mxu0 %v5530
      %6227 = vmatpush.bf16.msra.mxu0 %v5528
      %6228 = vmatpush.bf16.msra.mxu0 %v5526
      %6229 = vmatpush.bf16.msra.mxu0 %v5524
      %6230 = vmatpush.bf16.msra.mxu0 %v5522
      %6231 = vmatpush.bf16.msra.mxu0 %v5520
      %6232 = vmatpush.bf16.msra.mxu0 %v5518
      %6233 = vmatpush.bf16.msra.mxu0 %v5516
      %6234 = vmatmul.bf16.gmra.mxu0 %v4430
      %v6235 = vpop.f32.mrf.mxu0
      %v6236 = vadd.f32 %v6223, %v6235
      %v6237 = vpop.f32.mrf.mxu0
      %6238 = vdwg.mxu0
      %6239 = vmatpush.bf16.msra.mxu0 %v5546
      %6240 = vmatpush.bf16.msra.mxu0 %v5544
      %6241 = vmatpush.bf16.msra.mxu0 %v5542
      %6242 = vmatpush.bf16.msra.mxu0 %v5540
      %6243 = vmatpush.bf16.msra.mxu0 %v5538
      %6244 = vmatpush.bf16.msra.mxu0 %v5536
      %6245 = vmatpush.bf16.msra.mxu0 %v5534
      %6246 = vmatpush.bf16.msra.mxu0 %v5532
      %6247 = vmatmul.bf16.gmra.mxu0 %v4431
      %v6248 = vpop.f32.mrf.mxu0
      %v6249 = vadd.f32 %v6236, %v6248
      %v6250 = vpop.f32.mrf.mxu0
      %6251 = vdwg.mxu0
      %6252 = vmatpush.bf16.msra.mxu0 %v5562
      %6253 = vmatpush.bf16.msra.mxu0 %v5560
      %6254 = vmatpush.bf16.msra.mxu0 %v5558
      %6255 = vmatpush.bf16.msra.mxu0 %v5556
      %6256 = vmatpush.bf16.msra.mxu0 %v5554
      %6257 = vmatpush.bf16.msra.mxu0 %v5552
      %6258 = vmatpush.bf16.msra.mxu0 %v5550
      %6259 = vmatpush.bf16.msra.mxu0 %v5548
      %6260 = vmatmul.bf16.gmra.mxu0 %v4432
      %v6261 = vpop.f32.mrf.mxu0
      %v6262 = vadd.f32 %v6249, %v6261
      %v6263 = vpop.f32.mrf.mxu0
      %6264 = vdwg.mxu0
      %6265 = vmatpush.bf16.msra.mxu0 %v5578
      %6266 = vmatpush.bf16.msra.mxu0 %v5576
      %6267 = vmatpush.bf16.msra.mxu0 %v5574
      %6268 = vmatpush.bf16.msra.mxu0 %v5572
      %6269 = vmatpush.bf16.msra.mxu0 %v5570
      %6270 = vmatpush.bf16.msra.mxu0 %v5568
      %6271 = vmatpush.bf16.msra.mxu0 %v5566
      %6272 = vmatpush.bf16.msra.mxu0 %v5564
      %6273 = vmatmul.bf16.gmra.mxu0 %v4433
      %v6274 = vpop.f32.mrf.mxu0
      %v6275 = vadd.f32 %v6262, %v6274
      %v6276 = vpop.f32.mrf.mxu0
      %6277 = vdwg.mxu0
      %6278 = vmatpush.bf16.msra.mxu0 %v5594
      %6279 = vmatpush.bf16.msra.mxu0 %v5592
      %6280 = vmatpush.bf16.msra.mxu0 %v5590
      %6281 = vmatpush.bf16.msra.mxu0 %v5588
      %6282 = vmatpush.bf16.msra.mxu0 %v5586
      %6283 = vmatpush.bf16.msra.mxu0 %v5584
      %6284 = vmatpush.bf16.msra.mxu0 %v5582
      %6285 = vmatpush.bf16.msra.mxu0 %v5580
      %6286 = vmatmul.bf16.gmra.mxu0 %v4434
      %v6287 = vpop.f32.mrf.mxu0
      %v6288 = vadd.f32 %v6275, %v6287
      %v6289 = vpop.f32.mrf.mxu0
      %6290 = vdwg.mxu0
      %6291 = vmatpush.bf16.msra.mxu0 %v5610
      %6292 = vmatpush.bf16.msra.mxu0 %v5608
      %6293 = vmatpush.bf16.msra.mxu0 %v5606
      %6294 = vmatpush.bf16.msra.mxu0 %v5604
      %6295 = vmatpush.bf16.msra.mxu0 %v5602
      %6296 = vmatpush.bf16.msra.mxu0 %v5600
      %6297 = vmatpush.bf16.msra.mxu0 %v5598
      %6298 = vmatpush.bf16.msra.mxu0 %v5596
      %6299 = vmatmul.bf16.gmra.mxu0 %v4435
      %v6300 = vpop.f32.mrf.mxu0
      %v6301 = vadd.f32 %v6288, %v6300
      %v6302 = vpop.f32.mrf.mxu0
      %6303 = vdwg.mxu0
      %6304 = vmatpush.bf16.msra.mxu0 %v5626
      %6305 = vmatpush.bf16.msra.mxu0 %v5624
      %6306 = vmatpush.bf16.msra.mxu0 %v5622
      %6307 = vmatpush.bf16.msra.mxu0 %v5620
      %6308 = vmatpush.bf16.msra.mxu0 %v5618
      %6309 = vmatpush.bf16.msra.mxu0 %v5616
      %6310 = vmatpush.bf16.msra.mxu0 %v5614
      %6311 = vmatpush.bf16.msra.mxu0 %v5612
      %6312 = vmatmul.bf16.gmra.mxu0 %v4436
      %v6313 = vpop.f32.mrf.mxu0
      %v6314 = vadd.f32 %v6301, %v6313
      %v6315 = vpop.f32.mrf.mxu0
      %6316 = vdwg.mxu0
      %6317 = vmatpush.bf16.msra.mxu0 %v5642
      %6318 = vmatpush.bf16.msra.mxu0 %v5640
      %6319 = vmatpush.bf16.msra.mxu0 %v5638
      %6320 = vmatpush.bf16.msra.mxu0 %v5636
      %6321 = vmatpush.bf16.msra.mxu0 %v5634
      %6322 = vmatpush.bf16.msra.mxu0 %v5632
      %6323 = vmatpush.bf16.msra.mxu0 %v5630
      %6324 = vmatpush.bf16.msra.mxu0 %v5628
      %6325 = vmatmul.bf16.gmra.mxu0 %v4437
      %v6326 = vpop.f32.mrf.mxu0
      %v6327 = vadd.f32 %v6314, %v6326
      %v6328 = vpop.f32.mrf.mxu0
      %6329 = vdwg.mxu0
      %6330 = vmatpush.bf16.msra.mxu0 %v5658
      %6331 = vmatpush.bf16.msra.mxu0 %v5656
      %6332 = vmatpush.bf16.msra.mxu0 %v5654
      %6333 = vmatpush.bf16.msra.mxu0 %v5652
      %6334 = vmatpush.bf16.msra.mxu0 %v5650
      %6335 = vmatpush.bf16.msra.mxu0 %v5648
      %6336 = vmatpush.bf16.msra.mxu0 %v5646
      %6337 = vmatpush.bf16.msra.mxu0 %v5644
      %6338 = vmatmul.bf16.gmra.mxu0 %v4438
      %v6339 = vpop.f32.mrf.mxu0
      %v6340 = vadd.f32 %v6327, %v6339
      %v6341 = vpop.f32.mrf.mxu0
      %6342 = vdwg.mxu0
      %6343 = vmatpush.bf16.msra.mxu0 %v5674
      %6344 = vmatpush.bf16.msra.mxu0 %v5672
      %6345 = vmatpush.bf16.msra.mxu0 %v5670
      %6346 = vmatpush.bf16.msra.mxu0 %v5668
      %6347 = vmatpush.bf16.msra.mxu0 %v5666
      %6348 = vmatpush.bf16.msra.mxu0 %v5664
      %6349 = vmatpush.bf16.msra.mxu0 %v5662
      %6350 = vmatpush.bf16.msra.mxu0 %v5660
      %6351 = vmatmul.bf16.gmra.mxu0 %v4439
      %v6352 = vpop.f32.mrf.mxu0
      %v6353 = vadd.f32 %v6340, %v6352
      %v6354 = vpop.f32.mrf.mxu0
      %6355 = vdwg.mxu0
      %6356 = vmatpush.bf16.msra.mxu0 %v5690
      %6357 = vmatpush.bf16.msra.mxu0 %v5688
      %6358 = vmatpush.bf16.msra.mxu0 %v5686
      %6359 = vmatpush.bf16.msra.mxu0 %v5684
      %6360 = vmatpush.bf16.msra.mxu0 %v5682
      %6361 = vmatpush.bf16.msra.mxu0 %v5680
      %6362 = vmatpush.bf16.msra.mxu0 %v5678
      %6363 = vmatpush.bf16.msra.mxu0 %v5676
      %6364 = vmatmul.bf16.gmra.mxu0 %v4440
      %v6365 = vpop.f32.mrf.mxu0
      %v6366 = vadd.f32 %v6353, %v6365
      %v6367 = vpop.f32.mrf.mxu0
      %6368 = vdwg.mxu0
      %6369 = vmatpush.bf16.msra.mxu0 %v5706
      %6370 = vmatpush.bf16.msra.mxu0 %v5704
      %6371 = vmatpush.bf16.msra.mxu0 %v5702
      %6372 = vmatpush.bf16.msra.mxu0 %v5700
      %6373 = vmatpush.bf16.msra.mxu0 %v5698
      %6374 = vmatpush.bf16.msra.mxu0 %v5696
      %6375 = vmatpush.bf16.msra.mxu0 %v5694
      %6376 = vmatpush.bf16.msra.mxu0 %v5692
      %6377 = vmatmul.bf16.gmra.mxu0 %v4441
      %v6378 = vpop.f32.mrf.mxu0
      %v6379 = vadd.f32 %v6366, %v6378
      %v6380 = vpop.f32.mrf.mxu0
      %6381 = vdwg.mxu0
      %6382 = vmatpush.bf16.msra.mxu0 %v5722
      %6383 = vmatpush.bf16.msra.mxu0 %v5720
      %6384 = vmatpush.bf16.msra.mxu0 %v5718
      %6385 = vmatpush.bf16.msra.mxu0 %v5716
      %6386 = vmatpush.bf16.msra.mxu0 %v5714
      %6387 = vmatpush.bf16.msra.mxu0 %v5712
      %6388 = vmatpush.bf16.msra.mxu0 %v5710
      %6389 = vmatpush.bf16.msra.mxu0 %v5708
      %6390 = vmatmul.bf16.gmra.mxu0 %v4442
      %v6391 = vpop.f32.mrf.mxu0
      %v6392 = vadd.f32 %v6379, %v6391
      %v6393 = vpop.f32.mrf.mxu0
      %6394 = vdwg.mxu0
      %v6395 = vmax.f32 %v6184, 0.0
      %v6396 = vmax.f32 %v6392, 0.0
      %v6397 = vpack.c.bf16 %v6396, %v6395
      %v6399 = vunpack.c.l.b16 %v6397
      %v6400 = vunpack.c.h.b16 %v6397
      %v6401 = vpack.c.b16 %v6399, %v6399
      %v6402 = vpack.c.b16 %v6400, %v6400
      %v6406 = vshrl.u32 %v6401, 16
      %v6409 = vshrl.u32 %v6402, 16
      %v6413 = vrot.slane %v6401, 1
      %v6414 = vrot.slane %v6402, 1
      %v6417 = vrot.slane %v6406, 1
      %v6418 = vrot.slane %v6409, 1
      %v6421 = vld [vmem:[%s8] sm:$0xff]
      %v6422 = vld [vmem:[%s8 + $0x8] sm:$0xff]
      %v6423 = vld [vmem:[%s8 + $0x10] sm:$0xff]
      %v6424 = vld [vmem:[%s8 + $0x18] sm:$0xff]
      %v6425 = vld [vmem:[%s8 + $0x20] sm:$0xff]
      %v6426 = vld [vmem:[%s8 + $0x28] sm:$0xff]
      %v6427 = vld [vmem:[%s8 + $0x30] sm:$0xff]
      %v6428 = vld [vmem:[%s8 + $0x38] sm:$0xff]
      %v6429 = vld [vmem:[%s8 + $0x40] sm:$0xff]
      %v6430 = vld [vmem:[%s8 + $0x48] sm:$0xff]
      %v6431 = vld [vmem:[%s8 + $0x50] sm:$0xff]
      %v6432 = vld [vmem:[%s8 + $0x58] sm:$0xff]
      %v6433 = vld [vmem:[%s8 + $0x60] sm:$0xff]
      %v6434 = vld [vmem:[%s8 + $0x68] sm:$0xff]
      %v6435 = vld [vmem:[%s8 + $0x70] sm:$0xff]
      %v6436 = vld [vmem:[%s8 + $0x78] sm:$0xff]
      %v6437 = vld [vmem:[%s8 + $0x80] sm:$0xff]
      %v6438 = vld [vmem:[%s8 + $0x88] sm:$0xff]
      %v6439 = vld [vmem:[%s8 + $0x90] sm:$0xff]
      %v6440 = vld [vmem:[%s8 + $0x98] sm:$0xff]
      %v6441 = vld [vmem:[%s8 + $0xa0] sm:$0xff]
      %v6442 = vld [vmem:[%s8 + $0xa8] sm:$0xff]
      %v6443 = vld [vmem:[%s8 + $0xb0] sm:$0xff]
      %v6444 = vld [vmem:[%s8 + $0xb8] sm:$0xff]
      %v6445 = vld [vmem:[%s8 + $0xc0] sm:$0xff]
      %v6446 = vld [vmem:[%s8 + $0xc8] sm:$0xff]
      %v6447 = vld [vmem:[%s8 + $0xd0] sm:$0xff]
      %v6448 = vld [vmem:[%s8 + $0xd8] sm:$0xff]
      %v6449 = vld [vmem:[%s8 + $0xe0] sm:$0xff]
      %v6450 = vld [vmem:[%s8 + $0xe8] sm:$0xff]
      %v6451 = vld [vmem:[%s8 + $0xf0] sm:$0xff]
      %v6452 = vld [vmem:[%s8 + $0xf8] sm:$0xff]
      %v6453 = vld [vmem:[%s8 + $0x100] sm:$0xff]
      %v6454 = vld [vmem:[%s8 + $0x108] sm:$0xff]
      %v6455 = vld [vmem:[%s8 + $0x110] sm:$0xff]
      %v6456 = vld [vmem:[%s8 + $0x118] sm:$0xff]
      %v6457 = vld [vmem:[%s8 + $0x120] sm:$0xff]
      %v6458 = vld [vmem:[%s8 + $0x128] sm:$0xff]
      %v6459 = vld [vmem:[%s8 + $0x130] sm:$0xff]
      %v6460 = vld [vmem:[%s8 + $0x138] sm:$0xff]
      %v6461 = vld [vmem:[%s8 + $0x140] sm:$0xff]
      %v6462 = vld [vmem:[%s8 + $0x148] sm:$0xff]
      %v6463 = vld [vmem:[%s8 + $0x150] sm:$0xff]
      %v6464 = vld [vmem:[%s8 + $0x158] sm:$0xff]
      %v6465 = vld [vmem:[%s8 + $0x160] sm:$0xff]
      %v6466 = vld [vmem:[%s8 + $0x168] sm:$0xff]
      %v6467 = vld [vmem:[%s8 + $0x170] sm:$0xff]
      %v6468 = vld [vmem:[%s8 + $0x178] sm:$0xff]
      %v6469 = vld [vmem:[%s8 + $0x180] sm:$0xff]
      %v6470 = vld [vmem:[%s8 + $0x188] sm:$0xff]
      %v6471 = vld [vmem:[%s8 + $0x190] sm:$0xff]
      %v6472 = vld [vmem:[%s8 + $0x198] sm:$0xff]
      %v6473 = vld [vmem:[%s8 + $0x1a0] sm:$0xff]
      %v6474 = vld [vmem:[%s8 + $0x1a8] sm:$0xff]
      %v6475 = vld [vmem:[%s8 + $0x1b0] sm:$0xff]
      %v6476 = vld [vmem:[%s8 + $0x1b8] sm:$0xff]
      %v6477 = vld [vmem:[%s8 + $0x1c0] sm:$0xff]
      %v6478 = vld [vmem:[%s8 + $0x1c8] sm:$0xff]
      %v6479 = vld [vmem:[%s8 + $0x1d0] sm:$0xff]
      %v6480 = vld [vmem:[%s8 + $0x1d8] sm:$0xff]
      %v6481 = vld [vmem:[%s8 + $0x1e0] sm:$0xff]
      %v6482 = vld [vmem:[%s8 + $0x1e8] sm:$0xff]
      %v6483 = vld [vmem:[%s8 + $0x1f0] sm:$0xff]
      %v6484 = vld [vmem:[%s8 + $0x1f8] sm:$0xff]
      %v6485 = vld [vmem:[%s8 + $0x200] sm:$0xff]
      %v6486 = vld [vmem:[%s8 + $0x208] sm:$0xff]
      %v6487 = vld [vmem:[%s8 + $0x210] sm:$0xff]
      %v6488 = vld [vmem:[%s8 + $0x218] sm:$0xff]
      %v6489 = vld [vmem:[%s8 + $0x220] sm:$0xff]
      %v6490 = vld [vmem:[%s8 + $0x228] sm:$0xff]
      %v6491 = vld [vmem:[%s8 + $0x230] sm:$0xff]
      %v6492 = vld [vmem:[%s8 + $0x238] sm:$0xff]
      %v6493 = vld [vmem:[%s8 + $0x240] sm:$0xff]
      %v6494 = vld [vmem:[%s8 + $0x248] sm:$0xff]
      %v6495 = vld [vmem:[%s8 + $0x250] sm:$0xff]
      %v6496 = vld [vmem:[%s8 + $0x258] sm:$0xff]
      %v6497 = vld [vmem:[%s8 + $0x260] sm:$0xff]
      %v6498 = vld [vmem:[%s8 + $0x268] sm:$0xff]
      %v6499 = vld [vmem:[%s8 + $0x270] sm:$0xff]
      %v6500 = vld [vmem:[%s8 + $0x278] sm:$0xff]
      %v6501 = vld [vmem:[%s8 + $0x280] sm:$0xff]
      %v6502 = vld [vmem:[%s8 + $0x288] sm:$0xff]
      %v6503 = vld [vmem:[%s8 + $0x290] sm:$0xff]
      %v6504 = vld [vmem:[%s8 + $0x298] sm:$0xff]
      %v6505 = vld [vmem:[%s8 + $0x2a0] sm:$0xff]
      %v6506 = vld [vmem:[%s8 + $0x2a8] sm:$0xff]
      %v6507 = vld [vmem:[%s8 + $0x2b0] sm:$0xff]
      %v6508 = vld [vmem:[%s8 + $0x2b8] sm:$0xff]
      %v6509 = vld [vmem:[%s8 + $0x2c0] sm:$0xff]
      %v6510 = vld [vmem:[%s8 + $0x2c8] sm:$0xff]
      %v6511 = vld [vmem:[%s8 + $0x2d0] sm:$0xff]
      %v6512 = vld [vmem:[%s8 + $0x2d8] sm:$0xff]
      %v6513 = vld [vmem:[%s8 + $0x2e0] sm:$0xff]
      %v6514 = vld [vmem:[%s8 + $0x2e8] sm:$0xff]
      %v6515 = vld [vmem:[%s8 + $0x2f0] sm:$0xff]
      %v6516 = vld [vmem:[%s8 + $0x2f8] sm:$0xff]
      %v6517 = vld [vmem:[%s8 + $0x300] sm:$0xff]
      %v6518 = vld [vmem:[%s8 + $0x308] sm:$0xff]
      %v6519 = vld [vmem:[%s8 + $0x310] sm:$0xff]
      %v6520 = vld [vmem:[%s8 + $0x318] sm:$0xff]
      %v6521 = vld [vmem:[%s8 + $0x320] sm:$0xff]
      %v6522 = vld [vmem:[%s8 + $0x328] sm:$0xff]
      %v6523 = vld [vmem:[%s8 + $0x330] sm:$0xff]
      %v6524 = vld [vmem:[%s8 + $0x338] sm:$0xff]
      %v6525 = vld [vmem:[%s8 + $0x340] sm:$0xff]
      %v6526 = vld [vmem:[%s8 + $0x348] sm:$0xff]
      %v6527 = vld [vmem:[%s8 + $0x350] sm:$0xff]
      %v6528 = vld [vmem:[%s8 + $0x358] sm:$0xff]
      %v6529 = vld [vmem:[%s8 + $0x360] sm:$0xff]
      %v6530 = vld [vmem:[%s8 + $0x368] sm:$0xff]
      %v6531 = vld [vmem:[%s8 + $0x370] sm:$0xff]
      %v6532 = vld [vmem:[%s8 + $0x378] sm:$0xff]
      %v6533 = vld [vmem:[%s8 + $0x380] sm:$0xff]
      %v6534 = vld [vmem:[%s8 + $0x388] sm:$0xff]
      %v6535 = vld [vmem:[%s8 + $0x390] sm:$0xff]
      %v6536 = vld [vmem:[%s8 + $0x398] sm:$0xff]
      %v6537 = vld [vmem:[%s8 + $0x3a0] sm:$0xff]
      %v6538 = vld [vmem:[%s8 + $0x3a8] sm:$0xff]
      %v6539 = vld [vmem:[%s8 + $0x3b0] sm:$0xff]
      %v6540 = vld [vmem:[%s8 + $0x3b8] sm:$0xff]
      %v6541 = vld [vmem:[%s8 + $0x3c0] sm:$0xff]
      %v6542 = vld [vmem:[%s8 + $0x3c8] sm:$0xff]
      %v6543 = vld [vmem:[%s8 + $0x3d0] sm:$0xff]
      %v6544 = vld [vmem:[%s8 + $0x3d8] sm:$0xff]
      %v6545 = vld [vmem:[%s8 + $0x3e0] sm:$0xff]
      %v6546 = vld [vmem:[%s8 + $0x3e8] sm:$0xff]
      %v6547 = vld [vmem:[%s8 + $0x3f0] sm:$0xff]
      %v6548 = vld [vmem:[%s8 + $0x3f8] sm:$0xff]
      %v6549 = vld [vmem:[%s8 + $0x400] sm:$0xff]
      %v6550 = vld [vmem:[%s8 + $0x408] sm:$0xff]
      %v6551 = vld [vmem:[%s8 + $0x410] sm:$0xff]
      %v6552 = vld [vmem:[%s8 + $0x418] sm:$0xff]
      %v6553 = vld [vmem:[%s8 + $0x420] sm:$0xff]
      %v6554 = vld [vmem:[%s8 + $0x428] sm:$0xff]
      %v6555 = vld [vmem:[%s8 + $0x430] sm:$0xff]
      %v6556 = vld [vmem:[%s8 + $0x438] sm:$0xff]
      %v6557 = vld [vmem:[%s8 + $0x440] sm:$0xff]
      %v6558 = vld [vmem:[%s8 + $0x448] sm:$0xff]
      %v6559 = vld [vmem:[%s8 + $0x450] sm:$0xff]
      %v6560 = vld [vmem:[%s8 + $0x458] sm:$0xff]
      %v6561 = vld [vmem:[%s8 + $0x460] sm:$0xff]
      %v6562 = vld [vmem:[%s8 + $0x468] sm:$0xff]
      %v6563 = vld [vmem:[%s8 + $0x470] sm:$0xff]
      %v6564 = vld [vmem:[%s8 + $0x478] sm:$0xff]
      %v6565 = vld [vmem:[%s8 + $0x480] sm:$0xff]
      %v6566 = vld [vmem:[%s8 + $0x488] sm:$0xff]
      %v6567 = vld [vmem:[%s8 + $0x490] sm:$0xff]
      %v6568 = vld [vmem:[%s8 + $0x498] sm:$0xff]
      %v6569 = vld [vmem:[%s8 + $0x4a0] sm:$0xff]
      %v6570 = vld [vmem:[%s8 + $0x4a8] sm:$0xff]
      %v6571 = vld [vmem:[%s8 + $0x4b0] sm:$0xff]
      %v6572 = vld [vmem:[%s8 + $0x4b8] sm:$0xff]
      %v6573 = vld [vmem:[%s8 + $0x4c0] sm:$0xff]
      %v6574 = vld [vmem:[%s8 + $0x4c8] sm:$0xff]
      %v6575 = vld [vmem:[%s8 + $0x4d0] sm:$0xff]
      %v6576 = vld [vmem:[%s8 + $0x4d8] sm:$0xff]
      %v6577 = vld [vmem:[%s8 + $0x4e0] sm:$0xff]
      %v6578 = vld [vmem:[%s8 + $0x4e8] sm:$0xff]
      %v6579 = vld [vmem:[%s8 + $0x4f0] sm:$0xff]
      %v6580 = vld [vmem:[%s8 + $0x4f8] sm:$0xff]
      %v6581 = vld [vmem:[%s8 + $0x500] sm:$0xff]
      %v6582 = vld [vmem:[%s8 + $0x508] sm:$0xff]
      %v6583 = vld [vmem:[%s8 + $0x510] sm:$0xff]
      %v6584 = vld [vmem:[%s8 + $0x518] sm:$0xff]
      %v6585 = vld [vmem:[%s8 + $0x520] sm:$0xff]
      %v6586 = vld [vmem:[%s8 + $0x528] sm:$0xff]
      %v6587 = vld [vmem:[%s8 + $0x530] sm:$0xff]
      %v6588 = vld [vmem:[%s8 + $0x538] sm:$0xff]
      %v6589 = vld [vmem:[%s8 + $0x540] sm:$0xff]
      %v6590 = vld [vmem:[%s8 + $0x548] sm:$0xff]
      %v6591 = vld [vmem:[%s8 + $0x550] sm:$0xff]
      %v6592 = vld [vmem:[%s8 + $0x558] sm:$0xff]
      %v6593 = vld [vmem:[%s8 + $0x560] sm:$0xff]
      %v6594 = vld [vmem:[%s8 + $0x568] sm:$0xff]
      %v6595 = vld [vmem:[%s8 + $0x570] sm:$0xff]
      %v6596 = vld [vmem:[%s8 + $0x578] sm:$0xff]
      %v6597 = vld [vmem:[%s8 + $0x580] sm:$0xff]
      %v6598 = vld [vmem:[%s8 + $0x588] sm:$0xff]
      %v6599 = vld [vmem:[%s8 + $0x590] sm:$0xff]
      %v6600 = vld [vmem:[%s8 + $0x598] sm:$0xff]
      %v6601 = vld [vmem:[%s8 + $0x5a0] sm:$0xff]
      %v6602 = vld [vmem:[%s8 + $0x5a8] sm:$0xff]
      %v6603 = vld [vmem:[%s8 + $0x5b0] sm:$0xff]
      %v6604 = vld [vmem:[%s8 + $0x5b8] sm:$0xff]
      %v6605 = vld [vmem:[%s8 + $0x5c0] sm:$0xff]
      %v6606 = vld [vmem:[%s8 + $0x5c8] sm:$0xff]
      %v6607 = vld [vmem:[%s8 + $0x5d0] sm:$0xff]
      %v6608 = vld [vmem:[%s8 + $0x5d8] sm:$0xff]
      %v6609 = vld [vmem:[%s8 + $0x5e0] sm:$0xff]
      %v6610 = vld [vmem:[%s8 + $0x5e8] sm:$0xff]
      %v6611 = vld [vmem:[%s8 + $0x5f0] sm:$0xff]
      %v6612 = vld [vmem:[%s8 + $0x5f8] sm:$0xff]
      %v6613 = vld [vmem:[%s8 + $0x600] sm:$0xff]
      %v6614 = vld [vmem:[%s8 + $0x608] sm:$0xff]
      %v6615 = vld [vmem:[%s8 + $0x610] sm:$0xff]
      %v6616 = vld [vmem:[%s8 + $0x618] sm:$0xff]
      %v6617 = vld [vmem:[%s8 + $0x620] sm:$0xff]
      %v6618 = vld [vmem:[%s8 + $0x628] sm:$0xff]
      %v6619 = vld [vmem:[%s8 + $0x630] sm:$0xff]
      %v6620 = vld [vmem:[%s8 + $0x638] sm:$0xff]
      %v6621 = vld [vmem:[%s8 + $0x640] sm:$0xff]
      %v6622 = vld [vmem:[%s8 + $0x648] sm:$0xff]
      %v6623 = vld [vmem:[%s8 + $0x650] sm:$0xff]
      %v6624 = vld [vmem:[%s8 + $0x658] sm:$0xff]
      %v6625 = vld [vmem:[%s8 + $0x660] sm:$0xff]
      %v6626 = vld [vmem:[%s8 + $0x668] sm:$0xff]
      %v6627 = vld [vmem:[%s8 + $0x670] sm:$0xff]
      %v6628 = vld [vmem:[%s8 + $0x678] sm:$0xff]
      %v6629 = vld [vmem:[%s8 + $0x680] sm:$0xff]
      %v6630 = vld [vmem:[%s8 + $0x688] sm:$0xff]
      %v6631 = vld [vmem:[%s8 + $0x690] sm:$0xff]
      %v6632 = vld [vmem:[%s8 + $0x698] sm:$0xff]
      %v6633 = vld [vmem:[%s8 + $0x6a0] sm:$0xff]
      %v6634 = vld [vmem:[%s8 + $0x6a8] sm:$0xff]
      %v6635 = vld [vmem:[%s8 + $0x6b0] sm:$0xff]
      %v6636 = vld [vmem:[%s8 + $0x6b8] sm:$0xff]
      %v6637 = vld [vmem:[%s8 + $0x6c0] sm:$0xff]
      %v6638 = vld [vmem:[%s8 + $0x6c8] sm:$0xff]
      %v6639 = vld [vmem:[%s8 + $0x6d0] sm:$0xff]
      %v6640 = vld [vmem:[%s8 + $0x6d8] sm:$0xff]
      %v6641 = vld [vmem:[%s8 + $0x6e0] sm:$0xff]
      %v6642 = vld [vmem:[%s8 + $0x6e8] sm:$0xff]
      %v6643 = vld [vmem:[%s8 + $0x6f0] sm:$0xff]
      %v6644 = vld [vmem:[%s8 + $0x6f8] sm:$0xff]
      %v6645 = vld [vmem:[%s8 + $0x700] sm:$0xff]
      %v6646 = vld [vmem:[%s8 + $0x708] sm:$0xff]
      %v6647 = vld [vmem:[%s8 + $0x710] sm:$0xff]
      %v6648 = vld [vmem:[%s8 + $0x718] sm:$0xff]
      %v6649 = vld [vmem:[%s8 + $0x720] sm:$0xff]
      %v6650 = vld [vmem:[%s8 + $0x728] sm:$0xff]
      %v6651 = vld [vmem:[%s8 + $0x730] sm:$0xff]
      %v6652 = vld [vmem:[%s8 + $0x738] sm:$0xff]
      %v6653 = vld [vmem:[%s8 + $0x740] sm:$0xff]
      %v6654 = vld [vmem:[%s8 + $0x748] sm:$0xff]
      %v6655 = vld [vmem:[%s8 + $0x750] sm:$0xff]
      %v6656 = vld [vmem:[%s8 + $0x758] sm:$0xff]
      %v6657 = vld [vmem:[%s8 + $0x760] sm:$0xff]
      %v6658 = vld [vmem:[%s8 + $0x768] sm:$0xff]
      %v6659 = vld [vmem:[%s8 + $0x770] sm:$0xff]
      %v6660 = vld [vmem:[%s8 + $0x778] sm:$0xff]
      %v6661 = vld [vmem:[%s8 + $0x780] sm:$0xff]
      %v6662 = vld [vmem:[%s8 + $0x788] sm:$0xff]
      %v6663 = vld [vmem:[%s8 + $0x790] sm:$0xff]
      %v6664 = vld [vmem:[%s8 + $0x798] sm:$0xff]
      %v6665 = vld [vmem:[%s8 + $0x7a0] sm:$0xff]
      %v6666 = vld [vmem:[%s8 + $0x7a8] sm:$0xff]
      %v6667 = vld [vmem:[%s8 + $0x7b0] sm:$0xff]
      %v6668 = vld [vmem:[%s8 + $0x7b8] sm:$0xff]
      %v6669 = vld [vmem:[%s8 + $0x7c0] sm:$0xff]
      %v6670 = vld [vmem:[%s8 + $0x7c8] sm:$0xff]
      %v6671 = vld [vmem:[%s8 + $0x7d0] sm:$0xff]
      %v6672 = vld [vmem:[%s8 + $0x7d8] sm:$0xff]
      %v6673 = vld [vmem:[%s8 + $0x7e0] sm:$0xff]
      %v6674 = vld [vmem:[%s8 + $0x7e8] sm:$0xff]
      %v6675 = vld [vmem:[%s8 + $0x7f0] sm:$0xff]
      %v6676 = vld [vmem:[%s8 + $0x7f8] sm:$0xff]
      %v6677 = vld [vmem:[%s9] sm:$0xf]
      %v6934 = vunpack.c.l.b16 %v6421
      %v6935 = vunpack.c.h.b16 %v6421
      %v6936 = vunpack.c.l.b16 %v6422
      %v6937 = vunpack.c.h.b16 %v6422
      %v6938 = vunpack.c.l.b16 %v6423
      %v6939 = vunpack.c.h.b16 %v6423
      %v6940 = vunpack.c.l.b16 %v6424
      %v6941 = vunpack.c.h.b16 %v6424
      %v6942 = vunpack.c.l.b16 %v6425
      %v6943 = vunpack.c.h.b16 %v6425
      %v6944 = vunpack.c.l.b16 %v6426
      %v6945 = vunpack.c.h.b16 %v6426
      %v6946 = vunpack.c.l.b16 %v6427
      %v6947 = vunpack.c.h.b16 %v6427
      %v6948 = vunpack.c.l.b16 %v6428
      %v6949 = vunpack.c.h.b16 %v6428
      %v6950 = vunpack.c.l.b16 %v6429
      %v6951 = vunpack.c.h.b16 %v6429
      %v6952 = vunpack.c.l.b16 %v6430
      %v6953 = vunpack.c.h.b16 %v6430
      %v6954 = vunpack.c.l.b16 %v6431
      %v6955 = vunpack.c.h.b16 %v6431
      %v6956 = vunpack.c.l.b16 %v6432
      %v6957 = vunpack.c.h.b16 %v6432
      %v6958 = vunpack.c.l.b16 %v6433
      %v6959 = vunpack.c.h.b16 %v6433
      %v6960 = vunpack.c.l.b16 %v6434
      %v6961 = vunpack.c.h.b16 %v6434
      %v6962 = vunpack.c.l.b16 %v6435
      %v6963 = vunpack.c.h.b16 %v6435
      %v6964 = vunpack.c.l.b16 %v6436
      %v6965 = vunpack.c.h.b16 %v6436
      %v6966 = vunpack.c.l.b16 %v6437
      %v6967 = vunpack.c.h.b16 %v6437
      %v6968 = vunpack.c.l.b16 %v6438
      %v6969 = vunpack.c.h.b16 %v6438
      %v6970 = vunpack.c.l.b16 %v6439
      %v6971 = vunpack.c.h.b16 %v6439
      %v6972 = vunpack.c.l.b16 %v6440
      %v6973 = vunpack.c.h.b16 %v6440
      %v6974 = vunpack.c.l.b16 %v6441
      %v6975 = vunpack.c.h.b16 %v6441
      %v6976 = vunpack.c.l.b16 %v6442
      %v6977 = vunpack.c.h.b16 %v6442
      %v6978 = vunpack.c.l.b16 %v6443
      %v6979 = vunpack.c.h.b16 %v6443
      %v6980 = vunpack.c.l.b16 %v6444
      %v6981 = vunpack.c.h.b16 %v6444
      %v6982 = vunpack.c.l.b16 %v6445
      %v6983 = vunpack.c.h.b16 %v6445
      %v6984 = vunpack.c.l.b16 %v6446
      %v6985 = vunpack.c.h.b16 %v6446
      %v6986 = vunpack.c.l.b16 %v6447
      %v6987 = vunpack.c.h.b16 %v6447
      %v6988 = vunpack.c.l.b16 %v6448
      %v6989 = vunpack.c.h.b16 %v6448
      %v6990 = vunpack.c.l.b16 %v6449
      %v6991 = vunpack.c.h.b16 %v6449
      %v6992 = vunpack.c.l.b16 %v6450
      %v6993 = vunpack.c.h.b16 %v6450
      %v6994 = vunpack.c.l.b16 %v6451
      %v6995 = vunpack.c.h.b16 %v6451
      %v6996 = vunpack.c.l.b16 %v6452
      %v6997 = vunpack.c.h.b16 %v6452
      %v6998 = vunpack.c.l.b16 %v6453
      %v6999 = vunpack.c.h.b16 %v6453
      %v7000 = vunpack.c.l.b16 %v6454
      %v7001 = vunpack.c.h.b16 %v6454
      %v7002 = vunpack.c.l.b16 %v6455
      %v7003 = vunpack.c.h.b16 %v6455
      %v7004 = vunpack.c.l.b16 %v6456
      %v7005 = vunpack.c.h.b16 %v6456
      %v7006 = vunpack.c.l.b16 %v6457
      %v7007 = vunpack.c.h.b16 %v6457
      %v7008 = vunpack.c.l.b16 %v6458
      %v7009 = vunpack.c.h.b16 %v6458
      %v7010 = vunpack.c.l.b16 %v6459
      %v7011 = vunpack.c.h.b16 %v6459
      %v7012 = vunpack.c.l.b16 %v6460
      %v7013 = vunpack.c.h.b16 %v6460
      %v7014 = vunpack.c.l.b16 %v6461
      %v7015 = vunpack.c.h.b16 %v6461
      %v7016 = vunpack.c.l.b16 %v6462
      %v7017 = vunpack.c.h.b16 %v6462
      %v7018 = vunpack.c.l.b16 %v6463
      %v7019 = vunpack.c.h.b16 %v6463
      %v7020 = vunpack.c.l.b16 %v6464
      %v7021 = vunpack.c.h.b16 %v6464
      %v7022 = vunpack.c.l.b16 %v6465
      %v7023 = vunpack.c.h.b16 %v6465
      %v7024 = vunpack.c.l.b16 %v6466
      %v7025 = vunpack.c.h.b16 %v6466
      %v7026 = vunpack.c.l.b16 %v6467
      %v7027 = vunpack.c.h.b16 %v6467
      %v7028 = vunpack.c.l.b16 %v6468
      %v7029 = vunpack.c.h.b16 %v6468
      %v7030 = vunpack.c.l.b16 %v6469
      %v7031 = vunpack.c.h.b16 %v6469
      %v7032 = vunpack.c.l.b16 %v6470
      %v7033 = vunpack.c.h.b16 %v6470
      %v7034 = vunpack.c.l.b16 %v6471
      %v7035 = vunpack.c.h.b16 %v6471
      %v7036 = vunpack.c.l.b16 %v6472
      %v7037 = vunpack.c.h.b16 %v6472
      %v7038 = vunpack.c.l.b16 %v6473
      %v7039 = vunpack.c.h.b16 %v6473
      %v7040 = vunpack.c.l.b16 %v6474
      %v7041 = vunpack.c.h.b16 %v6474
      %v7042 = vunpack.c.l.b16 %v6475
      %v7043 = vunpack.c.h.b16 %v6475
      %v7044 = vunpack.c.l.b16 %v6476
      %v7045 = vunpack.c.h.b16 %v6476
      %v7046 = vunpack.c.l.b16 %v6477
      %v7047 = vunpack.c.h.b16 %v6477
      %v7048 = vunpack.c.l.b16 %v6478
      %v7049 = vunpack.c.h.b16 %v6478
      %v7050 = vunpack.c.l.b16 %v6479
      %v7051 = vunpack.c.h.b16 %v6479
      %v7052 = vunpack.c.l.b16 %v6480
      %v7053 = vunpack.c.h.b16 %v6480
      %v7054 = vunpack.c.l.b16 %v6481
      %v7055 = vunpack.c.h.b16 %v6481
      %v7056 = vunpack.c.l.b16 %v6482
      %v7057 = vunpack.c.h.b16 %v6482
      %v7058 = vunpack.c.l.b16 %v6483
      %v7059 = vunpack.c.h.b16 %v6483
      %v7060 = vunpack.c.l.b16 %v6484
      %v7061 = vunpack.c.h.b16 %v6484
      %v7062 = vunpack.c.l.b16 %v6485
      %v7063 = vunpack.c.h.b16 %v6485
      %v7064 = vunpack.c.l.b16 %v6486
      %v7065 = vunpack.c.h.b16 %v6486
      %v7066 = vunpack.c.l.b16 %v6487
      %v7067 = vunpack.c.h.b16 %v6487
      %v7068 = vunpack.c.l.b16 %v6488
      %v7069 = vunpack.c.h.b16 %v6488
      %v7070 = vunpack.c.l.b16 %v6489
      %v7071 = vunpack.c.h.b16 %v6489
      %v7072 = vunpack.c.l.b16 %v6490
      %v7073 = vunpack.c.h.b16 %v6490
      %v7074 = vunpack.c.l.b16 %v6491
      %v7075 = vunpack.c.h.b16 %v6491
      %v7076 = vunpack.c.l.b16 %v6492
      %v7077 = vunpack.c.h.b16 %v6492
      %v7078 = vunpack.c.l.b16 %v6493
      %v7079 = vunpack.c.h.b16 %v6493
      %v7080 = vunpack.c.l.b16 %v6494
      %v7081 = vunpack.c.h.b16 %v6494
      %v7082 = vunpack.c.l.b16 %v6495
      %v7083 = vunpack.c.h.b16 %v6495
      %v7084 = vunpack.c.l.b16 %v6496
      %v7085 = vunpack.c.h.b16 %v6496
      %v7086 = vunpack.c.l.b16 %v6497
      %v7087 = vunpack.c.h.b16 %v6497
      %v7088 = vunpack.c.l.b16 %v6498
      %v7089 = vunpack.c.h.b16 %v6498
      %v7090 = vunpack.c.l.b16 %v6499
      %v7091 = vunpack.c.h.b16 %v6499
      %v7092 = vunpack.c.l.b16 %v6500
      %v7093 = vunpack.c.h.b16 %v6500
      %v7094 = vunpack.c.l.b16 %v6501
      %v7095 = vunpack.c.h.b16 %v6501
      %v7096 = vunpack.c.l.b16 %v6502
      %v7097 = vunpack.c.h.b16 %v6502
      %v7098 = vunpack.c.l.b16 %v6503
      %v7099 = vunpack.c.h.b16 %v6503
      %v7100 = vunpack.c.l.b16 %v6504
      %v7101 = vunpack.c.h.b16 %v6504
      %v7102 = vunpack.c.l.b16 %v6505
      %v7103 = vunpack.c.h.b16 %v6505
      %v7104 = vunpack.c.l.b16 %v6506
      %v7105 = vunpack.c.h.b16 %v6506
      %v7106 = vunpack.c.l.b16 %v6507
      %v7107 = vunpack.c.h.b16 %v6507
      %v7108 = vunpack.c.l.b16 %v6508
      %v7109 = vunpack.c.h.b16 %v6508
      %v7110 = vunpack.c.l.b16 %v6509
      %v7111 = vunpack.c.h.b16 %v6509
      %v7112 = vunpack.c.l.b16 %v6510
      %v7113 = vunpack.c.h.b16 %v6510
      %v7114 = vunpack.c.l.b16 %v6511
      %v7115 = vunpack.c.h.b16 %v6511
      %v7116 = vunpack.c.l.b16 %v6512
      %v7117 = vunpack.c.h.b16 %v6512
      %v7118 = vunpack.c.l.b16 %v6513
      %v7119 = vunpack.c.h.b16 %v6513
      %v7120 = vunpack.c.l.b16 %v6514
      %v7121 = vunpack.c.h.b16 %v6514
      %v7122 = vunpack.c.l.b16 %v6515
      %v7123 = vunpack.c.h.b16 %v6515
      %v7124 = vunpack.c.l.b16 %v6516
      %v7125 = vunpack.c.h.b16 %v6516
      %v7126 = vunpack.c.l.b16 %v6517
      %v7127 = vunpack.c.h.b16 %v6517
      %v7128 = vunpack.c.l.b16 %v6518
      %v7129 = vunpack.c.h.b16 %v6518
      %v7130 = vunpack.c.l.b16 %v6519
      %v7131 = vunpack.c.h.b16 %v6519
      %v7132 = vunpack.c.l.b16 %v6520
      %v7133 = vunpack.c.h.b16 %v6520
      %v7134 = vunpack.c.l.b16 %v6521
      %v7135 = vunpack.c.h.b16 %v6521
      %v7136 = vunpack.c.l.b16 %v6522
      %v7137 = vunpack.c.h.b16 %v6522
      %v7138 = vunpack.c.l.b16 %v6523
      %v7139 = vunpack.c.h.b16 %v6523
      %v7140 = vunpack.c.l.b16 %v6524
      %v7141 = vunpack.c.h.b16 %v6524
      %v7142 = vunpack.c.l.b16 %v6525
      %v7143 = vunpack.c.h.b16 %v6525
      %v7144 = vunpack.c.l.b16 %v6526
      %v7145 = vunpack.c.h.b16 %v6526
      %v7146 = vunpack.c.l.b16 %v6527
      %v7147 = vunpack.c.h.b16 %v6527
      %v7148 = vunpack.c.l.b16 %v6528
      %v7149 = vunpack.c.h.b16 %v6528
      %v7150 = vunpack.c.l.b16 %v6529
      %v7151 = vunpack.c.h.b16 %v6529
      %v7152 = vunpack.c.l.b16 %v6530
      %v7153 = vunpack.c.h.b16 %v6530
      %v7154 = vunpack.c.l.b16 %v6531
      %v7155 = vunpack.c.h.b16 %v6531
      %v7156 = vunpack.c.l.b16 %v6532
      %v7157 = vunpack.c.h.b16 %v6532
      %v7158 = vunpack.c.l.b16 %v6533
      %v7159 = vunpack.c.h.b16 %v6533
      %v7160 = vunpack.c.l.b16 %v6534
      %v7161 = vunpack.c.h.b16 %v6534
      %v7162 = vunpack.c.l.b16 %v6535
      %v7163 = vunpack.c.h.b16 %v6535
      %v7164 = vunpack.c.l.b16 %v6536
      %v7165 = vunpack.c.h.b16 %v6536
      %v7166 = vunpack.c.l.b16 %v6537
      %v7167 = vunpack.c.h.b16 %v6537
      %v7168 = vunpack.c.l.b16 %v6538
      %v7169 = vunpack.c.h.b16 %v6538
      %v7170 = vunpack.c.l.b16 %v6539
      %v7171 = vunpack.c.h.b16 %v6539
      %v7172 = vunpack.c.l.b16 %v6540
      %v7173 = vunpack.c.h.b16 %v6540
      %v7174 = vunpack.c.l.b16 %v6541
      %v7175 = vunpack.c.h.b16 %v6541
      %v7176 = vunpack.c.l.b16 %v6542
      %v7177 = vunpack.c.h.b16 %v6542
      %v7178 = vunpack.c.l.b16 %v6543
      %v7179 = vunpack.c.h.b16 %v6543
      %v7180 = vunpack.c.l.b16 %v6544
      %v7181 = vunpack.c.h.b16 %v6544
      %v7182 = vunpack.c.l.b16 %v6545
      %v7183 = vunpack.c.h.b16 %v6545
      %v7184 = vunpack.c.l.b16 %v6546
      %v7185 = vunpack.c.h.b16 %v6546
      %v7186 = vunpack.c.l.b16 %v6547
      %v7187 = vunpack.c.h.b16 %v6547
      %v7188 = vunpack.c.l.b16 %v6548
      %v7189 = vunpack.c.h.b16 %v6548
      %v7190 = vunpack.c.l.b16 %v6549
      %v7191 = vunpack.c.h.b16 %v6549
      %v7192 = vunpack.c.l.b16 %v6550
      %v7193 = vunpack.c.h.b16 %v6550
      %v7194 = vunpack.c.l.b16 %v6551
      %v7195 = vunpack.c.h.b16 %v6551
      %v7196 = vunpack.c.l.b16 %v6552
      %v7197 = vunpack.c.h.b16 %v6552
      %v7198 = vunpack.c.l.b16 %v6553
      %v7199 = vunpack.c.h.b16 %v6553
      %v7200 = vunpack.c.l.b16 %v6554
      %v7201 = vunpack.c.h.b16 %v6554
      %v7202 = vunpack.c.l.b16 %v6555
      %v7203 = vunpack.c.h.b16 %v6555
      %v7204 = vunpack.c.l.b16 %v6556
      %v7205 = vunpack.c.h.b16 %v6556
      %v7206 = vunpack.c.l.b16 %v6557
      %v7207 = vunpack.c.h.b16 %v6557
      %v7208 = vunpack.c.l.b16 %v6558
      %v7209 = vunpack.c.h.b16 %v6558
      %v7210 = vunpack.c.l.b16 %v6559
      %v7211 = vunpack.c.h.b16 %v6559
      %v7212 = vunpack.c.l.b16 %v6560
      %v7213 = vunpack.c.h.b16 %v6560
      %v7214 = vunpack.c.l.b16 %v6561
      %v7215 = vunpack.c.h.b16 %v6561
      %v7216 = vunpack.c.l.b16 %v6562
      %v7217 = vunpack.c.h.b16 %v6562
      %v7218 = vunpack.c.l.b16 %v6563
      %v7219 = vunpack.c.h.b16 %v6563
      %v7220 = vunpack.c.l.b16 %v6564
      %v7221 = vunpack.c.h.b16 %v6564
      %v7222 = vunpack.c.l.b16 %v6565
      %v7223 = vunpack.c.h.b16 %v6565
      %v7224 = vunpack.c.l.b16 %v6566
      %v7225 = vunpack.c.h.b16 %v6566
      %v7226 = vunpack.c.l.b16 %v6567
      %v7227 = vunpack.c.h.b16 %v6567
      %v7228 = vunpack.c.l.b16 %v6568
      %v7229 = vunpack.c.h.b16 %v6568
      %v7230 = vunpack.c.l.b16 %v6569
      %v7231 = vunpack.c.h.b16 %v6569
      %v7232 = vunpack.c.l.b16 %v6570
      %v7233 = vunpack.c.h.b16 %v6570
      %v7234 = vunpack.c.l.b16 %v6571
      %v7235 = vunpack.c.h.b16 %v6571
      %v7236 = vunpack.c.l.b16 %v6572
      %v7237 = vunpack.c.h.b16 %v6572
      %v7238 = vunpack.c.l.b16 %v6573
      %v7239 = vunpack.c.h.b16 %v6573
      %v7240 = vunpack.c.l.b16 %v6574
      %v7241 = vunpack.c.h.b16 %v6574
      %v7242 = vunpack.c.l.b16 %v6575
      %v7243 = vunpack.c.h.b16 %v6575
      %v7244 = vunpack.c.l.b16 %v6576
      %v7245 = vunpack.c.h.b16 %v6576
      %v7246 = vunpack.c.l.b16 %v6577
      %v7247 = vunpack.c.h.b16 %v6577
      %v7248 = vunpack.c.l.b16 %v6578
      %v7249 = vunpack.c.h.b16 %v6578
      %v7250 = vunpack.c.l.b16 %v6579
      %v7251 = vunpack.c.h.b16 %v6579
      %v7252 = vunpack.c.l.b16 %v6580
      %v7253 = vunpack.c.h.b16 %v6580
      %v7254 = vunpack.c.l.b16 %v6581
      %v7255 = vunpack.c.h.b16 %v6581
      %v7256 = vunpack.c.l.b16 %v6582
      %v7257 = vunpack.c.h.b16 %v6582
      %v7258 = vunpack.c.l.b16 %v6583
      %v7259 = vunpack.c.h.b16 %v6583
      %v7260 = vunpack.c.l.b16 %v6584
      %v7261 = vunpack.c.h.b16 %v6584
      %v7262 = vunpack.c.l.b16 %v6585
      %v7263 = vunpack.c.h.b16 %v6585
      %v7264 = vunpack.c.l.b16 %v6586
      %v7265 = vunpack.c.h.b16 %v6586
      %v7266 = vunpack.c.l.b16 %v6587
      %v7267 = vunpack.c.h.b16 %v6587
      %v7268 = vunpack.c.l.b16 %v6588
      %v7269 = vunpack.c.h.b16 %v6588
      %v7270 = vunpack.c.l.b16 %v6589
      %v7271 = vunpack.c.h.b16 %v6589
      %v7272 = vunpack.c.l.b16 %v6590
      %v7273 = vunpack.c.h.b16 %v6590
      %v7274 = vunpack.c.l.b16 %v6591
      %v7275 = vunpack.c.h.b16 %v6591
      %v7276 = vunpack.c.l.b16 %v6592
      %v7277 = vunpack.c.h.b16 %v6592
      %v7278 = vunpack.c.l.b16 %v6593
      %v7279 = vunpack.c.h.b16 %v6593
      %v7280 = vunpack.c.l.b16 %v6594
      %v7281 = vunpack.c.h.b16 %v6594
      %v7282 = vunpack.c.l.b16 %v6595
      %v7283 = vunpack.c.h.b16 %v6595
      %v7284 = vunpack.c.l.b16 %v6596
      %v7285 = vunpack.c.h.b16 %v6596
      %v7286 = vunpack.c.l.b16 %v6597
      %v7287 = vunpack.c.h.b16 %v6597
      %v7288 = vunpack.c.l.b16 %v6598
      %v7289 = vunpack.c.h.b16 %v6598
      %v7290 = vunpack.c.l.b16 %v6599
      %v7291 = vunpack.c.h.b16 %v6599
      %v7292 = vunpack.c.l.b16 %v6600
      %v7293 = vunpack.c.h.b16 %v6600
      %v7294 = vunpack.c.l.b16 %v6601
      %v7295 = vunpack.c.h.b16 %v6601
      %v7296 = vunpack.c.l.b16 %v6602
      %v7297 = vunpack.c.h.b16 %v6602
      %v7298 = vunpack.c.l.b16 %v6603
      %v7299 = vunpack.c.h.b16 %v6603
      %v7300 = vunpack.c.l.b16 %v6604
      %v7301 = vunpack.c.h.b16 %v6604
      %v7302 = vunpack.c.l.b16 %v6605
      %v7303 = vunpack.c.h.b16 %v6605
      %v7304 = vunpack.c.l.b16 %v6606
      %v7305 = vunpack.c.h.b16 %v6606
      %v7306 = vunpack.c.l.b16 %v6607
      %v7307 = vunpack.c.h.b16 %v6607
      %v7308 = vunpack.c.l.b16 %v6608
      %v7309 = vunpack.c.h.b16 %v6608
      %v7310 = vunpack.c.l.b16 %v6609
      %v7311 = vunpack.c.h.b16 %v6609
      %v7312 = vunpack.c.l.b16 %v6610
      %v7313 = vunpack.c.h.b16 %v6610
      %v7314 = vunpack.c.l.b16 %v6611
      %v7315 = vunpack.c.h.b16 %v6611
      %v7316 = vunpack.c.l.b16 %v6612
      %v7317 = vunpack.c.h.b16 %v6612
      %v7318 = vunpack.c.l.b16 %v6613
      %v7319 = vunpack.c.h.b16 %v6613
      %v7320 = vunpack.c.l.b16 %v6614
      %v7321 = vunpack.c.h.b16 %v6614
      %v7322 = vunpack.c.l.b16 %v6615
      %v7323 = vunpack.c.h.b16 %v6615
      %v7324 = vunpack.c.l.b16 %v6616
      %v7325 = vunpack.c.h.b16 %v6616
      %v7326 = vunpack.c.l.b16 %v6617
      %v7327 = vunpack.c.h.b16 %v6617
      %v7328 = vunpack.c.l.b16 %v6618
      %v7329 = vunpack.c.h.b16 %v6618
      %v7330 = vunpack.c.l.b16 %v6619
      %v7331 = vunpack.c.h.b16 %v6619
      %v7332 = vunpack.c.l.b16 %v6620
      %v7333 = vunpack.c.h.b16 %v6620
      %v7334 = vunpack.c.l.b16 %v6621
      %v7335 = vunpack.c.h.b16 %v6621
      %v7336 = vunpack.c.l.b16 %v6622
      %v7337 = vunpack.c.h.b16 %v6622
      %v7338 = vunpack.c.l.b16 %v6623
      %v7339 = vunpack.c.h.b16 %v6623
      %v7340 = vunpack.c.l.b16 %v6624
      %v7341 = vunpack.c.h.b16 %v6624
      %v7342 = vunpack.c.l.b16 %v6625
      %v7343 = vunpack.c.h.b16 %v6625
      %v7344 = vunpack.c.l.b16 %v6626
      %v7345 = vunpack.c.h.b16 %v6626
      %v7346 = vunpack.c.l.b16 %v6627
      %v7347 = vunpack.c.h.b16 %v6627
      %v7348 = vunpack.c.l.b16 %v6628
      %v7349 = vunpack.c.h.b16 %v6628
      %v7350 = vunpack.c.l.b16 %v6629
      %v7351 = vunpack.c.h.b16 %v6629
      %v7352 = vunpack.c.l.b16 %v6630
      %v7353 = vunpack.c.h.b16 %v6630
      %v7354 = vunpack.c.l.b16 %v6631
      %v7355 = vunpack.c.h.b16 %v6631
      %v7356 = vunpack.c.l.b16 %v6632
      %v7357 = vunpack.c.h.b16 %v6632
      %v7358 = vunpack.c.l.b16 %v6633
      %v7359 = vunpack.c.h.b16 %v6633
      %v7360 = vunpack.c.l.b16 %v6634
      %v7361 = vunpack.c.h.b16 %v6634
      %v7362 = vunpack.c.l.b16 %v6635
      %v7363 = vunpack.c.h.b16 %v6635
      %v7364 = vunpack.c.l.b16 %v6636
      %v7365 = vunpack.c.h.b16 %v6636
      %v7366 = vunpack.c.l.b16 %v6637
      %v7367 = vunpack.c.h.b16 %v6637
      %v7368 = vunpack.c.l.b16 %v6638
      %v7369 = vunpack.c.h.b16 %v6638
      %v7370 = vunpack.c.l.b16 %v6639
      %v7371 = vunpack.c.h.b16 %v6639
      %v7372 = vunpack.c.l.b16 %v6640
      %v7373 = vunpack.c.h.b16 %v6640
      %v7374 = vunpack.c.l.b16 %v6641
      %v7375 = vunpack.c.h.b16 %v6641
      %v7376 = vunpack.c.l.b16 %v6642
      %v7377 = vunpack.c.h.b16 %v6642
      %v7378 = vunpack.c.l.b16 %v6643
      %v7379 = vunpack.c.h.b16 %v6643
      %v7380 = vunpack.c.l.b16 %v6644
      %v7381 = vunpack.c.h.b16 %v6644
      %v7382 = vunpack.c.l.b16 %v6645
      %v7383 = vunpack.c.h.b16 %v6645
      %v7384 = vunpack.c.l.b16 %v6646
      %v7385 = vunpack.c.h.b16 %v6646
      %v7386 = vunpack.c.l.b16 %v6647
      %v7387 = vunpack.c.h.b16 %v6647
      %v7388 = vunpack.c.l.b16 %v6648
      %v7389 = vunpack.c.h.b16 %v6648
      %v7390 = vunpack.c.l.b16 %v6649
      %v7391 = vunpack.c.h.b16 %v6649
      %v7392 = vunpack.c.l.b16 %v6650
      %v7393 = vunpack.c.h.b16 %v6650
      %v7394 = vunpack.c.l.b16 %v6651
      %v7395 = vunpack.c.h.b16 %v6651
      %v7396 = vunpack.c.l.b16 %v6652
      %v7397 = vunpack.c.h.b16 %v6652
      %v7398 = vunpack.c.l.b16 %v6653
      %v7399 = vunpack.c.h.b16 %v6653
      %v7400 = vunpack.c.l.b16 %v6654
      %v7401 = vunpack.c.h.b16 %v6654
      %v7402 = vunpack.c.l.b16 %v6655
      %v7403 = vunpack.c.h.b16 %v6655
      %v7404 = vunpack.c.l.b16 %v6656
      %v7405 = vunpack.c.h.b16 %v6656
      %v7406 = vunpack.c.l.b16 %v6657
      %v7407 = vunpack.c.h.b16 %v6657
      %v7408 = vunpack.c.l.b16 %v6658
      %v7409 = vunpack.c.h.b16 %v6658
      %v7410 = vunpack.c.l.b16 %v6659
      %v7411 = vunpack.c.h.b16 %v6659
      %v7412 = vunpack.c.l.b16 %v6660
      %v7413 = vunpack.c.h.b16 %v6660
      %v7414 = vunpack.c.l.b16 %v6661
      %v7415 = vunpack.c.h.b16 %v6661
      %v7416 = vunpack.c.l.b16 %v6662
      %v7417 = vunpack.c.h.b16 %v6662
      %v7418 = vunpack.c.l.b16 %v6663
      %v7419 = vunpack.c.h.b16 %v6663
      %v7420 = vunpack.c.l.b16 %v6664
      %v7421 = vunpack.c.h.b16 %v6664
      %v7422 = vunpack.c.l.b16 %v6665
      %v7423 = vunpack.c.h.b16 %v6665
      %v7424 = vunpack.c.l.b16 %v6666
      %v7425 = vunpack.c.h.b16 %v6666
      %v7426 = vunpack.c.l.b16 %v6667
      %v7427 = vunpack.c.h.b16 %v6667
      %v7428 = vunpack.c.l.b16 %v6668
      %v7429 = vunpack.c.h.b16 %v6668
      %v7430 = vunpack.c.l.b16 %v6669
      %v7431 = vunpack.c.h.b16 %v6669
      %v7432 = vunpack.c.l.b16 %v6670
      %v7433 = vunpack.c.h.b16 %v6670
      %v7434 = vunpack.c.l.b16 %v6671
      %v7435 = vunpack.c.h.b16 %v6671
      %v7436 = vunpack.c.l.b16 %v6672
      %v7437 = vunpack.c.h.b16 %v6672
      %v7438 = vunpack.c.l.b16 %v6673
      %v7439 = vunpack.c.h.b16 %v6673
      %v7440 = vunpack.c.l.b16 %v6674
      %v7441 = vunpack.c.h.b16 %v6674
      %v7442 = vunpack.c.l.b16 %v6675
      %v7443 = vunpack.c.h.b16 %v6675
      %v7444 = vunpack.c.l.b16 %v6676
      %v7445 = vunpack.c.h.b16 %v6676
      %v7446 = vpack.c.b16 %v6938, %v6934
      %v7447 = vpack.c.b16 %v6939, %v6935
      %v7448 = vpack.c.b16 %v6940, %v6936
      %v7449 = vpack.c.b16 %v6941, %v6937
      %v7450 = vpack.c.b16 %v6946, %v6942
      %v7451 = vpack.c.b16 %v6947, %v6943
      %v7452 = vpack.c.b16 %v6948, %v6944
      %v7453 = vpack.c.b16 %v6949, %v6945
      %v7454 = vpack.c.b16 %v6954, %v6950
      %v7455 = vpack.c.b16 %v6955, %v6951
      %v7456 = vpack.c.b16 %v6956, %v6952
      %v7457 = vpack.c.b16 %v6957, %v6953
      %v7458 = vpack.c.b16 %v6962, %v6958
      %v7459 = vpack.c.b16 %v6963, %v6959
      %v7460 = vpack.c.b16 %v6964, %v6960
      %v7461 = vpack.c.b16 %v6965, %v6961
      %v7462 = vpack.c.b16 %v6970, %v6966
      %v7463 = vpack.c.b16 %v6971, %v6967
      %v7464 = vpack.c.b16 %v6972, %v6968
      %v7465 = vpack.c.b16 %v6973, %v6969
      %v7466 = vpack.c.b16 %v6978, %v6974
      %v7467 = vpack.c.b16 %v6979, %v6975
      %v7468 = vpack.c.b16 %v6980, %v6976
      %v7469 = vpack.c.b16 %v6981, %v6977
      %v7470 = vpack.c.b16 %v6986, %v6982
      %v7471 = vpack.c.b16 %v6987, %v6983
      %v7472 = vpack.c.b16 %v6988, %v6984
      %v7473 = vpack.c.b16 %v6989, %v6985
      %v7474 = vpack.c.b16 %v6994, %v6990
      %v7475 = vpack.c.b16 %v6995, %v6991
      %v7476 = vpack.c.b16 %v6996, %v6992
      %v7477 = vpack.c.b16 %v6997, %v6993
      %v7478 = vpack.c.b16 %v7002, %v6998
      %v7479 = vpack.c.b16 %v7003, %v6999
      %v7480 = vpack.c.b16 %v7004, %v7000
      %v7481 = vpack.c.b16 %v7005, %v7001
      %v7482 = vpack.c.b16 %v7010, %v7006
      %v7483 = vpack.c.b16 %v7011, %v7007
      %v7484 = vpack.c.b16 %v7012, %v7008
      %v7485 = vpack.c.b16 %v7013, %v7009
      %v7486 = vpack.c.b16 %v7018, %v7014
      %v7487 = vpack.c.b16 %v7019, %v7015
      %v7488 = vpack.c.b16 %v7020, %v7016
      %v7489 = vpack.c.b16 %v7021, %v7017
      %v7490 = vpack.c.b16 %v7026, %v7022
      %v7491 = vpack.c.b16 %v7027, %v7023
      %v7492 = vpack.c.b16 %v7028, %v7024
      %v7493 = vpack.c.b16 %v7029, %v7025
      %v7494 = vpack.c.b16 %v7034, %v7030
      %v7495 = vpack.c.b16 %v7035, %v7031
      %v7496 = vpack.c.b16 %v7036, %v7032
      %v7497 = vpack.c.b16 %v7037, %v7033
      %v7498 = vpack.c.b16 %v7042, %v7038
      %v7499 = vpack.c.b16 %v7043, %v7039
      %v7500 = vpack.c.b16 %v7044, %v7040
      %v7501 = vpack.c.b16 %v7045, %v7041
      %v7502 = vpack.c.b16 %v7050, %v7046
      %v7503 = vpack.c.b16 %v7051, %v7047
      %v7504 = vpack.c.b16 %v7052, %v7048
      %v7505 = vpack.c.b16 %v7053, %v7049
      %v7506 = vpack.c.b16 %v7058, %v7054
      %v7507 = vpack.c.b16 %v7059, %v7055
      %v7508 = vpack.c.b16 %v7060, %v7056
      %v7509 = vpack.c.b16 %v7061, %v7057
      %v7510 = vpack.c.b16 %v7066, %v7062
      %v7511 = vpack.c.b16 %v7067, %v7063
      %v7512 = vpack.c.b16 %v7068, %v7064
      %v7513 = vpack.c.b16 %v7069, %v7065
      %v7514 = vpack.c.b16 %v7074, %v7070
      %v7515 = vpack.c.b16 %v7075, %v7071
      %v7516 = vpack.c.b16 %v7076, %v7072
      %v7517 = vpack.c.b16 %v7077, %v7073
      %v7518 = vpack.c.b16 %v7082, %v7078
      %v7519 = vpack.c.b16 %v7083, %v7079
      %v7520 = vpack.c.b16 %v7084, %v7080
      %v7521 = vpack.c.b16 %v7085, %v7081
      %v7522 = vpack.c.b16 %v7090, %v7086
      %v7523 = vpack.c.b16 %v7091, %v7087
      %v7524 = vpack.c.b16 %v7092, %v7088
      %v7525 = vpack.c.b16 %v7093, %v7089
      %v7526 = vpack.c.b16 %v7098, %v7094
      %v7527 = vpack.c.b16 %v7099, %v7095
      %v7528 = vpack.c.b16 %v7100, %v7096
      %v7529 = vpack.c.b16 %v7101, %v7097
      %v7530 = vpack.c.b16 %v7106, %v7102
      %v7531 = vpack.c.b16 %v7107, %v7103
      %v7532 = vpack.c.b16 %v7108, %v7104
      %v7533 = vpack.c.b16 %v7109, %v7105
      %v7534 = vpack.c.b16 %v7114, %v7110
      %v7535 = vpack.c.b16 %v7115, %v7111
      %v7536 = vpack.c.b16 %v7116, %v7112
      %v7537 = vpack.c.b16 %v7117, %v7113
      %v7538 = vpack.c.b16 %v7122, %v7118
      %v7539 = vpack.c.b16 %v7123, %v7119
      %v7540 = vpack.c.b16 %v7124, %v7120
      %v7541 = vpack.c.b16 %v7125, %v7121
      %v7542 = vpack.c.b16 %v7130, %v7126
      %v7543 = vpack.c.b16 %v7131, %v7127
      %v7544 = vpack.c.b16 %v7132, %v7128
      %v7545 = vpack.c.b16 %v7133, %v7129
      %v7546 = vpack.c.b16 %v7138, %v7134
      %v7547 = vpack.c.b16 %v7139, %v7135
      %v7548 = vpack.c.b16 %v7140, %v7136
      %v7549 = vpack.c.b16 %v7141, %v7137
      %v7550 = vpack.c.b16 %v7146, %v7142
      %v7551 = vpack.c.b16 %v7147, %v7143
      %v7552 = vpack.c.b16 %v7148, %v7144
      %v7553 = vpack.c.b16 %v7149, %v7145
      %v7554 = vpack.c.b16 %v7154, %v7150
      %v7555 = vpack.c.b16 %v7155, %v7151
      %v7556 = vpack.c.b16 %v7156, %v7152
      %v7557 = vpack.c.b16 %v7157, %v7153
      %v7558 = vpack.c.b16 %v7162, %v7158
      %v7559 = vpack.c.b16 %v7163, %v7159
      %v7560 = vpack.c.b16 %v7164, %v7160
      %v7561 = vpack.c.b16 %v7165, %v7161
      %v7562 = vpack.c.b16 %v7170, %v7166
      %v7563 = vpack.c.b16 %v7171, %v7167
      %v7564 = vpack.c.b16 %v7172, %v7168
      %v7565 = vpack.c.b16 %v7173, %v7169
      %v7566 = vpack.c.b16 %v7178, %v7174
      %v7567 = vpack.c.b16 %v7179, %v7175
      %v7568 = vpack.c.b16 %v7180, %v7176
      %v7569 = vpack.c.b16 %v7181, %v7177
      %v7570 = vpack.c.b16 %v7186, %v7182
      %v7571 = vpack.c.b16 %v7187, %v7183
      %v7572 = vpack.c.b16 %v7188, %v7184
      %v7573 = vpack.c.b16 %v7189, %v7185
      %v7574 = vpack.c.b16 %v7194, %v7190
      %v7575 = vpack.c.b16 %v7195, %v7191
      %v7576 = vpack.c.b16 %v7196, %v7192
      %v7577 = vpack.c.b16 %v7197, %v7193
      %v7578 = vpack.c.b16 %v7202, %v7198
      %v7579 = vpack.c.b16 %v7203, %v7199
      %v7580 = vpack.c.b16 %v7204, %v7200
      %v7581 = vpack.c.b16 %v7205, %v7201
      %v7582 = vpack.c.b16 %v7210, %v7206
      %v7583 = vpack.c.b16 %v7211, %v7207
      %v7584 = vpack.c.b16 %v7212, %v7208
      %v7585 = vpack.c.b16 %v7213, %v7209
      %v7586 = vpack.c.b16 %v7218, %v7214
      %v7587 = vpack.c.b16 %v7219, %v7215
      %v7588 = vpack.c.b16 %v7220, %v7216
      %v7589 = vpack.c.b16 %v7221, %v7217
      %v7590 = vpack.c.b16 %v7226, %v7222
      %v7591 = vpack.c.b16 %v7227, %v7223
      %v7592 = vpack.c.b16 %v7228, %v7224
      %v7593 = vpack.c.b16 %v7229, %v7225
      %v7594 = vpack.c.b16 %v7234, %v7230
      %v7595 = vpack.c.b16 %v7235, %v7231
      %v7596 = vpack.c.b16 %v7236, %v7232
      %v7597 = vpack.c.b16 %v7237, %v7233
      %v7598 = vpack.c.b16 %v7242, %v7238
      %v7599 = vpack.c.b16 %v7243, %v7239
      %v7600 = vpack.c.b16 %v7244, %v7240
      %v7601 = vpack.c.b16 %v7245, %v7241
      %v7602 = vpack.c.b16 %v7250, %v7246
      %v7603 = vpack.c.b16 %v7251, %v7247
      %v7604 = vpack.c.b16 %v7252, %v7248
      %v7605 = vpack.c.b16 %v7253, %v7249
      %v7606 = vpack.c.b16 %v7258, %v7254
      %v7607 = vpack.c.b16 %v7259, %v7255
      %v7608 = vpack.c.b16 %v7260, %v7256
      %v7609 = vpack.c.b16 %v7261, %v7257
      %v7610 = vpack.c.b16 %v7266, %v7262
      %v7611 = vpack.c.b16 %v7267, %v7263
      %v7612 = vpack.c.b16 %v7268, %v7264
      %v7613 = vpack.c.b16 %v7269, %v7265
      %v7614 = vpack.c.b16 %v7274, %v7270
      %v7615 = vpack.c.b16 %v7275, %v7271
      %v7616 = vpack.c.b16 %v7276, %v7272
      %v7617 = vpack.c.b16 %v7277, %v7273
      %v7618 = vpack.c.b16 %v7282, %v7278
      %v7619 = vpack.c.b16 %v7283, %v7279
      %v7620 = vpack.c.b16 %v7284, %v7280
      %v7621 = vpack.c.b16 %v7285, %v7281
      %v7622 = vpack.c.b16 %v7290, %v7286
      %v7623 = vpack.c.b16 %v7291, %v7287
      %v7624 = vpack.c.b16 %v7292, %v7288
      %v7625 = vpack.c.b16 %v7293, %v7289
      %v7626 = vpack.c.b16 %v7298, %v7294
      %v7627 = vpack.c.b16 %v7299, %v7295
      %v7628 = vpack.c.b16 %v7300, %v7296
      %v7629 = vpack.c.b16 %v7301, %v7297
      %v7630 = vpack.c.b16 %v7306, %v7302
      %v7631 = vpack.c.b16 %v7307, %v7303
      %v7632 = vpack.c.b16 %v7308, %v7304
      %v7633 = vpack.c.b16 %v7309, %v7305
      %v7634 = vpack.c.b16 %v7314, %v7310
      %v7635 = vpack.c.b16 %v7315, %v7311
      %v7636 = vpack.c.b16 %v7316, %v7312
      %v7637 = vpack.c.b16 %v7317, %v7313
      %v7638 = vpack.c.b16 %v7322, %v7318
      %v7639 = vpack.c.b16 %v7323, %v7319
      %v7640 = vpack.c.b16 %v7324, %v7320
      %v7641 = vpack.c.b16 %v7325, %v7321
      %v7642 = vpack.c.b16 %v7330, %v7326
      %v7643 = vpack.c.b16 %v7331, %v7327
      %v7644 = vpack.c.b16 %v7332, %v7328
      %v7645 = vpack.c.b16 %v7333, %v7329
      %v7646 = vpack.c.b16 %v7338, %v7334
      %v7647 = vpack.c.b16 %v7339, %v7335
      %v7648 = vpack.c.b16 %v7340, %v7336
      %v7649 = vpack.c.b16 %v7341, %v7337
      %v7650 = vpack.c.b16 %v7346, %v7342
      %v7651 = vpack.c.b16 %v7347, %v7343
      %v7652 = vpack.c.b16 %v7348, %v7344
      %v7653 = vpack.c.b16 %v7349, %v7345
      %v7654 = vpack.c.b16 %v7354, %v7350
      %v7655 = vpack.c.b16 %v7355, %v7351
      %v7656 = vpack.c.b16 %v7356, %v7352
      %v7657 = vpack.c.b16 %v7357, %v7353
      %v7658 = vpack.c.b16 %v7362, %v7358
      %v7659 = vpack.c.b16 %v7363, %v7359
      %v7660 = vpack.c.b16 %v7364, %v7360
      %v7661 = vpack.c.b16 %v7365, %v7361
      %v7662 = vpack.c.b16 %v7370, %v7366
      %v7663 = vpack.c.b16 %v7371, %v7367
      %v7664 = vpack.c.b16 %v7372, %v7368
      %v7665 = vpack.c.b16 %v7373, %v7369
      %v7666 = vpack.c.b16 %v7378, %v7374
      %v7667 = vpack.c.b16 %v7379, %v7375
      %v7668 = vpack.c.b16 %v7380, %v7376
      %v7669 = vpack.c.b16 %v7381, %v7377
      %v7670 = vpack.c.b16 %v7386, %v7382
      %v7671 = vpack.c.b16 %v7387, %v7383
      %v7672 = vpack.c.b16 %v7388, %v7384
      %v7673 = vpack.c.b16 %v7389, %v7385
      %v7674 = vpack.c.b16 %v7394, %v7390
      %v7675 = vpack.c.b16 %v7395, %v7391
      %v7676 = vpack.c.b16 %v7396, %v7392
      %v7677 = vpack.c.b16 %v7397, %v7393
      %v7678 = vpack.c.b16 %v7402, %v7398
      %v7679 = vpack.c.b16 %v7403, %v7399
      %v7680 = vpack.c.b16 %v7404, %v7400
      %v7681 = vpack.c.b16 %v7405, %v7401
      %v7682 = vpack.c.b16 %v7410, %v7406
      %v7683 = vpack.c.b16 %v7411, %v7407
      %v7684 = vpack.c.b16 %v7412, %v7408
      %v7685 = vpack.c.b16 %v7413, %v7409
      %v7686 = vpack.c.b16 %v7418, %v7414
      %v7687 = vpack.c.b16 %v7419, %v7415
      %v7688 = vpack.c.b16 %v7420, %v7416
      %v7689 = vpack.c.b16 %v7421, %v7417
      %v7690 = vpack.c.b16 %v7426, %v7422
      %v7691 = vpack.c.b16 %v7427, %v7423
      %v7692 = vpack.c.b16 %v7428, %v7424
      %v7693 = vpack.c.b16 %v7429, %v7425
      %v7694 = vpack.c.b16 %v7434, %v7430
      %v7695 = vpack.c.b16 %v7435, %v7431
      %v7696 = vpack.c.b16 %v7436, %v7432
      %v7697 = vpack.c.b16 %v7437, %v7433
      %v7698 = vpack.c.b16 %v7442, %v7438
      %v7699 = vpack.c.b16 %v7443, %v7439
      %v7700 = vpack.c.b16 %v7444, %v7440
      %v7701 = vpack.c.b16 %v7445, %v7441
      %v7959 = vperm.slane %v6677, 0
      %v7960 = vperm.slane %v6677, 1
      %v7961 = vperm.slane %v6677, 2
      %v7962 = vperm.slane %v6677, 3
      %7967 = vmatpush.bf16.msra.mxu0 %v7474
      %7968 = vmatpush.bf16.msra.mxu0 %v7470
      %7969 = vmatpush.bf16.msra.mxu0 %v7466
      %7970 = vmatpush.bf16.msra.mxu0 %v7462
      %7971 = vmatpush.bf16.msra.mxu0 %v7458
      %7972 = vmatpush.bf16.msra.mxu0 %v7454
      %7973 = vmatpush.bf16.msra.mxu0 %v7450
      %7974 = vmatpush.bf16.msra.mxu0 %v7446
      %7975 = vmatmul.bf16.gmra.mxu0 %v6401
      %v7976 = vpop.f32.mrf.mxu0
      %v7977 = vadd.f32 %v7959, %v7976
      %v7978 = vpop.f32.mrf.mxu0
      %7979 = vdwg.mxu0
      %7980 = vmatpush.bf16.msra.mxu0 %v7506
      %7981 = vmatpush.bf16.msra.mxu0 %v7502
      %7982 = vmatpush.bf16.msra.mxu0 %v7498
      %7983 = vmatpush.bf16.msra.mxu0 %v7494
      %7984 = vmatpush.bf16.msra.mxu0 %v7490
      %7985 = vmatpush.bf16.msra.mxu0 %v7486
      %7986 = vmatpush.bf16.msra.mxu0 %v7482
      %7987 = vmatpush.bf16.msra.mxu0 %v7478
      %7988 = vmatmul.bf16.gmra.mxu0 %v6402
      %v7989 = vpop.f32.mrf.mxu0
      %v7990 = vadd.f32 %v7977, %v7989
      %v7991 = vpop.f32.mrf.mxu0
      %7992 = vdwg.mxu0
      %7993 = vmatpush.bf16.msra.mxu0 %v7538
      %7994 = vmatpush.bf16.msra.mxu0 %v7534
      %7995 = vmatpush.bf16.msra.mxu0 %v7530
      %7996 = vmatpush.bf16.msra.mxu0 %v7526
      %7997 = vmatpush.bf16.msra.mxu0 %v7522
      %7998 = vmatpush.bf16.msra.mxu0 %v7518
      %7999 = vmatpush.bf16.msra.mxu0 %v7514
      %8000 = vmatpush.bf16.msra.mxu0 %v7510
      %8001 = vmatmul.bf16.gmra.mxu0 %v6406
      %v8002 = vpop.f32.mrf.mxu0
      %v8003 = vadd.f32 %v7990, %v8002
      %v8004 = vpop.f32.mrf.mxu0
      %8005 = vdwg.mxu0
      %8006 = vmatpush.bf16.msra.mxu0 %v7570
      %8007 = vmatpush.bf16.msra.mxu0 %v7566
      %8008 = vmatpush.bf16.msra.mxu0 %v7562
      %8009 = vmatpush.bf16.msra.mxu0 %v7558
      %8010 = vmatpush.bf16.msra.mxu0 %v7554
      %8011 = vmatpush.bf16.msra.mxu0 %v7550
      %8012 = vmatpush.bf16.msra.mxu0 %v7546
      %8013 = vmatpush.bf16.msra.mxu0 %v7542
      %8014 = vmatmul.bf16.gmra.mxu0 %v6409
      %v8015 = vpop.f32.mrf.mxu0
      %v8016 = vadd.f32 %v8003, %v8015
      %v8017 = vpop.f32.mrf.mxu0
      %8018 = vdwg.mxu0
      %8019 = vmatpush.bf16.msra.mxu0 %v7602
      %8020 = vmatpush.bf16.msra.mxu0 %v7598
      %8021 = vmatpush.bf16.msra.mxu0 %v7594
      %8022 = vmatpush.bf16.msra.mxu0 %v7590
      %8023 = vmatpush.bf16.msra.mxu0 %v7586
      %8024 = vmatpush.bf16.msra.mxu0 %v7582
      %8025 = vmatpush.bf16.msra.mxu0 %v7578
      %8026 = vmatpush.bf16.msra.mxu0 %v7574
      %8027 = vmatmul.bf16.gmra.mxu0 %v6413
      %v8028 = vpop.f32.mrf.mxu0
      %v8029 = vadd.f32 %v8016, %v8028
      %v8030 = vpop.f32.mrf.mxu0
      %8031 = vdwg.mxu0
      %8032 = vmatpush.bf16.msra.mxu0 %v7634
      %8033 = vmatpush.bf16.msra.mxu0 %v7630
      %8034 = vmatpush.bf16.msra.mxu0 %v7626
      %8035 = vmatpush.bf16.msra.mxu0 %v7622
      %8036 = vmatpush.bf16.msra.mxu0 %v7618
      %8037 = vmatpush.bf16.msra.mxu0 %v7614
      %8038 = vmatpush.bf16.msra.mxu0 %v7610
      %8039 = vmatpush.bf16.msra.mxu0 %v7606
      %8040 = vmatmul.bf16.gmra.mxu0 %v6414
      %v8041 = vpop.f32.mrf.mxu0
      %v8042 = vadd.f32 %v8029, %v8041
      %v8043 = vpop.f32.mrf.mxu0
      %8044 = vdwg.mxu0
      %8045 = vmatpush.bf16.msra.mxu0 %v7666
      %8046 = vmatpush.bf16.msra.mxu0 %v7662
      %8047 = vmatpush.bf16.msra.mxu0 %v7658
      %8048 = vmatpush.bf16.msra.mxu0 %v7654
      %8049 = vmatpush.bf16.msra.mxu0 %v7650
      %8050 = vmatpush.bf16.msra.mxu0 %v7646
      %8051 = vmatpush.bf16.msra.mxu0 %v7642
      %8052 = vmatpush.bf16.msra.mxu0 %v7638
      %8053 = vmatmul.bf16.gmra.mxu0 %v6417
      %v8054 = vpop.f32.mrf.mxu0
      %v8055 = vadd.f32 %v8042, %v8054
      %v8056 = vpop.f32.mrf.mxu0
      %8057 = vdwg.mxu0
      %8058 = vmatpush.bf16.msra.mxu0 %v7698
      %8059 = vmatpush.bf16.msra.mxu0 %v7694
      %8060 = vmatpush.bf16.msra.mxu0 %v7690
      %8061 = vmatpush.bf16.msra.mxu0 %v7686
      %8062 = vmatpush.bf16.msra.mxu0 %v7682
      %8063 = vmatpush.bf16.msra.mxu0 %v7678
      %8064 = vmatpush.bf16.msra.mxu0 %v7674
      %8065 = vmatpush.bf16.msra.mxu0 %v7670
      %8066 = vmatmul.bf16.gmra.mxu0 %v6418
      %v8067 = vpop.f32.mrf.mxu0
      %v8068 = vadd.f32 %v8055, %v8067
      %v8069 = vpop.f32.mrf.mxu0
      %8070 = vdwg.mxu0
      %8071 = vmatpush.bf16.msra.mxu0 %v7475
      %8072 = vmatpush.bf16.msra.mxu0 %v7471
      %8073 = vmatpush.bf16.msra.mxu0 %v7467
      %8074 = vmatpush.bf16.msra.mxu0 %v7463
      %8075 = vmatpush.bf16.msra.mxu0 %v7459
      %8076 = vmatpush.bf16.msra.mxu0 %v7455
      %8077 = vmatpush.bf16.msra.mxu0 %v7451
      %8078 = vmatpush.bf16.msra.mxu0 %v7447
      %8079 = vmatmul.bf16.gmra.mxu0 %v6401
      %v8080 = vpop.f32.mrf.mxu0
      %v8081 = vadd.f32 %v7960, %v8080
      %v8082 = vpop.f32.mrf.mxu0
      %8083 = vdwg.mxu0
      %8084 = vmatpush.bf16.msra.mxu0 %v7507
      %8085 = vmatpush.bf16.msra.mxu0 %v7503
      %8086 = vmatpush.bf16.msra.mxu0 %v7499
      %8087 = vmatpush.bf16.msra.mxu0 %v7495
      %8088 = vmatpush.bf16.msra.mxu0 %v7491
      %8089 = vmatpush.bf16.msra.mxu0 %v7487
      %8090 = vmatpush.bf16.msra.mxu0 %v7483
      %8091 = vmatpush.bf16.msra.mxu0 %v7479
      %8092 = vmatmul.bf16.gmra.mxu0 %v6402
      %v8093 = vpop.f32.mrf.mxu0
      %v8094 = vadd.f32 %v8081, %v8093
      %v8095 = vpop.f32.mrf.mxu0
      %8096 = vdwg.mxu0
      %8097 = vmatpush.bf16.msra.mxu0 %v7539
      %8098 = vmatpush.bf16.msra.mxu0 %v7535
      %8099 = vmatpush.bf16.msra.mxu0 %v7531
      %8100 = vmatpush.bf16.msra.mxu0 %v7527
      %8101 = vmatpush.bf16.msra.mxu0 %v7523
      %8102 = vmatpush.bf16.msra.mxu0 %v7519
      %8103 = vmatpush.bf16.msra.mxu0 %v7515
      %8104 = vmatpush.bf16.msra.mxu0 %v7511
      %8105 = vmatmul.bf16.gmra.mxu0 %v6406
      %v8106 = vpop.f32.mrf.mxu0
      %v8107 = vadd.f32 %v8094, %v8106
      %v8108 = vpop.f32.mrf.mxu0
      %8109 = vdwg.mxu0
      %8110 = vmatpush.bf16.msra.mxu0 %v7571
      %8111 = vmatpush.bf16.msra.mxu0 %v7567
      %8112 = vmatpush.bf16.msra.mxu0 %v7563
      %8113 = vmatpush.bf16.msra.mxu0 %v7559
      %8114 = vmatpush.bf16.msra.mxu0 %v7555
      %8115 = vmatpush.bf16.msra.mxu0 %v7551
      %8116 = vmatpush.bf16.msra.mxu0 %v7547
      %8117 = vmatpush.bf16.msra.mxu0 %v7543
      %8118 = vmatmul.bf16.gmra.mxu0 %v6409
      %v8119 = vpop.f32.mrf.mxu0
      %v8120 = vadd.f32 %v8107, %v8119
      %v8121 = vpop.f32.mrf.mxu0
      %8122 = vdwg.mxu0
      %8123 = vmatpush.bf16.msra.mxu0 %v7603
      %8124 = vmatpush.bf16.msra.mxu0 %v7599
      %8125 = vmatpush.bf16.msra.mxu0 %v7595
      %8126 = vmatpush.bf16.msra.mxu0 %v7591
      %8127 = vmatpush.bf16.msra.mxu0 %v7587
      %8128 = vmatpush.bf16.msra.mxu0 %v7583
      %8129 = vmatpush.bf16.msra.mxu0 %v7579
      %8130 = vmatpush.bf16.msra.mxu0 %v7575
      %8131 = vmatmul.bf16.gmra.mxu0 %v6413
      %v8132 = vpop.f32.mrf.mxu0
      %v8133 = vadd.f32 %v8120, %v8132
      %v8134 = vpop.f32.mrf.mxu0
      %8135 = vdwg.mxu0
      %8136 = vmatpush.bf16.msra.mxu0 %v7635
      %8137 = vmatpush.bf16.msra.mxu0 %v7631
      %8138 = vmatpush.bf16.msra.mxu0 %v7627
      %8139 = vmatpush.bf16.msra.mxu0 %v7623
      %8140 = vmatpush.bf16.msra.mxu0 %v7619
      %8141 = vmatpush.bf16.msra.mxu0 %v7615
      %8142 = vmatpush.bf16.msra.mxu0 %v7611
      %8143 = vmatpush.bf16.msra.mxu0 %v7607
      %8144 = vmatmul.bf16.gmra.mxu0 %v6414
      %v8145 = vpop.f32.mrf.mxu0
      %v8146 = vadd.f32 %v8133, %v8145
      %v8147 = vpop.f32.mrf.mxu0
      %8148 = vdwg.mxu0
      %8149 = vmatpush.bf16.msra.mxu0 %v7667
      %8150 = vmatpush.bf16.msra.mxu0 %v7663
      %8151 = vmatpush.bf16.msra.mxu0 %v7659
      %8152 = vmatpush.bf16.msra.mxu0 %v7655
      %8153 = vmatpush.bf16.msra.mxu0 %v7651
      %8154 = vmatpush.bf16.msra.mxu0 %v7647
      %8155 = vmatpush.bf16.msra.mxu0 %v7643
      %8156 = vmatpush.bf16.msra.mxu0 %v7639
      %8157 = vmatmul.bf16.gmra.mxu0 %v6417
      %v8158 = vpop.f32.mrf.mxu0
      %v8159 = vadd.f32 %v8146, %v8158
      %v8160 = vpop.f32.mrf.mxu0
      %8161 = vdwg.mxu0
      %8162 = vmatpush.bf16.msra.mxu0 %v7699
      %8163 = vmatpush.bf16.msra.mxu0 %v7695
      %8164 = vmatpush.bf16.msra.mxu0 %v7691
      %8165 = vmatpush.bf16.msra.mxu0 %v7687
      %8166 = vmatpush.bf16.msra.mxu0 %v7683
      %8167 = vmatpush.bf16.msra.mxu0 %v7679
      %8168 = vmatpush.bf16.msra.mxu0 %v7675
      %8169 = vmatpush.bf16.msra.mxu0 %v7671
      %8170 = vmatmul.bf16.gmra.mxu0 %v6418
      %v8171 = vpop.f32.mrf.mxu0
      %v8172 = vadd.f32 %v8159, %v8171
      %v8173 = vpop.f32.mrf.mxu0
      %8174 = vdwg.mxu0
      %8175 = vmatpush.bf16.msra.mxu0 %v7476
      %8176 = vmatpush.bf16.msra.mxu0 %v7472
      %8177 = vmatpush.bf16.msra.mxu0 %v7468
      %8178 = vmatpush.bf16.msra.mxu0 %v7464
      %8179 = vmatpush.bf16.msra.mxu0 %v7460
      %8180 = vmatpush.bf16.msra.mxu0 %v7456
      %8181 = vmatpush.bf16.msra.mxu0 %v7452
      %8182 = vmatpush.bf16.msra.mxu0 %v7448
      %8183 = vmatmul.bf16.gmra.mxu0 %v6401
      %v8184 = vpop.f32.mrf.mxu0
      %v8185 = vadd.f32 %v7961, %v8184
      %v8186 = vpop.f32.mrf.mxu0
      %8187 = vdwg.mxu0
      %8188 = vmatpush.bf16.msra.mxu0 %v7508
      %8189 = vmatpush.bf16.msra.mxu0 %v7504
      %8190 = vmatpush.bf16.msra.mxu0 %v7500
      %8191 = vmatpush.bf16.msra.mxu0 %v7496
      %8192 = vmatpush.bf16.msra.mxu0 %v7492
      %8193 = vmatpush.bf16.msra.mxu0 %v7488
      %8194 = vmatpush.bf16.msra.mxu0 %v7484
      %8195 = vmatpush.bf16.msra.mxu0 %v7480
      %8196 = vmatmul.bf16.gmra.mxu0 %v6402
      %v8197 = vpop.f32.mrf.mxu0
      %v8198 = vadd.f32 %v8185, %v8197
      %v8199 = vpop.f32.mrf.mxu0
      %8200 = vdwg.mxu0
      %8201 = vmatpush.bf16.msra.mxu0 %v7540
      %8202 = vmatpush.bf16.msra.mxu0 %v7536
      %8203 = vmatpush.bf16.msra.mxu0 %v7532
      %8204 = vmatpush.bf16.msra.mxu0 %v7528
      %8205 = vmatpush.bf16.msra.mxu0 %v7524
      %8206 = vmatpush.bf16.msra.mxu0 %v7520
      %8207 = vmatpush.bf16.msra.mxu0 %v7516
      %8208 = vmatpush.bf16.msra.mxu0 %v7512
      %8209 = vmatmul.bf16.gmra.mxu0 %v6406
      %v8210 = vpop.f32.mrf.mxu0
      %v8211 = vadd.f32 %v8198, %v8210
      %v8212 = vpop.f32.mrf.mxu0
      %8213 = vdwg.mxu0
      %8214 = vmatpush.bf16.msra.mxu0 %v7572
      %8215 = vmatpush.bf16.msra.mxu0 %v7568
      %8216 = vmatpush.bf16.msra.mxu0 %v7564
      %8217 = vmatpush.bf16.msra.mxu0 %v7560
      %8218 = vmatpush.bf16.msra.mxu0 %v7556
      %8219 = vmatpush.bf16.msra.mxu0 %v7552
      %8220 = vmatpush.bf16.msra.mxu0 %v7548
      %8221 = vmatpush.bf16.msra.mxu0 %v7544
      %8222 = vmatmul.bf16.gmra.mxu0 %v6409
      %v8223 = vpop.f32.mrf.mxu0
      %v8224 = vadd.f32 %v8211, %v8223
      %v8225 = vpop.f32.mrf.mxu0
      %8226 = vdwg.mxu0
      %8227 = vmatpush.bf16.msra.mxu0 %v7604
      %8228 = vmatpush.bf16.msra.mxu0 %v7600
      %8229 = vmatpush.bf16.msra.mxu0 %v7596
      %8230 = vmatpush.bf16.msra.mxu0 %v7592
      %8231 = vmatpush.bf16.msra.mxu0 %v7588
      %8232 = vmatpush.bf16.msra.mxu0 %v7584
      %8233 = vmatpush.bf16.msra.mxu0 %v7580
      %8234 = vmatpush.bf16.msra.mxu0 %v7576
      %8235 = vmatmul.bf16.gmra.mxu0 %v6413
      %v8236 = vpop.f32.mrf.mxu0
      %v8237 = vadd.f32 %v8224, %v8236
      %v8238 = vpop.f32.mrf.mxu0
      %8239 = vdwg.mxu0
      %8240 = vmatpush.bf16.msra.mxu0 %v7636
      %8241 = vmatpush.bf16.msra.mxu0 %v7632
      %8242 = vmatpush.bf16.msra.mxu0 %v7628
      %8243 = vmatpush.bf16.msra.mxu0 %v7624
      %8244 = vmatpush.bf16.msra.mxu0 %v7620
      %8245 = vmatpush.bf16.msra.mxu0 %v7616
      %8246 = vmatpush.bf16.msra.mxu0 %v7612
      %8247 = vmatpush.bf16.msra.mxu0 %v7608
      %8248 = vmatmul.bf16.gmra.mxu0 %v6414
      %v8249 = vpop.f32.mrf.mxu0
      %v8250 = vadd.f32 %v8237, %v8249
      %v8251 = vpop.f32.mrf.mxu0
      %8252 = vdwg.mxu0
      %8253 = vmatpush.bf16.msra.mxu0 %v7668
      %8254 = vmatpush.bf16.msra.mxu0 %v7664
      %8255 = vmatpush.bf16.msra.mxu0 %v7660
      %8256 = vmatpush.bf16.msra.mxu0 %v7656
      %8257 = vmatpush.bf16.msra.mxu0 %v7652
      %8258 = vmatpush.bf16.msra.mxu0 %v7648
      %8259 = vmatpush.bf16.msra.mxu0 %v7644
      %8260 = vmatpush.bf16.msra.mxu0 %v7640
      %8261 = vmatmul.bf16.gmra.mxu0 %v6417
      %v8262 = vpop.f32.mrf.mxu0
      %v8263 = vadd.f32 %v8250, %v8262
      %v8264 = vpop.f32.mrf.mxu0
      %8265 = vdwg.mxu0
      %8266 = vmatpush.bf16.msra.mxu0 %v7700
      %8267 = vmatpush.bf16.msra.mxu0 %v7696
      %8268 = vmatpush.bf16.msra.mxu0 %v7692
      %8269 = vmatpush.bf16.msra.mxu0 %v7688
      %8270 = vmatpush.bf16.msra.mxu0 %v7684
      %8271 = vmatpush.bf16.msra.mxu0 %v7680
      %8272 = vmatpush.bf16.msra.mxu0 %v7676
      %8273 = vmatpush.bf16.msra.mxu0 %v7672
      %8274 = vmatmul.bf16.gmra.mxu0 %v6418
      %v8275 = vpop.f32.mrf.mxu0
      %v8276 = vadd.f32 %v8263, %v8275
      %v8277 = vpop.f32.mrf.mxu0
      %8278 = vdwg.mxu0
      %8279 = vmatpush.bf16.msra.mxu0 %v7477
      %8280 = vmatpush.bf16.msra.mxu0 %v7473
      %8281 = vmatpush.bf16.msra.mxu0 %v7469
      %8282 = vmatpush.bf16.msra.mxu0 %v7465
      %8283 = vmatpush.bf16.msra.mxu0 %v7461
      %8284 = vmatpush.bf16.msra.mxu0 %v7457
      %8285 = vmatpush.bf16.msra.mxu0 %v7453
      %8286 = vmatpush.bf16.msra.mxu0 %v7449
      %8287 = vmatmul.bf16.gmra.mxu0 %v6401
      %v8288 = vpop.f32.mrf.mxu0
      %v8289 = vadd.f32 %v7962, %v8288
      %v8290 = vpop.f32.mrf.mxu0
      %8291 = vdwg.mxu0
      %8292 = vmatpush.bf16.msra.mxu0 %v7509
      %8293 = vmatpush.bf16.msra.mxu0 %v7505
      %8294 = vmatpush.bf16.msra.mxu0 %v7501
      %8295 = vmatpush.bf16.msra.mxu0 %v7497
      %8296 = vmatpush.bf16.msra.mxu0 %v7493
      %8297 = vmatpush.bf16.msra.mxu0 %v7489
      %8298 = vmatpush.bf16.msra.mxu0 %v7485
      %8299 = vmatpush.bf16.msra.mxu0 %v7481
      %8300 = vmatmul.bf16.gmra.mxu0 %v6402
      %v8301 = vpop.f32.mrf.mxu0
      %v8302 = vadd.f32 %v8289, %v8301
      %v8303 = vpop.f32.mrf.mxu0
      %8304 = vdwg.mxu0
      %8305 = vmatpush.bf16.msra.mxu0 %v7541
      %8306 = vmatpush.bf16.msra.mxu0 %v7537
      %8307 = vmatpush.bf16.msra.mxu0 %v7533
      %8308 = vmatpush.bf16.msra.mxu0 %v7529
      %8309 = vmatpush.bf16.msra.mxu0 %v7525
      %8310 = vmatpush.bf16.msra.mxu0 %v7521
      %8311 = vmatpush.bf16.msra.mxu0 %v7517
      %8312 = vmatpush.bf16.msra.mxu0 %v7513
      %8313 = vmatmul.bf16.gmra.mxu0 %v6406
      %v8314 = vpop.f32.mrf.mxu0
      %v8315 = vadd.f32 %v8302, %v8314
      %v8316 = vpop.f32.mrf.mxu0
      %8317 = vdwg.mxu0
      %8318 = vmatpush.bf16.msra.mxu0 %v7573
      %8319 = vmatpush.bf16.msra.mxu0 %v7569
      %8320 = vmatpush.bf16.msra.mxu0 %v7565
      %8321 = vmatpush.bf16.msra.mxu0 %v7561
      %8322 = vmatpush.bf16.msra.mxu0 %v7557
      %8323 = vmatpush.bf16.msra.mxu0 %v7553
      %8324 = vmatpush.bf16.msra.mxu0 %v7549
      %8325 = vmatpush.bf16.msra.mxu0 %v7545
      %8326 = vmatmul.bf16.gmra.mxu0 %v6409
      %v8327 = vpop.f32.mrf.mxu0
      %v8328 = vadd.f32 %v8315, %v8327
      %v8329 = vpop.f32.mrf.mxu0
      %8330 = vdwg.mxu0
      %8331 = vmatpush.bf16.msra.mxu0 %v7605
      %8332 = vmatpush.bf16.msra.mxu0 %v7601
      %8333 = vmatpush.bf16.msra.mxu0 %v7597
      %8334 = vmatpush.bf16.msra.mxu0 %v7593
      %8335 = vmatpush.bf16.msra.mxu0 %v7589
      %8336 = vmatpush.bf16.msra.mxu0 %v7585
      %8337 = vmatpush.bf16.msra.mxu0 %v7581
      %8338 = vmatpush.bf16.msra.mxu0 %v7577
      %8339 = vmatmul.bf16.gmra.mxu0 %v6413
      %v8340 = vpop.f32.mrf.mxu0
      %v8341 = vadd.f32 %v8328, %v8340
      %v8342 = vpop.f32.mrf.mxu0
      %8343 = vdwg.mxu0
      %8344 = vmatpush.bf16.msra.mxu0 %v7637
      %8345 = vmatpush.bf16.msra.mxu0 %v7633
      %8346 = vmatpush.bf16.msra.mxu0 %v7629
      %8347 = vmatpush.bf16.msra.mxu0 %v7625
      %8348 = vmatpush.bf16.msra.mxu0 %v7621
      %8349 = vmatpush.bf16.msra.mxu0 %v7617
      %8350 = vmatpush.bf16.msra.mxu0 %v7613
      %8351 = vmatpush.bf16.msra.mxu0 %v7609
      %8352 = vmatmul.bf16.gmra.mxu0 %v6414
      %v8353 = vpop.f32.mrf.mxu0
      %v8354 = vadd.f32 %v8341, %v8353
      %v8355 = vpop.f32.mrf.mxu0
      %8356 = vdwg.mxu0
      %8357 = vmatpush.bf16.msra.mxu0 %v7669
      %8358 = vmatpush.bf16.msra.mxu0 %v7665
      %8359 = vmatpush.bf16.msra.mxu0 %v7661
      %8360 = vmatpush.bf16.msra.mxu0 %v7657
      %8361 = vmatpush.bf16.msra.mxu0 %v7653
      %8362 = vmatpush.bf16.msra.mxu0 %v7649
      %8363 = vmatpush.bf16.msra.mxu0 %v7645
      %8364 = vmatpush.bf16.msra.mxu0 %v7641
      %8365 = vmatmul.bf16.gmra.mxu0 %v6417
      %v8366 = vpop.f32.mrf.mxu0
      %v8367 = vadd.f32 %v8354, %v8366
      %v8368 = vpop.f32.mrf.mxu0
      %8369 = vdwg.mxu0
      %8370 = vmatpush.bf16.msra.mxu0 %v7701
      %8371 = vmatpush.bf16.msra.mxu0 %v7697
      %8372 = vmatpush.bf16.msra.mxu0 %v7693
      %8373 = vmatpush.bf16.msra.mxu0 %v7689
      %8374 = vmatpush.bf16.msra.mxu0 %v7685
      %8375 = vmatpush.bf16.msra.mxu0 %v7681
      %8376 = vmatpush.bf16.msra.mxu0 %v7677
      %8377 = vmatpush.bf16.msra.mxu0 %v7673
      %8378 = vmatmul.bf16.gmra.mxu0 %v6418
      %v8379 = vpop.f32.mrf.mxu0
      %v8380 = vadd.f32 %v8367, %v8379
      %v8381 = vpop.f32.mrf.mxu0
      %8382 = vdwg.mxu0
      %v8383 = vmax.f32 %v8068, 0.0
      %v8384 = vmax.f32 %v8172, 0.0
      %v8385 = vmax.f32 %v8276, 0.0
      %v8386 = vmax.f32 %v8380, 0.0
      %v8387 = vpack.c.bf16 %v8383, %v8383
      %v8388 = vpack.c.bf16 %v8384, %v8384
      %v8389 = vpack.c.bf16 %v8385, %v8385
      %v8390 = vpack.c.bf16 %v8386, %v8386
      %v8391 = vld [vmem:[%s10] sm:$0xf]
      %v8392 = vld [vmem:[%s10 + $0x4] sm:$0xf]
      %v8393 = vld [vmem:[%s10 + $0x8] sm:$0xf]
      %v8394 = vld [vmem:[%s10 + $0xc] sm:$0xf]
      %v8395 = vld [vmem:[%s10 + $0x10] sm:$0xf]
      %v8396 = vld [vmem:[%s10 + $0x14] sm:$0xf]
      %v8397 = vld [vmem:[%s10 + $0x18] sm:$0xf]
      %v8398 = vld [vmem:[%s10 + $0x1c] sm:$0xf]
      %v8399 = vld [vmem:[%s10 + $0x20] sm:$0xf]
      %v8400 = vld [vmem:[%s10 + $0x24] sm:$0xf]
      %v8401 = vld [vmem:[%s10 + $0x28] sm:$0xf]
      %v8402 = vld [vmem:[%s10 + $0x2c] sm:$0xf]
      %v8403 = vld [vmem:[%s10 + $0x30] sm:$0xf]
      %v8404 = vld [vmem:[%s10 + $0x34] sm:$0xf]
      %v8405 = vld [vmem:[%s10 + $0x38] sm:$0xf]
      %v8406 = vld [vmem:[%s10 + $0x3c] sm:$0xf]
      %v8407 = vld [vmem:[%s10 + $0x40] sm:$0xf]
      %v8408 = vld [vmem:[%s10 + $0x44] sm:$0xf]
      %v8409 = vld [vmem:[%s10 + $0x48] sm:$0xf]
      %v8410 = vld [vmem:[%s10 + $0x4c] sm:$0xf]
      %v8411 = vld [vmem:[%s10 + $0x50] sm:$0xf]
      %v8412 = vld [vmem:[%s10 + $0x54] sm:$0xf]
      %v8413 = vld [vmem:[%s10 + $0x58] sm:$0xf]
      %v8414 = vld [vmem:[%s10 + $0x5c] sm:$0xf]
      %v8415 = vld [vmem:[%s10 + $0x60] sm:$0xf]
      %v8416 = vld [vmem:[%s10 + $0x64] sm:$0xf]
      %v8417 = vld [vmem:[%s10 + $0x68] sm:$0xf]
      %v8418 = vld [vmem:[%s10 + $0x6c] sm:$0xf]
      %v8419 = vld [vmem:[%s10 + $0x70] sm:$0xf]
      %v8420 = vld [vmem:[%s10 + $0x74] sm:$0xf]
      %v8421 = vld [vmem:[%s10 + $0x78] sm:$0xf]
      %v8422 = vld [vmem:[%s10 + $0x7c] sm:$0xf]
      %v8423 = vld [vmem:[%s10 + $0x80] sm:$0xf]
      %v8424 = vld [vmem:[%s10 + $0x84] sm:$0xf]
      %v8425 = vld [vmem:[%s10 + $0x88] sm:$0xf]
      %v8426 = vld [vmem:[%s10 + $0x8c] sm:$0xf]
      %v8427 = vld [vmem:[%s10 + $0x90] sm:$0xf]
      %v8428 = vld [vmem:[%s10 + $0x94] sm:$0xf]
      %v8429 = vld [vmem:[%s10 + $0x98] sm:$0xf]
      %v8430 = vld [vmem:[%s10 + $0x9c] sm:$0xf]
      %v8431 = vld [vmem:[%s10 + $0xa0] sm:$0xf]
      %v8432 = vld [vmem:[%s10 + $0xa4] sm:$0xf]
      %v8433 = vld [vmem:[%s10 + $0xa8] sm:$0xf]
      %v8434 = vld [vmem:[%s10 + $0xac] sm:$0xf]
      %v8435 = vld [vmem:[%s10 + $0xb0] sm:$0xf]
      %v8436 = vld [vmem:[%s10 + $0xb4] sm:$0xf]
      %v8437 = vld [vmem:[%s10 + $0xb8] sm:$0xf]
      %v8438 = vld [vmem:[%s10 + $0xbc] sm:$0xf]
      %v8439 = vld [vmem:[%s10 + $0xc0] sm:$0xf]
      %v8440 = vld [vmem:[%s10 + $0xc4] sm:$0xf]
      %v8441 = vld [vmem:[%s10 + $0xc8] sm:$0xf]
      %v8442 = vld [vmem:[%s10 + $0xcc] sm:$0xf]
      %v8443 = vld [vmem:[%s10 + $0xd0] sm:$0xf]
      %v8444 = vld [vmem:[%s10 + $0xd4] sm:$0xf]
      %v8445 = vld [vmem:[%s10 + $0xd8] sm:$0xf]
      %v8446 = vld [vmem:[%s10 + $0xdc] sm:$0xf]
      %v8447 = vld [vmem:[%s10 + $0xe0] sm:$0xf]
      %v8448 = vld [vmem:[%s10 + $0xe4] sm:$0xf]
      %v8449 = vld [vmem:[%s10 + $0xe8] sm:$0xf]
      %v8450 = vld [vmem:[%s10 + $0xec] sm:$0xf]
      %v8451 = vld [vmem:[%s10 + $0xf0] sm:$0xf]
      %v8452 = vld [vmem:[%s10 + $0xf4] sm:$0xf]
      %v8453 = vld [vmem:[%s10 + $0xf8] sm:$0xf]
      %v8454 = vld [vmem:[%s10 + $0xfc] sm:$0xf]
      %v8455 = vld [vmem:[%s11] sm:$0x1]
      %v8520 = vunpack.c.l.b16 %v8391
      %v8521 = vunpack.c.l.b16 %v8392
      %v8522 = vunpack.c.l.b16 %v8393
      %v8523 = vunpack.c.l.b16 %v8394
      %v8524 = vunpack.c.l.b16 %v8395
      %v8525 = vunpack.c.l.b16 %v8396
      %v8526 = vunpack.c.l.b16 %v8397
      %v8527 = vunpack.c.l.b16 %v8398
      %v8528 = vunpack.c.l.b16 %v8399
      %v8529 = vunpack.c.l.b16 %v8400
      %v8530 = vunpack.c.l.b16 %v8401
      %v8531 = vunpack.c.l.b16 %v8402
      %v8532 = vunpack.c.l.b16 %v8403
      %v8533 = vunpack.c.l.b16 %v8404
      %v8534 = vunpack.c.l.b16 %v8405
      %v8535 = vunpack.c.l.b16 %v8406
      %v8536 = vunpack.c.l.b16 %v8407
      %v8537 = vunpack.c.l.b16 %v8408
      %v8538 = vunpack.c.l.b16 %v8409
      %v8539 = vunpack.c.l.b16 %v8410
      %v8540 = vunpack.c.l.b16 %v8411
      %v8541 = vunpack.c.l.b16 %v8412
      %v8542 = vunpack.c.l.b16 %v8413
      %v8543 = vunpack.c.l.b16 %v8414
      %v8544 = vunpack.c.l.b16 %v8415
      %v8545 = vunpack.c.l.b16 %v8416
      %v8546 = vunpack.c.l.b16 %v8417
      %v8547 = vunpack.c.l.b16 %v8418
      %v8548 = vunpack.c.l.b16 %v8419
      %v8549 = vunpack.c.l.b16 %v8420
      %v8550 = vunpack.c.l.b16 %v8421
      %v8551 = vunpack.c.l.b16 %v8422
      %v8552 = vunpack.c.l.b16 %v8423
      %v8553 = vunpack.c.l.b16 %v8424
      %v8554 = vunpack.c.l.b16 %v8425
      %v8555 = vunpack.c.l.b16 %v8426
      %v8556 = vunpack.c.l.b16 %v8427
      %v8557 = vunpack.c.l.b16 %v8428
      %v8558 = vunpack.c.l.b16 %v8429
      %v8559 = vunpack.c.l.b16 %v8430
      %v8560 = vunpack.c.l.b16 %v8431
      %v8561 = vunpack.c.l.b16 %v8432
      %v8562 = vunpack.c.l.b16 %v8433
      %v8563 = vunpack.c.l.b16 %v8434
      %v8564 = vunpack.c.l.b16 %v8435
      %v8565 = vunpack.c.l.b16 %v8436
      %v8566 = vunpack.c.l.b16 %v8437
      %v8567 = vunpack.c.l.b16 %v8438
      %v8568 = vunpack.c.l.b16 %v8439
      %v8569 = vunpack.c.l.b16 %v8440
      %v8570 = vunpack.c.l.b16 %v8441
      %v8571 = vunpack.c.l.b16 %v8442
      %v8572 = vunpack.c.l.b16 %v8443
      %v8573 = vunpack.c.l.b16 %v8444
      %v8574 = vunpack.c.l.b16 %v8445
      %v8575 = vunpack.c.l.b16 %v8446
      %v8576 = vunpack.c.l.b16 %v8447
      %v8577 = vunpack.c.l.b16 %v8448
      %v8578 = vunpack.c.l.b16 %v8449
      %v8579 = vunpack.c.l.b16 %v8450
      %v8580 = vunpack.c.l.b16 %v8451
      %v8581 = vunpack.c.l.b16 %v8452
      %v8582 = vunpack.c.l.b16 %v8453
      %v8583 = vunpack.c.l.b16 %v8454
      %v8584 = vpack.c.b16 %v8521, %v8520
      %v8585 = vpack.c.b16 %v8523, %v8522
      %v8586 = vpack.c.b16 %v8525, %v8524
      %v8587 = vpack.c.b16 %v8527, %v8526
      %v8588 = vpack.c.b16 %v8529, %v8528
      %v8589 = vpack.c.b16 %v8531, %v8530
      %v8590 = vpack.c.b16 %v8533, %v8532
      %v8591 = vpack.c.b16 %v8535, %v8534
      %v8592 = vpack.c.b16 %v8537, %v8536
      %v8593 = vpack.c.b16 %v8539, %v8538
      %v8594 = vpack.c.b16 %v8541, %v8540
      %v8595 = vpack.c.b16 %v8543, %v8542
      %v8596 = vpack.c.b16 %v8545, %v8544
      %v8597 = vpack.c.b16 %v8547, %v8546
      %v8598 = vpack.c.b16 %v8549, %v8548
      %v8599 = vpack.c.b16 %v8551, %v8550
      %v8600 = vpack.c.b16 %v8553, %v8552
      %v8601 = vpack.c.b16 %v8555, %v8554
      %v8602 = vpack.c.b16 %v8557, %v8556
      %v8603 = vpack.c.b16 %v8559, %v8558
      %v8604 = vpack.c.b16 %v8561, %v8560
      %v8605 = vpack.c.b16 %v8563, %v8562
      %v8606 = vpack.c.b16 %v8565, %v8564
      %v8607 = vpack.c.b16 %v8567, %v8566
      %v8608 = vpack.c.b16 %v8569, %v8568
      %v8609 = vpack.c.b16 %v8571, %v8570
      %v8610 = vpack.c.b16 %v8573, %v8572
      %v8611 = vpack.c.b16 %v8575, %v8574
      %v8612 = vpack.c.b16 %v8577, %v8576
      %v8613 = vpack.c.b16 %v8579, %v8578
      %v8614 = vpack.c.b16 %v8581, %v8580
      %v8615 = vpack.c.b16 %v8583, %v8582
      %8648 = vmatpush.bf16.msra.mxu0 %v8591
      %8649 = vmatpush.bf16.msra.mxu0 %v8590
      %8650 = vmatpush.bf16.msra.mxu0 %v8589
      %8651 = vmatpush.bf16.msra.mxu0 %v8588
      %8652 = vmatpush.bf16.msra.mxu0 %v8587
      %8653 = vmatpush.bf16.msra.mxu0 %v8586
      %8654 = vmatpush.bf16.msra.mxu0 %v8585
      %8655 = vmatpush.bf16.msra.mxu0 %v8584
      %8656 = vmatmul.bf16.gmra.mxu0 %v8387
      %v8657 = vpop.f32.mrf.mxu0
      %v8658 = vadd.f32 %v8455, %v8657
      %v8659 = vpop.f32.mrf.mxu0
      %8660 = vdwg.mxu0
      %8661 = vmatpush.bf16.msra.mxu0 %v8599
      %8662 = vmatpush.bf16.msra.mxu0 %v8598
      %8663 = vmatpush.bf16.msra.mxu0 %v8597
      %8664 = vmatpush.bf16.msra.mxu0 %v8596
      %8665 = vmatpush.bf16.msra.mxu0 %v8595
      %8666 = vmatpush.bf16.msra.mxu0 %v8594
      %8667 = vmatpush.bf16.msra.mxu0 %v8593
      %8668 = vmatpush.bf16.msra.mxu0 %v8592
      %8669 = vmatmul.bf16.gmra.mxu0 %v8388
      %v8670 = vpop.f32.mrf.mxu0
      %v8671 = vadd.f32 %v8658, %v8670
      %v8672 = vpop.f32.mrf.mxu0
      %8673 = vdwg.mxu0
      %8674 = vmatpush.bf16.msra.mxu0 %v8607
      %8675 = vmatpush.bf16.msra.mxu0 %v8606
      %8676 = vmatpush.bf16.msra.mxu0 %v8605
      %8677 = vmatpush.bf16.msra.mxu0 %v8604
      %8678 = vmatpush.bf16.msra.mxu0 %v8603
      %8679 = vmatpush.bf16.msra.mxu0 %v8602
      %8680 = vmatpush.bf16.msra.mxu0 %v8601
      %8681 = vmatpush.bf16.msra.mxu0 %v8600
      %8682 = vmatmul.bf16.gmra.mxu0 %v8389
      %v8683 = vpop.f32.mrf.mxu0
      %v8684 = vadd.f32 %v8671, %v8683
      %v8685 = vpop.f32.mrf.mxu0
      %8686 = vdwg.mxu0
      %8687 = vmatpush.bf16.msra.mxu0 %v8615
      %8688 = vmatpush.bf16.msra.mxu0 %v8614
      %8689 = vmatpush.bf16.msra.mxu0 %v8613
      %8690 = vmatpush.bf16.msra.mxu0 %v8612
      %8691 = vmatpush.bf16.msra.mxu0 %v8611
      %8692 = vmatpush.bf16.msra.mxu0 %v8610
      %8693 = vmatpush.bf16.msra.mxu0 %v8609
      %8694 = vmatpush.bf16.msra.mxu0 %v8608
      %8695 = vmatmul.bf16.gmra.mxu0 %v8390
      %v8696 = vpop.f32.mrf.mxu0
      %v8697 = vadd.f32 %v8684, %v8696
      %v8698 = vpop.f32.mrf.mxu0
      %8699 = vdwg.mxu0
      %8700 = vst [vmem:[%s442] sm:$0x1] %v8697
      %v8701 = vlaneseq
      %v8702 = vand.u32 %v8701, 127
      %vm8703 = vcmp.ge.s32.totalorder %v8702, 50
      %vm8704 = vcmp.lt.s32.totalorder %v8702, 100
      %vm8705 = vmand %vm8703, %vm8704
      %v8706 = vsel %vm8705, %v8697, 0.0
      %v8707 = vmul.f32 %v8706, 1.442695
      %v8708 = vpow.pop %v8707
      %v8709 = vadd.f32 %v8708, 1e-09
      %v8710 = vrsqrt.pop %v8709
      %v8711 = vmul.f32 %v8710, %v8709
      %v8712 = vmul.f32 %v8711, %v8710
      %v8713 = vmul.f32 0.5, %v8712
      %v8714 = vsub.f32 1.5, %v8713
      %v8715 = vmul.f32 %v8710, %v8714
      %v8716 = vmul.f32 %v8709, %v8715
      %vm8717 = vcmp.eq.f32.partialorder %v8709, inf
      %v8718 = vsel %vm8717, %v8709, %v8716
      %vm8719 = vcmp.eq.f32.partialorder %v8709, 0.0
      %v8720 = vand.u32 %v8709, 2147483648
      %v8721 = vsel %vm8719, %v8720, %v8718
      %8722 = vst [vmem:[%s445] sm:$0x1] %v8721
      %p8723 = scmp.lt.s32.totalorder %s25, 1
      %s8724 = scalar_select %p8723, %s25, 1
      %s8725 = scalar_lea.vmem %s12, %s8724
      %p8726 = scmp.lt.s32.totalorder %s25, 1
      %s8727 = scalar_select %p8726, %s25, 1
      %s8728 = scalar_lea.vmem %s13, %s8727
      // Predicated region
      $region69: #{encoder_a_forward.1} parent=67 // pred_check
        %p8729 = pneg %p300
      $region70: #{encoder_a_forward.1} parent=67 // pred_check_branch
        %8731 = sbr.rel (%p8729) target = $region72
      $region71: #{encoder_a_forward.1} parent=67 // pred_region
        _
      $region72: #{encoder_a_forward.1} parent=67 // pred_fallthru
        _
      // Predicated region
      $region73: #{encoder_a_forward.1} parent=67 // pred_check
        %p8732 = pneg %p326
      $region74: #{encoder_a_forward.1} parent=67 // pred_check_branch
        %8734 = sbr.rel (%p8732) target = $region76
      $region75: #{encoder_a_forward.1} parent=67 // pred_region
        _
      $region76: #{encoder_a_forward.1} parent=67 // pred_fallthru
        _
    $region68: #{encoder_a_forward.1} parent=5 // pred_fallthru
      _
    %p8735 = scmp.le.s32.totalorder 2, %s20
    // Predicated region
    $region77: #{encoder_a_forward.1} parent=5 // pred_check
      %p8736 = pneg %p8735
    $region78: #{encoder_a_forward.1} parent=5 // pred_check_branch
      %8738 = sbr.rel (%p8736) target = $region80
    $region79: #{encoder_a_forward.1} parent=5 // pred_region
      %s8739 = ssub.s32 %s20, 2
      // Predicated region
      $region81: #{encoder_a_forward.1} parent=79 // pred_check
        %p8740 = pneg %p306
      $region82: #{encoder_a_forward.1} parent=79 // pred_check_branch
        %8742 = sbr.rel (%p8740) target = $region84
      $region83: #{encoder_a_forward.1} parent=79 // pred_region
        %p8743 = scmp.lt.s32.totalorder %s26, 1
        %s8744 = scalar_select %p8743, %s26, 1
        %s8745 = scalar_lea.vmem %s12, %s8744
      $region84: #{encoder_a_forward.1} parent=79 // pred_fallthru
        _
      // Predicated region
      $region85: #{encoder_a_forward.1} parent=79 // pred_check
        %p8746 = pneg %p332
      $region86: #{encoder_a_forward.1} parent=79 // pred_check_branch
        %8748 = sbr.rel (%p8746) target = $region88
      $region87: #{encoder_a_forward.1} parent=79 // pred_region
        %p8749 = scmp.lt.s32.totalorder %s26, 1
        %s8750 = scalar_select %p8749, %s26, 1
        %s8751 = scalar_lea.vmem %s13, %s8750
      $region88: #{encoder_a_forward.1} parent=79 // pred_fallthru
        _
    $region80: #{encoder_a_forward.1} parent=5 // pred_fallthru
      _
  $region6: #{encoder_a_forward.1} parent=0 // loop_footer
    %s24 = sadd.s32 1, %s20
  $region7: #{encoder_a_forward.1} parent=0 // loop_footer_branch
    %19 = sbr.rel target = $region3
  $region8: #{encoder_a_forward.1} parent=0 // loop_exit
    _

</llo_original>
